<compile_context>
chip_gen: v5e
topology: v5e:2x2
jax: 0.10.0
libtpu: 0.0.40
codegen_flags: <defaults>
</compile_context>

<pallas_src>
import functools

import jax
import jax.numpy as jnp
from jax import lax
from jax.experimental import pallas as pl
from jax.experimental.pallas import tpu as pltpu

_LANE = 128


def _round_up(x, m):
    return ((x + m - 1) // m) * m


# ----------------------------------------------------------------------------
# Counter-based dropout mask (portable replacement for pltpu.prng_*)
# ----------------------------------------------------------------------------
def _keep_mask(shape, row0_u32, seed, p_drop):
    """Bool mask with P(keep) = 1 - p_drop, keyed on (global_row, col, seed)."""
    r = lax.broadcasted_iota(jnp.int32, shape, 0).astype(jnp.uint32) + row0_u32
    c = lax.broadcasted_iota(jnp.int32, shape, 1).astype(jnp.uint32)
    h = r * jnp.uint32(0x9E3779B1) + c * jnp.uint32(0x85EBCA77)
    h = h ^ jnp.uint32(seed & 0xFFFFFFFF)
    # murmur3-style finalizer (good avalanche, cheap VPU ops)
    h = h ^ (h >> 16)
    h = h * jnp.uint32(0x7FEB352D)
    h = h ^ (h >> 15)
    h = h * jnp.uint32(0x846CA68B)
    h = h ^ (h >> 16)
    h31 = (h & jnp.uint32(0x7FFFFFFF)).astype(jnp.int32)   # [0, 2^31), signed cmp
    thresh = min(int(p_drop * float(1 << 31)), (1 << 31) - 1)
    return h31 >= jnp.int32(thresh)


# ----------------------------------------------------------------------------
# Fused Pallas kernel: Y = relu?(dropout?(A @ W + b))
# ----------------------------------------------------------------------------
def _matmul_bias_dropout_relu_kernel(a_ref, w_ref, b_ref, o_ref, *,
                                     tm, p_drop, relu, seed):
    y = jnp.dot(a_ref[...], w_ref[...], preferred_element_type=jnp.float32)
    y = y + b_ref[...]                         # bias broadcast over rows
    if p_drop > 0.0:
        row0 = (pl.program_id(0) * tm).astype(jnp.uint32)
        keep = _keep_mask(y.shape, row0, seed, p_drop)
        y = jnp.where(keep, y * jnp.float32(1.0 / (1.0 - p_drop)),
                      jnp.float32(0.0))
    if relu:
        y = jnp.maximum(y, 0.0)
    o_ref[...] = y.astype(o_ref.dtype)


def fused_matmul(a, w, b, *, p_drop=0.0, relu=False, seed=0, tm_max=2048):
    """a: (M, K), w: (K, Nout), b: (Nout,) -> (M, Nout) via one Pallas kernel."""
    M, K = a.shape
    Kw, Nraw = w.shape
    assert K == Kw
    Np = _round_up(Nraw, _LANE)                # lane-dense output (128-multiple)

    wp = jnp.zeros((K, Np), jnp.float32).at[:, :Nraw].set(w.astype(jnp.float32))
    bp = jnp.zeros((1, Np), jnp.float32).at[0, :Nraw].set(b.astype(jnp.float32))

    tm = min(tm_max, _round_up(M, 8))          # big row tile (sublane axis)
    Mp = _round_up(M, tm)
    ap = a.astype(jnp.float32)
    if Mp != M:
        ap = jnp.pad(ap, ((0, Mp - M), (0, 0)))

    kernel = functools.partial(
        _matmul_bias_dropout_relu_kernel,
        tm=tm, p_drop=float(p_drop), relu=relu, seed=int(seed) & 0xFFFFFFFF)

    out = pl.pallas_call(
        kernel,
        out_shape=jax.ShapeDtypeStruct((Mp, Np), jnp.float32),
        grid=(Mp // tm,),
        in_specs=[
            pl.BlockSpec((tm, K), lambda i: (i, 0)),
            pl.BlockSpec((K, Np), lambda i: (0, 0)),
            pl.BlockSpec((1, Np), lambda i: (0, 0)),
        ],
        out_specs=pl.BlockSpec((tm, Np), lambda i: (i, 0)),
        compiler_params=pltpu.CompilerParams(
            dimension_semantics=("parallel",),
            vmem_limit_bytes=32 * 1024 * 1024),
        cost_estimate=pl.CostEstimate(
            flops=2 * Mp * K * Np,
            transcendentals=0,
            bytes_accessed=4 * (Mp * K + K * Np + Np + Mp * Np)),
    )(ap, wp, bp)
    return out[:M, :Nraw]


# ----------------------------------------------------------------------------
# Fused FC stack: out = (A @ W1 + b1) @ W2 + b2 in ONE pallas_call
# ----------------------------------------------------------------------------
def _fc_stack_kernel(a_ref, w1_ref, b1_ref, w2_ref, b2_ref, o_ref):
    h = jnp.dot(a_ref[...], w1_ref[...],
                preferred_element_type=jnp.float32) + b1_ref[...]
    y = jnp.dot(h, w2_ref[...],
                preferred_element_type=jnp.float32) + b2_ref[...]
    o_ref[...] = y.astype(o_ref.dtype)


def fused_fc_stack(a, w1, b1, w2, b2, *, tm_max=1024):
    M, K = a.shape
    H = w1.shape[1]
    O = w2.shape[1]
    Hp = _round_up(H, _LANE)
    Op = _round_up(O, _LANE)

    w1p = jnp.zeros((K, Hp), jnp.float32).at[:, :H].set(w1.astype(jnp.float32))
    b1p = jnp.zeros((1, Hp), jnp.float32).at[0, :H].set(b1.astype(jnp.float32))
    w2p = jnp.zeros((Hp, Op), jnp.float32).at[:H, :O].set(w2.astype(jnp.float32))
    b2p = jnp.zeros((1, Op), jnp.float32).at[0, :O].set(b2.astype(jnp.float32))

    tm = min(tm_max, _round_up(M, 8))
    Mp = _round_up(M, tm)
    ap = a.astype(jnp.float32)
    if Mp != M:
        ap = jnp.pad(ap, ((0, Mp - M), (0, 0)))

    out = pl.pallas_call(
        _fc_stack_kernel,
        out_shape=jax.ShapeDtypeStruct((Mp, Op), jnp.float32),
        grid=(Mp // tm,),
        in_specs=[
            pl.BlockSpec((tm, K), lambda i: (i, 0)),
            pl.BlockSpec((K, Hp), lambda i: (0, 0)),
            pl.BlockSpec((1, Hp), lambda i: (0, 0)),
            pl.BlockSpec((Hp, Op), lambda i: (0, 0)),
            pl.BlockSpec((1, Op), lambda i: (0, 0)),
        ],
        out_specs=pl.BlockSpec((tm, Op), lambda i: (i, 0)),
        compiler_params=pltpu.CompilerParams(
            dimension_semantics=("parallel",),
            vmem_limit_bytes=32 * 1024 * 1024),
        cost_estimate=pl.CostEstimate(
            flops=2 * Mp * K * Hp + 2 * Mp * Hp * Op,
            transcendentals=0,
            bytes_accessed=4 * (Mp * K + K * Hp + Hp + Hp * Op + Op + Mp * Op)),
    )(ap, w1p, b1p, w2p, b2p)
    return out[:M, :O]


# ----------------------------------------------------------------------------
# Plain-JAX glue: NHWC im2col and 3x3/stride-3 max pooling (tiny at N=2)
# ----------------------------------------------------------------------------
def im2col_nhwc(x, k):
    """x: (N, H, W, C) -> (N*Ho*Wo, C*k*k); column order (c, kh, kw) matches
    torch weight.reshape(Cout, Cin*k*k) flattening."""
    N, H, W, C = x.shape
    Ho, Wo = H - k + 1, W - k + 1
    cols = []
    for c in range(C):
        for di in range(k):
            for dj in range(k):
                cols.append(x[:, di:di + Ho, dj:dj + Wo, c])
    patches = jnp.stack(cols, axis=-1)         # (N, Ho, Wo, C*k*k)
    return patches.reshape(N * Ho * Wo, C * k * k), Ho, Wo


def maxpool3_nhwc(x):
    """nn.MaxPool2d(3): window 3, stride 3, floor mode.  x: (N, H, W, C)."""
    N, H, W, C = x.shape
    Ho, Wo = H // 3, W // 3
    x = x[:, :Ho * 3, :Wo * 3, :]
    x = x.reshape(N, Ho, 3, Wo, 3, C)
    return jnp.max(x, axis=(2, 4))


# ----------------------------------------------------------------------------
# The model
# ----------------------------------------------------------------------------
class SimpleNetDropoutPallas:
    """JAX/Pallas re-implementation of SimpleNetDropout.forward."""

    def __init__(self, key):
        def uinit(k, shape, fan_in):
            bound = 1.0 / (fan_in ** 0.5)
            return jax.random.uniform(k, shape, jnp.float32, -bound, bound)

        ks = jax.random.split(key, 8)
        # Conv2d(1, 10, k=5) -> weight stored as (Cin*k*k, Cout) for matmul
        self.conv1_w = uinit(ks[0], (1 * 5 * 5, 10), 1 * 5 * 5)
        self.conv1_b = uinit(ks[1], (10,), 1 * 5 * 5)
        # Conv2d(10, 20, k=5)
        self.conv2_w = uinit(ks[2], (10 * 5 * 5, 20), 10 * 5 * 5)
        self.conv2_b = uinit(ks[3], (20,), 10 * 5 * 5)
        # Linear(500, 100)
        self.fc1_w = uinit(ks[4], (500, 100), 500)
        self.fc1_b = uinit(ks[5], (100,), 500)
        # Linear(100, 15)
        self.fc2_w = uinit(ks[6], (100, 15), 100)
        self.fc2_b = uinit(ks[7], (15,), 100)
        # TODO(synk): nn.CrossEntropyLoss(reduction='sum') is defined in
        # __init__ but never used in forward(); not implemented here.

    def forward(self, x, *, training=True, base_seed=0):
        N = x.shape[0]
        p1 = 0.5 if training else 0.0           # nn.Dropout(0.5), element-wise
        p2 = 0.2 if training else 0.0           # nn.Dropout(0.2)
        # Distinct, well-separated per-layer seeds (avoids correlated masks).
        seed1 = (int(base_seed) * 2654435761 + 0x0001234) & 0xFFFFFFFF
        seed2 = (int(base_seed) * 2654435761 + 0x00ABCD9) & 0xFFFFFFFF

        x = jnp.transpose(x, (0, 2, 3, 1))      # NCHW -> NHWC (C=1: trivial)

        # Conv1 + Dropout(0.5) + ReLU  (fused Pallas matmul kernel) + MaxPool(3)
        patches, Ho, Wo = im2col_nhwc(x, 5)                  # (N*60*60, 25)
        y = fused_matmul(patches, self.conv1_w, self.conv1_b,
                         p_drop=p1, relu=True, seed=seed1)
        y = maxpool3_nhwc(y.reshape(N, Ho, Wo, 10))          # (N, 20, 20, 10)

        # Conv2 + Dropout(0.2) + ReLU  (fused Pallas matmul kernel) + MaxPool(3)
        patches, Ho, Wo = im2col_nhwc(y, 5)                  # (N*16*16, 250)
        y = fused_matmul(patches, self.conv2_w, self.conv2_b,
                         p_drop=p2, relu=True, seed=seed2)
        y = maxpool3_nhwc(y.reshape(N, Ho, Wo, 20))          # (N, 5, 5, 20)

        # Flatten exactly like torch .view(-1, 500) on an NCHW tensor
        # (tiny (N,20,5,5) transpose — negligible).
        flat = jnp.transpose(y, (0, 3, 1, 2)).reshape(N, 500)

        # fc_layers: Linear(500,100) -> Linear(100,15), fused into one kernel.
        return fused_fc_stack(flat, self.fc1_w, self.fc1_b,
                              self.fc2_w, self.fc2_b)        # (N, 15)


# Pure-jnp reference (eval mode, no dropout) to sanity-check the Pallas path.
def _reference_eval(model, x_nchw):
    hi = jax.lax.Precision.HIGHEST
    N = x_nchw.shape[0]
    x = jnp.transpose(x_nchw, (0, 2, 3, 1))
    p, Ho, Wo = im2col_nhwc(x, 5)
    y = jnp.maximum(jnp.dot(p, model.conv1_w, precision=hi) + model.conv1_b, 0.0)
    y = maxpool3_nhwc(y.reshape(N, Ho, Wo, 10))
    p, Ho, Wo = im2col_nhwc(y, 5)
    y = jnp.maximum(jnp.dot(p, model.conv2_w, precision=hi) + model.conv2_b, 0.0)
    y = maxpool3_nhwc(y.reshape(N, Ho, Wo, 20))
    flat = jnp.transpose(y, (0, 3, 1, 2)).reshape(N, 500)
    h = jnp.dot(flat, model.fc1_w, precision=hi) + model.fc1_b
    return jnp.dot(h, model.fc2_w, precision=hi) + model.fc2_b


if __name__ == "__main__":
    key = jax.random.PRNGKey(0)
    pkey, xkey = jax.random.split(key)

    model = SimpleNetDropoutPallas(pkey)
    # 64x64 input is what .view(-1, 500) implies: 64 -conv5-> 60 -pool3-> 20
    # -conv5-> 16 -pool3-> 5, and 20*5*5 = 500.
    x = jax.random.normal(xkey, (2, 1, 64, 64), jnp.float32)  # NCHW, like torch

    # Training-mode forward (module default): stochastic dropout in-kernel.
    y_train = jax.block_until_ready(model.forward(x, training=True,
                                                  base_seed=1234))
    assert y_train.shape == (2, 15), y_train.shape
    assert bool(jnp.all(jnp.isfinite(y_train)))

    # Eval-mode forward: dropout is identity -> must match pure-jnp reference.
    y_eval = jax.block_until_ready(model.forward(x, training=False))
    y_ref = jax.block_until_ready(_reference_eval(model, x))
    assert y_eval.shape == (2, 15)
    assert jnp.allclose(y_eval, y_ref, atol=2e-3, rtol=2e-3), \
        float(jnp.max(jnp.abs(y_eval - y_ref)))

    print("KERNEL_OK")
</pallas_src>

<mosaic_0001>
module attributes {stable_mosaic.version = 11 : i64} {
  func.func @_matmul_bias_dropout_relu_kernel(%arg0: i32, %arg1: memref<2048x25xf32, #tpu.memory_space<vmem>>, %arg2: memref<25x128xf32, #tpu.memory_space<vmem>>, %arg3: memref<1x128xf32, #tpu.memory_space<vmem>>, %arg4: memref<2048x128xf32, #tpu.memory_space<vmem>>) attributes {dimension_semantics = [#tpu.dimension_semantics<parallel>], iteration_bounds = array<i64: 4>, scalar_prefetch = 0 : i64, scratch_operands = 0 : i64, tpu.core_type = #tpu.core_type<tc>, window_params = [{transform_indices = @transform_0, window_bounds = array<i64: 2048, 25>}, {pipeline_mode = #tpu.pipeline_mode<synchronous>, transform_indices = @transform_1, window_bounds = array<i64: 25, 128>}, {pipeline_mode = #tpu.pipeline_mode<synchronous>, transform_indices = @transform_2, window_bounds = array<i64: 1, 128>}, {transform_indices = @transform_3, window_bounds = array<i64: 2048, 128>}]} {
    %c0 = arith.constant 0 : index
    %c0_0 = arith.constant 0 : index
    %0 = vector.load %arg1[%c0, %c0_0] : memref<2048x25xf32, #tpu.memory_space<vmem>>, vector<2048x25xf32>
    %c0_1 = arith.constant 0 : index
    %c0_2 = arith.constant 0 : index
    %1 = vector.load %arg2[%c0_1, %c0_2] : memref<25x128xf32, #tpu.memory_space<vmem>>, vector<25x128xf32>
    %cst = arith.constant dense<0.000000e+00> : vector<2048x128xf32>
    %2 = tpu.matmul %0, %1, %cst {dimension_numbers = #tpu.dot_dimension_numbers<[1], [0], [0], [1], [0, 0, 1, 1], [], []>} : vector<2048x25xf32>, vector<25x128xf32>, vector<2048x128xf32> -> vector<2048x128xf32>
    %c0_3 = arith.constant 0 : index
    %c0_4 = arith.constant 0 : index
    %3 = vector.load %arg3[%c0_3, %c0_4] : memref<1x128xf32, #tpu.memory_space<vmem>>, vector<1x128xf32>
    %4 = vector.broadcast %3 : vector<1x128xf32> to vector<2048x128xf32>
    %5 = arith.addf %2, %4 : vector<2048x128xf32>
    %c2048_i32 = arith.constant 2048 : i32
    %6 = arith.muli %arg0, %c2048_i32 : i32
    %7 = tpu.iota {dimensions = array<i32: 0>} : vector<2048x128xi32>
    %8 = vector.broadcast %6 : i32 to vector<2048x128xi32>
    %9 = arith.addi %7, %8 : vector<2048x128xi32>
    %10 = tpu.iota {dimensions = array<i32: 1>} : vector<2048x128xi32>
    %c-1640531535_i32 = arith.constant -1640531535 : i32
    %11 = vector.broadcast %c-1640531535_i32 : i32 to vector<2048x128xi32>
    %12 = arith.muli %9, %11 : vector<2048x128xi32>
    %c-2048144777_i32 = arith.constant -2048144777 : i32
    %13 = vector.broadcast %c-2048144777_i32 : i32 to vector<2048x128xi32>
    %14 = arith.muli %10, %13 : vector<2048x128xi32>
    %15 = arith.addi %12, %14 : vector<2048x128xi32>
    %c-1486313114_i32 = arith.constant -1486313114 : i32
    %16 = vector.broadcast %c-1486313114_i32 : i32 to vector<2048x128xi32>
    %17 = arith.xori %15, %16 : vector<2048x128xi32>
    %c16_i32 = arith.constant 16 : i32
    %18 = vector.broadcast %c16_i32 : i32 to vector<2048x128xi32>
    %19 = arith.shrui %17, %18 : vector<2048x128xi32>
    %20 = arith.xori %17, %19 : vector<2048x128xi32>
    %c2146121005_i32 = arith.constant 2146121005 : i32
    %21 = vector.broadcast %c2146121005_i32 : i32 to vector<2048x128xi32>
    %22 = arith.muli %20, %21 : vector<2048x128xi32>
    %c15_i32 = arith.constant 15 : i32
    %23 = vector.broadcast %c15_i32 : i32 to vector<2048x128xi32>
    %24 = arith.shrui %22, %23 : vector<2048x128xi32>
    %25 = arith.xori %22, %24 : vector<2048x128xi32>
    %c-2073254261_i32 = arith.constant -2073254261 : i32
    %26 = vector.broadcast %c-2073254261_i32 : i32 to vector<2048x128xi32>
    %27 = arith.muli %25, %26 : vector<2048x128xi32>
    %c16_i32_5 = arith.constant 16 : i32
    %28 = vector.broadcast %c16_i32_5 : i32 to vector<2048x128xi32>
    %29 = arith.shrui %27, %28 : vector<2048x128xi32>
    %30 = arith.xori %27, %29 : vector<2048x128xi32>
    %c2147483647_i32 = arith.constant 2147483647 : i32
    %31 = vector.broadcast %c2147483647_i32 : i32 to vector<2048x128xi32>
    %32 = arith.andi %30, %31 : vector<2048x128xi32>
    %c1073741824_i32 = arith.constant 1073741824 : i32
    %33 = vector.broadcast %c1073741824_i32 : i32 to vector<2048x128xi32>
    %34 = arith.cmpi sge, %32, %33 : vector<2048x128xi32>
    %cst_6 = arith.constant 2.000000e+00 : f32
    %35 = vector.broadcast %cst_6 : f32 to vector<2048x128xf32>
    %36 = arith.mulf %5, %35 : vector<2048x128xf32>
    %cst_7 = arith.constant 0.000000e+00 : f32
    %37 = vector.broadcast %cst_7 : f32 to vector<2048x128xf32>
    %38 = arith.select %34, %36, %37 : vector<2048x128xi1>, vector<2048x128xf32>
    %cst_8 = arith.constant 0.000000e+00 : f32
    %39 = vector.broadcast %cst_8 : f32 to vector<2048x128xf32>
    %40 = arith.maximumf %38, %39 : vector<2048x128xf32>
    %c0_9 = arith.constant 0 : index
    %c0_10 = arith.constant 0 : index
    %41 = vector.load %arg4[%c0_9, %c0_10] : memref<2048x128xf32, #tpu.memory_space<vmem>>, vector<2048x128xf32>
    tpu.vector_store %arg4[%c0_9, %c0_10], %40 {strides = array<i32>} : memref<2048x128xf32, #tpu.memory_space<vmem>>, vector<2048x128xf32>,
    return
  }
  func.func @transform_0(%arg0: i32) -> (i32, i32) {
    %c0_i32 = arith.constant 0 : i32
    %c0_i32_0 = arith.constant 0 : i32
    return %arg0, %c0_i32 : i32, i32
  }
  func.func @transform_1(%arg0: i32) -> (i32, i32) {
    %c0_i32 = arith.constant 0 : i32
    %c0_i32_0 = arith.constant 0 : i32
    %c0_i32_1 = arith.constant 0 : i32
    return %c0_i32, %c0_i32_0 : i32, i32
  }
  func.func @transform_2(%arg0: i32) -> (i32, i32) {
    %c0_i32 = arith.constant 0 : i32
    %c0_i32_0 = arith.constant 0 : i32
    %c0_i32_1 = arith.constant 0 : i32
    return %c0_i32, %c0_i32_0 : i32, i32
  }
  func.func @transform_3(%arg0: i32) -> (i32, i32) {
    %c0_i32 = arith.constant 0 : i32
    %c0_i32_0 = arith.constant 0 : i32
    return %arg0, %c0_i32 : i32, i32
  }
}

</mosaic_0001>

<llo_original>
// kernel: tpu_custom_call.1
$region0: #{tpu_custom_call.1}
  #allocation0 [shape = 'u32[]', space=smem, size = 0x4, offset = 0x4, fixed_abs, tag = 'smem constant byte address 0x4 - core index']
  #allocation1 [shape = 'u32[72,128]{1,0:T(1,128)}', space=vmem, size = 0x9000, scoped, tag = 'internal scratch']
  %s0 = inlined_call_operand.vmem [shape: f32[8192,25], index: 0, kind: input, shape index: {}]
  %s1 = inlined_call_operand.vmem [shape: f32[25,128], index: 1, kind: input, shape index: {}]
  %s2 = inlined_call_operand.vmem [shape: f32[1,128], index: 2, kind: input, shape index: {}]
  %s3 = inlined_call_operand.hbm [shape: f32[8192,128], index: 3, kind: output, shape index: {}]
  %s4 = sld [smem:[#allocation0]]
  $region45: #{tpu_custom_call.1} parent=0
    _
  %s6 = ssub.s32 1, %s4
  %s7 = scalar_select 0, %s6, %s4
  $region1: #{tpu_custom_call.1} parent=0
    #allocation2 [shape = 'u8[2097152]{0}', space=vmem, size = 0x200000, scoped, tag = 'output window, operand 0']
    #allocation3 [shape = 's32[2]{0}', space=sflag, size = 0x8, scoped, tag = 'scoped memory for tpu_custom_call.1']
    %8 = vsyncpa [#allocation3], 0
    %s9 = scalar_lea.sflag [#allocation3], 1
    %10 = vsyncpa %s9, 0
    loop: start=0, step=1, limit=6
    $region2: #{tpu_custom_call.1} parent=1 // loop_pre_header
      _
    $region3: #{tpu_custom_call.1} parent=1 // loop_header
      %s12 = sphi 0, %s16
      %p13 = scmp.ge.s32.totalorder %s12, 6
      %s22 = sphi 0, %s24
      %s25 = sphi 0, %s22
      %s26 = sphi 0, %s25
      %s42 = sphi 0, %s26
      %s46 = sphi 0, %s46
      %s48 = sphi 0, %s46
      %s49 = sphi 0, %s48
      %s63 = sphi 0, %s49
      %s67 = sphi 0, %s67
      %s69 = sphi 0, %s67
      %s70 = sphi 0, %s69
      %s84 = sphi 0, %s70
      %s90 = sphi 0, %s92
      %s93 = sphi 0, %s90
      %s94 = sphi 0, %s93
      %s110 = sphi 0, %s94
    $region4: #{tpu_custom_call.1} parent=1 // loop_header_branch
      %15 = sbr.rel (%p13) target = $region8
    $region5: #{tpu_custom_call.1} parent=1 // loop_body
      %s17 = ssub.s32 %s12, 1
      %s18 = ssub.s32 %s12, 2
      %s19 = sadd.s32 %s12, 1
      %s20 = ssub.s32 %s12, %s19
      %p21 = scmp.eq.s32.totalorder %s20, 0
      %s23 = sadd.s32 %s22, 1
      %s24 = scalar_select %p21, %s22, %s23
      %p27 = pneg %p21
      %p28 = scmp.eq.s32.totalorder %s12, 3
      %p29 = por %p27, %p28
      %p30 = scmp.ne.s32.totalorder %s22, %s25
      %p31 = scmp.eq.s32.totalorder %s12, 0
      %p32 = por %p30, %p31
      %p33 = scmp.ne.s32.totalorder %s22, %s25
      %p34 = scmp.eq.s32.totalorder %s17, 3
      %p35 = por %p33, %p34
      %p36 = scmp.ne.s32.totalorder %s25, %s26
      %p37 = scmp.eq.s32.totalorder %s17, 0
      %p38 = por %p36, %p37
      %p39 = scmp.ne.s32.totalorder %s25, %s26
      %p40 = scmp.eq.s32.totalorder %s18, 3
      %p41 = por %p39, %p40
      %p43 = scmp.ne.s32.totalorder %s26, %s42
      %p44 = scmp.eq.s32.totalorder %s18, 0
      %p45 = por %p43, %p44
      %s47 = sadd.s32 %s46, 1
      %p50 = scmp.eq.s32.totalorder %s12, 3
      %p51 = scmp.ne.s32.totalorder %s46, %s48
      %p52 = scmp.eq.s32.totalorder %s12, 0
      %p53 = por %p51, %p52
      %p54 = scmp.ne.s32.totalorder %s46, %s48
      %p55 = scmp.eq.s32.totalorder %s17, 3
      %p56 = por %p54, %p55
      %p57 = scmp.ne.s32.totalorder %s48, %s49
      %p58 = scmp.eq.s32.totalorder %s17, 0
      %p59 = por %p57, %p58
      %p60 = scmp.ne.s32.totalorder %s48, %s49
      %p61 = scmp.eq.s32.totalorder %s18, 3
      %p62 = por %p60, %p61
      %p64 = scmp.ne.s32.totalorder %s49, %s63
      %p65 = scmp.eq.s32.totalorder %s18, 0
      %p66 = por %p64, %p65
      %s68 = sadd.s32 %s67, 1
      %p71 = scmp.eq.s32.totalorder %s12, 3
      %p72 = scmp.ne.s32.totalorder %s67, %s69
      %p73 = scmp.eq.s32.totalorder %s12, 0
      %p74 = por %p72, %p73
      %p75 = scmp.ne.s32.totalorder %s67, %s69
      %p76 = scmp.eq.s32.totalorder %s17, 3
      %p77 = por %p75, %p76
      %p78 = scmp.ne.s32.totalorder %s69, %s70
      %p79 = scmp.eq.s32.totalorder %s17, 0
      %p80 = por %p78, %p79
      %p81 = scmp.ne.s32.totalorder %s69, %s70
      %p82 = scmp.eq.s32.totalorder %s18, 3
      %p83 = por %p81, %p82
      %p85 = scmp.ne.s32.totalorder %s70, %s84
      %p86 = scmp.eq.s32.totalorder %s18, 0
      %p87 = por %p85, %p86
      %s88 = ssub.s32 %s12, %s19
      %p89 = scmp.eq.s32.totalorder %s88, 0
      %s91 = sadd.s32 %s90, 1
      %s92 = scalar_select %p89, %s90, %s91
      %p95 = pneg %p89
      %p96 = scmp.eq.s32.totalorder %s12, 3
      %p97 = por %p95, %p96
      %p98 = scmp.ne.s32.totalorder %s90, %s93
      %p99 = scmp.eq.s32.totalorder %s12, 0
      %p100 = por %p98, %p99
      %p101 = scmp.ne.s32.totalorder %s90, %s93
      %p102 = scmp.eq.s32.totalorder %s17, 3
      %p103 = por %p101, %p102
      %p104 = scmp.ne.s32.totalorder %s93, %s94
      %p105 = scmp.eq.s32.totalorder %s17, 0
      %p106 = por %p104, %p105
      %p107 = scmp.ne.s32.totalorder %s93, %s94
      %p108 = scmp.eq.s32.totalorder %s18, 3
      %p109 = por %p107, %p108
      %p111 = scmp.ne.s32.totalorder %s94, %s110
      %p112 = scmp.eq.s32.totalorder %s18, 0
      %p113 = por %p111, %p112
      %p114 = scmp.le.s32.totalorder 1, %s12
      %p115 = scmp.lt.s32.totalorder %s12, 5
      %p116 = pnand %p114, %p115
      %p117 = pneg %p116
      // Predicated region
      $region9: #{tpu_custom_call.1} parent=5 // pred_check
        _
      $region10: #{tpu_custom_call.1} parent=5 // pred_check_branch
        %119 = sbr.rel (%p116) target = $region12
      $region11: #{tpu_custom_call.1} parent=5 // pred_region
        %s120 = ssub.s32 %s12, 1
        // Predicated region
        $region13: #{tpu_custom_call.1} parent=11 // pred_check
          %p121 = pneg %p59
        $region14: #{tpu_custom_call.1} parent=11 // pred_check_branch
          %123 = sbr.rel (%p121) target = $region16
        $region15: #{tpu_custom_call.1} parent=11 // pred_region
          _
        $region16: #{tpu_custom_call.1} parent=11 // pred_fallthru
          _
        // Predicated region
        $region17: #{tpu_custom_call.1} parent=11 // pred_check
          %p124 = pneg %p80
        $region18: #{tpu_custom_call.1} parent=11 // pred_check_branch
          %126 = sbr.rel (%p124) target = $region20
        $region19: #{tpu_custom_call.1} parent=11 // pred_region
          _
        $region20: #{tpu_custom_call.1} parent=11 // pred_fallthru
          _
      $region12: #{tpu_custom_call.1} parent=5 // pred_fallthru
        _
      %p127 = scmp.lt.s32.totalorder %s12, 4
      // Predicated region
      $region21: #{tpu_custom_call.1} parent=5 // pred_check
        %p128 = pneg %p127
      $region22: #{tpu_custom_call.1} parent=5 // pred_check_branch
        %130 = sbr.rel (%p128) target = $region24
      $region23: #{tpu_custom_call.1} parent=5 // pred_region
        // Predicated region
        $region25: #{tpu_custom_call.1} parent=23 // pred_check
          %p131 = pneg %p32
        $region26: #{tpu_custom_call.1} parent=23 // pred_check_branch
          %133 = sbr.rel (%p131) target = $region28
        $region27: #{tpu_custom_call.1} parent=23 // pred_region
          %s134 = smul.u32 256, %s12
          %p135 = scmp.lt.s32.totalorder %s134, 1023
          %s136 = scalar_select %p135, %s134, 1023
          %s137 = smul.addr %s136, 8
          %s138 = scalar_lea.vmem %s0, %s137
          %s139 = smul.u32 256, %s12
        $region28: #{tpu_custom_call.1} parent=23 // pred_fallthru
          _
      $region24: #{tpu_custom_call.1} parent=5 // pred_fallthru
        _
      %p140 = scmp.le.s32.totalorder 1, %s12
      %p141 = scmp.lt.s32.totalorder %s12, 5
      %p142 = pnand %p140, %p141
      %p143 = pneg %p142
      // Predicated region
      $region29: #{tpu_custom_call.1} parent=5 // pred_check
        _
      $region30: #{tpu_custom_call.1} parent=5 // pred_check_branch
        %145 = sbr.rel (%p142) target = $region32
      $region31: #{tpu_custom_call.1} parent=5 // pred_region
        %s146 = ssub.s32 %s12, 1
        %s147 = smul.u32 256, %s17
        %p148 = scmp.lt.s32.totalorder %s147, 1023
        %s149 = scalar_select %p148, %s147, 1023
        %s150 = smul.addr %s149, 8
        %s151 = scalar_lea.vmem %s0, %s150
        %p152 = pneg %p38
        %p153 = pneg %p35
        %p154 = pneg %p59
        %p155 = pneg %p56
        %p156 = pneg %p80
        %p157 = pneg %p77
        %p158 = pneg %p106
        %p159 = pneg %p103
        %s160 = sand.u32 %s93, 1
        %s161 = scalar_lea.sflag [#allocation3], %s160
        %s162 = sand.u32 %s93, 1
        %s163 = smul.addr %s162, 2048
        %s164 = scalar_lea.vmem [#allocation2], %s163
        %s165 = smul.u32 256, %s17
        %p166 = scmp.lt.s32.totalorder %s165, 1023
        %s167 = scalar_select %p166, %s165, 1023
        %s168 = smul.addr %s167, 8
        %s169 = scalar_lea.vmem %s0, %s168
        %s170 = smul.u32 256, %s17
        %s171 = smul.u32 256, %s17
        %v172 = vld [vmem:[%s169] sm:$0xff]
        %v173 = vld [vmem:[%s169 + $0x8] sm:$0xff]
        %v174 = vld [vmem:[%s169 + $0x10] sm:$0xff]
        %v175 = vld [vmem:[%s169 + $0x18] sm:$0xff]
        %v176 = vld [vmem:[%s169 + $0x20] sm:$0xff]
        %v177 = vld [vmem:[%s169 + $0x28] sm:$0xff]
        %v178 = vld [vmem:[%s169 + $0x30] sm:$0xff]
        %v179 = vld [vmem:[%s169 + $0x38] sm:$0xff]
        %v180 = vld [vmem:[%s169 + $0x40] sm:$0xff]
        %v181 = vld [vmem:[%s169 + $0x48] sm:$0xff]
        %v182 = vld [vmem:[%s169 + $0x50] sm:$0xff]
        %v183 = vld [vmem:[%s169 + $0x58] sm:$0xff]
        %v184 = vld [vmem:[%s169 + $0x60] sm:$0xff]
        %v185 = vld [vmem:[%s169 + $0x68] sm:$0xff]
        %v186 = vld [vmem:[%s169 + $0x70] sm:$0xff]
        %v187 = vld [vmem:[%s169 + $0x78] sm:$0xff]
        %v188 = vld [vmem:[%s169 + $0x80] sm:$0xff]
        %v189 = vld [vmem:[%s169 + $0x88] sm:$0xff]
        %v190 = vld [vmem:[%s169 + $0x90] sm:$0xff]
        %v191 = vld [vmem:[%s169 + $0x98] sm:$0xff]
        %v192 = vld [vmem:[%s169 + $0xa0] sm:$0xff]
        %v193 = vld [vmem:[%s169 + $0xa8] sm:$0xff]
        %v194 = vld [vmem:[%s169 + $0xb0] sm:$0xff]
        %v195 = vld [vmem:[%s169 + $0xb8] sm:$0xff]
        %v196 = vld [vmem:[%s169 + $0xc0] sm:$0xff]
        %v197 = vld [vmem:[%s169 + $0xc8] sm:$0xff]
        %v198 = vld [vmem:[%s169 + $0xd0] sm:$0xff]
        %v199 = vld [vmem:[%s169 + $0xd8] sm:$0xff]
        %v200 = vld [vmem:[%s169 + $0xe0] sm:$0xff]
        %v201 = vld [vmem:[%s169 + $0xe8] sm:$0xff]
        %v202 = vld [vmem:[%s169 + $0xf0] sm:$0xff]
        %v203 = vld [vmem:[%s169 + $0xf8] sm:$0xff]
        %v204 = vld [vmem:[%s169 + $0x100] sm:$0xff]
        %v205 = vld [vmem:[%s169 + $0x108] sm:$0xff]
        %v206 = vld [vmem:[%s169 + $0x110] sm:$0xff]
        %v207 = vld [vmem:[%s169 + $0x118] sm:$0xff]
        %v208 = vld [vmem:[%s169 + $0x120] sm:$0xff]
        %v209 = vld [vmem:[%s169 + $0x128] sm:$0xff]
        %v210 = vld [vmem:[%s169 + $0x130] sm:$0xff]
        %v211 = vld [vmem:[%s169 + $0x138] sm:$0xff]
        %v212 = vld [vmem:[%s169 + $0x140] sm:$0xff]
        %v213 = vld [vmem:[%s169 + $0x148] sm:$0xff]
        %v214 = vld [vmem:[%s169 + $0x150] sm:$0xff]
        %v215 = vld [vmem:[%s169 + $0x158] sm:$0xff]
        %v216 = vld [vmem:[%s169 + $0x160] sm:$0xff]
        %v217 = vld [vmem:[%s169 + $0x168] sm:$0xff]
        %v218 = vld [vmem:[%s169 + $0x170] sm:$0xff]
        %v219 = vld [vmem:[%s169 + $0x178] sm:$0xff]
        %v220 = vld [vmem:[%s169 + $0x180] sm:$0xff]
        %v221 = vld [vmem:[%s169 + $0x188] sm:$0xff]
        %v222 = vld [vmem:[%s169 + $0x190] sm:$0xff]
        %v223 = vld [vmem:[%s169 + $0x198] sm:$0xff]
        %v224 = vld [vmem:[%s169 + $0x1a0] sm:$0xff]
        %v225 = vld [vmem:[%s169 + $0x1a8] sm:$0xff]
        %v226 = vld [vmem:[%s169 + $0x1b0] sm:$0xff]
        %v227 = vld [vmem:[%s169 + $0x1b8] sm:$0xff]
        %v228 = vld [vmem:[%s169 + $0x1c0] sm:$0xff]
        %v229 = vld [vmem:[%s169 + $0x1c8] sm:$0xff]
        %v230 = vld [vmem:[%s169 + $0x1d0] sm:$0xff]
        %v231 = vld [vmem:[%s169 + $0x1d8] sm:$0xff]
        %v232 = vld [vmem:[%s169 + $0x1e0] sm:$0xff]
        %v233 = vld [vmem:[%s169 + $0x1e8] sm:$0xff]
        %v234 = vld [vmem:[%s169 + $0x1f0] sm:$0xff]
        %v235 = vld [vmem:[%s169 + $0x1f8] sm:$0xff]
        %v236 = vld [vmem:[%s169 + $0x200] sm:$0xff]
        %v237 = vld [vmem:[%s169 + $0x208] sm:$0xff]
        %v238 = vld [vmem:[%s169 + $0x210] sm:$0xff]
        %v239 = vld [vmem:[%s169 + $0x218] sm:$0xff]
        %v240 = vld [vmem:[%s169 + $0x220] sm:$0xff]
        %v241 = vld [vmem:[%s169 + $0x228] sm:$0xff]
        %v242 = vld [vmem:[%s169 + $0x230] sm:$0xff]
        %v243 = vld [vmem:[%s169 + $0x238] sm:$0xff]
        %v244 = vld [vmem:[%s169 + $0x240] sm:$0xff]
        %v245 = vld [vmem:[%s169 + $0x248] sm:$0xff]
        %v246 = vld [vmem:[%s169 + $0x250] sm:$0xff]
        %v247 = vld [vmem:[%s169 + $0x258] sm:$0xff]
        %v248 = vld [vmem:[%s169 + $0x260] sm:$0xff]
        %v249 = vld [vmem:[%s169 + $0x268] sm:$0xff]
        %v250 = vld [vmem:[%s169 + $0x270] sm:$0xff]
        %v251 = vld [vmem:[%s169 + $0x278] sm:$0xff]
        %v252 = vld [vmem:[%s169 + $0x280] sm:$0xff]
        %v253 = vld [vmem:[%s169 + $0x288] sm:$0xff]
        %v254 = vld [vmem:[%s169 + $0x290] sm:$0xff]
        %v255 = vld [vmem:[%s169 + $0x298] sm:$0xff]
        %v256 = vld [vmem:[%s169 + $0x2a0] sm:$0xff]
        %v257 = vld [vmem:[%s169 + $0x2a8] sm:$0xff]
        %v258 = vld [vmem:[%s169 + $0x2b0] sm:$0xff]
        %v259 = vld [vmem:[%s169 + $0x2b8] sm:$0xff]
        %v260 = vld [vmem:[%s169 + $0x2c0] sm:$0xff]
        %v261 = vld [vmem:[%s169 + $0x2c8] sm:$0xff]
        %v262 = vld [vmem:[%s169 + $0x2d0] sm:$0xff]
        %v263 = vld [vmem:[%s169 + $0x2d8] sm:$0xff]
        %v264 = vld [vmem:[%s169 + $0x2e0] sm:$0xff]
        %v265 = vld [vmem:[%s169 + $0x2e8] sm:$0xff]
        %v266 = vld [vmem:[%s169 + $0x2f0] sm:$0xff]
        %v267 = vld [vmem:[%s169 + $0x2f8] sm:$0xff]
        %v268 = vld [vmem:[%s169 + $0x300] sm:$0xff]
        %v269 = vld [vmem:[%s169 + $0x308] sm:$0xff]
        %v270 = vld [vmem:[%s169 + $0x310] sm:$0xff]
        %v271 = vld [vmem:[%s169 + $0x318] sm:$0xff]
        %v272 = vld [vmem:[%s169 + $0x320] sm:$0xff]
        %v273 = vld [vmem:[%s169 + $0x328] sm:$0xff]
        %v274 = vld [vmem:[%s169 + $0x330] sm:$0xff]
        %v275 = vld [vmem:[%s169 + $0x338] sm:$0xff]
        %v276 = vld [vmem:[%s169 + $0x340] sm:$0xff]
        %v277 = vld [vmem:[%s169 + $0x348] sm:$0xff]
        %v278 = vld [vmem:[%s169 + $0x350] sm:$0xff]
        %v279 = vld [vmem:[%s169 + $0x358] sm:$0xff]
        %v280 = vld [vmem:[%s169 + $0x360] sm:$0xff]
        %v281 = vld [vmem:[%s169 + $0x368] sm:$0xff]
        %v282 = vld [vmem:[%s169 + $0x370] sm:$0xff]
        %v283 = vld [vmem:[%s169 + $0x378] sm:$0xff]
        %v284 = vld [vmem:[%s169 + $0x380] sm:$0xff]
        %v285 = vld [vmem:[%s169 + $0x388] sm:$0xff]
        %v286 = vld [vmem:[%s169 + $0x390] sm:$0xff]
        %v287 = vld [vmem:[%s169 + $0x398] sm:$0xff]
        %v288 = vld [vmem:[%s169 + $0x3a0] sm:$0xff]
        %v289 = vld [vmem:[%s169 + $0x3a8] sm:$0xff]
        %v290 = vld [vmem:[%s169 + $0x3b0] sm:$0xff]
        %v291 = vld [vmem:[%s169 + $0x3b8] sm:$0xff]
        %v292 = vld [vmem:[%s169 + $0x3c0] sm:$0xff]
        %v293 = vld [vmem:[%s169 + $0x3c8] sm:$0xff]
        %v294 = vld [vmem:[%s169 + $0x3d0] sm:$0xff]
        %v295 = vld [vmem:[%s169 + $0x3d8] sm:$0xff]
        %v296 = vld [vmem:[%s169 + $0x3e0] sm:$0xff]
        %v297 = vld [vmem:[%s169 + $0x3e8] sm:$0xff]
        %v298 = vld [vmem:[%s169 + $0x3f0] sm:$0xff]
        %v299 = vld [vmem:[%s169 + $0x3f8] sm:$0xff]
        %v300 = vld [vmem:[%s169 + $0x400] sm:$0xff]
        %v301 = vld [vmem:[%s169 + $0x408] sm:$0xff]
        %v302 = vld [vmem:[%s169 + $0x410] sm:$0xff]
        %v303 = vld [vmem:[%s169 + $0x418] sm:$0xff]
        %v304 = vld [vmem:[%s169 + $0x420] sm:$0xff]
        %v305 = vld [vmem:[%s169 + $0x428] sm:$0xff]
        %v306 = vld [vmem:[%s169 + $0x430] sm:$0xff]
        %v307 = vld [vmem:[%s169 + $0x438] sm:$0xff]
        %v308 = vld [vmem:[%s169 + $0x440] sm:$0xff]
        %v309 = vld [vmem:[%s169 + $0x448] sm:$0xff]
        %v310 = vld [vmem:[%s169 + $0x450] sm:$0xff]
        %v311 = vld [vmem:[%s169 + $0x458] sm:$0xff]
        %v312 = vld [vmem:[%s169 + $0x460] sm:$0xff]
        %v313 = vld [vmem:[%s169 + $0x468] sm:$0xff]
        %v314 = vld [vmem:[%s169 + $0x470] sm:$0xff]
        %v315 = vld [vmem:[%s169 + $0x478] sm:$0xff]
        %v316 = vld [vmem:[%s169 + $0x480] sm:$0xff]
        %v317 = vld [vmem:[%s169 + $0x488] sm:$0xff]
        %v318 = vld [vmem:[%s169 + $0x490] sm:$0xff]
        %v319 = vld [vmem:[%s169 + $0x498] sm:$0xff]
        %v320 = vld [vmem:[%s169 + $0x4a0] sm:$0xff]
        %v321 = vld [vmem:[%s169 + $0x4a8] sm:$0xff]
        %v322 = vld [vmem:[%s169 + $0x4b0] sm:$0xff]
        %v323 = vld [vmem:[%s169 + $0x4b8] sm:$0xff]
        %v324 = vld [vmem:[%s169 + $0x4c0] sm:$0xff]
        %v325 = vld [vmem:[%s169 + $0x4c8] sm:$0xff]
        %v326 = vld [vmem:[%s169 + $0x4d0] sm:$0xff]
        %v327 = vld [vmem:[%s169 + $0x4d8] sm:$0xff]
        %v328 = vld [vmem:[%s169 + $0x4e0] sm:$0xff]
        %v329 = vld [vmem:[%s169 + $0x4e8] sm:$0xff]
        %v330 = vld [vmem:[%s169 + $0x4f0] sm:$0xff]
        %v331 = vld [vmem:[%s169 + $0x4f8] sm:$0xff]
        %v332 = vld [vmem:[%s169 + $0x500] sm:$0xff]
        %v333 = vld [vmem:[%s169 + $0x508] sm:$0xff]
        %v334 = vld [vmem:[%s169 + $0x510] sm:$0xff]
        %v335 = vld [vmem:[%s169 + $0x518] sm:$0xff]
        %v336 = vld [vmem:[%s169 + $0x520] sm:$0xff]
        %v337 = vld [vmem:[%s169 + $0x528] sm:$0xff]
        %v338 = vld [vmem:[%s169 + $0x530] sm:$0xff]
        %v339 = vld [vmem:[%s169 + $0x538] sm:$0xff]
        %v340 = vld [vmem:[%s169 + $0x540] sm:$0xff]
        %v341 = vld [vmem:[%s169 + $0x548] sm:$0xff]
        %v342 = vld [vmem:[%s169 + $0x550] sm:$0xff]
        %v343 = vld [vmem:[%s169 + $0x558] sm:$0xff]
        %v344 = vld [vmem:[%s169 + $0x560] sm:$0xff]
        %v345 = vld [vmem:[%s169 + $0x568] sm:$0xff]
        %v346 = vld [vmem:[%s169 + $0x570] sm:$0xff]
        %v347 = vld [vmem:[%s169 + $0x578] sm:$0xff]
        %v348 = vld [vmem:[%s169 + $0x580] sm:$0xff]
        %v349 = vld [vmem:[%s169 + $0x588] sm:$0xff]
        %v350 = vld [vmem:[%s169 + $0x590] sm:$0xff]
        %v351 = vld [vmem:[%s169 + $0x598] sm:$0xff]
        %v352 = vld [vmem:[%s169 + $0x5a0] sm:$0xff]
        %v353 = vld [vmem:[%s169 + $0x5a8] sm:$0xff]
        %v354 = vld [vmem:[%s169 + $0x5b0] sm:$0xff]
        %v355 = vld [vmem:[%s169 + $0x5b8] sm:$0xff]
        %v356 = vld [vmem:[%s169 + $0x5c0] sm:$0xff]
        %v357 = vld [vmem:[%s169 + $0x5c8] sm:$0xff]
        %v358 = vld [vmem:[%s169 + $0x5d0] sm:$0xff]
        %v359 = vld [vmem:[%s169 + $0x5d8] sm:$0xff]
        %v360 = vld [vmem:[%s169 + $0x5e0] sm:$0xff]
        %v361 = vld [vmem:[%s169 + $0x5e8] sm:$0xff]
        %v362 = vld [vmem:[%s169 + $0x5f0] sm:$0xff]
        %v363 = vld [vmem:[%s169 + $0x5f8] sm:$0xff]
        %v364 = vld [vmem:[%s169 + $0x600] sm:$0xff]
        %v365 = vld [vmem:[%s169 + $0x608] sm:$0xff]
        %v366 = vld [vmem:[%s169 + $0x610] sm:$0xff]
        %v367 = vld [vmem:[%s169 + $0x618] sm:$0xff]
        %v368 = vld [vmem:[%s169 + $0x620] sm:$0xff]
        %v369 = vld [vmem:[%s169 + $0x628] sm:$0xff]
        %v370 = vld [vmem:[%s169 + $0x630] sm:$0xff]
        %v371 = vld [vmem:[%s169 + $0x638] sm:$0xff]
        %v372 = vld [vmem:[%s169 + $0x640] sm:$0xff]
        %v373 = vld [vmem:[%s169 + $0x648] sm:$0xff]
        %v374 = vld [vmem:[%s169 + $0x650] sm:$0xff]
        %v375 = vld [vmem:[%s169 + $0x658] sm:$0xff]
        %v376 = vld [vmem:[%s169 + $0x660] sm:$0xff]
        %v377 = vld [vmem:[%s169 + $0x668] sm:$0xff]
        %v378 = vld [vmem:[%s169 + $0x670] sm:$0xff]
        %v379 = vld [vmem:[%s169 + $0x678] sm:$0xff]
        %v380 = vld [vmem:[%s169 + $0x680] sm:$0xff]
        %v381 = vld [vmem:[%s169 + $0x688] sm:$0xff]
        %v382 = vld [vmem:[%s169 + $0x690] sm:$0xff]
        %v383 = vld [vmem:[%s169 + $0x698] sm:$0xff]
        %v384 = vld [vmem:[%s169 + $0x6a0] sm:$0xff]
        %v385 = vld [vmem:[%s169 + $0x6a8] sm:$0xff]
        %v386 = vld [vmem:[%s169 + $0x6b0] sm:$0xff]
        %v387 = vld [vmem:[%s169 + $0x6b8] sm:$0xff]
        %v388 = vld [vmem:[%s169 + $0x6c0] sm:$0xff]
        %v389 = vld [vmem:[%s169 + $0x6c8] sm:$0xff]
        %v390 = vld [vmem:[%s169 + $0x6d0] sm:$0xff]
        %v391 = vld [vmem:[%s169 + $0x6d8] sm:$0xff]
        %v392 = vld [vmem:[%s169 + $0x6e0] sm:$0xff]
        %v393 = vld [vmem:[%s169 + $0x6e8] sm:$0xff]
        %v394 = vld [vmem:[%s169 + $0x6f0] sm:$0xff]
        %v395 = vld [vmem:[%s169 + $0x6f8] sm:$0xff]
        %v396 = vld [vmem:[%s169 + $0x700] sm:$0xff]
        %v397 = vld [vmem:[%s169 + $0x708] sm:$0xff]
        %v398 = vld [vmem:[%s169 + $0x710] sm:$0xff]
        %v399 = vld [vmem:[%s169 + $0x718] sm:$0xff]
        %v400 = vld [vmem:[%s169 + $0x720] sm:$0xff]
        %v401 = vld [vmem:[%s169 + $0x728] sm:$0xff]
        %v402 = vld [vmem:[%s169 + $0x730] sm:$0xff]
        %v403 = vld [vmem:[%s169 + $0x738] sm:$0xff]
        %v404 = vld [vmem:[%s169 + $0x740] sm:$0xff]
        %v405 = vld [vmem:[%s169 + $0x748] sm:$0xff]
        %v406 = vld [vmem:[%s169 + $0x750] sm:$0xff]
        %v407 = vld [vmem:[%s169 + $0x758] sm:$0xff]
        %v408 = vld [vmem:[%s169 + $0x760] sm:$0xff]
        %v409 = vld [vmem:[%s169 + $0x768] sm:$0xff]
        %v410 = vld [vmem:[%s169 + $0x770] sm:$0xff]
        %v411 = vld [vmem:[%s169 + $0x778] sm:$0xff]
        %v412 = vld [vmem:[%s169 + $0x780] sm:$0xff]
        %v413 = vld [vmem:[%s169 + $0x788] sm:$0xff]
        %v414 = vld [vmem:[%s169 + $0x790] sm:$0xff]
        %v415 = vld [vmem:[%s169 + $0x798] sm:$0xff]
        %v416 = vld [vmem:[%s169 + $0x7a0] sm:$0xff]
        %v417 = vld [vmem:[%s169 + $0x7a8] sm:$0xff]
        %v418 = vld [vmem:[%s169 + $0x7b0] sm:$0xff]
        %v419 = vld [vmem:[%s169 + $0x7b8] sm:$0xff]
        %v420 = vld [vmem:[%s169 + $0x7c0] sm:$0xff]
        %v421 = vld [vmem:[%s169 + $0x7c8] sm:$0xff]
        %v422 = vld [vmem:[%s169 + $0x7d0] sm:$0xff]
        %v423 = vld [vmem:[%s169 + $0x7d8] sm:$0xff]
        %v424 = vld [vmem:[%s169 + $0x7e0] sm:$0xff]
        %v425 = vld [vmem:[%s169 + $0x7e8] sm:$0xff]
        %v426 = vld [vmem:[%s169 + $0x7f0] sm:$0xff]
        %v427 = vld [vmem:[%s169 + $0x7f8] sm:$0xff]
        %v428 = vld [vmem:[%s1] sm:$0xff]
        %v429 = vld [vmem:[%s1 + $0x8] sm:$0xff]
        %v430 = vld [vmem:[%s1 + $0x10] sm:$0xff]
        %v431 = vld [vmem:[%s1 + $0x18] sm:$0x1]
        %v432 = vld [vmem:[%s2] sm:$0x1]
        %v434 = vperm.slane %v432, 0
        %vm436 = vcmask 203776
        %v438 = vsel %vm436, %v172, 0
        %v441 = vsel %vm436, %v173, 0
        %v444 = vsel %vm436, %v174, 0
        %v447 = vsel %vm436, %v175, 0
        %v450 = vsel %vm436, %v176, 0
        %v453 = vsel %vm436, %v177, 0
        %v456 = vsel %vm436, %v178, 0
        %v459 = vsel %vm436, %v179, 0
        %v462 = vsel %vm436, %v180, 0
        %v465 = vsel %vm436, %v181, 0
        %v468 = vsel %vm436, %v182, 0
        %v471 = vsel %vm436, %v183, 0
        %v474 = vsel %vm436, %v184, 0
        %v477 = vsel %vm436, %v185, 0
        %v480 = vsel %vm436, %v186, 0
        %v483 = vsel %vm436, %v187, 0
        %v486 = vsel %vm436, %v188, 0
        %v489 = vsel %vm436, %v189, 0
        %v492 = vsel %vm436, %v190, 0
        %v495 = vsel %vm436, %v191, 0
        %v498 = vsel %vm436, %v192, 0
        %v501 = vsel %vm436, %v193, 0
        %v504 = vsel %vm436, %v194, 0
        %v507 = vsel %vm436, %v195, 0
        %v510 = vsel %vm436, %v196, 0
        %v513 = vsel %vm436, %v197, 0
        %v516 = vsel %vm436, %v198, 0
        %v519 = vsel %vm436, %v199, 0
        %v522 = vsel %vm436, %v200, 0
        %v525 = vsel %vm436, %v201, 0
        %v528 = vsel %vm436, %v202, 0
        %v531 = vsel %vm436, %v203, 0
        %v534 = vsel %vm436, %v204, 0
        %v537 = vsel %vm436, %v205, 0
        %v540 = vsel %vm436, %v206, 0
        %v543 = vsel %vm436, %v207, 0
        %v546 = vsel %vm436, %v208, 0
        %v549 = vsel %vm436, %v209, 0
        %v552 = vsel %vm436, %v210, 0
        %v555 = vsel %vm436, %v211, 0
        %v558 = vsel %vm436, %v212, 0
        %v561 = vsel %vm436, %v213, 0
        %v564 = vsel %vm436, %v214, 0
        %v567 = vsel %vm436, %v215, 0
        %v570 = vsel %vm436, %v216, 0
        %v573 = vsel %vm436, %v217, 0
        %v576 = vsel %vm436, %v218, 0
        %v579 = vsel %vm436, %v219, 0
        %v582 = vsel %vm436, %v220, 0
        %v585 = vsel %vm436, %v221, 0
        %v588 = vsel %vm436, %v222, 0
        %v591 = vsel %vm436, %v223, 0
        %v594 = vsel %vm436, %v224, 0
        %v597 = vsel %vm436, %v225, 0
        %v600 = vsel %vm436, %v226, 0
        %v603 = vsel %vm436, %v227, 0
        %v606 = vsel %vm436, %v228, 0
        %v609 = vsel %vm436, %v229, 0
        %v612 = vsel %vm436, %v230, 0
        %v615 = vsel %vm436, %v231, 0
        %v618 = vsel %vm436, %v232, 0
        %v621 = vsel %vm436, %v233, 0
        %v624 = vsel %vm436, %v234, 0
        %v627 = vsel %vm436, %v235, 0
        %v630 = vsel %vm436, %v236, 0
        %v633 = vsel %vm436, %v237, 0
        %v636 = vsel %vm436, %v238, 0
        %v639 = vsel %vm436, %v239, 0
        %v642 = vsel %vm436, %v240, 0
        %v645 = vsel %vm436, %v241, 0
        %v648 = vsel %vm436, %v242, 0
        %v651 = vsel %vm436, %v243, 0
        %v654 = vsel %vm436, %v244, 0
        %v657 = vsel %vm436, %v245, 0
        %v660 = vsel %vm436, %v246, 0
        %v663 = vsel %vm436, %v247, 0
        %v666 = vsel %vm436, %v248, 0
        %v669 = vsel %vm436, %v249, 0
        %v672 = vsel %vm436, %v250, 0
        %v675 = vsel %vm436, %v251, 0
        %v678 = vsel %vm436, %v252, 0
        %v681 = vsel %vm436, %v253, 0
        %v684 = vsel %vm436, %v254, 0
        %v687 = vsel %vm436, %v255, 0
        %v690 = vsel %vm436, %v256, 0
        %v693 = vsel %vm436, %v257, 0
        %v696 = vsel %vm436, %v258, 0
        %v699 = vsel %vm436, %v259, 0
        %v702 = vsel %vm436, %v260, 0
        %v705 = vsel %vm436, %v261, 0
        %v708 = vsel %vm436, %v262, 0
        %v711 = vsel %vm436, %v263, 0
        %v714 = vsel %vm436, %v264, 0
        %v717 = vsel %vm436, %v265, 0
        %v720 = vsel %vm436, %v266, 0
        %v723 = vsel %vm436, %v267, 0
        %v726 = vsel %vm436, %v268, 0
        %v729 = vsel %vm436, %v269, 0
        %v732 = vsel %vm436, %v270, 0
        %v735 = vsel %vm436, %v271, 0
        %v738 = vsel %vm436, %v272, 0
        %v741 = vsel %vm436, %v273, 0
        %v744 = vsel %vm436, %v274, 0
        %v747 = vsel %vm436, %v275, 0
        %v750 = vsel %vm436, %v276, 0
        %v753 = vsel %vm436, %v277, 0
        %v756 = vsel %vm436, %v278, 0
        %v759 = vsel %vm436, %v279, 0
        %v762 = vsel %vm436, %v280, 0
        %v765 = vsel %vm436, %v281, 0
        %v768 = vsel %vm436, %v282, 0
        %v771 = vsel %vm436, %v283, 0
        %v774 = vsel %vm436, %v284, 0
        %v777 = vsel %vm436, %v285, 0
        %v780 = vsel %vm436, %v286, 0
        %v783 = vsel %vm436, %v287, 0
        %v786 = vsel %vm436, %v288, 0
        %v789 = vsel %vm436, %v289, 0
        %v792 = vsel %vm436, %v290, 0
        %v795 = vsel %vm436, %v291, 0
        %v798 = vsel %vm436, %v292, 0
        %v801 = vsel %vm436, %v293, 0
        %v804 = vsel %vm436, %v294, 0
        %v807 = vsel %vm436, %v295, 0
        %v810 = vsel %vm436, %v296, 0
        %v813 = vsel %vm436, %v297, 0
        %v816 = vsel %vm436, %v298, 0
        %v819 = vsel %vm436, %v299, 0
        %v822 = vsel %vm436, %v300, 0
        %v825 = vsel %vm436, %v301, 0
        %v828 = vsel %vm436, %v302, 0
        %v831 = vsel %vm436, %v303, 0
        %v834 = vsel %vm436, %v304, 0
        %v837 = vsel %vm436, %v305, 0
        %v840 = vsel %vm436, %v306, 0
        %v843 = vsel %vm436, %v307, 0
        %v846 = vsel %vm436, %v308, 0
        %v849 = vsel %vm436, %v309, 0
        %v852 = vsel %vm436, %v310, 0
        %v855 = vsel %vm436, %v311, 0
        %v858 = vsel %vm436, %v312, 0
        %v861 = vsel %vm436, %v313, 0
        %v864 = vsel %vm436, %v314, 0
        %v867 = vsel %vm436, %v315, 0
        %v870 = vsel %vm436, %v316, 0
        %v873 = vsel %vm436, %v317, 0
        %v876 = vsel %vm436, %v318, 0
        %v879 = vsel %vm436, %v319, 0
        %v882 = vsel %vm436, %v320, 0
        %v885 = vsel %vm436, %v321, 0
        %v888 = vsel %vm436, %v322, 0
        %v891 = vsel %vm436, %v323, 0
        %v894 = vsel %vm436, %v324, 0
        %v897 = vsel %vm436, %v325, 0
        %v900 = vsel %vm436, %v326, 0
        %v903 = vsel %vm436, %v327, 0
        %v906 = vsel %vm436, %v328, 0
        %v909 = vsel %vm436, %v329, 0
        %v912 = vsel %vm436, %v330, 0
        %v915 = vsel %vm436, %v331, 0
        %v918 = vsel %vm436, %v332, 0
        %v921 = vsel %vm436, %v333, 0
        %v924 = vsel %vm436, %v334, 0
        %v927 = vsel %vm436, %v335, 0
        %v930 = vsel %vm436, %v336, 0
        %v933 = vsel %vm436, %v337, 0
        %v936 = vsel %vm436, %v338, 0
        %v939 = vsel %vm436, %v339, 0
        %v942 = vsel %vm436, %v340, 0
        %v945 = vsel %vm436, %v341, 0
        %v948 = vsel %vm436, %v342, 0
        %v951 = vsel %vm436, %v343, 0
        %v954 = vsel %vm436, %v344, 0
        %v957 = vsel %vm436, %v345, 0
        %v960 = vsel %vm436, %v346, 0
        %v963 = vsel %vm436, %v347, 0
        %v966 = vsel %vm436, %v348, 0
        %v969 = vsel %vm436, %v349, 0
        %v972 = vsel %vm436, %v350, 0
        %v975 = vsel %vm436, %v351, 0
        %v978 = vsel %vm436, %v352, 0
        %v981 = vsel %vm436, %v353, 0
        %v984 = vsel %vm436, %v354, 0
        %v987 = vsel %vm436, %v355, 0
        %v990 = vsel %vm436, %v356, 0
        %v993 = vsel %vm436, %v357, 0
        %v996 = vsel %vm436, %v358, 0
        %v999 = vsel %vm436, %v359, 0
        %v1002 = vsel %vm436, %v360, 0
        %v1005 = vsel %vm436, %v361, 0
        %v1008 = vsel %vm436, %v362, 0
        %v1011 = vsel %vm436, %v363, 0
        %v1014 = vsel %vm436, %v364, 0
        %v1017 = vsel %vm436, %v365, 0
        %v1020 = vsel %vm436, %v366, 0
        %v1023 = vsel %vm436, %v367, 0
        %v1026 = vsel %vm436, %v368, 0
        %v1029 = vsel %vm436, %v369, 0
        %v1032 = vsel %vm436, %v370, 0
        %v1035 = vsel %vm436, %v371, 0
        %v1038 = vsel %vm436, %v372, 0
        %v1041 = vsel %vm436, %v373, 0
        %v1044 = vsel %vm436, %v374, 0
        %v1047 = vsel %vm436, %v375, 0
        %v1050 = vsel %vm436, %v376, 0
        %v1053 = vsel %vm436, %v377, 0
        %v1056 = vsel %vm436, %v378, 0
        %v1059 = vsel %vm436, %v379, 0
        %v1062 = vsel %vm436, %v380, 0
        %v1065 = vsel %vm436, %v381, 0
        %v1068 = vsel %vm436, %v382, 0
        %v1071 = vsel %vm436, %v383, 0
        %v1074 = vsel %vm436, %v384, 0
        %v1077 = vsel %vm436, %v385, 0
        %v1080 = vsel %vm436, %v386, 0
        %v1083 = vsel %vm436, %v387, 0
        %v1086 = vsel %vm436, %v388, 0
        %v1089 = vsel %vm436, %v389, 0
        %v1092 = vsel %vm436, %v390, 0
        %v1095 = vsel %vm436, %v391, 0
        %v1098 = vsel %vm436, %v392, 0
        %v1101 = vsel %vm436, %v393, 0
        %v1104 = vsel %vm436, %v394, 0
        %v1107 = vsel %vm436, %v395, 0
        %v1110 = vsel %vm436, %v396, 0
        %v1113 = vsel %vm436, %v397, 0
        %v1116 = vsel %vm436, %v398, 0
        %v1119 = vsel %vm436, %v399, 0
        %v1122 = vsel %vm436, %v400, 0
        %v1125 = vsel %vm436, %v401, 0
        %v1128 = vsel %vm436, %v402, 0
        %v1131 = vsel %vm436, %v403, 0
        %v1134 = vsel %vm436, %v404, 0
        %v1137 = vsel %vm436, %v405, 0
        %v1140 = vsel %vm436, %v406, 0
        %v1143 = vsel %vm436, %v407, 0
        %v1146 = vsel %vm436, %v408, 0
        %v1149 = vsel %vm436, %v409, 0
        %v1152 = vsel %vm436, %v410, 0
        %v1155 = vsel %vm436, %v411, 0
        %v1158 = vsel %vm436, %v412, 0
        %v1161 = vsel %vm436, %v413, 0
        %v1164 = vsel %vm436, %v414, 0
        %v1167 = vsel %vm436, %v415, 0
        %v1170 = vsel %vm436, %v416, 0
        %v1173 = vsel %vm436, %v417, 0
        %v1176 = vsel %vm436, %v418, 0
        %v1179 = vsel %vm436, %v419, 0
        %v1182 = vsel %vm436, %v420, 0
        %v1185 = vsel %vm436, %v421, 0
        %v1188 = vsel %vm436, %v422, 0
        %v1191 = vsel %vm436, %v423, 0
        %v1194 = vsel %vm436, %v424, 0
        %v1197 = vsel %vm436, %v425, 0
        %v1200 = vsel %vm436, %v426, 0
        %v1203 = vsel %vm436, %v427, 0
        %vm1205 = vcmask 1040384
        %v1207 = vsel %vm1205, %v431, 0
        %1209 = vmatpush.msra.mxu0 0.0
        %1210 = vmatpush.msra.mxu0 0.0
        %1211 = vmatpush.msra.mxu0 0.0
        %1212 = vmatpush.msra.mxu0 0.0
        %1213 = vmatpush.msra.mxu0 0.0
        %1214 = vmatpush.msra.mxu0 0.0
        %1215 = vmatpush.msra.mxu0 0.0
        %1216 = vmatpush.msra.mxu0 0.0
        %1217 = vmatpush.msra.mxu0 0.0
        %1218 = vmatpush.msra.mxu0 0.0
        %1219 = vmatpush.msra.mxu0 0.0
        %1220 = vmatpush.msra.mxu0 0.0
        %1221 = vmatpush.msra.mxu0 %v1207
        %1222 = vmatpush.msra.mxu0 %v430
        %1223 = vmatpush.msra.mxu0 %v429
        %1224 = vmatpush.msra.mxu0 %v428
        %1225 = vmatmul.f32.gmra.mxu0 %v438
        %v1226 = vpop.f32.mrf.mxu0
        %v1227 = vadd.f32 %v434, %v1226
        %1228 = vmatmul.f32.gmra.mxu0 %v441
        %v1229 = vpop.f32.mrf.mxu0
        %v1230 = vadd.f32 %v434, %v1229
        %1231 = vmatmul.f32.gmra.mxu0 %v444
        %v1232 = vpop.f32.mrf.mxu0
        %v1233 = vadd.f32 %v434, %v1232
        %1234 = vmatmul.f32.gmra.mxu0 %v447
        %v1235 = vpop.f32.mrf.mxu0
        %v1236 = vadd.f32 %v434, %v1235
        %1237 = vmatmul.f32.gmra.mxu0 %v450
        %v1238 = vpop.f32.mrf.mxu0
        %v1239 = vadd.f32 %v434, %v1238
        %1240 = vmatmul.f32.gmra.mxu0 %v453
        %v1241 = vpop.f32.mrf.mxu0
        %v1242 = vadd.f32 %v434, %v1241
        %1243 = vmatmul.f32.gmra.mxu0 %v456
        %v1244 = vpop.f32.mrf.mxu0
        %v1245 = vadd.f32 %v434, %v1244
        %1246 = vmatmul.f32.gmra.mxu0 %v459
        %v1247 = vpop.f32.mrf.mxu0
        %v1248 = vadd.f32 %v434, %v1247
        %1249 = vmatmul.f32.gmra.mxu0 %v462
        %v1250 = vpop.f32.mrf.mxu0
        %v1251 = vadd.f32 %v434, %v1250
        %1252 = vmatmul.f32.gmra.mxu0 %v465
        %v1253 = vpop.f32.mrf.mxu0
        %v1254 = vadd.f32 %v434, %v1253
        %1255 = vmatmul.f32.gmra.mxu0 %v468
        %v1256 = vpop.f32.mrf.mxu0
        %v1257 = vadd.f32 %v434, %v1256
        %1258 = vmatmul.f32.gmra.mxu0 %v471
        %v1259 = vpop.f32.mrf.mxu0
        %v1260 = vadd.f32 %v434, %v1259
        %1261 = vmatmul.f32.gmra.mxu0 %v474
        %v1262 = vpop.f32.mrf.mxu0
        %v1263 = vadd.f32 %v434, %v1262
        %1264 = vmatmul.f32.gmra.mxu0 %v477
        %v1265 = vpop.f32.mrf.mxu0
        %v1266 = vadd.f32 %v434, %v1265
        %1267 = vmatmul.f32.gmra.mxu0 %v480
        %v1268 = vpop.f32.mrf.mxu0
        %v1269 = vadd.f32 %v434, %v1268
        %1270 = vmatmul.f32.gmra.mxu0 %v483
        %v1271 = vpop.f32.mrf.mxu0
        %v1272 = vadd.f32 %v434, %v1271
        %1273 = vmatmul.f32.gmra.mxu0 %v486
        %v1274 = vpop.f32.mrf.mxu0
        %v1275 = vadd.f32 %v434, %v1274
        %1276 = vmatmul.f32.gmra.mxu0 %v489
        %v1277 = vpop.f32.mrf.mxu0
        %v1278 = vadd.f32 %v434, %v1277
        %1279 = vmatmul.f32.gmra.mxu0 %v492
        %v1280 = vpop.f32.mrf.mxu0
        %v1281 = vadd.f32 %v434, %v1280
        %1282 = vmatmul.f32.gmra.mxu0 %v495
        %v1283 = vpop.f32.mrf.mxu0
        %v1284 = vadd.f32 %v434, %v1283
        %1285 = vmatmul.f32.gmra.mxu0 %v498
        %v1286 = vpop.f32.mrf.mxu0
        %v1287 = vadd.f32 %v434, %v1286
        %1288 = vmatmul.f32.gmra.mxu0 %v501
        %v1289 = vpop.f32.mrf.mxu0
        %v1290 = vadd.f32 %v434, %v1289
        %1291 = vmatmul.f32.gmra.mxu0 %v504
        %v1292 = vpop.f32.mrf.mxu0
        %v1293 = vadd.f32 %v434, %v1292
        %1294 = vmatmul.f32.gmra.mxu0 %v507
        %v1295 = vpop.f32.mrf.mxu0
        %v1296 = vadd.f32 %v434, %v1295
        %1297 = vmatmul.f32.gmra.mxu0 %v510
        %v1298 = vpop.f32.mrf.mxu0
        %v1299 = vadd.f32 %v434, %v1298
        %1300 = vmatmul.f32.gmra.mxu0 %v513
        %v1301 = vpop.f32.mrf.mxu0
        %v1302 = vadd.f32 %v434, %v1301
        %1303 = vmatmul.f32.gmra.mxu0 %v516
        %v1304 = vpop.f32.mrf.mxu0
        %v1305 = vadd.f32 %v434, %v1304
        %1306 = vmatmul.f32.gmra.mxu0 %v519
        %v1307 = vpop.f32.mrf.mxu0
        %v1308 = vadd.f32 %v434, %v1307
        %1309 = vmatmul.f32.gmra.mxu0 %v522
        %v1310 = vpop.f32.mrf.mxu0
        %v1311 = vadd.f32 %v434, %v1310
        %1312 = vmatmul.f32.gmra.mxu0 %v525
        %v1313 = vpop.f32.mrf.mxu0
        %v1314 = vadd.f32 %v434, %v1313
        %1315 = vmatmul.f32.gmra.mxu0 %v528
        %v1316 = vpop.f32.mrf.mxu0
        %v1317 = vadd.f32 %v434, %v1316
        %1318 = vmatmul.f32.gmra.mxu0 %v531
        %v1319 = vpop.f32.mrf.mxu0
        %v1320 = vadd.f32 %v434, %v1319
        %1321 = vmatmul.f32.gmra.mxu0 %v534
        %v1322 = vpop.f32.mrf.mxu0
        %v1323 = vadd.f32 %v434, %v1322
        %1324 = vmatmul.f32.gmra.mxu0 %v537
        %v1325 = vpop.f32.mrf.mxu0
        %v1326 = vadd.f32 %v434, %v1325
        %1327 = vmatmul.f32.gmra.mxu0 %v540
        %v1328 = vpop.f32.mrf.mxu0
        %v1329 = vadd.f32 %v434, %v1328
        %1330 = vmatmul.f32.gmra.mxu0 %v543
        %v1331 = vpop.f32.mrf.mxu0
        %v1332 = vadd.f32 %v434, %v1331
        %1333 = vmatmul.f32.gmra.mxu0 %v546
        %v1334 = vpop.f32.mrf.mxu0
        %v1335 = vadd.f32 %v434, %v1334
        %1336 = vmatmul.f32.gmra.mxu0 %v549
        %v1337 = vpop.f32.mrf.mxu0
        %v1338 = vadd.f32 %v434, %v1337
        %1339 = vmatmul.f32.gmra.mxu0 %v552
        %v1340 = vpop.f32.mrf.mxu0
        %v1341 = vadd.f32 %v434, %v1340
        %1342 = vmatmul.f32.gmra.mxu0 %v555
        %v1343 = vpop.f32.mrf.mxu0
        %v1344 = vadd.f32 %v434, %v1343
        %1345 = vmatmul.f32.gmra.mxu0 %v558
        %v1346 = vpop.f32.mrf.mxu0
        %v1347 = vadd.f32 %v434, %v1346
        %1348 = vmatmul.f32.gmra.mxu0 %v561
        %v1349 = vpop.f32.mrf.mxu0
        %v1350 = vadd.f32 %v434, %v1349
        %1351 = vmatmul.f32.gmra.mxu0 %v564
        %v1352 = vpop.f32.mrf.mxu0
        %v1353 = vadd.f32 %v434, %v1352
        %1354 = vmatmul.f32.gmra.mxu0 %v567
        %v1355 = vpop.f32.mrf.mxu0
        %v1356 = vadd.f32 %v434, %v1355
        %1357 = vmatmul.f32.gmra.mxu0 %v570
        %v1358 = vpop.f32.mrf.mxu0
        %v1359 = vadd.f32 %v434, %v1358
        %1360 = vmatmul.f32.gmra.mxu0 %v573
        %v1361 = vpop.f32.mrf.mxu0
        %v1362 = vadd.f32 %v434, %v1361
        %1363 = vmatmul.f32.gmra.mxu0 %v576
        %v1364 = vpop.f32.mrf.mxu0
        %v1365 = vadd.f32 %v434, %v1364
        %1366 = vmatmul.f32.gmra.mxu0 %v579
        %v1367 = vpop.f32.mrf.mxu0
        %v1368 = vadd.f32 %v434, %v1367
        %1369 = vmatmul.f32.gmra.mxu0 %v582
        %v1370 = vpop.f32.mrf.mxu0
        %v1371 = vadd.f32 %v434, %v1370
        %1372 = vmatmul.f32.gmra.mxu0 %v585
        %v1373 = vpop.f32.mrf.mxu0
        %v1374 = vadd.f32 %v434, %v1373
        %1375 = vmatmul.f32.gmra.mxu0 %v588
        %v1376 = vpop.f32.mrf.mxu0
        %v1377 = vadd.f32 %v434, %v1376
        %1378 = vmatmul.f32.gmra.mxu0 %v591
        %v1379 = vpop.f32.mrf.mxu0
        %v1380 = vadd.f32 %v434, %v1379
        %1381 = vmatmul.f32.gmra.mxu0 %v594
        %v1382 = vpop.f32.mrf.mxu0
        %v1383 = vadd.f32 %v434, %v1382
        %1384 = vmatmul.f32.gmra.mxu0 %v597
        %v1385 = vpop.f32.mrf.mxu0
        %v1386 = vadd.f32 %v434, %v1385
        %1387 = vmatmul.f32.gmra.mxu0 %v600
        %v1388 = vpop.f32.mrf.mxu0
        %v1389 = vadd.f32 %v434, %v1388
        %1390 = vmatmul.f32.gmra.mxu0 %v603
        %v1391 = vpop.f32.mrf.mxu0
        %v1392 = vadd.f32 %v434, %v1391
        %1393 = vmatmul.f32.gmra.mxu0 %v606
        %v1394 = vpop.f32.mrf.mxu0
        %v1395 = vadd.f32 %v434, %v1394
        %1396 = vmatmul.f32.gmra.mxu0 %v609
        %v1397 = vpop.f32.mrf.mxu0
        %v1398 = vadd.f32 %v434, %v1397
        %1399 = vmatmul.f32.gmra.mxu0 %v612
        %v1400 = vpop.f32.mrf.mxu0
        %v1401 = vadd.f32 %v434, %v1400
        %1402 = vmatmul.f32.gmra.mxu0 %v615
        %v1403 = vpop.f32.mrf.mxu0
        %v1404 = vadd.f32 %v434, %v1403
        %1405 = vmatmul.f32.gmra.mxu0 %v618
        %v1406 = vpop.f32.mrf.mxu0
        %v1407 = vadd.f32 %v434, %v1406
        %1408 = vmatmul.f32.gmra.mxu0 %v621
        %v1409 = vpop.f32.mrf.mxu0
        %v1410 = vadd.f32 %v434, %v1409
        %1411 = vmatmul.f32.gmra.mxu0 %v624
        %v1412 = vpop.f32.mrf.mxu0
        %v1413 = vadd.f32 %v434, %v1412
        %1414 = vmatmul.f32.gmra.mxu0 %v627
        %v1415 = vpop.f32.mrf.mxu0
        %v1416 = vadd.f32 %v434, %v1415
        %1417 = vmatmul.f32.gmra.mxu0 %v630
        %v1418 = vpop.f32.mrf.mxu0
        %v1419 = vadd.f32 %v434, %v1418
        %1420 = vmatmul.f32.gmra.mxu0 %v633
        %v1421 = vpop.f32.mrf.mxu0
        %v1422 = vadd.f32 %v434, %v1421
        %1423 = vmatmul.f32.gmra.mxu0 %v636
        %v1424 = vpop.f32.mrf.mxu0
        %v1425 = vadd.f32 %v434, %v1424
        %1426 = vmatmul.f32.gmra.mxu0 %v639
        %v1427 = vpop.f32.mrf.mxu0
        %v1428 = vadd.f32 %v434, %v1427
        %1429 = vmatmul.f32.gmra.mxu0 %v642
        %v1430 = vpop.f32.mrf.mxu0
        %v1431 = vadd.f32 %v434, %v1430
        %1432 = vmatmul.f32.gmra.mxu0 %v645
        %v1433 = vpop.f32.mrf.mxu0
        %v1434 = vadd.f32 %v434, %v1433
        %1435 = vmatmul.f32.gmra.mxu0 %v648
        %v1436 = vpop.f32.mrf.mxu0
        %v1437 = vadd.f32 %v434, %v1436
        %1438 = vmatmul.f32.gmra.mxu0 %v651
        %v1439 = vpop.f32.mrf.mxu0
        %v1440 = vadd.f32 %v434, %v1439
        %1441 = vmatmul.f32.gmra.mxu0 %v654
        %v1442 = vpop.f32.mrf.mxu0
        %v1443 = vadd.f32 %v434, %v1442
        %1444 = vmatmul.f32.gmra.mxu0 %v657
        %v1445 = vpop.f32.mrf.mxu0
        %v1446 = vadd.f32 %v434, %v1445
        %1447 = vmatmul.f32.gmra.mxu0 %v660
        %v1448 = vpop.f32.mrf.mxu0
        %v1449 = vadd.f32 %v434, %v1448
        %1450 = vmatmul.f32.gmra.mxu0 %v663
        %v1451 = vpop.f32.mrf.mxu0
        %v1452 = vadd.f32 %v434, %v1451
        %1453 = vmatmul.f32.gmra.mxu0 %v666
        %v1454 = vpop.f32.mrf.mxu0
        %v1455 = vadd.f32 %v434, %v1454
        %1456 = vmatmul.f32.gmra.mxu0 %v669
        %v1457 = vpop.f32.mrf.mxu0
        %v1458 = vadd.f32 %v434, %v1457
        %1459 = vmatmul.f32.gmra.mxu0 %v672
        %v1460 = vpop.f32.mrf.mxu0
        %v1461 = vadd.f32 %v434, %v1460
        %1462 = vmatmul.f32.gmra.mxu0 %v675
        %v1463 = vpop.f32.mrf.mxu0
        %v1464 = vadd.f32 %v434, %v1463
        %1465 = vmatmul.f32.gmra.mxu0 %v678
        %v1466 = vpop.f32.mrf.mxu0
        %v1467 = vadd.f32 %v434, %v1466
        %1468 = vmatmul.f32.gmra.mxu0 %v681
        %v1469 = vpop.f32.mrf.mxu0
        %v1470 = vadd.f32 %v434, %v1469
        %1471 = vmatmul.f32.gmra.mxu0 %v684
        %v1472 = vpop.f32.mrf.mxu0
        %v1473 = vadd.f32 %v434, %v1472
        %1474 = vmatmul.f32.gmra.mxu0 %v687
        %v1475 = vpop.f32.mrf.mxu0
        %v1476 = vadd.f32 %v434, %v1475
        %1477 = vmatmul.f32.gmra.mxu0 %v690
        %v1478 = vpop.f32.mrf.mxu0
        %v1479 = vadd.f32 %v434, %v1478
        %1480 = vmatmul.f32.gmra.mxu0 %v693
        %v1481 = vpop.f32.mrf.mxu0
        %v1482 = vadd.f32 %v434, %v1481
        %1483 = vmatmul.f32.gmra.mxu0 %v696
        %v1484 = vpop.f32.mrf.mxu0
        %v1485 = vadd.f32 %v434, %v1484
        %1486 = vmatmul.f32.gmra.mxu0 %v699
        %v1487 = vpop.f32.mrf.mxu0
        %v1488 = vadd.f32 %v434, %v1487
        %1489 = vmatmul.f32.gmra.mxu0 %v702
        %v1490 = vpop.f32.mrf.mxu0
        %v1491 = vadd.f32 %v434, %v1490
        %1492 = vmatmul.f32.gmra.mxu0 %v705
        %v1493 = vpop.f32.mrf.mxu0
        %v1494 = vadd.f32 %v434, %v1493
        %1495 = vmatmul.f32.gmra.mxu0 %v708
        %v1496 = vpop.f32.mrf.mxu0
        %v1497 = vadd.f32 %v434, %v1496
        %1498 = vmatmul.f32.gmra.mxu0 %v711
        %v1499 = vpop.f32.mrf.mxu0
        %v1500 = vadd.f32 %v434, %v1499
        %1501 = vmatmul.f32.gmra.mxu0 %v714
        %v1502 = vpop.f32.mrf.mxu0
        %v1503 = vadd.f32 %v434, %v1502
        %1504 = vmatmul.f32.gmra.mxu0 %v717
        %v1505 = vpop.f32.mrf.mxu0
        %v1506 = vadd.f32 %v434, %v1505
        %1507 = vmatmul.f32.gmra.mxu0 %v720
        %v1508 = vpop.f32.mrf.mxu0
        %v1509 = vadd.f32 %v434, %v1508
        %1510 = vmatmul.f32.gmra.mxu0 %v723
        %v1511 = vpop.f32.mrf.mxu0
        %v1512 = vadd.f32 %v434, %v1511
        %1513 = vmatmul.f32.gmra.mxu0 %v726
        %v1514 = vpop.f32.mrf.mxu0
        %v1515 = vadd.f32 %v434, %v1514
        %1516 = vmatmul.f32.gmra.mxu0 %v729
        %v1517 = vpop.f32.mrf.mxu0
        %v1518 = vadd.f32 %v434, %v1517
        %1519 = vmatmul.f32.gmra.mxu0 %v732
        %v1520 = vpop.f32.mrf.mxu0
        %v1521 = vadd.f32 %v434, %v1520
        %1522 = vmatmul.f32.gmra.mxu0 %v735
        %v1523 = vpop.f32.mrf.mxu0
        %v1524 = vadd.f32 %v434, %v1523
        %1525 = vmatmul.f32.gmra.mxu0 %v738
        %v1526 = vpop.f32.mrf.mxu0
        %v1527 = vadd.f32 %v434, %v1526
        %1528 = vmatmul.f32.gmra.mxu0 %v741
        %v1529 = vpop.f32.mrf.mxu0
        %v1530 = vadd.f32 %v434, %v1529
        %1531 = vmatmul.f32.gmra.mxu0 %v744
        %v1532 = vpop.f32.mrf.mxu0
        %v1533 = vadd.f32 %v434, %v1532
        %1534 = vmatmul.f32.gmra.mxu0 %v747
        %v1535 = vpop.f32.mrf.mxu0
        %v1536 = vadd.f32 %v434, %v1535
        %1537 = vmatmul.f32.gmra.mxu0 %v750
        %v1538 = vpop.f32.mrf.mxu0
        %v1539 = vadd.f32 %v434, %v1538
        %1540 = vmatmul.f32.gmra.mxu0 %v753
        %v1541 = vpop.f32.mrf.mxu0
        %v1542 = vadd.f32 %v434, %v1541
        %1543 = vmatmul.f32.gmra.mxu0 %v756
        %v1544 = vpop.f32.mrf.mxu0
        %v1545 = vadd.f32 %v434, %v1544
        %1546 = vmatmul.f32.gmra.mxu0 %v759
        %v1547 = vpop.f32.mrf.mxu0
        %v1548 = vadd.f32 %v434, %v1547
        %1549 = vmatmul.f32.gmra.mxu0 %v762
        %v1550 = vpop.f32.mrf.mxu0
        %v1551 = vadd.f32 %v434, %v1550
        %1552 = vmatmul.f32.gmra.mxu0 %v765
        %v1553 = vpop.f32.mrf.mxu0
        %v1554 = vadd.f32 %v434, %v1553
        %1555 = vmatmul.f32.gmra.mxu0 %v768
        %v1556 = vpop.f32.mrf.mxu0
        %v1557 = vadd.f32 %v434, %v1556
        %1558 = vmatmul.f32.gmra.mxu0 %v771
        %v1559 = vpop.f32.mrf.mxu0
        %v1560 = vadd.f32 %v434, %v1559
        %1561 = vmatmul.f32.gmra.mxu0 %v774
        %v1562 = vpop.f32.mrf.mxu0
        %v1563 = vadd.f32 %v434, %v1562
        %1564 = vmatmul.f32.gmra.mxu0 %v777
        %v1565 = vpop.f32.mrf.mxu0
        %v1566 = vadd.f32 %v434, %v1565
        %1567 = vmatmul.f32.gmra.mxu0 %v780
        %v1568 = vpop.f32.mrf.mxu0
        %v1569 = vadd.f32 %v434, %v1568
        %1570 = vmatmul.f32.gmra.mxu0 %v783
        %v1571 = vpop.f32.mrf.mxu0
        %v1572 = vadd.f32 %v434, %v1571
        %1573 = vmatmul.f32.gmra.mxu0 %v786
        %v1574 = vpop.f32.mrf.mxu0
        %v1575 = vadd.f32 %v434, %v1574
        %1576 = vmatmul.f32.gmra.mxu0 %v789
        %v1577 = vpop.f32.mrf.mxu0
        %v1578 = vadd.f32 %v434, %v1577
        %1579 = vmatmul.f32.gmra.mxu0 %v792
        %v1580 = vpop.f32.mrf.mxu0
        %v1581 = vadd.f32 %v434, %v1580
        %1582 = vmatmul.f32.gmra.mxu0 %v795
        %v1583 = vpop.f32.mrf.mxu0
        %v1584 = vadd.f32 %v434, %v1583
        %1585 = vmatmul.f32.gmra.mxu0 %v798
        %v1586 = vpop.f32.mrf.mxu0
        %v1587 = vadd.f32 %v434, %v1586
        %1588 = vmatmul.f32.gmra.mxu0 %v801
        %v1589 = vpop.f32.mrf.mxu0
        %v1590 = vadd.f32 %v434, %v1589
        %1591 = vmatmul.f32.gmra.mxu0 %v804
        %v1592 = vpop.f32.mrf.mxu0
        %v1593 = vadd.f32 %v434, %v1592
        %1594 = vmatmul.f32.gmra.mxu0 %v807
        %v1595 = vpop.f32.mrf.mxu0
        %v1596 = vadd.f32 %v434, %v1595
        %1597 = vmatmul.f32.gmra.mxu0 %v810
        %v1598 = vpop.f32.mrf.mxu0
        %v1599 = vadd.f32 %v434, %v1598
        %1600 = vmatmul.f32.gmra.mxu0 %v813
        %v1601 = vpop.f32.mrf.mxu0
        %v1602 = vadd.f32 %v434, %v1601
        %1603 = vmatmul.f32.gmra.mxu0 %v816
        %v1604 = vpop.f32.mrf.mxu0
        %v1605 = vadd.f32 %v434, %v1604
        %1606 = vmatmul.f32.gmra.mxu0 %v819
        %v1607 = vpop.f32.mrf.mxu0
        %v1608 = vadd.f32 %v434, %v1607
        %1609 = vmatmul.f32.gmra.mxu0 %v822
        %v1610 = vpop.f32.mrf.mxu0
        %v1611 = vadd.f32 %v434, %v1610
        %1612 = vmatmul.f32.gmra.mxu0 %v825
        %v1613 = vpop.f32.mrf.mxu0
        %v1614 = vadd.f32 %v434, %v1613
        %1615 = vmatmul.f32.gmra.mxu0 %v828
        %v1616 = vpop.f32.mrf.mxu0
        %v1617 = vadd.f32 %v434, %v1616
        %1618 = vmatmul.f32.gmra.mxu0 %v831
        %v1619 = vpop.f32.mrf.mxu0
        %v1620 = vadd.f32 %v434, %v1619
        %1621 = vmatmul.f32.gmra.mxu0 %v834
        %v1622 = vpop.f32.mrf.mxu0
        %v1623 = vadd.f32 %v434, %v1622
        %1624 = vmatmul.f32.gmra.mxu0 %v837
        %v1625 = vpop.f32.mrf.mxu0
        %v1626 = vadd.f32 %v434, %v1625
        %1627 = vmatmul.f32.gmra.mxu0 %v840
        %v1628 = vpop.f32.mrf.mxu0
        %v1629 = vadd.f32 %v434, %v1628
        %1630 = vmatmul.f32.gmra.mxu0 %v843
        %v1631 = vpop.f32.mrf.mxu0
        %v1632 = vadd.f32 %v434, %v1631
        %1633 = vmatmul.f32.gmra.mxu0 %v846
        %v1634 = vpop.f32.mrf.mxu0
        %v1635 = vadd.f32 %v434, %v1634
        %1636 = vmatmul.f32.gmra.mxu0 %v849
        %v1637 = vpop.f32.mrf.mxu0
        %v1638 = vadd.f32 %v434, %v1637
        %1639 = vmatmul.f32.gmra.mxu0 %v852
        %v1640 = vpop.f32.mrf.mxu0
        %v1641 = vadd.f32 %v434, %v1640
        %1642 = vmatmul.f32.gmra.mxu0 %v855
        %v1643 = vpop.f32.mrf.mxu0
        %v1644 = vadd.f32 %v434, %v1643
        %1645 = vmatmul.f32.gmra.mxu0 %v858
        %v1646 = vpop.f32.mrf.mxu0
        %v1647 = vadd.f32 %v434, %v1646
        %1648 = vmatmul.f32.gmra.mxu0 %v861
        %v1649 = vpop.f32.mrf.mxu0
        %v1650 = vadd.f32 %v434, %v1649
        %1651 = vmatmul.f32.gmra.mxu0 %v864
        %v1652 = vpop.f32.mrf.mxu0
        %v1653 = vadd.f32 %v434, %v1652
        %1654 = vmatmul.f32.gmra.mxu0 %v867
        %v1655 = vpop.f32.mrf.mxu0
        %v1656 = vadd.f32 %v434, %v1655
        %1657 = vmatmul.f32.gmra.mxu0 %v870
        %v1658 = vpop.f32.mrf.mxu0
        %v1659 = vadd.f32 %v434, %v1658
        %1660 = vmatmul.f32.gmra.mxu0 %v873
        %v1661 = vpop.f32.mrf.mxu0
        %v1662 = vadd.f32 %v434, %v1661
        %1663 = vmatmul.f32.gmra.mxu0 %v876
        %v1664 = vpop.f32.mrf.mxu0
        %v1665 = vadd.f32 %v434, %v1664
        %1666 = vmatmul.f32.gmra.mxu0 %v879
        %v1667 = vpop.f32.mrf.mxu0
        %v1668 = vadd.f32 %v434, %v1667
        %1669 = vmatmul.f32.gmra.mxu0 %v882
        %v1670 = vpop.f32.mrf.mxu0
        %v1671 = vadd.f32 %v434, %v1670
        %1672 = vmatmul.f32.gmra.mxu0 %v885
        %v1673 = vpop.f32.mrf.mxu0
        %v1674 = vadd.f32 %v434, %v1673
        %1675 = vmatmul.f32.gmra.mxu0 %v888
        %v1676 = vpop.f32.mrf.mxu0
        %v1677 = vadd.f32 %v434, %v1676
        %1678 = vmatmul.f32.gmra.mxu0 %v891
        %v1679 = vpop.f32.mrf.mxu0
        %v1680 = vadd.f32 %v434, %v1679
        %1681 = vmatmul.f32.gmra.mxu0 %v894
        %v1682 = vpop.f32.mrf.mxu0
        %v1683 = vadd.f32 %v434, %v1682
        %1684 = vmatmul.f32.gmra.mxu0 %v897
        %v1685 = vpop.f32.mrf.mxu0
        %v1686 = vadd.f32 %v434, %v1685
        %1687 = vmatmul.f32.gmra.mxu0 %v900
        %v1688 = vpop.f32.mrf.mxu0
        %v1689 = vadd.f32 %v434, %v1688
        %1690 = vmatmul.f32.gmra.mxu0 %v903
        %v1691 = vpop.f32.mrf.mxu0
        %v1692 = vadd.f32 %v434, %v1691
        %1693 = vmatmul.f32.gmra.mxu0 %v906
        %v1694 = vpop.f32.mrf.mxu0
        %v1695 = vadd.f32 %v434, %v1694
        %1696 = vmatmul.f32.gmra.mxu0 %v909
        %v1697 = vpop.f32.mrf.mxu0
        %v1698 = vadd.f32 %v434, %v1697
        %1699 = vmatmul.f32.gmra.mxu0 %v912
        %v1700 = vpop.f32.mrf.mxu0
        %v1701 = vadd.f32 %v434, %v1700
        %1702 = vmatmul.f32.gmra.mxu0 %v915
        %v1703 = vpop.f32.mrf.mxu0
        %v1704 = vadd.f32 %v434, %v1703
        %1705 = vmatmul.f32.gmra.mxu0 %v918
        %v1706 = vpop.f32.mrf.mxu0
        %v1707 = vadd.f32 %v434, %v1706
        %1708 = vmatmul.f32.gmra.mxu0 %v921
        %v1709 = vpop.f32.mrf.mxu0
        %v1710 = vadd.f32 %v434, %v1709
        %1711 = vmatmul.f32.gmra.mxu0 %v924
        %v1712 = vpop.f32.mrf.mxu0
        %v1713 = vadd.f32 %v434, %v1712
        %1714 = vmatmul.f32.gmra.mxu0 %v927
        %v1715 = vpop.f32.mrf.mxu0
        %v1716 = vadd.f32 %v434, %v1715
        %1717 = vmatmul.f32.gmra.mxu0 %v930
        %v1718 = vpop.f32.mrf.mxu0
        %v1719 = vadd.f32 %v434, %v1718
        %1720 = vmatmul.f32.gmra.mxu0 %v933
        %v1721 = vpop.f32.mrf.mxu0
        %v1722 = vadd.f32 %v434, %v1721
        %1723 = vmatmul.f32.gmra.mxu0 %v936
        %v1724 = vpop.f32.mrf.mxu0
        %v1725 = vadd.f32 %v434, %v1724
        %1726 = vmatmul.f32.gmra.mxu0 %v939
        %v1727 = vpop.f32.mrf.mxu0
        %v1728 = vadd.f32 %v434, %v1727
        %1729 = vmatmul.f32.gmra.mxu0 %v942
        %v1730 = vpop.f32.mrf.mxu0
        %v1731 = vadd.f32 %v434, %v1730
        %1732 = vmatmul.f32.gmra.mxu0 %v945
        %v1733 = vpop.f32.mrf.mxu0
        %v1734 = vadd.f32 %v434, %v1733
        %1735 = vmatmul.f32.gmra.mxu0 %v948
        %v1736 = vpop.f32.mrf.mxu0
        %v1737 = vadd.f32 %v434, %v1736
        %1738 = vmatmul.f32.gmra.mxu0 %v951
        %v1739 = vpop.f32.mrf.mxu0
        %v1740 = vadd.f32 %v434, %v1739
        %1741 = vmatmul.f32.gmra.mxu0 %v954
        %v1742 = vpop.f32.mrf.mxu0
        %v1743 = vadd.f32 %v434, %v1742
        %1744 = vmatmul.f32.gmra.mxu0 %v957
        %v1745 = vpop.f32.mrf.mxu0
        %v1746 = vadd.f32 %v434, %v1745
        %1747 = vmatmul.f32.gmra.mxu0 %v960
        %v1748 = vpop.f32.mrf.mxu0
        %v1749 = vadd.f32 %v434, %v1748
        %1750 = vmatmul.f32.gmra.mxu0 %v963
        %v1751 = vpop.f32.mrf.mxu0
        %v1752 = vadd.f32 %v434, %v1751
        %1753 = vmatmul.f32.gmra.mxu0 %v966
        %v1754 = vpop.f32.mrf.mxu0
        %v1755 = vadd.f32 %v434, %v1754
        %1756 = vmatmul.f32.gmra.mxu0 %v969
        %v1757 = vpop.f32.mrf.mxu0
        %v1758 = vadd.f32 %v434, %v1757
        %1759 = vmatmul.f32.gmra.mxu0 %v972
        %v1760 = vpop.f32.mrf.mxu0
        %v1761 = vadd.f32 %v434, %v1760
        %1762 = vmatmul.f32.gmra.mxu0 %v975
        %v1763 = vpop.f32.mrf.mxu0
        %v1764 = vadd.f32 %v434, %v1763
        %1765 = vmatmul.f32.gmra.mxu0 %v978
        %v1766 = vpop.f32.mrf.mxu0
        %v1767 = vadd.f32 %v434, %v1766
        %1768 = vmatmul.f32.gmra.mxu0 %v981
        %v1769 = vpop.f32.mrf.mxu0
        %v1770 = vadd.f32 %v434, %v1769
        %1771 = vmatmul.f32.gmra.mxu0 %v984
        %v1772 = vpop.f32.mrf.mxu0
        %v1773 = vadd.f32 %v434, %v1772
        %1774 = vmatmul.f32.gmra.mxu0 %v987
        %v1775 = vpop.f32.mrf.mxu0
        %v1776 = vadd.f32 %v434, %v1775
        %1777 = vmatmul.f32.gmra.mxu0 %v990
        %v1778 = vpop.f32.mrf.mxu0
        %v1779 = vadd.f32 %v434, %v1778
        %1780 = vmatmul.f32.gmra.mxu0 %v993
        %v1781 = vpop.f32.mrf.mxu0
        %v1782 = vadd.f32 %v434, %v1781
        %1783 = vmatmul.f32.gmra.mxu0 %v996
        %v1784 = vpop.f32.mrf.mxu0
        %v1785 = vadd.f32 %v434, %v1784
        %1786 = vmatmul.f32.gmra.mxu0 %v999
        %v1787 = vpop.f32.mrf.mxu0
        %v1788 = vadd.f32 %v434, %v1787
        %1789 = vmatmul.f32.gmra.mxu0 %v1002
        %v1790 = vpop.f32.mrf.mxu0
        %v1791 = vadd.f32 %v434, %v1790
        %1792 = vmatmul.f32.gmra.mxu0 %v1005
        %v1793 = vpop.f32.mrf.mxu0
        %v1794 = vadd.f32 %v434, %v1793
        %1795 = vmatmul.f32.gmra.mxu0 %v1008
        %v1796 = vpop.f32.mrf.mxu0
        %v1797 = vadd.f32 %v434, %v1796
        %1798 = vmatmul.f32.gmra.mxu0 %v1011
        %v1799 = vpop.f32.mrf.mxu0
        %v1800 = vadd.f32 %v434, %v1799
        %1801 = vmatmul.f32.gmra.mxu0 %v1014
        %v1802 = vpop.f32.mrf.mxu0
        %v1803 = vadd.f32 %v434, %v1802
        %1804 = vmatmul.f32.gmra.mxu0 %v1017
        %v1805 = vpop.f32.mrf.mxu0
        %v1806 = vadd.f32 %v434, %v1805
        %1807 = vmatmul.f32.gmra.mxu0 %v1020
        %v1808 = vpop.f32.mrf.mxu0
        %v1809 = vadd.f32 %v434, %v1808
        %1810 = vmatmul.f32.gmra.mxu0 %v1023
        %v1811 = vpop.f32.mrf.mxu0
        %v1812 = vadd.f32 %v434, %v1811
        %1813 = vmatmul.f32.gmra.mxu0 %v1026
        %v1814 = vpop.f32.mrf.mxu0
        %v1815 = vadd.f32 %v434, %v1814
        %1816 = vmatmul.f32.gmra.mxu0 %v1029
        %v1817 = vpop.f32.mrf.mxu0
        %v1818 = vadd.f32 %v434, %v1817
        %1819 = vmatmul.f32.gmra.mxu0 %v1032
        %v1820 = vpop.f32.mrf.mxu0
        %v1821 = vadd.f32 %v434, %v1820
        %1822 = vmatmul.f32.gmra.mxu0 %v1035
        %v1823 = vpop.f32.mrf.mxu0
        %v1824 = vadd.f32 %v434, %v1823
        %1825 = vmatmul.f32.gmra.mxu0 %v1038
        %v1826 = vpop.f32.mrf.mxu0
        %v1827 = vadd.f32 %v434, %v1826
        %1828 = vmatmul.f32.gmra.mxu0 %v1041
        %v1829 = vpop.f32.mrf.mxu0
        %v1830 = vadd.f32 %v434, %v1829
        %1831 = vmatmul.f32.gmra.mxu0 %v1044
        %v1832 = vpop.f32.mrf.mxu0
        %v1833 = vadd.f32 %v434, %v1832
        %1834 = vmatmul.f32.gmra.mxu0 %v1047
        %v1835 = vpop.f32.mrf.mxu0
        %v1836 = vadd.f32 %v434, %v1835
        %1837 = vmatmul.f32.gmra.mxu0 %v1050
        %v1838 = vpop.f32.mrf.mxu0
        %v1839 = vadd.f32 %v434, %v1838
        %1840 = vmatmul.f32.gmra.mxu0 %v1053
        %v1841 = vpop.f32.mrf.mxu0
        %v1842 = vadd.f32 %v434, %v1841
        %1843 = vmatmul.f32.gmra.mxu0 %v1056
        %v1844 = vpop.f32.mrf.mxu0
        %v1845 = vadd.f32 %v434, %v1844
        %1846 = vmatmul.f32.gmra.mxu0 %v1059
        %v1847 = vpop.f32.mrf.mxu0
        %v1848 = vadd.f32 %v434, %v1847
        %1849 = vmatmul.f32.gmra.mxu0 %v1062
        %v1850 = vpop.f32.mrf.mxu0
        %v1851 = vadd.f32 %v434, %v1850
        %1852 = vmatmul.f32.gmra.mxu0 %v1065
        %v1853 = vpop.f32.mrf.mxu0
        %v1854 = vadd.f32 %v434, %v1853
        %1855 = vmatmul.f32.gmra.mxu0 %v1068
        %v1856 = vpop.f32.mrf.mxu0
        %v1857 = vadd.f32 %v434, %v1856
        %1858 = vmatmul.f32.gmra.mxu0 %v1071
        %v1859 = vpop.f32.mrf.mxu0
        %v1860 = vadd.f32 %v434, %v1859
        %1861 = vmatmul.f32.gmra.mxu0 %v1074
        %v1862 = vpop.f32.mrf.mxu0
        %v1863 = vadd.f32 %v434, %v1862
        %1864 = vmatmul.f32.gmra.mxu0 %v1077
        %v1865 = vpop.f32.mrf.mxu0
        %v1866 = vadd.f32 %v434, %v1865
        %1867 = vmatmul.f32.gmra.mxu0 %v1080
        %v1868 = vpop.f32.mrf.mxu0
        %v1869 = vadd.f32 %v434, %v1868
        %1870 = vmatmul.f32.gmra.mxu0 %v1083
        %v1871 = vpop.f32.mrf.mxu0
        %v1872 = vadd.f32 %v434, %v1871
        %1873 = vmatmul.f32.gmra.mxu0 %v1086
        %v1874 = vpop.f32.mrf.mxu0
        %v1875 = vadd.f32 %v434, %v1874
        %1876 = vmatmul.f32.gmra.mxu0 %v1089
        %v1877 = vpop.f32.mrf.mxu0
        %v1878 = vadd.f32 %v434, %v1877
        %1879 = vmatmul.f32.gmra.mxu0 %v1092
        %v1880 = vpop.f32.mrf.mxu0
        %v1881 = vadd.f32 %v434, %v1880
        %1882 = vmatmul.f32.gmra.mxu0 %v1095
        %v1883 = vpop.f32.mrf.mxu0
        %v1884 = vadd.f32 %v434, %v1883
        %1885 = vmatmul.f32.gmra.mxu0 %v1098
        %v1886 = vpop.f32.mrf.mxu0
        %v1887 = vadd.f32 %v434, %v1886
        %1888 = vmatmul.f32.gmra.mxu0 %v1101
        %v1889 = vpop.f32.mrf.mxu0
        %v1890 = vadd.f32 %v434, %v1889
        %1891 = vmatmul.f32.gmra.mxu0 %v1104
        %v1892 = vpop.f32.mrf.mxu0
        %v1893 = vadd.f32 %v434, %v1892
        %1894 = vmatmul.f32.gmra.mxu0 %v1107
        %v1895 = vpop.f32.mrf.mxu0
        %v1896 = vadd.f32 %v434, %v1895
        %1897 = vmatmul.f32.gmra.mxu0 %v1110
        %v1898 = vpop.f32.mrf.mxu0
        %v1899 = vadd.f32 %v434, %v1898
        %1900 = vmatmul.f32.gmra.mxu0 %v1113
        %v1901 = vpop.f32.mrf.mxu0
        %v1902 = vadd.f32 %v434, %v1901
        %1903 = vmatmul.f32.gmra.mxu0 %v1116
        %v1904 = vpop.f32.mrf.mxu0
        %v1905 = vadd.f32 %v434, %v1904
        %1906 = vmatmul.f32.gmra.mxu0 %v1119
        %v1907 = vpop.f32.mrf.mxu0
        %v1908 = vadd.f32 %v434, %v1907
        %1909 = vmatmul.f32.gmra.mxu0 %v1122
        %v1910 = vpop.f32.mrf.mxu0
        %v1911 = vadd.f32 %v434, %v1910
        %1912 = vmatmul.f32.gmra.mxu0 %v1125
        %v1913 = vpop.f32.mrf.mxu0
        %v1914 = vadd.f32 %v434, %v1913
        %1915 = vmatmul.f32.gmra.mxu0 %v1128
        %v1916 = vpop.f32.mrf.mxu0
        %v1917 = vadd.f32 %v434, %v1916
        %1918 = vmatmul.f32.gmra.mxu0 %v1131
        %v1919 = vpop.f32.mrf.mxu0
        %v1920 = vadd.f32 %v434, %v1919
        %1921 = vmatmul.f32.gmra.mxu0 %v1134
        %v1922 = vpop.f32.mrf.mxu0
        %v1923 = vadd.f32 %v434, %v1922
        %1924 = vmatmul.f32.gmra.mxu0 %v1137
        %v1925 = vpop.f32.mrf.mxu0
        %v1926 = vadd.f32 %v434, %v1925
        %1927 = vmatmul.f32.gmra.mxu0 %v1140
        %v1928 = vpop.f32.mrf.mxu0
        %v1929 = vadd.f32 %v434, %v1928
        %1930 = vmatmul.f32.gmra.mxu0 %v1143
        %v1931 = vpop.f32.mrf.mxu0
        %v1932 = vadd.f32 %v434, %v1931
        %1933 = vmatmul.f32.gmra.mxu0 %v1146
        %v1934 = vpop.f32.mrf.mxu0
        %v1935 = vadd.f32 %v434, %v1934
        %1936 = vmatmul.f32.gmra.mxu0 %v1149
        %v1937 = vpop.f32.mrf.mxu0
        %v1938 = vadd.f32 %v434, %v1937
        %1939 = vmatmul.f32.gmra.mxu0 %v1152
        %v1940 = vpop.f32.mrf.mxu0
        %v1941 = vadd.f32 %v434, %v1940
        %1942 = vmatmul.f32.gmra.mxu0 %v1155
        %v1943 = vpop.f32.mrf.mxu0
        %v1944 = vadd.f32 %v434, %v1943
        %1945 = vmatmul.f32.gmra.mxu0 %v1158
        %v1946 = vpop.f32.mrf.mxu0
        %v1947 = vadd.f32 %v434, %v1946
        %1948 = vmatmul.f32.gmra.mxu0 %v1161
        %v1949 = vpop.f32.mrf.mxu0
        %v1950 = vadd.f32 %v434, %v1949
        %1951 = vmatmul.f32.gmra.mxu0 %v1164
        %v1952 = vpop.f32.mrf.mxu0
        %v1953 = vadd.f32 %v434, %v1952
        %1954 = vmatmul.f32.gmra.mxu0 %v1167
        %v1955 = vpop.f32.mrf.mxu0
        %v1956 = vadd.f32 %v434, %v1955
        %1957 = vmatmul.f32.gmra.mxu0 %v1170
        %v1958 = vpop.f32.mrf.mxu0
        %v1959 = vadd.f32 %v434, %v1958
        %1960 = vmatmul.f32.gmra.mxu0 %v1173
        %v1961 = vpop.f32.mrf.mxu0
        %v1962 = vadd.f32 %v434, %v1961
        %1963 = vmatmul.f32.gmra.mxu0 %v1176
        %v1964 = vpop.f32.mrf.mxu0
        %v1965 = vadd.f32 %v434, %v1964
        %1966 = vmatmul.f32.gmra.mxu0 %v1179
        %v1967 = vpop.f32.mrf.mxu0
        %v1968 = vadd.f32 %v434, %v1967
        %1969 = vmatmul.f32.gmra.mxu0 %v1182
        %v1970 = vpop.f32.mrf.mxu0
        %v1971 = vadd.f32 %v434, %v1970
        %1972 = vmatmul.f32.gmra.mxu0 %v1185
        %v1973 = vpop.f32.mrf.mxu0
        %v1974 = vadd.f32 %v434, %v1973
        %1975 = vmatmul.f32.gmra.mxu0 %v1188
        %v1976 = vpop.f32.mrf.mxu0
        %v1977 = vadd.f32 %v434, %v1976
        %1978 = vmatmul.f32.gmra.mxu0 %v1191
        %v1979 = vpop.f32.mrf.mxu0
        %v1980 = vadd.f32 %v434, %v1979
        %1981 = vmatmul.f32.gmra.mxu0 %v1194
        %v1982 = vpop.f32.mrf.mxu0
        %v1983 = vadd.f32 %v434, %v1982
        %1984 = vmatmul.f32.gmra.mxu0 %v1197
        %v1985 = vpop.f32.mrf.mxu0
        %v1986 = vadd.f32 %v434, %v1985
        %1987 = vmatmul.f32.gmra.mxu0 %v1200
        %v1988 = vpop.f32.mrf.mxu0
        %v1989 = vadd.f32 %v434, %v1988
        %1990 = vmatmul.f32.gmra.mxu0 %v1203
        %v1991 = vpop.f32.mrf.mxu0
        %v1992 = vadd.f32 %v434, %v1991
        %1993 = vdwg.mxu0
        %s1994 = smul.u32 %s17, 2048
        %v1995 = vlaneseq
        %v1996 = vshrl.u32 %v1995, 7
        %v1997 = vadd.s32 %v1996, 8
        %v1998 = vadd.s32 %v1996, 16
        %v1999 = vadd.s32 %v1996, 24
        %v2000 = vadd.s32 %v1996, 32
        %v2001 = vadd.s32 %v1996, 40
        %v2002 = vadd.s32 %v1996, 48
        %v2003 = vadd.s32 %v1996, 56
        %v2004 = vadd.s32 %v1996, 64
        %v2005 = vadd.s32 %v1996, 72
        %v2006 = vadd.s32 %v1996, 80
        %v2007 = vadd.s32 %v1996, 88
        %v2008 = vadd.s32 %v1996, 96
        %v2009 = vadd.s32 %v1996, 104
        %v2010 = vadd.s32 %v1996, 112
        %v2011 = vadd.s32 %v1996, 120
        %v2012 = vadd.s32 %v1996, 128
        %v2013 = vadd.s32 %v1996, 136
        %v2014 = vadd.s32 %v1996, 144
        %v2015 = vadd.s32 %v1996, 152
        %v2016 = vadd.s32 %v1996, 160
        %v2017 = vadd.s32 %v1996, 168
        %v2018 = vadd.s32 %v1996, 176
        %v2019 = vadd.s32 %v1996, 184
        %v2020 = vadd.s32 %v1996, 192
        %v2021 = vadd.s32 %v1996, 200
        %v2022 = vadd.s32 %v1996, 208
        %v2023 = vadd.s32 %v1996, 216
        %v2024 = vadd.s32 %v1996, 224
        %v2025 = vadd.s32 %v1996, 232
        %v2026 = vadd.s32 %v1996, 240
        %v2027 = vadd.s32 %v1996, 248
        %v2028 = vadd.s32 %v1996, 256
        %v2029 = vadd.s32 %v1996, 264
        %v2030 = vadd.s32 %v1996, 272
        %v2031 = vadd.s32 %v1996, 280
        %v2032 = vadd.s32 %v1996, 288
        %v2033 = vadd.s32 %v1996, 296
        %v2034 = vadd.s32 %v1996, 304
        %v2035 = vadd.s32 %v1996, 312
        %v2036 = vadd.s32 %v1996, 320
        %v2037 = vadd.s32 %v1996, 328
        %v2038 = vadd.s32 %v1996, 336
        %v2039 = vadd.s32 %v1996, 344
        %v2040 = vadd.s32 %v1996, 352
        %v2041 = vadd.s32 %v1996, 360
        %v2042 = vadd.s32 %v1996, 368
        %v2043 = vadd.s32 %v1996, 376
        %v2044 = vadd.s32 %v1996, 384
        %v2045 = vadd.s32 %v1996, 392
        %v2046 = vadd.s32 %v1996, 400
        %v2047 = vadd.s32 %v1996, 408
        %v2048 = vadd.s32 %v1996, 416
        %v2049 = vadd.s32 %v1996, 424
        %v2050 = vadd.s32 %v1996, 432
        %v2051 = vadd.s32 %v1996, 440
        %v2052 = vadd.s32 %v1996, 448
        %v2053 = vadd.s32 %v1996, 456
        %v2054 = vadd.s32 %v1996, 464
        %v2055 = vadd.s32 %v1996, 472
        %v2056 = vadd.s32 %v1996, 480
        %v2057 = vadd.s32 %v1996, 488
        %v2058 = vadd.s32 %v1996, 496
        %v2059 = vadd.s32 %v1996, 504
        %v2060 = vadd.s32 %v1996, 512
        %v2061 = vadd.s32 %v1996, 520
        %v2062 = vadd.s32 %v1996, 528
        %v2063 = vadd.s32 %v1996, 536
        %v2064 = vadd.s32 %v1996, 544
        %v2065 = vadd.s32 %v1996, 552
        %v2066 = vadd.s32 %v1996, 560
        %v2067 = vadd.s32 %v1996, 568
        %v2068 = vadd.s32 %v1996, 576
        %v2069 = vadd.s32 %v1996, 584
        %v2070 = vadd.s32 %v1996, 592
        %v2071 = vadd.s32 %v1996, 600
        %v2072 = vadd.s32 %v1996, 608
        %v2073 = vadd.s32 %v1996, 616
        %v2074 = vadd.s32 %v1996, 624
        %v2075 = vadd.s32 %v1996, 632
        %v2076 = vadd.s32 %v1996, 640
        %v2077 = vadd.s32 %v1996, 648
        %v2078 = vadd.s32 %v1996, 656
        %v2079 = vadd.s32 %v1996, 664
        %v2080 = vadd.s32 %v1996, 672
        %v2081 = vadd.s32 %v1996, 680
        %v2082 = vadd.s32 %v1996, 688
        %v2083 = vadd.s32 %v1996, 696
        %v2084 = vadd.s32 %v1996, 704
        %v2085 = vadd.s32 %v1996, 712
        %v2086 = vadd.s32 %v1996, 720
        %v2087 = vadd.s32 %v1996, 728
        %v2088 = vadd.s32 %v1996, 736
        %v2089 = vadd.s32 %v1996, 744
        %v2090 = vadd.s32 %v1996, 752
        %v2091 = vadd.s32 %v1996, 760
        %v2092 = vadd.s32 %v1996, 768
        %v2093 = vadd.s32 %v1996, 776
        %v2094 = vadd.s32 %v1996, 784
        %v2095 = vadd.s32 %v1996, 792
        %v2096 = vadd.s32 %v1996, 800
        %v2097 = vadd.s32 %v1996, 808
        %v2098 = vadd.s32 %v1996, 816
        %v2099 = vadd.s32 %v1996, 824
        %v2100 = vadd.s32 %v1996, 832
        %v2101 = vadd.s32 %v1996, 840
        %v2102 = vadd.s32 %v1996, 848
        %v2103 = vadd.s32 %v1996, 856
        %v2104 = vadd.s32 %v1996, 864
        %v2105 = vadd.s32 %v1996, 872
        %v2106 = vadd.s32 %v1996, 880
        %v2107 = vadd.s32 %v1996, 888
        %v2108 = vadd.s32 %v1996, 896
        %v2109 = vadd.s32 %v1996, 904
        %v2110 = vadd.s32 %v1996, 912
        %v2111 = vadd.s32 %v1996, 920
        %v2112 = vadd.s32 %v1996, 928
        %v2113 = vadd.s32 %v1996, 936
        %v2114 = vadd.s32 %v1996, 944
        %v2115 = vadd.s32 %v1996, 952
        %v2116 = vadd.s32 %v1996, 960
        %v2117 = vadd.s32 %v1996, 968
        %v2118 = vadd.s32 %v1996, 976
        %v2119 = vadd.s32 %v1996, 984
        %v2120 = vadd.s32 %v1996, 992
        %v2121 = vadd.s32 %v1996, 1000
        %v2122 = vadd.s32 %v1996, 1008
        %v2123 = vadd.s32 %v1996, 1016
        %v2124 = vadd.s32 %v1996, 1024
        %v2125 = vadd.s32 %v1996, 1032
        %v2126 = vadd.s32 %v1996, 1040
        %v2127 = vadd.s32 %v1996, 1048
        %v2128 = vadd.s32 %v1996, 1056
        %v2129 = vadd.s32 %v1996, 1064
        %v2130 = vadd.s32 %v1996, 1072
        %v2131 = vadd.s32 %v1996, 1080
        %v2132 = vadd.s32 %v1996, 1088
        %v2133 = vadd.s32 %v1996, 1096
        %v2134 = vadd.s32 %v1996, 1104
        %v2135 = vadd.s32 %v1996, 1112
        %v2136 = vadd.s32 %v1996, 1120
        %v2137 = vadd.s32 %v1996, 1128
        %v2138 = vadd.s32 %v1996, 1136
        %v2139 = vadd.s32 %v1996, 1144
        %v2140 = vadd.s32 %v1996, 1152
        %v2141 = vadd.s32 %v1996, 1160
        %v2142 = vadd.s32 %v1996, 1168
        %v2143 = vadd.s32 %v1996, 1176
        %v2144 = vadd.s32 %v1996, 1184
        %v2145 = vadd.s32 %v1996, 1192
        %v2146 = vadd.s32 %v1996, 1200
        %v2147 = vadd.s32 %v1996, 1208
        %v2148 = vadd.s32 %v1996, 1216
        %v2149 = vadd.s32 %v1996, 1224
        %v2150 = vadd.s32 %v1996, 1232
        %v2151 = vadd.s32 %v1996, 1240
        %v2152 = vadd.s32 %v1996, 1248
        %v2153 = vadd.s32 %v1996, 1256
        %v2154 = vadd.s32 %v1996, 1264
        %v2155 = vadd.s32 %v1996, 1272
        %v2156 = vadd.s32 %v1996, 1280
        %v2157 = vadd.s32 %v1996, 1288
        %v2158 = vadd.s32 %v1996, 1296
        %v2159 = vadd.s32 %v1996, 1304
        %v2160 = vadd.s32 %v1996, 1312
        %v2161 = vadd.s32 %v1996, 1320
        %v2162 = vadd.s32 %v1996, 1328
        %v2163 = vadd.s32 %v1996, 1336
        %v2164 = vadd.s32 %v1996, 1344
        %v2165 = vadd.s32 %v1996, 1352
        %v2166 = vadd.s32 %v1996, 1360
        %v2167 = vadd.s32 %v1996, 1368
        %v2168 = vadd.s32 %v1996, 1376
        %v2169 = vadd.s32 %v1996, 1384
        %v2170 = vadd.s32 %v1996, 1392
        %v2171 = vadd.s32 %v1996, 1400
        %v2172 = vadd.s32 %v1996, 1408
        %v2173 = vadd.s32 %v1996, 1416
        %v2174 = vadd.s32 %v1996, 1424
        %v2175 = vadd.s32 %v1996, 1432
        %v2176 = vadd.s32 %v1996, 1440
        %v2177 = vadd.s32 %v1996, 1448
        %v2178 = vadd.s32 %v1996, 1456
        %v2179 = vadd.s32 %v1996, 1464
        %v2180 = vadd.s32 %v1996, 1472
        %v2181 = vadd.s32 %v1996, 1480
        %v2182 = vadd.s32 %v1996, 1488
        %v2183 = vadd.s32 %v1996, 1496
        %v2184 = vadd.s32 %v1996, 1504
        %v2185 = vadd.s32 %v1996, 1512
        %v2186 = vadd.s32 %v1996, 1520
        %v2187 = vadd.s32 %v1996, 1528
        %v2188 = vadd.s32 %v1996, 1536
        %v2189 = vadd.s32 %v1996, 1544
        %v2190 = vadd.s32 %v1996, 1552
        %v2191 = vadd.s32 %v1996, 1560
        %v2192 = vadd.s32 %v1996, 1568
        %v2193 = vadd.s32 %v1996, 1576
        %v2194 = vadd.s32 %v1996, 1584
        %v2195 = vadd.s32 %v1996, 1592
        %v2196 = vadd.s32 %v1996, 1600
        %v2197 = vadd.s32 %v1996, 1608
        %v2198 = vadd.s32 %v1996, 1616
        %v2199 = vadd.s32 %v1996, 1624
        %v2200 = vadd.s32 %v1996, 1632
        %v2201 = vadd.s32 %v1996, 1640
        %v2202 = vadd.s32 %v1996, 1648
        %v2203 = vadd.s32 %v1996, 1656
        %v2204 = vadd.s32 %v1996, 1664
        %v2205 = vadd.s32 %v1996, 1672
        %v2206 = vadd.s32 %v1996, 1680
        %v2207 = vadd.s32 %v1996, 1688
        %v2208 = vadd.s32 %v1996, 1696
        %v2209 = vadd.s32 %v1996, 1704
        %v2210 = vadd.s32 %v1996, 1712
        %v2211 = vadd.s32 %v1996, 1720
        %v2212 = vadd.s32 %v1996, 1728
        %v2213 = vadd.s32 %v1996, 1736
        %v2214 = vadd.s32 %v1996, 1744
        %v2215 = vadd.s32 %v1996, 1752
        %v2216 = vadd.s32 %v1996, 1760
        %v2217 = vadd.s32 %v1996, 1768
        %v2218 = vadd.s32 %v1996, 1776
        %v2219 = vadd.s32 %v1996, 1784
        %v2220 = vadd.s32 %v1996, 1792
        %v2221 = vadd.s32 %v1996, 1800
        %v2222 = vadd.s32 %v1996, 1808
        %v2223 = vadd.s32 %v1996, 1816
        %v2224 = vadd.s32 %v1996, 1824
        %v2225 = vadd.s32 %v1996, 1832
        %v2226 = vadd.s32 %v1996, 1840
        %v2227 = vadd.s32 %v1996, 1848
        %v2228 = vadd.s32 %v1996, 1856
        %v2229 = vadd.s32 %v1996, 1864
        %v2230 = vadd.s32 %v1996, 1872
        %v2231 = vadd.s32 %v1996, 1880
        %v2232 = vadd.s32 %v1996, 1888
        %v2233 = vadd.s32 %v1996, 1896
        %v2234 = vadd.s32 %v1996, 1904
        %v2235 = vadd.s32 %v1996, 1912
        %v2236 = vadd.s32 %v1996, 1920
        %v2237 = vadd.s32 %v1996, 1928
        %v2238 = vadd.s32 %v1996, 1936
        %v2239 = vadd.s32 %v1996, 1944
        %v2240 = vadd.s32 %v1996, 1952
        %v2241 = vadd.s32 %v1996, 1960
        %v2242 = vadd.s32 %v1996, 1968
        %v2243 = vadd.s32 %v1996, 1976
        %v2244 = vadd.s32 %v1996, 1984
        %v2245 = vadd.s32 %v1996, 1992
        %v2246 = vadd.s32 %v1996, 2000
        %v2247 = vadd.s32 %v1996, 2008
        %v2248 = vadd.s32 %v1996, 2016
        %v2249 = vadd.s32 %v1996, 2024
        %v2250 = vadd.s32 %v1996, 2032
        %v2251 = vadd.s32 %v1996, 2040
        %v2252 = vstv %s1994
        %v2253 = vadd.s32 %v1996, %v2252
        %v2254 = vadd.s32 %v1997, %v2252
        %v2255 = vadd.s32 %v1998, %v2252
        %v2256 = vadd.s32 %v1999, %v2252
        %v2257 = vadd.s32 %v2000, %v2252
        %v2258 = vadd.s32 %v2001, %v2252
        %v2259 = vadd.s32 %v2002, %v2252
        %v2260 = vadd.s32 %v2003, %v2252
        %v2261 = vadd.s32 %v2004, %v2252
        %v2262 = vadd.s32 %v2005, %v2252
        %v2263 = vadd.s32 %v2006, %v2252
        %v2264 = vadd.s32 %v2007, %v2252
        %v2265 = vadd.s32 %v2008, %v2252
        %v2266 = vadd.s32 %v2009, %v2252
        %v2267 = vadd.s32 %v2010, %v2252
        %v2268 = vadd.s32 %v2011, %v2252
        %v2269 = vadd.s32 %v2012, %v2252
        %v2270 = vadd.s32 %v2013, %v2252
        %v2271 = vadd.s32 %v2014, %v2252
        %v2272 = vadd.s32 %v2015, %v2252
        %v2273 = vadd.s32 %v2016, %v2252
        %v2274 = vadd.s32 %v2017, %v2252
        %v2275 = vadd.s32 %v2018, %v2252
        %v2276 = vadd.s32 %v2019, %v2252
        %v2277 = vadd.s32 %v2020, %v2252
        %v2278 = vadd.s32 %v2021, %v2252
        %v2279 = vadd.s32 %v2022, %v2252
        %v2280 = vadd.s32 %v2023, %v2252
        %v2281 = vadd.s32 %v2024, %v2252
        %v2282 = vadd.s32 %v2025, %v2252
        %v2283 = vadd.s32 %v2026, %v2252
        %v2284 = vadd.s32 %v2027, %v2252
        %v2285 = vadd.s32 %v2028, %v2252
        %v2286 = vadd.s32 %v2029, %v2252
        %v2287 = vadd.s32 %v2030, %v2252
        %v2288 = vadd.s32 %v2031, %v2252
        %v2289 = vadd.s32 %v2032, %v2252
        %v2290 = vadd.s32 %v2033, %v2252
        %v2291 = vadd.s32 %v2034, %v2252
        %v2292 = vadd.s32 %v2035, %v2252
        %v2293 = vadd.s32 %v2036, %v2252
        %v2294 = vadd.s32 %v2037, %v2252
        %v2295 = vadd.s32 %v2038, %v2252
        %v2296 = vadd.s32 %v2039, %v2252
        %v2297 = vadd.s32 %v2040, %v2252
        %v2298 = vadd.s32 %v2041, %v2252
        %v2299 = vadd.s32 %v2042, %v2252
        %v2300 = vadd.s32 %v2043, %v2252
        %v2301 = vadd.s32 %v2044, %v2252
        %v2302 = vadd.s32 %v2045, %v2252
        %v2303 = vadd.s32 %v2046, %v2252
        %v2304 = vadd.s32 %v2047, %v2252
        %v2305 = vadd.s32 %v2048, %v2252
        %v2306 = vadd.s32 %v2049, %v2252
        %v2307 = vadd.s32 %v2050, %v2252
        %v2308 = vadd.s32 %v2051, %v2252
        %v2309 = vadd.s32 %v2052, %v2252
        %v2310 = vadd.s32 %v2053, %v2252
        %v2311 = vadd.s32 %v2054, %v2252
        %v2312 = vadd.s32 %v2055, %v2252
        %v2313 = vadd.s32 %v2056, %v2252
        %v2314 = vadd.s32 %v2057, %v2252
        %v2315 = vadd.s32 %v2058, %v2252
        %v2316 = vadd.s32 %v2059, %v2252
        %v2317 = vadd.s32 %v2060, %v2252
        %v2318 = vadd.s32 %v2061, %v2252
        %v2319 = vadd.s32 %v2062, %v2252
        %v2320 = vadd.s32 %v2063, %v2252
        %v2321 = vadd.s32 %v2064, %v2252
        %v2322 = vadd.s32 %v2065, %v2252
        %v2323 = vadd.s32 %v2066, %v2252
        %v2324 = vadd.s32 %v2067, %v2252
        %v2325 = vadd.s32 %v2068, %v2252
        %v2326 = vadd.s32 %v2069, %v2252
        %v2327 = vadd.s32 %v2070, %v2252
        %v2328 = vadd.s32 %v2071, %v2252
        %v2329 = vadd.s32 %v2072, %v2252
        %v2330 = vadd.s32 %v2073, %v2252
        %v2331 = vadd.s32 %v2074, %v2252
        %v2332 = vadd.s32 %v2075, %v2252
        %v2333 = vadd.s32 %v2076, %v2252
        %v2334 = vadd.s32 %v2077, %v2252
        %v2335 = vadd.s32 %v2078, %v2252
        %v2336 = vadd.s32 %v2079, %v2252
        %v2337 = vadd.s32 %v2080, %v2252
        %v2338 = vadd.s32 %v2081, %v2252
        %v2339 = vadd.s32 %v2082, %v2252
        %v2340 = vadd.s32 %v2083, %v2252
        %v2341 = vadd.s32 %v2084, %v2252
        %v2342 = vadd.s32 %v2085, %v2252
        %v2343 = vadd.s32 %v2086, %v2252
        %v2344 = vadd.s32 %v2087, %v2252
        %v2345 = vadd.s32 %v2088, %v2252
        %v2346 = vadd.s32 %v2089, %v2252
        %v2347 = vadd.s32 %v2090, %v2252
        %v2348 = vadd.s32 %v2091, %v2252
        %v2349 = vadd.s32 %v2092, %v2252
        %v2350 = vadd.s32 %v2093, %v2252
        %v2351 = vadd.s32 %v2094, %v2252
        %v2352 = vadd.s32 %v2095, %v2252
        %v2353 = vadd.s32 %v2096, %v2252
        %v2354 = vadd.s32 %v2097, %v2252
        %v2355 = vadd.s32 %v2098, %v2252
        %v2356 = vadd.s32 %v2099, %v2252
        %v2357 = vadd.s32 %v2100, %v2252
        %v2358 = vadd.s32 %v2101, %v2252
        %v2359 = vadd.s32 %v2102, %v2252
        %v2360 = vadd.s32 %v2103, %v2252
        %v2361 = vadd.s32 %v2104, %v2252
        %v2362 = vadd.s32 %v2105, %v2252
        %v2363 = vadd.s32 %v2106, %v2252
        %v2364 = vadd.s32 %v2107, %v2252
        %v2365 = vadd.s32 %v2108, %v2252
        %v2366 = vadd.s32 %v2109, %v2252
        %v2367 = vadd.s32 %v2110, %v2252
        %v2368 = vadd.s32 %v2111, %v2252
        %v2369 = vadd.s32 %v2112, %v2252
        %v2370 = vadd.s32 %v2113, %v2252
        %v2371 = vadd.s32 %v2114, %v2252
        %v2372 = vadd.s32 %v2115, %v2252
        %v2373 = vadd.s32 %v2116, %v2252
        %v2374 = vadd.s32 %v2117, %v2252
        %v2375 = vadd.s32 %v2118, %v2252
        %v2376 = vadd.s32 %v2119, %v2252
        %v2377 = vadd.s32 %v2120, %v2252
        %v2378 = vadd.s32 %v2121, %v2252
        %v2379 = vadd.s32 %v2122, %v2252
        %v2380 = vadd.s32 %v2123, %v2252
        %v2381 = vadd.s32 %v2124, %v2252
        %v2382 = vadd.s32 %v2125, %v2252
        %v2383 = vadd.s32 %v2126, %v2252
        %v2384 = vadd.s32 %v2127, %v2252
        %v2385 = vadd.s32 %v2128, %v2252
        %v2386 = vadd.s32 %v2129, %v2252
        %v2387 = vadd.s32 %v2130, %v2252
        %v2388 = vadd.s32 %v2131, %v2252
        %v2389 = vadd.s32 %v2132, %v2252
        %v2390 = vadd.s32 %v2133, %v2252
        %v2391 = vadd.s32 %v2134, %v2252
        %v2392 = vadd.s32 %v2135, %v2252
        %v2393 = vadd.s32 %v2136, %v2252
        %v2394 = vadd.s32 %v2137, %v2252
        %v2395 = vadd.s32 %v2138, %v2252
        %v2396 = vadd.s32 %v2139, %v2252
        %v2397 = vadd.s32 %v2140, %v2252
        %v2398 = vadd.s32 %v2141, %v2252
        %v2399 = vadd.s32 %v2142, %v2252
        %v2400 = vadd.s32 %v2143, %v2252
        %v2401 = vadd.s32 %v2144, %v2252
        %v2402 = vadd.s32 %v2145, %v2252
        %v2403 = vadd.s32 %v2146, %v2252
        %v2404 = vadd.s32 %v2147, %v2252
        %v2405 = vadd.s32 %v2148, %v2252
        %v2406 = vadd.s32 %v2149, %v2252
        %v2407 = vadd.s32 %v2150, %v2252
        %v2408 = vadd.s32 %v2151, %v2252
        %v2409 = vadd.s32 %v2152, %v2252
        %v2410 = vadd.s32 %v2153, %v2252
        %v2411 = vadd.s32 %v2154, %v2252
        %v2412 = vadd.s32 %v2155, %v2252
        %v2413 = vadd.s32 %v2156, %v2252
        %v2414 = vadd.s32 %v2157, %v2252
        %v2415 = vadd.s32 %v2158, %v2252
        %v2416 = vadd.s32 %v2159, %v2252
        %v2417 = vadd.s32 %v2160, %v2252
        %v2418 = vadd.s32 %v2161, %v2252
        %v2419 = vadd.s32 %v2162, %v2252
        %v2420 = vadd.s32 %v2163, %v2252
        %v2421 = vadd.s32 %v2164, %v2252
        %v2422 = vadd.s32 %v2165, %v2252
        %v2423 = vadd.s32 %v2166, %v2252
        %v2424 = vadd.s32 %v2167, %v2252
        %v2425 = vadd.s32 %v2168, %v2252
        %v2426 = vadd.s32 %v2169, %v2252
        %v2427 = vadd.s32 %v2170, %v2252
        %v2428 = vadd.s32 %v2171, %v2252
        %v2429 = vadd.s32 %v2172, %v2252
        %v2430 = vadd.s32 %v2173, %v2252
        %v2431 = vadd.s32 %v2174, %v2252
        %v2432 = vadd.s32 %v2175, %v2252
        %v2433 = vadd.s32 %v2176, %v2252
        %v2434 = vadd.s32 %v2177, %v2252
        %v2435 = vadd.s32 %v2178, %v2252
        %v2436 = vadd.s32 %v2179, %v2252
        %v2437 = vadd.s32 %v2180, %v2252
        %v2438 = vadd.s32 %v2181, %v2252
        %v2439 = vadd.s32 %v2182, %v2252
        %v2440 = vadd.s32 %v2183, %v2252
        %v2441 = vadd.s32 %v2184, %v2252
        %v2442 = vadd.s32 %v2185, %v2252
        %v2443 = vadd.s32 %v2186, %v2252
        %v2444 = vadd.s32 %v2187, %v2252
        %v2445 = vadd.s32 %v2188, %v2252
        %v2446 = vadd.s32 %v2189, %v2252
        %v2447 = vadd.s32 %v2190, %v2252
        %v2448 = vadd.s32 %v2191, %v2252
        %v2449 = vadd.s32 %v2192, %v2252
        %v2450 = vadd.s32 %v2193, %v2252
        %v2451 = vadd.s32 %v2194, %v2252
        %v2452 = vadd.s32 %v2195, %v2252
        %v2453 = vadd.s32 %v2196, %v2252
        %v2454 = vadd.s32 %v2197, %v2252
        %v2455 = vadd.s32 %v2198, %v2252
        %v2456 = vadd.s32 %v2199, %v2252
        %v2457 = vadd.s32 %v2200, %v2252
        %v2458 = vadd.s32 %v2201, %v2252
        %v2459 = vadd.s32 %v2202, %v2252
        %v2460 = vadd.s32 %v2203, %v2252
        %v2461 = vadd.s32 %v2204, %v2252
        %v2462 = vadd.s32 %v2205, %v2252
        %v2463 = vadd.s32 %v2206, %v2252
        %v2464 = vadd.s32 %v2207, %v2252
        %v2465 = vadd.s32 %v2208, %v2252
        %v2466 = vadd.s32 %v2209, %v2252
        %v2467 = vadd.s32 %v2210, %v2252
        %v2468 = vadd.s32 %v2211, %v2252
        %v2469 = vadd.s32 %v2212, %v2252
        %v2470 = vadd.s32 %v2213, %v2252
        %v2471 = vadd.s32 %v2214, %v2252
        %v2472 = vadd.s32 %v2215, %v2252
        %v2473 = vadd.s32 %v2216, %v2252
        %v2474 = vadd.s32 %v2217, %v2252
        %v2475 = vadd.s32 %v2218, %v2252
        %v2476 = vadd.s32 %v2219, %v2252
        %v2477 = vadd.s32 %v2220, %v2252
        %v2478 = vadd.s32 %v2221, %v2252
        %v2479 = vadd.s32 %v2222, %v2252
        %v2480 = vadd.s32 %v2223, %v2252
        %v2481 = vadd.s32 %v2224, %v2252
        %v2482 = vadd.s32 %v2225, %v2252
        %v2483 = vadd.s32 %v2226, %v2252
        %v2484 = vadd.s32 %v2227, %v2252
        %v2485 = vadd.s32 %v2228, %v2252
        %v2486 = vadd.s32 %v2229, %v2252
        %v2487 = vadd.s32 %v2230, %v2252
        %v2488 = vadd.s32 %v2231, %v2252
        %v2489 = vadd.s32 %v2232, %v2252
        %v2490 = vadd.s32 %v2233, %v2252
        %v2491 = vadd.s32 %v2234, %v2252
        %v2492 = vadd.s32 %v2235, %v2252
        %v2493 = vadd.s32 %v2236, %v2252
        %v2494 = vadd.s32 %v2237, %v2252
        %v2495 = vadd.s32 %v2238, %v2252
        %v2496 = vadd.s32 %v2239, %v2252
        %v2497 = vadd.s32 %v2240, %v2252
        %v2498 = vadd.s32 %v2241, %v2252
        %v2499 = vadd.s32 %v2242, %v2252
        %v2500 = vadd.s32 %v2243, %v2252
        %v2501 = vadd.s32 %v2244, %v2252
        %v2502 = vadd.s32 %v2245, %v2252
        %v2503 = vadd.s32 %v2246, %v2252
        %v2504 = vadd.s32 %v2247, %v2252
        %v2505 = vadd.s32 %v2248, %v2252
        %v2506 = vadd.s32 %v2249, %v2252
        %v2507 = vadd.s32 %v2250, %v2252
        %v2508 = vadd.s32 %v2251, %v2252
        %v2509 = vlaneseq
        %v2510 = vand.u32 %v2509, 127
        %v2511 = vmul.u32 %v2253, 2654435761
        %v2512 = vmul.u32 %v2254, 2654435761
        %v2513 = vmul.u32 %v2255, 2654435761
        %v2514 = vmul.u32 %v2256, 2654435761
        %v2515 = vmul.u32 %v2257, 2654435761
        %v2516 = vmul.u32 %v2258, 2654435761
        %v2517 = vmul.u32 %v2259, 2654435761
        %v2518 = vmul.u32 %v2260, 2654435761
        %v2519 = vmul.u32 %v2261, 2654435761
        %v2520 = vmul.u32 %v2262, 2654435761
        %v2521 = vmul.u32 %v2263, 2654435761
        %v2522 = vmul.u32 %v2264, 2654435761
        %v2523 = vmul.u32 %v2265, 2654435761
        %v2524 = vmul.u32 %v2266, 2654435761
        %v2525 = vmul.u32 %v2267, 2654435761
        %v2526 = vmul.u32 %v2268, 2654435761
        %v2527 = vmul.u32 %v2269, 2654435761
        %v2528 = vmul.u32 %v2270, 2654435761
        %v2529 = vmul.u32 %v2271, 2654435761
        %v2530 = vmul.u32 %v2272, 2654435761
        %v2531 = vmul.u32 %v2273, 2654435761
        %v2532 = vmul.u32 %v2274, 2654435761
        %v2533 = vmul.u32 %v2275, 2654435761
        %v2534 = vmul.u32 %v2276, 2654435761
        %v2535 = vmul.u32 %v2277, 2654435761
        %v2536 = vmul.u32 %v2278, 2654435761
        %v2537 = vmul.u32 %v2279, 2654435761
        %v2538 = vmul.u32 %v2280, 2654435761
        %v2539 = vmul.u32 %v2281, 2654435761
        %v2540 = vmul.u32 %v2282, 2654435761
        %v2541 = vmul.u32 %v2283, 2654435761
        %v2542 = vmul.u32 %v2284, 2654435761
        %v2543 = vmul.u32 %v2285, 2654435761
        %v2544 = vmul.u32 %v2286, 2654435761
        %v2545 = vmul.u32 %v2287, 2654435761
        %v2546 = vmul.u32 %v2288, 2654435761
        %v2547 = vmul.u32 %v2289, 2654435761
        %v2548 = vmul.u32 %v2290, 2654435761
        %v2549 = vmul.u32 %v2291, 2654435761
        %v2550 = vmul.u32 %v2292, 2654435761
        %v2551 = vmul.u32 %v2293, 2654435761
        %v2552 = vmul.u32 %v2294, 2654435761
        %v2553 = vmul.u32 %v2295, 2654435761
        %v2554 = vmul.u32 %v2296, 2654435761
        %v2555 = vmul.u32 %v2297, 2654435761
        %v2556 = vmul.u32 %v2298, 2654435761
        %v2557 = vmul.u32 %v2299, 2654435761
        %v2558 = vmul.u32 %v2300, 2654435761
        %v2559 = vmul.u32 %v2301, 2654435761
        %v2560 = vmul.u32 %v2302, 2654435761
        %v2561 = vmul.u32 %v2303, 2654435761
        %v2562 = vmul.u32 %v2304, 2654435761
        %v2563 = vmul.u32 %v2305, 2654435761
        %v2564 = vmul.u32 %v2306, 2654435761
        %v2565 = vmul.u32 %v2307, 2654435761
        %v2566 = vmul.u32 %v2308, 2654435761
        %v2567 = vmul.u32 %v2309, 2654435761
        %v2568 = vmul.u32 %v2310, 2654435761
        %v2569 = vmul.u32 %v2311, 2654435761
        %v2570 = vmul.u32 %v2312, 2654435761
        %v2571 = vmul.u32 %v2313, 2654435761
        %v2572 = vmul.u32 %v2314, 2654435761
        %v2573 = vmul.u32 %v2315, 2654435761
        %v2574 = vmul.u32 %v2316, 2654435761
        %v2575 = vmul.u32 %v2317, 2654435761
        %v2576 = vmul.u32 %v2318, 2654435761
        %v2577 = vmul.u32 %v2319, 2654435761
        %v2578 = vmul.u32 %v2320, 2654435761
        %v2579 = vmul.u32 %v2321, 2654435761
        %v2580 = vmul.u32 %v2322, 2654435761
        %v2581 = vmul.u32 %v2323, 2654435761
        %v2582 = vmul.u32 %v2324, 2654435761
        %v2583 = vmul.u32 %v2325, 2654435761
        %v2584 = vmul.u32 %v2326, 2654435761
        %v2585 = vmul.u32 %v2327, 2654435761
        %v2586 = vmul.u32 %v2328, 2654435761
        %v2587 = vmul.u32 %v2329, 2654435761
        %v2588 = vmul.u32 %v2330, 2654435761
        %v2589 = vmul.u32 %v2331, 2654435761
        %v2590 = vmul.u32 %v2332, 2654435761
        %v2591 = vmul.u32 %v2333, 2654435761
        %v2592 = vmul.u32 %v2334, 2654435761
        %v2593 = vmul.u32 %v2335, 2654435761
        %v2594 = vmul.u32 %v2336, 2654435761
        %v2595 = vmul.u32 %v2337, 2654435761
        %v2596 = vmul.u32 %v2338, 2654435761
        %v2597 = vmul.u32 %v2339, 2654435761
        %v2598 = vmul.u32 %v2340, 2654435761
        %v2599 = vmul.u32 %v2341, 2654435761
        %v2600 = vmul.u32 %v2342, 2654435761
        %v2601 = vmul.u32 %v2343, 2654435761
        %v2602 = vmul.u32 %v2344, 2654435761
        %v2603 = vmul.u32 %v2345, 2654435761
        %v2604 = vmul.u32 %v2346, 2654435761
        %v2605 = vmul.u32 %v2347, 2654435761
        %v2606 = vmul.u32 %v2348, 2654435761
        %v2607 = vmul.u32 %v2349, 2654435761
        %v2608 = vmul.u32 %v2350, 2654435761
        %v2609 = vmul.u32 %v2351, 2654435761
        %v2610 = vmul.u32 %v2352, 2654435761
        %v2611 = vmul.u32 %v2353, 2654435761
        %v2612 = vmul.u32 %v2354, 2654435761
        %v2613 = vmul.u32 %v2355, 2654435761
        %v2614 = vmul.u32 %v2356, 2654435761
        %v2615 = vmul.u32 %v2357, 2654435761
        %v2616 = vmul.u32 %v2358, 2654435761
        %v2617 = vmul.u32 %v2359, 2654435761
        %v2618 = vmul.u32 %v2360, 2654435761
        %v2619 = vmul.u32 %v2361, 2654435761
        %v2620 = vmul.u32 %v2362, 2654435761
        %v2621 = vmul.u32 %v2363, 2654435761
        %v2622 = vmul.u32 %v2364, 2654435761
        %v2623 = vmul.u32 %v2365, 2654435761
        %v2624 = vmul.u32 %v2366, 2654435761
        %v2625 = vmul.u32 %v2367, 2654435761
        %v2626 = vmul.u32 %v2368, 2654435761
        %v2627 = vmul.u32 %v2369, 2654435761
        %v2628 = vmul.u32 %v2370, 2654435761
        %v2629 = vmul.u32 %v2371, 2654435761
        %v2630 = vmul.u32 %v2372, 2654435761
        %v2631 = vmul.u32 %v2373, 2654435761
        %v2632 = vmul.u32 %v2374, 2654435761
        %v2633 = vmul.u32 %v2375, 2654435761
        %v2634 = vmul.u32 %v2376, 2654435761
        %v2635 = vmul.u32 %v2377, 2654435761
        %v2636 = vmul.u32 %v2378, 2654435761
        %v2637 = vmul.u32 %v2379, 2654435761
        %v2638 = vmul.u32 %v2380, 2654435761
        %v2639 = vmul.u32 %v2381, 2654435761
        %v2640 = vmul.u32 %v2382, 2654435761
        %v2641 = vmul.u32 %v2383, 2654435761
        %v2642 = vmul.u32 %v2384, 2654435761
        %v2643 = vmul.u32 %v2385, 2654435761
        %v2644 = vmul.u32 %v2386, 2654435761
        %v2645 = vmul.u32 %v2387, 2654435761
        %v2646 = vmul.u32 %v2388, 2654435761
        %v2647 = vmul.u32 %v2389, 2654435761
        %v2648 = vmul.u32 %v2390, 2654435761
        %v2649 = vmul.u32 %v2391, 2654435761
        %v2650 = vmul.u32 %v2392, 2654435761
        %v2651 = vmul.u32 %v2393, 2654435761
        %v2652 = vmul.u32 %v2394, 2654435761
        %v2653 = vmul.u32 %v2395, 2654435761
        %v2654 = vmul.u32 %v2396, 2654435761
        %v2655 = vmul.u32 %v2397, 2654435761
        %v2656 = vmul.u32 %v2398, 2654435761
        %v2657 = vmul.u32 %v2399, 2654435761
        %v2658 = vmul.u32 %v2400, 2654435761
        %v2659 = vmul.u32 %v2401, 2654435761
        %v2660 = vmul.u32 %v2402, 2654435761
        %v2661 = vmul.u32 %v2403, 2654435761
        %v2662 = vmul.u32 %v2404, 2654435761
        %v2663 = vmul.u32 %v2405, 2654435761
        %v2664 = vmul.u32 %v2406, 2654435761
        %v2665 = vmul.u32 %v2407, 2654435761
        %v2666 = vmul.u32 %v2408, 2654435761
        %v2667 = vmul.u32 %v2409, 2654435761
        %v2668 = vmul.u32 %v2410, 2654435761
        %v2669 = vmul.u32 %v2411, 2654435761
        %v2670 = vmul.u32 %v2412, 2654435761
        %v2671 = vmul.u32 %v2413, 2654435761
        %v2672 = vmul.u32 %v2414, 2654435761
        %v2673 = vmul.u32 %v2415, 2654435761
        %v2674 = vmul.u32 %v2416, 2654435761
        %v2675 = vmul.u32 %v2417, 2654435761
        %v2676 = vmul.u32 %v2418, 2654435761
        %v2677 = vmul.u32 %v2419, 2654435761
        %v2678 = vmul.u32 %v2420, 2654435761
        %v2679 = vmul.u32 %v2421, 2654435761
        %v2680 = vmul.u32 %v2422, 2654435761
        %v2681 = vmul.u32 %v2423, 2654435761
        %v2682 = vmul.u32 %v2424, 2654435761
        %v2683 = vmul.u32 %v2425, 2654435761
        %v2684 = vmul.u32 %v2426, 2654435761
        %v2685 = vmul.u32 %v2427, 2654435761
        %v2686 = vmul.u32 %v2428, 2654435761
        %v2687 = vmul.u32 %v2429, 2654435761
        %v2688 = vmul.u32 %v2430, 2654435761
        %v2689 = vmul.u32 %v2431, 2654435761
        %v2690 = vmul.u32 %v2432, 2654435761
        %v2691 = vmul.u32 %v2433, 2654435761
        %v2692 = vmul.u32 %v2434, 2654435761
        %v2693 = vmul.u32 %v2435, 2654435761
        %v2694 = vmul.u32 %v2436, 2654435761
        %v2695 = vmul.u32 %v2437, 2654435761
        %v2696 = vmul.u32 %v2438, 2654435761
        %v2697 = vmul.u32 %v2439, 2654435761
        %v2698 = vmul.u32 %v2440, 2654435761
        %v2699 = vmul.u32 %v2441, 2654435761
        %v2700 = vmul.u32 %v2442, 2654435761
        %v2701 = vmul.u32 %v2443, 2654435761
        %v2702 = vmul.u32 %v2444, 2654435761
        %v2703 = vmul.u32 %v2445, 2654435761
        %v2704 = vmul.u32 %v2446, 2654435761
        %v2705 = vmul.u32 %v2447, 2654435761
        %v2706 = vmul.u32 %v2448, 2654435761
        %v2707 = vmul.u32 %v2449, 2654435761
        %v2708 = vmul.u32 %v2450, 2654435761
        %v2709 = vmul.u32 %v2451, 2654435761
        %v2710 = vmul.u32 %v2452, 2654435761
        %v2711 = vmul.u32 %v2453, 2654435761
        %v2712 = vmul.u32 %v2454, 2654435761
        %v2713 = vmul.u32 %v2455, 2654435761
        %v2714 = vmul.u32 %v2456, 2654435761
        %v2715 = vmul.u32 %v2457, 2654435761
        %v2716 = vmul.u32 %v2458, 2654435761
        %v2717 = vmul.u32 %v2459, 2654435761
        %v2718 = vmul.u32 %v2460, 2654435761
        %v2719 = vmul.u32 %v2461, 2654435761
        %v2720 = vmul.u32 %v2462, 2654435761
        %v2721 = vmul.u32 %v2463, 2654435761
        %v2722 = vmul.u32 %v2464, 2654435761
        %v2723 = vmul.u32 %v2465, 2654435761
        %v2724 = vmul.u32 %v2466, 2654435761
        %v2725 = vmul.u32 %v2467, 2654435761
        %v2726 = vmul.u32 %v2468, 2654435761
        %v2727 = vmul.u32 %v2469, 2654435761
        %v2728 = vmul.u32 %v2470, 2654435761
        %v2729 = vmul.u32 %v2471, 2654435761
        %v2730 = vmul.u32 %v2472, 2654435761
        %v2731 = vmul.u32 %v2473, 2654435761
        %v2732 = vmul.u32 %v2474, 2654435761
        %v2733 = vmul.u32 %v2475, 2654435761
        %v2734 = vmul.u32 %v2476, 2654435761
        %v2735 = vmul.u32 %v2477, 2654435761
        %v2736 = vmul.u32 %v2478, 2654435761
        %v2737 = vmul.u32 %v2479, 2654435761
        %v2738 = vmul.u32 %v2480, 2654435761
        %v2739 = vmul.u32 %v2481, 2654435761
        %v2740 = vmul.u32 %v2482, 2654435761
        %v2741 = vmul.u32 %v2483, 2654435761
        %v2742 = vmul.u32 %v2484, 2654435761
        %v2743 = vmul.u32 %v2485, 2654435761
        %v2744 = vmul.u32 %v2486, 2654435761
        %v2745 = vmul.u32 %v2487, 2654435761
        %v2746 = vmul.u32 %v2488, 2654435761
        %v2747 = vmul.u32 %v2489, 2654435761
        %v2748 = vmul.u32 %v2490, 2654435761
        %v2749 = vmul.u32 %v2491, 2654435761
        %v2750 = vmul.u32 %v2492, 2654435761
        %v2751 = vmul.u32 %v2493, 2654435761
        %v2752 = vmul.u32 %v2494, 2654435761
        %v2753 = vmul.u32 %v2495, 2654435761
        %v2754 = vmul.u32 %v2496, 2654435761
        %v2755 = vmul.u32 %v2497, 2654435761
        %v2756 = vmul.u32 %v2498, 2654435761
        %v2757 = vmul.u32 %v2499, 2654435761
        %v2758 = vmul.u32 %v2500, 2654435761
        %v2759 = vmul.u32 %v2501, 2654435761
        %v2760 = vmul.u32 %v2502, 2654435761
        %v2761 = vmul.u32 %v2503, 2654435761
        %v2762 = vmul.u32 %v2504, 2654435761
        %v2763 = vmul.u32 %v2505, 2654435761
        %v2764 = vmul.u32 %v2506, 2654435761
        %v2765 = vmul.u32 %v2507, 2654435761
        %v2766 = vmul.u32 %v2508, 2654435761
        %v2767 = vmul.u32 %v2510, 2246822519
        %v2768 = vadd.s32 %v2511, %v2767
        %v2769 = vadd.s32 %v2512, %v2767
        %v2770 = vadd.s32 %v2513, %v2767
        %v2771 = vadd.s32 %v2514, %v2767
        %v2772 = vadd.s32 %v2515, %v2767
        %v2773 = vadd.s32 %v2516, %v2767
        %v2774 = vadd.s32 %v2517, %v2767
        %v2775 = vadd.s32 %v2518, %v2767
        %v2776 = vadd.s32 %v2519, %v2767
        %v2777 = vadd.s32 %v2520, %v2767
        %v2778 = vadd.s32 %v2521, %v2767
        %v2779 = vadd.s32 %v2522, %v2767
        %v2780 = vadd.s32 %v2523, %v2767
        %v2781 = vadd.s32 %v2524, %v2767
        %v2782 = vadd.s32 %v2525, %v2767
        %v2783 = vadd.s32 %v2526, %v2767
        %v2784 = vadd.s32 %v2527, %v2767
        %v2785 = vadd.s32 %v2528, %v2767
        %v2786 = vadd.s32 %v2529, %v2767
        %v2787 = vadd.s32 %v2530, %v2767
        %v2788 = vadd.s32 %v2531, %v2767
        %v2789 = vadd.s32 %v2532, %v2767
        %v2790 = vadd.s32 %v2533, %v2767
        %v2791 = vadd.s32 %v2534, %v2767
        %v2792 = vadd.s32 %v2535, %v2767
        %v2793 = vadd.s32 %v2536, %v2767
        %v2794 = vadd.s32 %v2537, %v2767
        %v2795 = vadd.s32 %v2538, %v2767
        %v2796 = vadd.s32 %v2539, %v2767
        %v2797 = vadd.s32 %v2540, %v2767
        %v2798 = vadd.s32 %v2541, %v2767
        %v2799 = vadd.s32 %v2542, %v2767
        %v2800 = vadd.s32 %v2543, %v2767
        %v2801 = vadd.s32 %v2544, %v2767
        %v2802 = vadd.s32 %v2545, %v2767
        %v2803 = vadd.s32 %v2546, %v2767
        %v2804 = vadd.s32 %v2547, %v2767
        %v2805 = vadd.s32 %v2548, %v2767
        %v2806 = vadd.s32 %v2549, %v2767
        %v2807 = vadd.s32 %v2550, %v2767
        %v2808 = vadd.s32 %v2551, %v2767
        %v2809 = vadd.s32 %v2552, %v2767
        %v2810 = vadd.s32 %v2553, %v2767
        %v2811 = vadd.s32 %v2554, %v2767
        %v2812 = vadd.s32 %v2555, %v2767
        %v2813 = vadd.s32 %v2556, %v2767
        %v2814 = vadd.s32 %v2557, %v2767
        %v2815 = vadd.s32 %v2558, %v2767
        %v2816 = vadd.s32 %v2559, %v2767
        %v2817 = vadd.s32 %v2560, %v2767
        %v2818 = vadd.s32 %v2561, %v2767
        %v2819 = vadd.s32 %v2562, %v2767
        %v2820 = vadd.s32 %v2563, %v2767
        %v2821 = vadd.s32 %v2564, %v2767
        %v2822 = vadd.s32 %v2565, %v2767
        %v2823 = vadd.s32 %v2566, %v2767
        %v2824 = vadd.s32 %v2567, %v2767
        %v2825 = vadd.s32 %v2568, %v2767
        %v2826 = vadd.s32 %v2569, %v2767
        %v2827 = vadd.s32 %v2570, %v2767
        %v2828 = vadd.s32 %v2571, %v2767
        %v2829 = vadd.s32 %v2572, %v2767
        %v2830 = vadd.s32 %v2573, %v2767
        %v2831 = vadd.s32 %v2574, %v2767
        %v2832 = vadd.s32 %v2575, %v2767
        %v2833 = vadd.s32 %v2576, %v2767
        %v2834 = vadd.s32 %v2577, %v2767
        %v2835 = vadd.s32 %v2578, %v2767
        %v2836 = vadd.s32 %v2579, %v2767
        %v2837 = vadd.s32 %v2580, %v2767
        %v2838 = vadd.s32 %v2581, %v2767
        %v2839 = vadd.s32 %v2582, %v2767
        %v2840 = vadd.s32 %v2583, %v2767
        %v2841 = vadd.s32 %v2584, %v2767
        %v2842 = vadd.s32 %v2585, %v2767
        %v2843 = vadd.s32 %v2586, %v2767
        %v2844 = vadd.s32 %v2587, %v2767
        %v2845 = vadd.s32 %v2588, %v2767
        %v2846 = vadd.s32 %v2589, %v2767
        %v2847 = vadd.s32 %v2590, %v2767
        %v2848 = vadd.s32 %v2591, %v2767
        %v2849 = vadd.s32 %v2592, %v2767
        %v2850 = vadd.s32 %v2593, %v2767
        %v2851 = vadd.s32 %v2594, %v2767
        %v2852 = vadd.s32 %v2595, %v2767
        %v2853 = vadd.s32 %v2596, %v2767
        %v2854 = vadd.s32 %v2597, %v2767
        %v2855 = vadd.s32 %v2598, %v2767
        %v2856 = vadd.s32 %v2599, %v2767
        %v2857 = vadd.s32 %v2600, %v2767
        %v2858 = vadd.s32 %v2601, %v2767
        %v2859 = vadd.s32 %v2602, %v2767
        %v2860 = vadd.s32 %v2603, %v2767
        %v2861 = vadd.s32 %v2604, %v2767
        %v2862 = vadd.s32 %v2605, %v2767
        %v2863 = vadd.s32 %v2606, %v2767
        %v2864 = vadd.s32 %v2607, %v2767
        %v2865 = vadd.s32 %v2608, %v2767
        %v2866 = vadd.s32 %v2609, %v2767
        %v2867 = vadd.s32 %v2610, %v2767
        %v2868 = vadd.s32 %v2611, %v2767
        %v2869 = vadd.s32 %v2612, %v2767
        %v2870 = vadd.s32 %v2613, %v2767
        %v2871 = vadd.s32 %v2614, %v2767
        %v2872 = vadd.s32 %v2615, %v2767
        %v2873 = vadd.s32 %v2616, %v2767
        %v2874 = vadd.s32 %v2617, %v2767
        %v2875 = vadd.s32 %v2618, %v2767
        %v2876 = vadd.s32 %v2619, %v2767
        %v2877 = vadd.s32 %v2620, %v2767
        %v2878 = vadd.s32 %v2621, %v2767
        %v2879 = vadd.s32 %v2622, %v2767
        %v2880 = vadd.s32 %v2623, %v2767
        %v2881 = vadd.s32 %v2624, %v2767
        %v2882 = vadd.s32 %v2625, %v2767
        %v2883 = vadd.s32 %v2626, %v2767
        %v2884 = vadd.s32 %v2627, %v2767
        %v2885 = vadd.s32 %v2628, %v2767
        %v2886 = vadd.s32 %v2629, %v2767
        %v2887 = vadd.s32 %v2630, %v2767
        %v2888 = vadd.s32 %v2631, %v2767
        %v2889 = vadd.s32 %v2632, %v2767
        %v2890 = vadd.s32 %v2633, %v2767
        %v2891 = vadd.s32 %v2634, %v2767
        %v2892 = vadd.s32 %v2635, %v2767
        %v2893 = vadd.s32 %v2636, %v2767
        %v2894 = vadd.s32 %v2637, %v2767
        %v2895 = vadd.s32 %v2638, %v2767
        %v2896 = vadd.s32 %v2639, %v2767
        %v2897 = vadd.s32 %v2640, %v2767
        %v2898 = vadd.s32 %v2641, %v2767
        %v2899 = vadd.s32 %v2642, %v2767
        %v2900 = vadd.s32 %v2643, %v2767
        %v2901 = vadd.s32 %v2644, %v2767
        %v2902 = vadd.s32 %v2645, %v2767
        %v2903 = vadd.s32 %v2646, %v2767
        %v2904 = vadd.s32 %v2647, %v2767
        %v2905 = vadd.s32 %v2648, %v2767
        %v2906 = vadd.s32 %v2649, %v2767
        %v2907 = vadd.s32 %v2650, %v2767
        %v2908 = vadd.s32 %v2651, %v2767
        %v2909 = vadd.s32 %v2652, %v2767
        %v2910 = vadd.s32 %v2653, %v2767
        %v2911 = vadd.s32 %v2654, %v2767
        %v2912 = vadd.s32 %v2655, %v2767
        %v2913 = vadd.s32 %v2656, %v2767
        %v2914 = vadd.s32 %v2657, %v2767
        %v2915 = vadd.s32 %v2658, %v2767
        %v2916 = vadd.s32 %v2659, %v2767
        %v2917 = vadd.s32 %v2660, %v2767
        %v2918 = vadd.s32 %v2661, %v2767
        %v2919 = vadd.s32 %v2662, %v2767
        %v2920 = vadd.s32 %v2663, %v2767
        %v2921 = vadd.s32 %v2664, %v2767
        %v2922 = vadd.s32 %v2665, %v2767
        %v2923 = vadd.s32 %v2666, %v2767
        %v2924 = vadd.s32 %v2667, %v2767
        %v2925 = vadd.s32 %v2668, %v2767
        %v2926 = vadd.s32 %v2669, %v2767
        %v2927 = vadd.s32 %v2670, %v2767
        %v2928 = vadd.s32 %v2671, %v2767
        %v2929 = vadd.s32 %v2672, %v2767
        %v2930 = vadd.s32 %v2673, %v2767
        %v2931 = vadd.s32 %v2674, %v2767
        %v2932 = vadd.s32 %v2675, %v2767
        %v2933 = vadd.s32 %v2676, %v2767
        %v2934 = vadd.s32 %v2677, %v2767
        %v2935 = vadd.s32 %v2678, %v2767
        %v2936 = vadd.s32 %v2679, %v2767
        %v2937 = vadd.s32 %v2680, %v2767
        %v2938 = vadd.s32 %v2681, %v2767
        %v2939 = vadd.s32 %v2682, %v2767
        %v2940 = vadd.s32 %v2683, %v2767
        %v2941 = vadd.s32 %v2684, %v2767
        %v2942 = vadd.s32 %v2685, %v2767
        %v2943 = vadd.s32 %v2686, %v2767
        %v2944 = vadd.s32 %v2687, %v2767
        %v2945 = vadd.s32 %v2688, %v2767
        %v2946 = vadd.s32 %v2689, %v2767
        %v2947 = vadd.s32 %v2690, %v2767
        %v2948 = vadd.s32 %v2691, %v2767
        %v2949 = vadd.s32 %v2692, %v2767
        %v2950 = vadd.s32 %v2693, %v2767
        %v2951 = vadd.s32 %v2694, %v2767
        %v2952 = vadd.s32 %v2695, %v2767
        %v2953 = vadd.s32 %v2696, %v2767
        %v2954 = vadd.s32 %v2697, %v2767
        %v2955 = vadd.s32 %v2698, %v2767
        %v2956 = vadd.s32 %v2699, %v2767
        %v2957 = vadd.s32 %v2700, %v2767
        %v2958 = vadd.s32 %v2701, %v2767
        %v2959 = vadd.s32 %v2702, %v2767
        %v2960 = vadd.s32 %v2703, %v2767
        %v2961 = vadd.s32 %v2704, %v2767
        %v2962 = vadd.s32 %v2705, %v2767
        %v2963 = vadd.s32 %v2706, %v2767
        %v2964 = vadd.s32 %v2707, %v2767
        %v2965 = vadd.s32 %v2708, %v2767
        %v2966 = vadd.s32 %v2709, %v2767
        %v2967 = vadd.s32 %v2710, %v2767
        %v2968 = vadd.s32 %v2711, %v2767
        %v2969 = vadd.s32 %v2712, %v2767
        %v2970 = vadd.s32 %v2713, %v2767
        %v2971 = vadd.s32 %v2714, %v2767
        %v2972 = vadd.s32 %v2715, %v2767
        %v2973 = vadd.s32 %v2716, %v2767
        %v2974 = vadd.s32 %v2717, %v2767
        %v2975 = vadd.s32 %v2718, %v2767
        %v2976 = vadd.s32 %v2719, %v2767
        %v2977 = vadd.s32 %v2720, %v2767
        %v2978 = vadd.s32 %v2721, %v2767
        %v2979 = vadd.s32 %v2722, %v2767
        %v2980 = vadd.s32 %v2723, %v2767
        %v2981 = vadd.s32 %v2724, %v2767
        %v2982 = vadd.s32 %v2725, %v2767
        %v2983 = vadd.s32 %v2726, %v2767
        %v2984 = vadd.s32 %v2727, %v2767
        %v2985 = vadd.s32 %v2728, %v2767
        %v2986 = vadd.s32 %v2729, %v2767
        %v2987 = vadd.s32 %v2730, %v2767
        %v2988 = vadd.s32 %v2731, %v2767
        %v2989 = vadd.s32 %v2732, %v2767
        %v2990 = vadd.s32 %v2733, %v2767
        %v2991 = vadd.s32 %v2734, %v2767
        %v2992 = vadd.s32 %v2735, %v2767
        %v2993 = vadd.s32 %v2736, %v2767
        %v2994 = vadd.s32 %v2737, %v2767
        %v2995 = vadd.s32 %v2738, %v2767
        %v2996 = vadd.s32 %v2739, %v2767
        %v2997 = vadd.s32 %v2740, %v2767
        %v2998 = vadd.s32 %v2741, %v2767
        %v2999 = vadd.s32 %v2742, %v2767
        %v3000 = vadd.s32 %v2743, %v2767
        %v3001 = vadd.s32 %v2744, %v2767
        %v3002 = vadd.s32 %v2745, %v2767
        %v3003 = vadd.s32 %v2746, %v2767
        %v3004 = vadd.s32 %v2747, %v2767
        %v3005 = vadd.s32 %v2748, %v2767
        %v3006 = vadd.s32 %v2749, %v2767
        %v3007 = vadd.s32 %v2750, %v2767
        %v3008 = vadd.s32 %v2751, %v2767
        %v3009 = vadd.s32 %v2752, %v2767
        %v3010 = vadd.s32 %v2753, %v2767
        %v3011 = vadd.s32 %v2754, %v2767
        %v3012 = vadd.s32 %v2755, %v2767
        %v3013 = vadd.s32 %v2756, %v2767
        %v3014 = vadd.s32 %v2757, %v2767
        %v3015 = vadd.s32 %v2758, %v2767
        %v3016 = vadd.s32 %v2759, %v2767
        %v3017 = vadd.s32 %v2760, %v2767
        %v3018 = vadd.s32 %v2761, %v2767
        %v3019 = vadd.s32 %v2762, %v2767
        %v3020 = vadd.s32 %v2763, %v2767
        %v3021 = vadd.s32 %v2764, %v2767
        %v3022 = vadd.s32 %v2765, %v2767
        %v3023 = vadd.s32 %v2766, %v2767
        %v3024 = vxor.u32 %v2768, 2808654182
        %v3025 = vxor.u32 %v2769, 2808654182
        %v3026 = vxor.u32 %v2770, 2808654182
        %v3027 = vxor.u32 %v2771, 2808654182
        %v3028 = vxor.u32 %v2772, 2808654182
        %v3029 = vxor.u32 %v2773, 2808654182
        %v3030 = vxor.u32 %v2774, 2808654182
        %v3031 = vxor.u32 %v2775, 2808654182
        %v3032 = vxor.u32 %v2776, 2808654182
        %v3033 = vxor.u32 %v2777, 2808654182
        %v3034 = vxor.u32 %v2778, 2808654182
        %v3035 = vxor.u32 %v2779, 2808654182
        %v3036 = vxor.u32 %v2780, 2808654182
        %v3037 = vxor.u32 %v2781, 2808654182
        %v3038 = vxor.u32 %v2782, 2808654182
        %v3039 = vxor.u32 %v2783, 2808654182
        %v3040 = vxor.u32 %v2784, 2808654182
        %v3041 = vxor.u32 %v2785, 2808654182
        %v3042 = vxor.u32 %v2786, 2808654182
        %v3043 = vxor.u32 %v2787, 2808654182
        %v3044 = vxor.u32 %v2788, 2808654182
        %v3045 = vxor.u32 %v2789, 2808654182
        %v3046 = vxor.u32 %v2790, 2808654182
        %v3047 = vxor.u32 %v2791, 2808654182
        %v3048 = vxor.u32 %v2792, 2808654182
        %v3049 = vxor.u32 %v2793, 2808654182
        %v3050 = vxor.u32 %v2794, 2808654182
        %v3051 = vxor.u32 %v2795, 2808654182
        %v3052 = vxor.u32 %v2796, 2808654182
        %v3053 = vxor.u32 %v2797, 2808654182
        %v3054 = vxor.u32 %v2798, 2808654182
        %v3055 = vxor.u32 %v2799, 2808654182
        %v3056 = vxor.u32 %v2800, 2808654182
        %v3057 = vxor.u32 %v2801, 2808654182
        %v3058 = vxor.u32 %v2802, 2808654182
        %v3059 = vxor.u32 %v2803, 2808654182
        %v3060 = vxor.u32 %v2804, 2808654182
        %v3061 = vxor.u32 %v2805, 2808654182
        %v3062 = vxor.u32 %v2806, 2808654182
        %v3063 = vxor.u32 %v2807, 2808654182
        %v3064 = vxor.u32 %v2808, 2808654182
        %v3065 = vxor.u32 %v2809, 2808654182
        %v3066 = vxor.u32 %v2810, 2808654182
        %v3067 = vxor.u32 %v2811, 2808654182
        %v3068 = vxor.u32 %v2812, 2808654182
        %v3069 = vxor.u32 %v2813, 2808654182
        %v3070 = vxor.u32 %v2814, 2808654182
        %v3071 = vxor.u32 %v2815, 2808654182
        %v3072 = vxor.u32 %v2816, 2808654182
        %v3073 = vxor.u32 %v2817, 2808654182
        %v3074 = vxor.u32 %v2818, 2808654182
        %v3075 = vxor.u32 %v2819, 2808654182
        %v3076 = vxor.u32 %v2820, 2808654182
        %v3077 = vxor.u32 %v2821, 2808654182
        %v3078 = vxor.u32 %v2822, 2808654182
        %v3079 = vxor.u32 %v2823, 2808654182
        %v3080 = vxor.u32 %v2824, 2808654182
        %v3081 = vxor.u32 %v2825, 2808654182
        %v3082 = vxor.u32 %v2826, 2808654182
        %v3083 = vxor.u32 %v2827, 2808654182
        %v3084 = vxor.u32 %v2828, 2808654182
        %v3085 = vxor.u32 %v2829, 2808654182
        %v3086 = vxor.u32 %v2830, 2808654182
        %v3087 = vxor.u32 %v2831, 2808654182
        %v3088 = vxor.u32 %v2832, 2808654182
        %v3089 = vxor.u32 %v2833, 2808654182
        %v3090 = vxor.u32 %v2834, 2808654182
        %v3091 = vxor.u32 %v2835, 2808654182
        %v3092 = vxor.u32 %v2836, 2808654182
        %v3093 = vxor.u32 %v2837, 2808654182
        %v3094 = vxor.u32 %v2838, 2808654182
        %v3095 = vxor.u32 %v2839, 2808654182
        %v3096 = vxor.u32 %v2840, 2808654182
        %v3097 = vxor.u32 %v2841, 2808654182
        %v3098 = vxor.u32 %v2842, 2808654182
        %v3099 = vxor.u32 %v2843, 2808654182
        %v3100 = vxor.u32 %v2844, 2808654182
        %v3101 = vxor.u32 %v2845, 2808654182
        %v3102 = vxor.u32 %v2846, 2808654182
        %v3103 = vxor.u32 %v2847, 2808654182
        %v3104 = vxor.u32 %v2848, 2808654182
        %v3105 = vxor.u32 %v2849, 2808654182
        %v3106 = vxor.u32 %v2850, 2808654182
        %v3107 = vxor.u32 %v2851, 2808654182
        %v3108 = vxor.u32 %v2852, 2808654182
        %v3109 = vxor.u32 %v2853, 2808654182
        %v3110 = vxor.u32 %v2854, 2808654182
        %v3111 = vxor.u32 %v2855, 2808654182
        %v3112 = vxor.u32 %v2856, 2808654182
        %v3113 = vxor.u32 %v2857, 2808654182
        %v3114 = vxor.u32 %v2858, 2808654182
        %v3115 = vxor.u32 %v2859, 2808654182
        %v3116 = vxor.u32 %v2860, 2808654182
        %v3117 = vxor.u32 %v2861, 2808654182
        %v3118 = vxor.u32 %v2862, 2808654182
        %v3119 = vxor.u32 %v2863, 2808654182
        %v3120 = vxor.u32 %v2864, 2808654182
        %v3121 = vxor.u32 %v2865, 2808654182
        %v3122 = vxor.u32 %v2866, 2808654182
        %v3123 = vxor.u32 %v2867, 2808654182
        %v3124 = vxor.u32 %v2868, 2808654182
        %v3125 = vxor.u32 %v2869, 2808654182
        %v3126 = vxor.u32 %v2870, 2808654182
        %v3127 = vxor.u32 %v2871, 2808654182
        %v3128 = vxor.u32 %v2872, 2808654182
        %v3129 = vxor.u32 %v2873, 2808654182
        %v3130 = vxor.u32 %v2874, 2808654182
        %v3131 = vxor.u32 %v2875, 2808654182
        %v3132 = vxor.u32 %v2876, 2808654182
        %v3133 = vxor.u32 %v2877, 2808654182
        %v3134 = vxor.u32 %v2878, 2808654182
        %v3135 = vxor.u32 %v2879, 2808654182
        %v3136 = vxor.u32 %v2880, 2808654182
        %v3137 = vxor.u32 %v2881, 2808654182
        %v3138 = vxor.u32 %v2882, 2808654182
        %v3139 = vxor.u32 %v2883, 2808654182
        %v3140 = vxor.u32 %v2884, 2808654182
        %v3141 = vxor.u32 %v2885, 2808654182
        %v3142 = vxor.u32 %v2886, 2808654182
        %v3143 = vxor.u32 %v2887, 2808654182
        %v3144 = vxor.u32 %v2888, 2808654182
        %v3145 = vxor.u32 %v2889, 2808654182
        %v3146 = vxor.u32 %v2890, 2808654182
        %v3147 = vxor.u32 %v2891, 2808654182
        %v3148 = vxor.u32 %v2892, 2808654182
        %v3149 = vxor.u32 %v2893, 2808654182
        %v3150 = vxor.u32 %v2894, 2808654182
        %v3151 = vxor.u32 %v2895, 2808654182
        %v3152 = vxor.u32 %v2896, 2808654182
        %v3153 = vxor.u32 %v2897, 2808654182
        %v3154 = vxor.u32 %v2898, 2808654182
        %v3155 = vxor.u32 %v2899, 2808654182
        %v3156 = vxor.u32 %v2900, 2808654182
        %v3157 = vxor.u32 %v2901, 2808654182
        %v3158 = vxor.u32 %v2902, 2808654182
        %v3159 = vxor.u32 %v2903, 2808654182
        %v3160 = vxor.u32 %v2904, 2808654182
        %v3161 = vxor.u32 %v2905, 2808654182
        %v3162 = vxor.u32 %v2906, 2808654182
        %v3163 = vxor.u32 %v2907, 2808654182
        %v3164 = vxor.u32 %v2908, 2808654182
        %v3165 = vxor.u32 %v2909, 2808654182
        %v3166 = vxor.u32 %v2910, 2808654182
        %v3167 = vxor.u32 %v2911, 2808654182
        %v3168 = vxor.u32 %v2912, 2808654182
        %v3169 = vxor.u32 %v2913, 2808654182
        %v3170 = vxor.u32 %v2914, 2808654182
        %v3171 = vxor.u32 %v2915, 2808654182
        %v3172 = vxor.u32 %v2916, 2808654182
        %v3173 = vxor.u32 %v2917, 2808654182
        %v3174 = vxor.u32 %v2918, 2808654182
        %v3175 = vxor.u32 %v2919, 2808654182
        %v3176 = vxor.u32 %v2920, 2808654182
        %v3177 = vxor.u32 %v2921, 2808654182
        %v3178 = vxor.u32 %v2922, 2808654182
        %v3179 = vxor.u32 %v2923, 2808654182
        %v3180 = vxor.u32 %v2924, 2808654182
        %v3181 = vxor.u32 %v2925, 2808654182
        %v3182 = vxor.u32 %v2926, 2808654182
        %v3183 = vxor.u32 %v2927, 2808654182
        %v3184 = vxor.u32 %v2928, 2808654182
        %v3185 = vxor.u32 %v2929, 2808654182
        %v3186 = vxor.u32 %v2930, 2808654182
        %v3187 = vxor.u32 %v2931, 2808654182
        %v3188 = vxor.u32 %v2932, 2808654182
        %v3189 = vxor.u32 %v2933, 2808654182
        %v3190 = vxor.u32 %v2934, 2808654182
        %v3191 = vxor.u32 %v2935, 2808654182
        %v3192 = vxor.u32 %v2936, 2808654182
        %v3193 = vxor.u32 %v2937, 2808654182
        %v3194 = vxor.u32 %v2938, 2808654182
        %v3195 = vxor.u32 %v2939, 2808654182
        %v3196 = vxor.u32 %v2940, 2808654182
        %v3197 = vxor.u32 %v2941, 2808654182
        %v3198 = vxor.u32 %v2942, 2808654182
        %v3199 = vxor.u32 %v2943, 2808654182
        %v3200 = vxor.u32 %v2944, 2808654182
        %v3201 = vxor.u32 %v2945, 2808654182
        %v3202 = vxor.u32 %v2946, 2808654182
        %v3203 = vxor.u32 %v2947, 2808654182
        %v3204 = vxor.u32 %v2948, 2808654182
        %v3205 = vxor.u32 %v2949, 2808654182
        %v3206 = vxor.u32 %v2950, 2808654182
        %v3207 = vxor.u32 %v2951, 2808654182
        %v3208 = vxor.u32 %v2952, 2808654182
        %v3209 = vxor.u32 %v2953, 2808654182
        %v3210 = vxor.u32 %v2954, 2808654182
        %v3211 = vxor.u32 %v2955, 2808654182
        %v3212 = vxor.u32 %v2956, 2808654182
        %v3213 = vxor.u32 %v2957, 2808654182
        %v3214 = vxor.u32 %v2958, 2808654182
        %v3215 = vxor.u32 %v2959, 2808654182
        %v3216 = vxor.u32 %v2960, 2808654182
        %v3217 = vxor.u32 %v2961, 2808654182
        %v3218 = vxor.u32 %v2962, 2808654182
        %v3219 = vxor.u32 %v2963, 2808654182
        %v3220 = vxor.u32 %v2964, 2808654182
        %v3221 = vxor.u32 %v2965, 2808654182
        %v3222 = vxor.u32 %v2966, 2808654182
        %v3223 = vxor.u32 %v2967, 2808654182
        %v3224 = vxor.u32 %v2968, 2808654182
        %v3225 = vxor.u32 %v2969, 2808654182
        %v3226 = vxor.u32 %v2970, 2808654182
        %v3227 = vxor.u32 %v2971, 2808654182
        %v3228 = vxor.u32 %v2972, 2808654182
        %v3229 = vxor.u32 %v2973, 2808654182
        %v3230 = vxor.u32 %v2974, 2808654182
        %v3231 = vxor.u32 %v2975, 2808654182
        %v3232 = vxor.u32 %v2976, 2808654182
        %v3233 = vxor.u32 %v2977, 2808654182
        %v3234 = vxor.u32 %v2978, 2808654182
        %v3235 = vxor.u32 %v2979, 2808654182
        %v3236 = vxor.u32 %v2980, 2808654182
        %v3237 = vxor.u32 %v2981, 2808654182
        %v3238 = vxor.u32 %v2982, 2808654182
        %v3239 = vxor.u32 %v2983, 2808654182
        %v3240 = vxor.u32 %v2984, 2808654182
        %v3241 = vxor.u32 %v2985, 2808654182
        %v3242 = vxor.u32 %v2986, 2808654182
        %v3243 = vxor.u32 %v2987, 2808654182
        %v3244 = vxor.u32 %v2988, 2808654182
        %v3245 = vxor.u32 %v2989, 2808654182
        %v3246 = vxor.u32 %v2990, 2808654182
        %v3247 = vxor.u32 %v2991, 2808654182
        %v3248 = vxor.u32 %v2992, 2808654182
        %v3249 = vxor.u32 %v2993, 2808654182
        %v3250 = vxor.u32 %v2994, 2808654182
        %v3251 = vxor.u32 %v2995, 2808654182
        %v3252 = vxor.u32 %v2996, 2808654182
        %v3253 = vxor.u32 %v2997, 2808654182
        %v3254 = vxor.u32 %v2998, 2808654182
        %v3255 = vxor.u32 %v2999, 2808654182
        %v3256 = vxor.u32 %v3000, 2808654182
        %v3257 = vxor.u32 %v3001, 2808654182
        %v3258 = vxor.u32 %v3002, 2808654182
        %v3259 = vxor.u32 %v3003, 2808654182
        %v3260 = vxor.u32 %v3004, 2808654182
        %v3261 = vxor.u32 %v3005, 2808654182
        %v3262 = vxor.u32 %v3006, 2808654182
        %v3263 = vxor.u32 %v3007, 2808654182
        %v3264 = vxor.u32 %v3008, 2808654182
        %v3265 = vxor.u32 %v3009, 2808654182
        %v3266 = vxor.u32 %v3010, 2808654182
        %v3267 = vxor.u32 %v3011, 2808654182
        %v3268 = vxor.u32 %v3012, 2808654182
        %v3269 = vxor.u32 %v3013, 2808654182
        %v3270 = vxor.u32 %v3014, 2808654182
        %v3271 = vxor.u32 %v3015, 2808654182
        %v3272 = vxor.u32 %v3016, 2808654182
        %v3273 = vxor.u32 %v3017, 2808654182
        %v3274 = vxor.u32 %v3018, 2808654182
        %v3275 = vxor.u32 %v3019, 2808654182
        %v3276 = vxor.u32 %v3020, 2808654182
        %v3277 = vxor.u32 %v3021, 2808654182
        %v3278 = vxor.u32 %v3022, 2808654182
        %v3279 = vxor.u32 %v3023, 2808654182
        %v3280 = vshrl.u32 %v3024, 16
        %v3281 = vshrl.u32 %v3025, 16
        %v3282 = vshrl.u32 %v3026, 16
        %v3283 = vshrl.u32 %v3027, 16
        %v3284 = vshrl.u32 %v3028, 16
        %v3285 = vshrl.u32 %v3029, 16
        %v3286 = vshrl.u32 %v3030, 16
        %v3287 = vshrl.u32 %v3031, 16
        %v3288 = vshrl.u32 %v3032, 16
        %v3289 = vshrl.u32 %v3033, 16
        %v3290 = vshrl.u32 %v3034, 16
        %v3291 = vshrl.u32 %v3035, 16
        %v3292 = vshrl.u32 %v3036, 16
        %v3293 = vshrl.u32 %v3037, 16
        %v3294 = vshrl.u32 %v3038, 16
        %v3295 = vshrl.u32 %v3039, 16
        %v3296 = vshrl.u32 %v3040, 16
        %v3297 = vshrl.u32 %v3041, 16
        %v3298 = vshrl.u32 %v3042, 16
        %v3299 = vshrl.u32 %v3043, 16
        %v3300 = vshrl.u32 %v3044, 16
        %v3301 = vshrl.u32 %v3045, 16
        %v3302 = vshrl.u32 %v3046, 16
        %v3303 = vshrl.u32 %v3047, 16
        %v3304 = vshrl.u32 %v3048, 16
        %v3305 = vshrl.u32 %v3049, 16
        %v3306 = vshrl.u32 %v3050, 16
        %v3307 = vshrl.u32 %v3051, 16
        %v3308 = vshrl.u32 %v3052, 16
        %v3309 = vshrl.u32 %v3053, 16
        %v3310 = vshrl.u32 %v3054, 16
        %v3311 = vshrl.u32 %v3055, 16
        %v3312 = vshrl.u32 %v3056, 16
        %v3313 = vshrl.u32 %v3057, 16
        %v3314 = vshrl.u32 %v3058, 16
        %v3315 = vshrl.u32 %v3059, 16
        %v3316 = vshrl.u32 %v3060, 16
        %v3317 = vshrl.u32 %v3061, 16
        %v3318 = vshrl.u32 %v3062, 16
        %v3319 = vshrl.u32 %v3063, 16
        %v3320 = vshrl.u32 %v3064, 16
        %v3321 = vshrl.u32 %v3065, 16
        %v3322 = vshrl.u32 %v3066, 16
        %v3323 = vshrl.u32 %v3067, 16
        %v3324 = vshrl.u32 %v3068, 16
        %v3325 = vshrl.u32 %v3069, 16
        %v3326 = vshrl.u32 %v3070, 16
        %v3327 = vshrl.u32 %v3071, 16
        %v3328 = vshrl.u32 %v3072, 16
        %v3329 = vshrl.u32 %v3073, 16
        %v3330 = vshrl.u32 %v3074, 16
        %v3331 = vshrl.u32 %v3075, 16
        %v3332 = vshrl.u32 %v3076, 16
        %v3333 = vshrl.u32 %v3077, 16
        %v3334 = vshrl.u32 %v3078, 16
        %v3335 = vshrl.u32 %v3079, 16
        %v3336 = vshrl.u32 %v3080, 16
        %v3337 = vshrl.u32 %v3081, 16
        %v3338 = vshrl.u32 %v3082, 16
        %v3339 = vshrl.u32 %v3083, 16
        %v3340 = vshrl.u32 %v3084, 16
        %v3341 = vshrl.u32 %v3085, 16
        %v3342 = vshrl.u32 %v3086, 16
        %v3343 = vshrl.u32 %v3087, 16
        %v3344 = vshrl.u32 %v3088, 16
        %v3345 = vshrl.u32 %v3089, 16
        %v3346 = vshrl.u32 %v3090, 16
        %v3347 = vshrl.u32 %v3091, 16
        %v3348 = vshrl.u32 %v3092, 16
        %v3349 = vshrl.u32 %v3093, 16
        %v3350 = vshrl.u32 %v3094, 16
        %v3351 = vshrl.u32 %v3095, 16
        %v3352 = vshrl.u32 %v3096, 16
        %v3353 = vshrl.u32 %v3097, 16
        %v3354 = vshrl.u32 %v3098, 16
        %v3355 = vshrl.u32 %v3099, 16
        %v3356 = vshrl.u32 %v3100, 16
        %v3357 = vshrl.u32 %v3101, 16
        %v3358 = vshrl.u32 %v3102, 16
        %v3359 = vshrl.u32 %v3103, 16
        %v3360 = vshrl.u32 %v3104, 16
        %v3361 = vshrl.u32 %v3105, 16
        %v3362 = vshrl.u32 %v3106, 16
        %v3363 = vshrl.u32 %v3107, 16
        %v3364 = vshrl.u32 %v3108, 16
        %v3365 = vshrl.u32 %v3109, 16
        %v3366 = vshrl.u32 %v3110, 16
        %v3367 = vshrl.u32 %v3111, 16
        %v3368 = vshrl.u32 %v3112, 16
        %v3369 = vshrl.u32 %v3113, 16
        %v3370 = vshrl.u32 %v3114, 16
        %v3371 = vshrl.u32 %v3115, 16
        %v3372 = vshrl.u32 %v3116, 16
        %v3373 = vshrl.u32 %v3117, 16
        %v3374 = vshrl.u32 %v3118, 16
        %v3375 = vshrl.u32 %v3119, 16
        %v3376 = vshrl.u32 %v3120, 16
        %v3377 = vshrl.u32 %v3121, 16
        %v3378 = vshrl.u32 %v3122, 16
        %v3379 = vshrl.u32 %v3123, 16
        %v3380 = vshrl.u32 %v3124, 16
        %v3381 = vshrl.u32 %v3125, 16
        %v3382 = vshrl.u32 %v3126, 16
        %v3383 = vshrl.u32 %v3127, 16
        %v3384 = vshrl.u32 %v3128, 16
        %v3385 = vshrl.u32 %v3129, 16
        %v3386 = vshrl.u32 %v3130, 16
        %v3387 = vshrl.u32 %v3131, 16
        %v3388 = vshrl.u32 %v3132, 16
        %v3389 = vshrl.u32 %v3133, 16
        %v3390 = vshrl.u32 %v3134, 16
        %v3391 = vshrl.u32 %v3135, 16
        %v3392 = vshrl.u32 %v3136, 16
        %v3393 = vshrl.u32 %v3137, 16
        %v3394 = vshrl.u32 %v3138, 16
        %v3395 = vshrl.u32 %v3139, 16
        %v3396 = vshrl.u32 %v3140, 16
        %v3397 = vshrl.u32 %v3141, 16
        %v3398 = vshrl.u32 %v3142, 16
        %v3399 = vshrl.u32 %v3143, 16
        %v3400 = vshrl.u32 %v3144, 16
        %v3401 = vshrl.u32 %v3145, 16
        %v3402 = vshrl.u32 %v3146, 16
        %v3403 = vshrl.u32 %v3147, 16
        %v3404 = vshrl.u32 %v3148, 16
        %v3405 = vshrl.u32 %v3149, 16
        %v3406 = vshrl.u32 %v3150, 16
        %v3407 = vshrl.u32 %v3151, 16
        %v3408 = vshrl.u32 %v3152, 16
        %v3409 = vshrl.u32 %v3153, 16
        %v3410 = vshrl.u32 %v3154, 16
        %v3411 = vshrl.u32 %v3155, 16
        %v3412 = vshrl.u32 %v3156, 16
        %v3413 = vshrl.u32 %v3157, 16
        %v3414 = vshrl.u32 %v3158, 16
        %v3415 = vshrl.u32 %v3159, 16
        %v3416 = vshrl.u32 %v3160, 16
        %v3417 = vshrl.u32 %v3161, 16
        %v3418 = vshrl.u32 %v3162, 16
        %v3419 = vshrl.u32 %v3163, 16
        %v3420 = vshrl.u32 %v3164, 16
        %v3421 = vshrl.u32 %v3165, 16
        %v3422 = vshrl.u32 %v3166, 16
        %v3423 = vshrl.u32 %v3167, 16
        %v3424 = vshrl.u32 %v3168, 16
        %v3425 = vshrl.u32 %v3169, 16
        %v3426 = vshrl.u32 %v3170, 16
        %v3427 = vshrl.u32 %v3171, 16
        %v3428 = vshrl.u32 %v3172, 16
        %v3429 = vshrl.u32 %v3173, 16
        %v3430 = vshrl.u32 %v3174, 16
        %v3431 = vshrl.u32 %v3175, 16
        %v3432 = vshrl.u32 %v3176, 16
        %v3433 = vshrl.u32 %v3177, 16
        %v3434 = vshrl.u32 %v3178, 16
        %v3435 = vshrl.u32 %v3179, 16
        %v3436 = vshrl.u32 %v3180, 16
        %v3437 = vshrl.u32 %v3181, 16
        %v3438 = vshrl.u32 %v3182, 16
        %v3439 = vshrl.u32 %v3183, 16
        %v3440 = vshrl.u32 %v3184, 16
        %v3441 = vshrl.u32 %v3185, 16
        %v3442 = vshrl.u32 %v3186, 16
        %v3443 = vshrl.u32 %v3187, 16
        %v3444 = vshrl.u32 %v3188, 16
        %v3445 = vshrl.u32 %v3189, 16
        %v3446 = vshrl.u32 %v3190, 16
        %v3447 = vshrl.u32 %v3191, 16
        %v3448 = vshrl.u32 %v3192, 16
        %v3449 = vshrl.u32 %v3193, 16
        %v3450 = vshrl.u32 %v3194, 16
        %v3451 = vshrl.u32 %v3195, 16
        %v3452 = vshrl.u32 %v3196, 16
        %v3453 = vshrl.u32 %v3197, 16
        %v3454 = vshrl.u32 %v3198, 16
        %v3455 = vshrl.u32 %v3199, 16
        %v3456 = vshrl.u32 %v3200, 16
        %v3457 = vshrl.u32 %v3201, 16
        %v3458 = vshrl.u32 %v3202, 16
        %v3459 = vshrl.u32 %v3203, 16
        %v3460 = vshrl.u32 %v3204, 16
        %v3461 = vshrl.u32 %v3205, 16
        %v3462 = vshrl.u32 %v3206, 16
        %v3463 = vshrl.u32 %v3207, 16
        %v3464 = vshrl.u32 %v3208, 16
        %v3465 = vshrl.u32 %v3209, 16
        %v3466 = vshrl.u32 %v3210, 16
        %v3467 = vshrl.u32 %v3211, 16
        %v3468 = vshrl.u32 %v3212, 16
        %v3469 = vshrl.u32 %v3213, 16
        %v3470 = vshrl.u32 %v3214, 16
        %v3471 = vshrl.u32 %v3215, 16
        %v3472 = vshrl.u32 %v3216, 16
        %v3473 = vshrl.u32 %v3217, 16
        %v3474 = vshrl.u32 %v3218, 16
        %v3475 = vshrl.u32 %v3219, 16
        %v3476 = vshrl.u32 %v3220, 16
        %v3477 = vshrl.u32 %v3221, 16
        %v3478 = vshrl.u32 %v3222, 16
        %v3479 = vshrl.u32 %v3223, 16
        %v3480 = vshrl.u32 %v3224, 16
        %v3481 = vshrl.u32 %v3225, 16
        %v3482 = vshrl.u32 %v3226, 16
        %v3483 = vshrl.u32 %v3227, 16
        %v3484 = vshrl.u32 %v3228, 16
        %v3485 = vshrl.u32 %v3229, 16
        %v3486 = vshrl.u32 %v3230, 16
        %v3487 = vshrl.u32 %v3231, 16
        %v3488 = vshrl.u32 %v3232, 16
        %v3489 = vshrl.u32 %v3233, 16
        %v3490 = vshrl.u32 %v3234, 16
        %v3491 = vshrl.u32 %v3235, 16
        %v3492 = vshrl.u32 %v3236, 16
        %v3493 = vshrl.u32 %v3237, 16
        %v3494 = vshrl.u32 %v3238, 16
        %v3495 = vshrl.u32 %v3239, 16
        %v3496 = vshrl.u32 %v3240, 16
        %v3497 = vshrl.u32 %v3241, 16
        %v3498 = vshrl.u32 %v3242, 16
        %v3499 = vshrl.u32 %v3243, 16
        %v3500 = vshrl.u32 %v3244, 16
        %v3501 = vshrl.u32 %v3245, 16
        %v3502 = vshrl.u32 %v3246, 16
        %v3503 = vshrl.u32 %v3247, 16
        %v3504 = vshrl.u32 %v3248, 16
        %v3505 = vshrl.u32 %v3249, 16
        %v3506 = vshrl.u32 %v3250, 16
        %v3507 = vshrl.u32 %v3251, 16
        %v3508 = vshrl.u32 %v3252, 16
        %v3509 = vshrl.u32 %v3253, 16
        %v3510 = vshrl.u32 %v3254, 16
        %v3511 = vshrl.u32 %v3255, 16
        %v3512 = vshrl.u32 %v3256, 16
        %v3513 = vshrl.u32 %v3257, 16
        %v3514 = vshrl.u32 %v3258, 16
        %v3515 = vshrl.u32 %v3259, 16
        %v3516 = vshrl.u32 %v3260, 16
        %v3517 = vshrl.u32 %v3261, 16
        %v3518 = vshrl.u32 %v3262, 16
        %v3519 = vshrl.u32 %v3263, 16
        %v3520 = vshrl.u32 %v3264, 16
        %v3521 = vshrl.u32 %v3265, 16
        %v3522 = vshrl.u32 %v3266, 16
        %v3523 = vshrl.u32 %v3267, 16
        %v3524 = vshrl.u32 %v3268, 16
        %v3525 = vshrl.u32 %v3269, 16
        %v3526 = vshrl.u32 %v3270, 16
        %v3527 = vshrl.u32 %v3271, 16
        %v3528 = vshrl.u32 %v3272, 16
        %v3529 = vshrl.u32 %v3273, 16
        %v3530 = vshrl.u32 %v3274, 16
        %v3531 = vshrl.u32 %v3275, 16
        %v3532 = vshrl.u32 %v3276, 16
        %v3533 = vshrl.u32 %v3277, 16
        %v3534 = vshrl.u32 %v3278, 16
        %v3535 = vshrl.u32 %v3279, 16
        %v3536 = vxor.u32 %v3024, %v3280
        %v3537 = vxor.u32 %v3025, %v3281
        %v3538 = vxor.u32 %v3026, %v3282
        %v3539 = vxor.u32 %v3027, %v3283
        %v3540 = vxor.u32 %v3028, %v3284
        %v3541 = vxor.u32 %v3029, %v3285
        %v3542 = vxor.u32 %v3030, %v3286
        %v3543 = vxor.u32 %v3031, %v3287
        %v3544 = vxor.u32 %v3032, %v3288
        %v3545 = vxor.u32 %v3033, %v3289
        %v3546 = vxor.u32 %v3034, %v3290
        %v3547 = vxor.u32 %v3035, %v3291
        %v3548 = vxor.u32 %v3036, %v3292
        %v3549 = vxor.u32 %v3037, %v3293
        %v3550 = vxor.u32 %v3038, %v3294
        %v3551 = vxor.u32 %v3039, %v3295
        %v3552 = vxor.u32 %v3040, %v3296
        %v3553 = vxor.u32 %v3041, %v3297
        %v3554 = vxor.u32 %v3042, %v3298
        %v3555 = vxor.u32 %v3043, %v3299
        %v3556 = vxor.u32 %v3044, %v3300
        %v3557 = vxor.u32 %v3045, %v3301
        %v3558 = vxor.u32 %v3046, %v3302
        %v3559 = vxor.u32 %v3047, %v3303
        %v3560 = vxor.u32 %v3048, %v3304
        %v3561 = vxor.u32 %v3049, %v3305
        %v3562 = vxor.u32 %v3050, %v3306
        %v3563 = vxor.u32 %v3051, %v3307
        %v3564 = vxor.u32 %v3052, %v3308
        %v3565 = vxor.u32 %v3053, %v3309
        %v3566 = vxor.u32 %v3054, %v3310
        %v3567 = vxor.u32 %v3055, %v3311
        %v3568 = vxor.u32 %v3056, %v3312
        %v3569 = vxor.u32 %v3057, %v3313
        %v3570 = vxor.u32 %v3058, %v3314
        %v3571 = vxor.u32 %v3059, %v3315
        %v3572 = vxor.u32 %v3060, %v3316
        %v3573 = vxor.u32 %v3061, %v3317
        %v3574 = vxor.u32 %v3062, %v3318
        %v3575 = vxor.u32 %v3063, %v3319
        %v3576 = vxor.u32 %v3064, %v3320
        %v3577 = vxor.u32 %v3065, %v3321
        %v3578 = vxor.u32 %v3066, %v3322
        %v3579 = vxor.u32 %v3067, %v3323
        %v3580 = vxor.u32 %v3068, %v3324
        %v3581 = vxor.u32 %v3069, %v3325
        %v3582 = vxor.u32 %v3070, %v3326
        %v3583 = vxor.u32 %v3071, %v3327
        %v3584 = vxor.u32 %v3072, %v3328
        %v3585 = vxor.u32 %v3073, %v3329
        %v3586 = vxor.u32 %v3074, %v3330
        %v3587 = vxor.u32 %v3075, %v3331
        %v3588 = vxor.u32 %v3076, %v3332
        %v3589 = vxor.u32 %v3077, %v3333
        %v3590 = vxor.u32 %v3078, %v3334
        %v3591 = vxor.u32 %v3079, %v3335
        %v3592 = vxor.u32 %v3080, %v3336
        %v3593 = vxor.u32 %v3081, %v3337
        %v3594 = vxor.u32 %v3082, %v3338
        %v3595 = vxor.u32 %v3083, %v3339
        %v3596 = vxor.u32 %v3084, %v3340
        %v3597 = vxor.u32 %v3085, %v3341
        %v3598 = vxor.u32 %v3086, %v3342
        %v3599 = vxor.u32 %v3087, %v3343
        %v3600 = vxor.u32 %v3088, %v3344
        %v3601 = vxor.u32 %v3089, %v3345
        %v3602 = vxor.u32 %v3090, %v3346
        %v3603 = vxor.u32 %v3091, %v3347
        %v3604 = vxor.u32 %v3092, %v3348
        %v3605 = vxor.u32 %v3093, %v3349
        %v3606 = vxor.u32 %v3094, %v3350
        %v3607 = vxor.u32 %v3095, %v3351
        %v3608 = vxor.u32 %v3096, %v3352
        %v3609 = vxor.u32 %v3097, %v3353
        %v3610 = vxor.u32 %v3098, %v3354
        %v3611 = vxor.u32 %v3099, %v3355
        %v3612 = vxor.u32 %v3100, %v3356
        %v3613 = vxor.u32 %v3101, %v3357
        %v3614 = vxor.u32 %v3102, %v3358
        %v3615 = vxor.u32 %v3103, %v3359
        %v3616 = vxor.u32 %v3104, %v3360
        %v3617 = vxor.u32 %v3105, %v3361
        %v3618 = vxor.u32 %v3106, %v3362
        %v3619 = vxor.u32 %v3107, %v3363
        %v3620 = vxor.u32 %v3108, %v3364
        %v3621 = vxor.u32 %v3109, %v3365
        %v3622 = vxor.u32 %v3110, %v3366
        %v3623 = vxor.u32 %v3111, %v3367
        %v3624 = vxor.u32 %v3112, %v3368
        %v3625 = vxor.u32 %v3113, %v3369
        %v3626 = vxor.u32 %v3114, %v3370
        %v3627 = vxor.u32 %v3115, %v3371
        %v3628 = vxor.u32 %v3116, %v3372
        %v3629 = vxor.u32 %v3117, %v3373
        %v3630 = vxor.u32 %v3118, %v3374
        %v3631 = vxor.u32 %v3119, %v3375
        %v3632 = vxor.u32 %v3120, %v3376
        %v3633 = vxor.u32 %v3121, %v3377
        %v3634 = vxor.u32 %v3122, %v3378
        %v3635 = vxor.u32 %v3123, %v3379
        %v3636 = vxor.u32 %v3124, %v3380
        %v3637 = vxor.u32 %v3125, %v3381
        %v3638 = vxor.u32 %v3126, %v3382
        %v3639 = vxor.u32 %v3127, %v3383
        %v3640 = vxor.u32 %v3128, %v3384
        %v3641 = vxor.u32 %v3129, %v3385
        %v3642 = vxor.u32 %v3130, %v3386
        %v3643 = vxor.u32 %v3131, %v3387
        %v3644 = vxor.u32 %v3132, %v3388
        %v3645 = vxor.u32 %v3133, %v3389
        %v3646 = vxor.u32 %v3134, %v3390
        %v3647 = vxor.u32 %v3135, %v3391
        %v3648 = vxor.u32 %v3136, %v3392
        %v3649 = vxor.u32 %v3137, %v3393
        %v3650 = vxor.u32 %v3138, %v3394
        %v3651 = vxor.u32 %v3139, %v3395
        %v3652 = vxor.u32 %v3140, %v3396
        %v3653 = vxor.u32 %v3141, %v3397
        %v3654 = vxor.u32 %v3142, %v3398
        %v3655 = vxor.u32 %v3143, %v3399
        %v3656 = vxor.u32 %v3144, %v3400
        %v3657 = vxor.u32 %v3145, %v3401
        %v3658 = vxor.u32 %v3146, %v3402
        %v3659 = vxor.u32 %v3147, %v3403
        %v3660 = vxor.u32 %v3148, %v3404
        %v3661 = vxor.u32 %v3149, %v3405
        %v3662 = vxor.u32 %v3150, %v3406
        %v3663 = vxor.u32 %v3151, %v3407
        %v3664 = vxor.u32 %v3152, %v3408
        %v3665 = vxor.u32 %v3153, %v3409
        %v3666 = vxor.u32 %v3154, %v3410
        %v3667 = vxor.u32 %v3155, %v3411
        %v3668 = vxor.u32 %v3156, %v3412
        %v3669 = vxor.u32 %v3157, %v3413
        %v3670 = vxor.u32 %v3158, %v3414
        %v3671 = vxor.u32 %v3159, %v3415
        %v3672 = vxor.u32 %v3160, %v3416
        %v3673 = vxor.u32 %v3161, %v3417
        %v3674 = vxor.u32 %v3162, %v3418
        %v3675 = vxor.u32 %v3163, %v3419
        %v3676 = vxor.u32 %v3164, %v3420
        %v3677 = vxor.u32 %v3165, %v3421
        %v3678 = vxor.u32 %v3166, %v3422
        %v3679 = vxor.u32 %v3167, %v3423
        %v3680 = vxor.u32 %v3168, %v3424
        %v3681 = vxor.u32 %v3169, %v3425
        %v3682 = vxor.u32 %v3170, %v3426
        %v3683 = vxor.u32 %v3171, %v3427
        %v3684 = vxor.u32 %v3172, %v3428
        %v3685 = vxor.u32 %v3173, %v3429
        %v3686 = vxor.u32 %v3174, %v3430
        %v3687 = vxor.u32 %v3175, %v3431
        %v3688 = vxor.u32 %v3176, %v3432
        %v3689 = vxor.u32 %v3177, %v3433
        %v3690 = vxor.u32 %v3178, %v3434
        %v3691 = vxor.u32 %v3179, %v3435
        %v3692 = vxor.u32 %v3180, %v3436
        %v3693 = vxor.u32 %v3181, %v3437
        %v3694 = vxor.u32 %v3182, %v3438
        %v3695 = vxor.u32 %v3183, %v3439
        %v3696 = vxor.u32 %v3184, %v3440
        %v3697 = vxor.u32 %v3185, %v3441
        %v3698 = vxor.u32 %v3186, %v3442
        %v3699 = vxor.u32 %v3187, %v3443
        %v3700 = vxor.u32 %v3188, %v3444
        %v3701 = vxor.u32 %v3189, %v3445
        %v3702 = vxor.u32 %v3190, %v3446
        %v3703 = vxor.u32 %v3191, %v3447
        %v3704 = vxor.u32 %v3192, %v3448
        %v3705 = vxor.u32 %v3193, %v3449
        %v3706 = vxor.u32 %v3194, %v3450
        %v3707 = vxor.u32 %v3195, %v3451
        %v3708 = vxor.u32 %v3196, %v3452
        %v3709 = vxor.u32 %v3197, %v3453
        %v3710 = vxor.u32 %v3198, %v3454
        %v3711 = vxor.u32 %v3199, %v3455
        %v3712 = vxor.u32 %v3200, %v3456
        %v3713 = vxor.u32 %v3201, %v3457
        %v3714 = vxor.u32 %v3202, %v3458
        %v3715 = vxor.u32 %v3203, %v3459
        %v3716 = vxor.u32 %v3204, %v3460
        %v3717 = vxor.u32 %v3205, %v3461
        %v3718 = vxor.u32 %v3206, %v3462
        %v3719 = vxor.u32 %v3207, %v3463
        %v3720 = vxor.u32 %v3208, %v3464
        %v3721 = vxor.u32 %v3209, %v3465
        %v3722 = vxor.u32 %v3210, %v3466
        %v3723 = vxor.u32 %v3211, %v3467
        %v3724 = vxor.u32 %v3212, %v3468
        %v3725 = vxor.u32 %v3213, %v3469
        %v3726 = vxor.u32 %v3214, %v3470
        %v3727 = vxor.u32 %v3215, %v3471
        %v3728 = vxor.u32 %v3216, %v3472
        %v3729 = vxor.u32 %v3217, %v3473
        %v3730 = vxor.u32 %v3218, %v3474
        %v3731 = vxor.u32 %v3219, %v3475
        %v3732 = vxor.u32 %v3220, %v3476
        %v3733 = vxor.u32 %v3221, %v3477
        %v3734 = vxor.u32 %v3222, %v3478
        %v3735 = vxor.u32 %v3223, %v3479
        %v3736 = vxor.u32 %v3224, %v3480
        %v3737 = vxor.u32 %v3225, %v3481
        %v3738 = vxor.u32 %v3226, %v3482
        %v3739 = vxor.u32 %v3227, %v3483
        %v3740 = vxor.u32 %v3228, %v3484
        %v3741 = vxor.u32 %v3229, %v3485
        %v3742 = vxor.u32 %v3230, %v3486
        %v3743 = vxor.u32 %v3231, %v3487
        %v3744 = vxor.u32 %v3232, %v3488
        %v3745 = vxor.u32 %v3233, %v3489
        %v3746 = vxor.u32 %v3234, %v3490
        %v3747 = vxor.u32 %v3235, %v3491
        %v3748 = vxor.u32 %v3236, %v3492
        %v3749 = vxor.u32 %v3237, %v3493
        %v3750 = vxor.u32 %v3238, %v3494
        %v3751 = vxor.u32 %v3239, %v3495
        %v3752 = vxor.u32 %v3240, %v3496
        %v3753 = vxor.u32 %v3241, %v3497
        %v3754 = vxor.u32 %v3242, %v3498
        %v3755 = vxor.u32 %v3243, %v3499
        %v3756 = vxor.u32 %v3244, %v3500
        %v3757 = vxor.u32 %v3245, %v3501
        %v3758 = vxor.u32 %v3246, %v3502
        %v3759 = vxor.u32 %v3247, %v3503
        %v3760 = vxor.u32 %v3248, %v3504
        %v3761 = vxor.u32 %v3249, %v3505
        %v3762 = vxor.u32 %v3250, %v3506
        %v3763 = vxor.u32 %v3251, %v3507
        %v3764 = vxor.u32 %v3252, %v3508
        %v3765 = vxor.u32 %v3253, %v3509
        %v3766 = vxor.u32 %v3254, %v3510
        %v3767 = vxor.u32 %v3255, %v3511
        %v3768 = vxor.u32 %v3256, %v3512
        %v3769 = vxor.u32 %v3257, %v3513
        %v3770 = vxor.u32 %v3258, %v3514
        %v3771 = vxor.u32 %v3259, %v3515
        %v3772 = vxor.u32 %v3260, %v3516
        %v3773 = vxor.u32 %v3261, %v3517
        %v3774 = vxor.u32 %v3262, %v3518
        %v3775 = vxor.u32 %v3263, %v3519
        %v3776 = vxor.u32 %v3264, %v3520
        %v3777 = vxor.u32 %v3265, %v3521
        %v3778 = vxor.u32 %v3266, %v3522
        %v3779 = vxor.u32 %v3267, %v3523
        %v3780 = vxor.u32 %v3268, %v3524
        %v3781 = vxor.u32 %v3269, %v3525
        %v3782 = vxor.u32 %v3270, %v3526
        %v3783 = vxor.u32 %v3271, %v3527
        %v3784 = vxor.u32 %v3272, %v3528
        %v3785 = vxor.u32 %v3273, %v3529
        %v3786 = vxor.u32 %v3274, %v3530
        %v3787 = vxor.u32 %v3275, %v3531
        %v3788 = vxor.u32 %v3276, %v3532
        %v3789 = vxor.u32 %v3277, %v3533
        %v3790 = vxor.u32 %v3278, %v3534
        %v3791 = vxor.u32 %v3279, %v3535
        %v3792 = vmul.u32 %v3536, 2146121005
        %v3793 = vmul.u32 %v3537, 2146121005
        %v3794 = vmul.u32 %v3538, 2146121005
        %v3795 = vmul.u32 %v3539, 2146121005
        %v3796 = vmul.u32 %v3540, 2146121005
        %v3797 = vmul.u32 %v3541, 2146121005
        %v3798 = vmul.u32 %v3542, 2146121005
        %v3799 = vmul.u32 %v3543, 2146121005
        %v3800 = vmul.u32 %v3544, 2146121005
        %v3801 = vmul.u32 %v3545, 2146121005
        %v3802 = vmul.u32 %v3546, 2146121005
        %v3803 = vmul.u32 %v3547, 2146121005
        %v3804 = vmul.u32 %v3548, 2146121005
        %v3805 = vmul.u32 %v3549, 2146121005
        %v3806 = vmul.u32 %v3550, 2146121005
        %v3807 = vmul.u32 %v3551, 2146121005
        %v3808 = vmul.u32 %v3552, 2146121005
        %v3809 = vmul.u32 %v3553, 2146121005
        %v3810 = vmul.u32 %v3554, 2146121005
        %v3811 = vmul.u32 %v3555, 2146121005
        %v3812 = vmul.u32 %v3556, 2146121005
        %v3813 = vmul.u32 %v3557, 2146121005
        %v3814 = vmul.u32 %v3558, 2146121005
        %v3815 = vmul.u32 %v3559, 2146121005
        %v3816 = vmul.u32 %v3560, 2146121005
        %v3817 = vmul.u32 %v3561, 2146121005
        %v3818 = vmul.u32 %v3562, 2146121005
        %v3819 = vmul.u32 %v3563, 2146121005
        %v3820 = vmul.u32 %v3564, 2146121005
        %v3821 = vmul.u32 %v3565, 2146121005
        %v3822 = vmul.u32 %v3566, 2146121005
        %v3823 = vmul.u32 %v3567, 2146121005
        %v3824 = vmul.u32 %v3568, 2146121005
        %v3825 = vmul.u32 %v3569, 2146121005
        %v3826 = vmul.u32 %v3570, 2146121005
        %v3827 = vmul.u32 %v3571, 2146121005
        %v3828 = vmul.u32 %v3572, 2146121005
        %v3829 = vmul.u32 %v3573, 2146121005
        %v3830 = vmul.u32 %v3574, 2146121005
        %v3831 = vmul.u32 %v3575, 2146121005
        %v3832 = vmul.u32 %v3576, 2146121005
        %v3833 = vmul.u32 %v3577, 2146121005
        %v3834 = vmul.u32 %v3578, 2146121005
        %v3835 = vmul.u32 %v3579, 2146121005
        %v3836 = vmul.u32 %v3580, 2146121005
        %v3837 = vmul.u32 %v3581, 2146121005
        %v3838 = vmul.u32 %v3582, 2146121005
        %v3839 = vmul.u32 %v3583, 2146121005
        %v3840 = vmul.u32 %v3584, 2146121005
        %v3841 = vmul.u32 %v3585, 2146121005
        %v3842 = vmul.u32 %v3586, 2146121005
        %v3843 = vmul.u32 %v3587, 2146121005
        %v3844 = vmul.u32 %v3588, 2146121005
        %v3845 = vmul.u32 %v3589, 2146121005
        %v3846 = vmul.u32 %v3590, 2146121005
        %v3847 = vmul.u32 %v3591, 2146121005
        %v3848 = vmul.u32 %v3592, 2146121005
        %v3849 = vmul.u32 %v3593, 2146121005
        %v3850 = vmul.u32 %v3594, 2146121005
        %v3851 = vmul.u32 %v3595, 2146121005
        %v3852 = vmul.u32 %v3596, 2146121005
        %v3853 = vmul.u32 %v3597, 2146121005
        %v3854 = vmul.u32 %v3598, 2146121005
        %v3855 = vmul.u32 %v3599, 2146121005
        %v3856 = vmul.u32 %v3600, 2146121005
        %v3857 = vmul.u32 %v3601, 2146121005
        %v3858 = vmul.u32 %v3602, 2146121005
        %v3859 = vmul.u32 %v3603, 2146121005
        %v3860 = vmul.u32 %v3604, 2146121005
        %v3861 = vmul.u32 %v3605, 2146121005
        %v3862 = vmul.u32 %v3606, 2146121005
        %v3863 = vmul.u32 %v3607, 2146121005
        %v3864 = vmul.u32 %v3608, 2146121005
        %v3865 = vmul.u32 %v3609, 2146121005
        %v3866 = vmul.u32 %v3610, 2146121005
        %v3867 = vmul.u32 %v3611, 2146121005
        %v3868 = vmul.u32 %v3612, 2146121005
        %v3869 = vmul.u32 %v3613, 2146121005
        %v3870 = vmul.u32 %v3614, 2146121005
        %v3871 = vmul.u32 %v3615, 2146121005
        %v3872 = vmul.u32 %v3616, 2146121005
        %v3873 = vmul.u32 %v3617, 2146121005
        %v3874 = vmul.u32 %v3618, 2146121005
        %v3875 = vmul.u32 %v3619, 2146121005
        %v3876 = vmul.u32 %v3620, 2146121005
        %v3877 = vmul.u32 %v3621, 2146121005
        %v3878 = vmul.u32 %v3622, 2146121005
        %v3879 = vmul.u32 %v3623, 2146121005
        %v3880 = vmul.u32 %v3624, 2146121005
        %v3881 = vmul.u32 %v3625, 2146121005
        %v3882 = vmul.u32 %v3626, 2146121005
        %v3883 = vmul.u32 %v3627, 2146121005
        %v3884 = vmul.u32 %v3628, 2146121005
        %v3885 = vmul.u32 %v3629, 2146121005
        %v3886 = vmul.u32 %v3630, 2146121005
        %v3887 = vmul.u32 %v3631, 2146121005
        %v3888 = vmul.u32 %v3632, 2146121005
        %v3889 = vmul.u32 %v3633, 2146121005
        %v3890 = vmul.u32 %v3634, 2146121005
        %v3891 = vmul.u32 %v3635, 2146121005
        %v3892 = vmul.u32 %v3636, 2146121005
        %v3893 = vmul.u32 %v3637, 2146121005
        %v3894 = vmul.u32 %v3638, 2146121005
        %v3895 = vmul.u32 %v3639, 2146121005
        %v3896 = vmul.u32 %v3640, 2146121005
        %v3897 = vmul.u32 %v3641, 2146121005
        %v3898 = vmul.u32 %v3642, 2146121005
        %v3899 = vmul.u32 %v3643, 2146121005
        %v3900 = vmul.u32 %v3644, 2146121005
        %v3901 = vmul.u32 %v3645, 2146121005
        %v3902 = vmul.u32 %v3646, 2146121005
        %v3903 = vmul.u32 %v3647, 2146121005
        %v3904 = vmul.u32 %v3648, 2146121005
        %v3905 = vmul.u32 %v3649, 2146121005
        %v3906 = vmul.u32 %v3650, 2146121005
        %v3907 = vmul.u32 %v3651, 2146121005
        %v3908 = vmul.u32 %v3652, 2146121005
        %v3909 = vmul.u32 %v3653, 2146121005
        %v3910 = vmul.u32 %v3654, 2146121005
        %v3911 = vmul.u32 %v3655, 2146121005
        %v3912 = vmul.u32 %v3656, 2146121005
        %v3913 = vmul.u32 %v3657, 2146121005
        %v3914 = vmul.u32 %v3658, 2146121005
        %v3915 = vmul.u32 %v3659, 2146121005
        %v3916 = vmul.u32 %v3660, 2146121005
        %v3917 = vmul.u32 %v3661, 2146121005
        %v3918 = vmul.u32 %v3662, 2146121005
        %v3919 = vmul.u32 %v3663, 2146121005
        %v3920 = vmul.u32 %v3664, 2146121005
        %v3921 = vmul.u32 %v3665, 2146121005
        %v3922 = vmul.u32 %v3666, 2146121005
        %v3923 = vmul.u32 %v3667, 2146121005
        %v3924 = vmul.u32 %v3668, 2146121005
        %v3925 = vmul.u32 %v3669, 2146121005
        %v3926 = vmul.u32 %v3670, 2146121005
        %v3927 = vmul.u32 %v3671, 2146121005
        %v3928 = vmul.u32 %v3672, 2146121005
        %v3929 = vmul.u32 %v3673, 2146121005
        %v3930 = vmul.u32 %v3674, 2146121005
        %v3931 = vmul.u32 %v3675, 2146121005
        %v3932 = vmul.u32 %v3676, 2146121005
        %v3933 = vmul.u32 %v3677, 2146121005
        %v3934 = vmul.u32 %v3678, 2146121005
        %v3935 = vmul.u32 %v3679, 2146121005
        %v3936 = vmul.u32 %v3680, 2146121005
        %v3937 = vmul.u32 %v3681, 2146121005
        %v3938 = vmul.u32 %v3682, 2146121005
        %v3939 = vmul.u32 %v3683, 2146121005
        %v3940 = vmul.u32 %v3684, 2146121005
        %v3941 = vmul.u32 %v3685, 2146121005
        %v3942 = vmul.u32 %v3686, 2146121005
        %v3943 = vmul.u32 %v3687, 2146121005
        %v3944 = vmul.u32 %v3688, 2146121005
        %v3945 = vmul.u32 %v3689, 2146121005
        %v3946 = vmul.u32 %v3690, 2146121005
        %v3947 = vmul.u32 %v3691, 2146121005
        %v3948 = vmul.u32 %v3692, 2146121005
        %v3949 = vmul.u32 %v3693, 2146121005
        %v3950 = vmul.u32 %v3694, 2146121005
        %v3951 = vmul.u32 %v3695, 2146121005
        %v3952 = vmul.u32 %v3696, 2146121005
        %v3953 = vmul.u32 %v3697, 2146121005
        %v3954 = vmul.u32 %v3698, 2146121005
        %v3955 = vmul.u32 %v3699, 2146121005
        %v3956 = vmul.u32 %v3700, 2146121005
        %v3957 = vmul.u32 %v3701, 2146121005
        %v3958 = vmul.u32 %v3702, 2146121005
        %v3959 = vmul.u32 %v3703, 2146121005
        %v3960 = vmul.u32 %v3704, 2146121005
        %v3961 = vmul.u32 %v3705, 2146121005
        %v3962 = vmul.u32 %v3706, 2146121005
        %v3963 = vmul.u32 %v3707, 2146121005
        %v3964 = vmul.u32 %v3708, 2146121005
        %v3965 = vmul.u32 %v3709, 2146121005
        %v3966 = vmul.u32 %v3710, 2146121005
        %v3967 = vmul.u32 %v3711, 2146121005
        %v3968 = vmul.u32 %v3712, 2146121005
        %v3969 = vmul.u32 %v3713, 2146121005
        %v3970 = vmul.u32 %v3714, 2146121005
        %v3971 = vmul.u32 %v3715, 2146121005
        %v3972 = vmul.u32 %v3716, 2146121005
        %v3973 = vmul.u32 %v3717, 2146121005
        %v3974 = vmul.u32 %v3718, 2146121005
        %v3975 = vmul.u32 %v3719, 2146121005
        %v3976 = vmul.u32 %v3720, 2146121005
        %v3977 = vmul.u32 %v3721, 2146121005
        %v3978 = vmul.u32 %v3722, 2146121005
        %v3979 = vmul.u32 %v3723, 2146121005
        %v3980 = vmul.u32 %v3724, 2146121005
        %v3981 = vmul.u32 %v3725, 2146121005
        %v3982 = vmul.u32 %v3726, 2146121005
        %v3983 = vmul.u32 %v3727, 2146121005
        %v3984 = vmul.u32 %v3728, 2146121005
        %v3985 = vmul.u32 %v3729, 2146121005
        %v3986 = vmul.u32 %v3730, 2146121005
        %v3987 = vmul.u32 %v3731, 2146121005
        %v3988 = vmul.u32 %v3732, 2146121005
        %v3989 = vmul.u32 %v3733, 2146121005
        %v3990 = vmul.u32 %v3734, 2146121005
        %v3991 = vmul.u32 %v3735, 2146121005
        %v3992 = vmul.u32 %v3736, 2146121005
        %v3993 = vmul.u32 %v3737, 2146121005
        %v3994 = vmul.u32 %v3738, 2146121005
        %v3995 = vmul.u32 %v3739, 2146121005
        %v3996 = vmul.u32 %v3740, 2146121005
        %v3997 = vmul.u32 %v3741, 2146121005
        %v3998 = vmul.u32 %v3742, 2146121005
        %v3999 = vmul.u32 %v3743, 2146121005
        %v4000 = vmul.u32 %v3744, 2146121005
        %v4001 = vmul.u32 %v3745, 2146121005
        %v4002 = vmul.u32 %v3746, 2146121005
        %v4003 = vmul.u32 %v3747, 2146121005
        %v4004 = vmul.u32 %v3748, 2146121005
        %v4005 = vmul.u32 %v3749, 2146121005
        %v4006 = vmul.u32 %v3750, 2146121005
        %v4007 = vmul.u32 %v3751, 2146121005
        %v4008 = vmul.u32 %v3752, 2146121005
        %v4009 = vmul.u32 %v3753, 2146121005
        %v4010 = vmul.u32 %v3754, 2146121005
        %v4011 = vmul.u32 %v3755, 2146121005
        %v4012 = vmul.u32 %v3756, 2146121005
        %v4013 = vmul.u32 %v3757, 2146121005
        %v4014 = vmul.u32 %v3758, 2146121005
        %v4015 = vmul.u32 %v3759, 2146121005
        %v4016 = vmul.u32 %v3760, 2146121005
        %v4017 = vmul.u32 %v3761, 2146121005
        %v4018 = vmul.u32 %v3762, 2146121005
        %v4019 = vmul.u32 %v3763, 2146121005
        %v4020 = vmul.u32 %v3764, 2146121005
        %v4021 = vmul.u32 %v3765, 2146121005
        %v4022 = vmul.u32 %v3766, 2146121005
        %v4023 = vmul.u32 %v3767, 2146121005
        %v4024 = vmul.u32 %v3768, 2146121005
        %v4025 = vmul.u32 %v3769, 2146121005
        %v4026 = vmul.u32 %v3770, 2146121005
        %v4027 = vmul.u32 %v3771, 2146121005
        %v4028 = vmul.u32 %v3772, 2146121005
        %v4029 = vmul.u32 %v3773, 2146121005
        %v4030 = vmul.u32 %v3774, 2146121005
        %v4031 = vmul.u32 %v3775, 2146121005
        %v4032 = vmul.u32 %v3776, 2146121005
        %v4033 = vmul.u32 %v3777, 2146121005
        %v4034 = vmul.u32 %v3778, 2146121005
        %v4035 = vmul.u32 %v3779, 2146121005
        %v4036 = vmul.u32 %v3780, 2146121005
        %v4037 = vmul.u32 %v3781, 2146121005
        %v4038 = vmul.u32 %v3782, 2146121005
        %v4039 = vmul.u32 %v3783, 2146121005
        %v4040 = vmul.u32 %v3784, 2146121005
        %v4041 = vmul.u32 %v3785, 2146121005
        %v4042 = vmul.u32 %v3786, 2146121005
        %v4043 = vmul.u32 %v3787, 2146121005
        %v4044 = vmul.u32 %v3788, 2146121005
        %v4045 = vmul.u32 %v3789, 2146121005
        %v4046 = vmul.u32 %v3790, 2146121005
        %v4047 = vmul.u32 %v3791, 2146121005
        %v4048 = vshrl.u32 %v3792, 15
        %v4049 = vshrl.u32 %v3793, 15
        %v4050 = vshrl.u32 %v3794, 15
        %v4051 = vshrl.u32 %v3795, 15
        %v4052 = vshrl.u32 %v3796, 15
        %v4053 = vshrl.u32 %v3797, 15
        %v4054 = vshrl.u32 %v3798, 15
        %v4055 = vshrl.u32 %v3799, 15
        %v4056 = vshrl.u32 %v3800, 15
        %v4057 = vshrl.u32 %v3801, 15
        %v4058 = vshrl.u32 %v3802, 15
        %v4059 = vshrl.u32 %v3803, 15
        %v4060 = vshrl.u32 %v3804, 15
        %v4061 = vshrl.u32 %v3805, 15
        %v4062 = vshrl.u32 %v3806, 15
        %v4063 = vshrl.u32 %v3807, 15
        %v4064 = vshrl.u32 %v3808, 15
        %v4065 = vshrl.u32 %v3809, 15
        %v4066 = vshrl.u32 %v3810, 15
        %v4067 = vshrl.u32 %v3811, 15
        %v4068 = vshrl.u32 %v3812, 15
        %v4069 = vshrl.u32 %v3813, 15
        %v4070 = vshrl.u32 %v3814, 15
        %v4071 = vshrl.u32 %v3815, 15
        %v4072 = vshrl.u32 %v3816, 15
        %v4073 = vshrl.u32 %v3817, 15
        %v4074 = vshrl.u32 %v3818, 15
        %v4075 = vshrl.u32 %v3819, 15
        %v4076 = vshrl.u32 %v3820, 15
        %v4077 = vshrl.u32 %v3821, 15
        %v4078 = vshrl.u32 %v3822, 15
        %v4079 = vshrl.u32 %v3823, 15
        %v4080 = vshrl.u32 %v3824, 15
        %v4081 = vshrl.u32 %v3825, 15
        %v4082 = vshrl.u32 %v3826, 15
        %v4083 = vshrl.u32 %v3827, 15
        %v4084 = vshrl.u32 %v3828, 15
        %v4085 = vshrl.u32 %v3829, 15
        %v4086 = vshrl.u32 %v3830, 15
        %v4087 = vshrl.u32 %v3831, 15
        %v4088 = vshrl.u32 %v3832, 15
        %v4089 = vshrl.u32 %v3833, 15
        %v4090 = vshrl.u32 %v3834, 15
        %v4091 = vshrl.u32 %v3835, 15
        %v4092 = vshrl.u32 %v3836, 15
        %v4093 = vshrl.u32 %v3837, 15
        %v4094 = vshrl.u32 %v3838, 15
        %v4095 = vshrl.u32 %v3839, 15
        %v4096 = vshrl.u32 %v3840, 15
        %v4097 = vshrl.u32 %v3841, 15
        %v4098 = vshrl.u32 %v3842, 15
        %v4099 = vshrl.u32 %v3843, 15
        %v4100 = vshrl.u32 %v3844, 15
        %v4101 = vshrl.u32 %v3845, 15
        %v4102 = vshrl.u32 %v3846, 15
        %v4103 = vshrl.u32 %v3847, 15
        %v4104 = vshrl.u32 %v3848, 15
        %v4105 = vshrl.u32 %v3849, 15
        %v4106 = vshrl.u32 %v3850, 15
        %v4107 = vshrl.u32 %v3851, 15
        %v4108 = vshrl.u32 %v3852, 15
        %v4109 = vshrl.u32 %v3853, 15
        %v4110 = vshrl.u32 %v3854, 15
        %v4111 = vshrl.u32 %v3855, 15
        %v4112 = vshrl.u32 %v3856, 15
        %v4113 = vshrl.u32 %v3857, 15
        %v4114 = vshrl.u32 %v3858, 15
        %v4115 = vshrl.u32 %v3859, 15
        %v4116 = vshrl.u32 %v3860, 15
        %v4117 = vshrl.u32 %v3861, 15
        %v4118 = vshrl.u32 %v3862, 15
        %v4119 = vshrl.u32 %v3863, 15
        %v4120 = vshrl.u32 %v3864, 15
        %v4121 = vshrl.u32 %v3865, 15
        %v4122 = vshrl.u32 %v3866, 15
        %v4123 = vshrl.u32 %v3867, 15
        %v4124 = vshrl.u32 %v3868, 15
        %v4125 = vshrl.u32 %v3869, 15
        %v4126 = vshrl.u32 %v3870, 15
        %v4127 = vshrl.u32 %v3871, 15
        %v4128 = vshrl.u32 %v3872, 15
        %v4129 = vshrl.u32 %v3873, 15
        %v4130 = vshrl.u32 %v3874, 15
        %v4131 = vshrl.u32 %v3875, 15
        %v4132 = vshrl.u32 %v3876, 15
        %v4133 = vshrl.u32 %v3877, 15
        %v4134 = vshrl.u32 %v3878, 15
        %v4135 = vshrl.u32 %v3879, 15
        %v4136 = vshrl.u32 %v3880, 15
        %v4137 = vshrl.u32 %v3881, 15
        %v4138 = vshrl.u32 %v3882, 15
        %v4139 = vshrl.u32 %v3883, 15
        %v4140 = vshrl.u32 %v3884, 15
        %v4141 = vshrl.u32 %v3885, 15
        %v4142 = vshrl.u32 %v3886, 15
        %v4143 = vshrl.u32 %v3887, 15
        %v4144 = vshrl.u32 %v3888, 15
        %v4145 = vshrl.u32 %v3889, 15
        %v4146 = vshrl.u32 %v3890, 15
        %v4147 = vshrl.u32 %v3891, 15
        %v4148 = vshrl.u32 %v3892, 15
        %v4149 = vshrl.u32 %v3893, 15
        %v4150 = vshrl.u32 %v3894, 15
        %v4151 = vshrl.u32 %v3895, 15
        %v4152 = vshrl.u32 %v3896, 15
        %v4153 = vshrl.u32 %v3897, 15
        %v4154 = vshrl.u32 %v3898, 15
        %v4155 = vshrl.u32 %v3899, 15
        %v4156 = vshrl.u32 %v3900, 15
        %v4157 = vshrl.u32 %v3901, 15
        %v4158 = vshrl.u32 %v3902, 15
        %v4159 = vshrl.u32 %v3903, 15
        %v4160 = vshrl.u32 %v3904, 15
        %v4161 = vshrl.u32 %v3905, 15
        %v4162 = vshrl.u32 %v3906, 15
        %v4163 = vshrl.u32 %v3907, 15
        %v4164 = vshrl.u32 %v3908, 15
        %v4165 = vshrl.u32 %v3909, 15
        %v4166 = vshrl.u32 %v3910, 15
        %v4167 = vshrl.u32 %v3911, 15
        %v4168 = vshrl.u32 %v3912, 15
        %v4169 = vshrl.u32 %v3913, 15
        %v4170 = vshrl.u32 %v3914, 15
        %v4171 = vshrl.u32 %v3915, 15
        %v4172 = vshrl.u32 %v3916, 15
        %v4173 = vshrl.u32 %v3917, 15
        %v4174 = vshrl.u32 %v3918, 15
        %v4175 = vshrl.u32 %v3919, 15
        %v4176 = vshrl.u32 %v3920, 15
        %v4177 = vshrl.u32 %v3921, 15
        %v4178 = vshrl.u32 %v3922, 15
        %v4179 = vshrl.u32 %v3923, 15
        %v4180 = vshrl.u32 %v3924, 15
        %v4181 = vshrl.u32 %v3925, 15
        %v4182 = vshrl.u32 %v3926, 15
        %v4183 = vshrl.u32 %v3927, 15
        %v4184 = vshrl.u32 %v3928, 15
        %v4185 = vshrl.u32 %v3929, 15
        %v4186 = vshrl.u32 %v3930, 15
        %v4187 = vshrl.u32 %v3931, 15
        %v4188 = vshrl.u32 %v3932, 15
        %v4189 = vshrl.u32 %v3933, 15
        %v4190 = vshrl.u32 %v3934, 15
        %v4191 = vshrl.u32 %v3935, 15
        %v4192 = vshrl.u32 %v3936, 15
        %v4193 = vshrl.u32 %v3937, 15
        %v4194 = vshrl.u32 %v3938, 15
        %v4195 = vshrl.u32 %v3939, 15
        %v4196 = vshrl.u32 %v3940, 15
        %v4197 = vshrl.u32 %v3941, 15
        %v4198 = vshrl.u32 %v3942, 15
        %v4199 = vshrl.u32 %v3943, 15
        %v4200 = vshrl.u32 %v3944, 15
        %v4201 = vshrl.u32 %v3945, 15
        %v4202 = vshrl.u32 %v3946, 15
        %v4203 = vshrl.u32 %v3947, 15
        %v4204 = vshrl.u32 %v3948, 15
        %v4205 = vshrl.u32 %v3949, 15
        %v4206 = vshrl.u32 %v3950, 15
        %v4207 = vshrl.u32 %v3951, 15
        %v4208 = vshrl.u32 %v3952, 15
        %v4209 = vshrl.u32 %v3953, 15
        %v4210 = vshrl.u32 %v3954, 15
        %v4211 = vshrl.u32 %v3955, 15
        %v4212 = vshrl.u32 %v3956, 15
        %v4213 = vshrl.u32 %v3957, 15
        %v4214 = vshrl.u32 %v3958, 15
        %v4215 = vshrl.u32 %v3959, 15
        %v4216 = vshrl.u32 %v3960, 15
        %v4217 = vshrl.u32 %v3961, 15
        %v4218 = vshrl.u32 %v3962, 15
        %v4219 = vshrl.u32 %v3963, 15
        %v4220 = vshrl.u32 %v3964, 15
        %v4221 = vshrl.u32 %v3965, 15
        %v4222 = vshrl.u32 %v3966, 15
        %v4223 = vshrl.u32 %v3967, 15
        %v4224 = vshrl.u32 %v3968, 15
        %v4225 = vshrl.u32 %v3969, 15
        %v4226 = vshrl.u32 %v3970, 15
        %v4227 = vshrl.u32 %v3971, 15
        %v4228 = vshrl.u32 %v3972, 15
        %v4229 = vshrl.u32 %v3973, 15
        %v4230 = vshrl.u32 %v3974, 15
        %v4231 = vshrl.u32 %v3975, 15
        %v4232 = vshrl.u32 %v3976, 15
        %v4233 = vshrl.u32 %v3977, 15
        %v4234 = vshrl.u32 %v3978, 15
        %v4235 = vshrl.u32 %v3979, 15
        %v4236 = vshrl.u32 %v3980, 15
        %v4237 = vshrl.u32 %v3981, 15
        %v4238 = vshrl.u32 %v3982, 15
        %v4239 = vshrl.u32 %v3983, 15
        %v4240 = vshrl.u32 %v3984, 15
        %v4241 = vshrl.u32 %v3985, 15
        %v4242 = vshrl.u32 %v3986, 15
        %v4243 = vshrl.u32 %v3987, 15
        %v4244 = vshrl.u32 %v3988, 15
        %v4245 = vshrl.u32 %v3989, 15
        %v4246 = vshrl.u32 %v3990, 15
        %v4247 = vshrl.u32 %v3991, 15
        %v4248 = vshrl.u32 %v3992, 15
        %v4249 = vshrl.u32 %v3993, 15
        %v4250 = vshrl.u32 %v3994, 15
        %v4251 = vshrl.u32 %v3995, 15
        %v4252 = vshrl.u32 %v3996, 15
        %v4253 = vshrl.u32 %v3997, 15
        %v4254 = vshrl.u32 %v3998, 15
        %v4255 = vshrl.u32 %v3999, 15
        %v4256 = vshrl.u32 %v4000, 15
        %v4257 = vshrl.u32 %v4001, 15
        %v4258 = vshrl.u32 %v4002, 15
        %v4259 = vshrl.u32 %v4003, 15
        %v4260 = vshrl.u32 %v4004, 15
        %v4261 = vshrl.u32 %v4005, 15
        %v4262 = vshrl.u32 %v4006, 15
        %v4263 = vshrl.u32 %v4007, 15
        %v4264 = vshrl.u32 %v4008, 15
        %v4265 = vshrl.u32 %v4009, 15
        %v4266 = vshrl.u32 %v4010, 15
        %v4267 = vshrl.u32 %v4011, 15
        %v4268 = vshrl.u32 %v4012, 15
        %v4269 = vshrl.u32 %v4013, 15
        %v4270 = vshrl.u32 %v4014, 15
        %v4271 = vshrl.u32 %v4015, 15
        %v4272 = vshrl.u32 %v4016, 15
        %v4273 = vshrl.u32 %v4017, 15
        %v4274 = vshrl.u32 %v4018, 15
        %v4275 = vshrl.u32 %v4019, 15
        %v4276 = vshrl.u32 %v4020, 15
        %v4277 = vshrl.u32 %v4021, 15
        %v4278 = vshrl.u32 %v4022, 15
        %v4279 = vshrl.u32 %v4023, 15
        %v4280 = vshrl.u32 %v4024, 15
        %v4281 = vshrl.u32 %v4025, 15
        %v4282 = vshrl.u32 %v4026, 15
        %v4283 = vshrl.u32 %v4027, 15
        %v4284 = vshrl.u32 %v4028, 15
        %v4285 = vshrl.u32 %v4029, 15
        %v4286 = vshrl.u32 %v4030, 15
        %v4287 = vshrl.u32 %v4031, 15
        %v4288 = vshrl.u32 %v4032, 15
        %v4289 = vshrl.u32 %v4033, 15
        %v4290 = vshrl.u32 %v4034, 15
        %v4291 = vshrl.u32 %v4035, 15
        %v4292 = vshrl.u32 %v4036, 15
        %v4293 = vshrl.u32 %v4037, 15
        %v4294 = vshrl.u32 %v4038, 15
        %v4295 = vshrl.u32 %v4039, 15
        %v4296 = vshrl.u32 %v4040, 15
        %v4297 = vshrl.u32 %v4041, 15
        %v4298 = vshrl.u32 %v4042, 15
        %v4299 = vshrl.u32 %v4043, 15
        %v4300 = vshrl.u32 %v4044, 15
        %v4301 = vshrl.u32 %v4045, 15
        %v4302 = vshrl.u32 %v4046, 15
        %v4303 = vshrl.u32 %v4047, 15
        %v4304 = vxor.u32 %v3792, %v4048
        %v4305 = vxor.u32 %v3793, %v4049
        %v4306 = vxor.u32 %v3794, %v4050
        %v4307 = vxor.u32 %v3795, %v4051
        %v4308 = vxor.u32 %v3796, %v4052
        %v4309 = vxor.u32 %v3797, %v4053
        %v4310 = vxor.u32 %v3798, %v4054
        %v4311 = vxor.u32 %v3799, %v4055
        %v4312 = vxor.u32 %v3800, %v4056
        %v4313 = vxor.u32 %v3801, %v4057
        %v4314 = vxor.u32 %v3802, %v4058
        %v4315 = vxor.u32 %v3803, %v4059
        %v4316 = vxor.u32 %v3804, %v4060
        %v4317 = vxor.u32 %v3805, %v4061
        %v4318 = vxor.u32 %v3806, %v4062
        %v4319 = vxor.u32 %v3807, %v4063
        %v4320 = vxor.u32 %v3808, %v4064
        %v4321 = vxor.u32 %v3809, %v4065
        %v4322 = vxor.u32 %v3810, %v4066
        %v4323 = vxor.u32 %v3811, %v4067
        %v4324 = vxor.u32 %v3812, %v4068
        %v4325 = vxor.u32 %v3813, %v4069
        %v4326 = vxor.u32 %v3814, %v4070
        %v4327 = vxor.u32 %v3815, %v4071
        %v4328 = vxor.u32 %v3816, %v4072
        %v4329 = vxor.u32 %v3817, %v4073
        %v4330 = vxor.u32 %v3818, %v4074
        %v4331 = vxor.u32 %v3819, %v4075
        %v4332 = vxor.u32 %v3820, %v4076
        %v4333 = vxor.u32 %v3821, %v4077
        %v4334 = vxor.u32 %v3822, %v4078
        %v4335 = vxor.u32 %v3823, %v4079
        %v4336 = vxor.u32 %v3824, %v4080
        %v4337 = vxor.u32 %v3825, %v4081
        %v4338 = vxor.u32 %v3826, %v4082
        %v4339 = vxor.u32 %v3827, %v4083
        %v4340 = vxor.u32 %v3828, %v4084
        %v4341 = vxor.u32 %v3829, %v4085
        %v4342 = vxor.u32 %v3830, %v4086
        %v4343 = vxor.u32 %v3831, %v4087
        %v4344 = vxor.u32 %v3832, %v4088
        %v4345 = vxor.u32 %v3833, %v4089
        %v4346 = vxor.u32 %v3834, %v4090
        %v4347 = vxor.u32 %v3835, %v4091
        %v4348 = vxor.u32 %v3836, %v4092
        %v4349 = vxor.u32 %v3837, %v4093
        %v4350 = vxor.u32 %v3838, %v4094
        %v4351 = vxor.u32 %v3839, %v4095
        %v4352 = vxor.u32 %v3840, %v4096
        %v4353 = vxor.u32 %v3841, %v4097
        %v4354 = vxor.u32 %v3842, %v4098
        %v4355 = vxor.u32 %v3843, %v4099
        %v4356 = vxor.u32 %v3844, %v4100
        %v4357 = vxor.u32 %v3845, %v4101
        %v4358 = vxor.u32 %v3846, %v4102
        %v4359 = vxor.u32 %v3847, %v4103
        %v4360 = vxor.u32 %v3848, %v4104
        %v4361 = vxor.u32 %v3849, %v4105
        %v4362 = vxor.u32 %v3850, %v4106
        %v4363 = vxor.u32 %v3851, %v4107
        %v4364 = vxor.u32 %v3852, %v4108
        %v4365 = vxor.u32 %v3853, %v4109
        %v4366 = vxor.u32 %v3854, %v4110
        %v4367 = vxor.u32 %v3855, %v4111
        %v4368 = vxor.u32 %v3856, %v4112
        %v4369 = vxor.u32 %v3857, %v4113
        %v4370 = vxor.u32 %v3858, %v4114
        %v4371 = vxor.u32 %v3859, %v4115
        %v4372 = vxor.u32 %v3860, %v4116
        %v4373 = vxor.u32 %v3861, %v4117
        %v4374 = vxor.u32 %v3862, %v4118
        %v4375 = vxor.u32 %v3863, %v4119
        %v4376 = vxor.u32 %v3864, %v4120
        %v4377 = vxor.u32 %v3865, %v4121
        %v4378 = vxor.u32 %v3866, %v4122
        %v4379 = vxor.u32 %v3867, %v4123
        %v4380 = vxor.u32 %v3868, %v4124
        %v4381 = vxor.u32 %v3869, %v4125
        %v4382 = vxor.u32 %v3870, %v4126
        %v4383 = vxor.u32 %v3871, %v4127
        %v4384 = vxor.u32 %v3872, %v4128
        %v4385 = vxor.u32 %v3873, %v4129
        %v4386 = vxor.u32 %v3874, %v4130
        %v4387 = vxor.u32 %v3875, %v4131
        %v4388 = vxor.u32 %v3876, %v4132
        %v4389 = vxor.u32 %v3877, %v4133
        %v4390 = vxor.u32 %v3878, %v4134
        %v4391 = vxor.u32 %v3879, %v4135
        %v4392 = vxor.u32 %v3880, %v4136
        %v4393 = vxor.u32 %v3881, %v4137
        %v4394 = vxor.u32 %v3882, %v4138
        %v4395 = vxor.u32 %v3883, %v4139
        %v4396 = vxor.u32 %v3884, %v4140
        %v4397 = vxor.u32 %v3885, %v4141
        %v4398 = vxor.u32 %v3886, %v4142
        %v4399 = vxor.u32 %v3887, %v4143
        %v4400 = vxor.u32 %v3888, %v4144
        %v4401 = vxor.u32 %v3889, %v4145
        %v4402 = vxor.u32 %v3890, %v4146
        %v4403 = vxor.u32 %v3891, %v4147
        %v4404 = vxor.u32 %v3892, %v4148
        %v4405 = vxor.u32 %v3893, %v4149
        %v4406 = vxor.u32 %v3894, %v4150
        %v4407 = vxor.u32 %v3895, %v4151
        %v4408 = vxor.u32 %v3896, %v4152
        %v4409 = vxor.u32 %v3897, %v4153
        %v4410 = vxor.u32 %v3898, %v4154
        %v4411 = vxor.u32 %v3899, %v4155
        %v4412 = vxor.u32 %v3900, %v4156
        %v4413 = vxor.u32 %v3901, %v4157
        %v4414 = vxor.u32 %v3902, %v4158
        %v4415 = vxor.u32 %v3903, %v4159
        %v4416 = vxor.u32 %v3904, %v4160
        %v4417 = vxor.u32 %v3905, %v4161
        %v4418 = vxor.u32 %v3906, %v4162
        %v4419 = vxor.u32 %v3907, %v4163
        %v4420 = vxor.u32 %v3908, %v4164
        %v4421 = vxor.u32 %v3909, %v4165
        %v4422 = vxor.u32 %v3910, %v4166
        %v4423 = vxor.u32 %v3911, %v4167
        %v4424 = vxor.u32 %v3912, %v4168
        %v4425 = vxor.u32 %v3913, %v4169
        %v4426 = vxor.u32 %v3914, %v4170
        %v4427 = vxor.u32 %v3915, %v4171
        %v4428 = vxor.u32 %v3916, %v4172
        %v4429 = vxor.u32 %v3917, %v4173
        %v4430 = vxor.u32 %v3918, %v4174
        %v4431 = vxor.u32 %v3919, %v4175
        %v4432 = vxor.u32 %v3920, %v4176
        %v4433 = vxor.u32 %v3921, %v4177
        %v4434 = vxor.u32 %v3922, %v4178
        %v4435 = vxor.u32 %v3923, %v4179
        %v4436 = vxor.u32 %v3924, %v4180
        %v4437 = vxor.u32 %v3925, %v4181
        %v4438 = vxor.u32 %v3926, %v4182
        %v4439 = vxor.u32 %v3927, %v4183
        %v4440 = vxor.u32 %v3928, %v4184
        %v4441 = vxor.u32 %v3929, %v4185
        %v4442 = vxor.u32 %v3930, %v4186
        %v4443 = vxor.u32 %v3931, %v4187
        %v4444 = vxor.u32 %v3932, %v4188
        %v4445 = vxor.u32 %v3933, %v4189
        %v4446 = vxor.u32 %v3934, %v4190
        %v4447 = vxor.u32 %v3935, %v4191
        %v4448 = vxor.u32 %v3936, %v4192
        %v4449 = vxor.u32 %v3937, %v4193
        %v4450 = vxor.u32 %v3938, %v4194
        %v4451 = vxor.u32 %v3939, %v4195
        %v4452 = vxor.u32 %v3940, %v4196
        %v4453 = vxor.u32 %v3941, %v4197
        %v4454 = vxor.u32 %v3942, %v4198
        %v4455 = vxor.u32 %v3943, %v4199
        %v4456 = vxor.u32 %v3944, %v4200
        %v4457 = vxor.u32 %v3945, %v4201
        %v4458 = vxor.u32 %v3946, %v4202
        %v4459 = vxor.u32 %v3947, %v4203
        %v4460 = vxor.u32 %v3948, %v4204
        %v4461 = vxor.u32 %v3949, %v4205
        %v4462 = vxor.u32 %v3950, %v4206
        %v4463 = vxor.u32 %v3951, %v4207
        %v4464 = vxor.u32 %v3952, %v4208
        %v4465 = vxor.u32 %v3953, %v4209
        %v4466 = vxor.u32 %v3954, %v4210
        %v4467 = vxor.u32 %v3955, %v4211
        %v4468 = vxor.u32 %v3956, %v4212
        %v4469 = vxor.u32 %v3957, %v4213
        %v4470 = vxor.u32 %v3958, %v4214
        %v4471 = vxor.u32 %v3959, %v4215
        %v4472 = vxor.u32 %v3960, %v4216
        %v4473 = vxor.u32 %v3961, %v4217
        %v4474 = vxor.u32 %v3962, %v4218
        %v4475 = vxor.u32 %v3963, %v4219
        %v4476 = vxor.u32 %v3964, %v4220
        %v4477 = vxor.u32 %v3965, %v4221
        %v4478 = vxor.u32 %v3966, %v4222
        %v4479 = vxor.u32 %v3967, %v4223
        %v4480 = vxor.u32 %v3968, %v4224
        %v4481 = vxor.u32 %v3969, %v4225
        %v4482 = vxor.u32 %v3970, %v4226
        %v4483 = vxor.u32 %v3971, %v4227
        %v4484 = vxor.u32 %v3972, %v4228
        %v4485 = vxor.u32 %v3973, %v4229
        %v4486 = vxor.u32 %v3974, %v4230
        %v4487 = vxor.u32 %v3975, %v4231
        %v4488 = vxor.u32 %v3976, %v4232
        %v4489 = vxor.u32 %v3977, %v4233
        %v4490 = vxor.u32 %v3978, %v4234
        %v4491 = vxor.u32 %v3979, %v4235
        %v4492 = vxor.u32 %v3980, %v4236
        %v4493 = vxor.u32 %v3981, %v4237
        %v4494 = vxor.u32 %v3982, %v4238
        %v4495 = vxor.u32 %v3983, %v4239
        %v4496 = vxor.u32 %v3984, %v4240
        %v4497 = vxor.u32 %v3985, %v4241
        %v4498 = vxor.u32 %v3986, %v4242
        %v4499 = vxor.u32 %v3987, %v4243
        %v4500 = vxor.u32 %v3988, %v4244
        %v4501 = vxor.u32 %v3989, %v4245
        %v4502 = vxor.u32 %v3990, %v4246
        %v4503 = vxor.u32 %v3991, %v4247
        %v4504 = vxor.u32 %v3992, %v4248
        %v4505 = vxor.u32 %v3993, %v4249
        %v4506 = vxor.u32 %v3994, %v4250
        %v4507 = vxor.u32 %v3995, %v4251
        %v4508 = vxor.u32 %v3996, %v4252
        %v4509 = vxor.u32 %v3997, %v4253
        %v4510 = vxor.u32 %v3998, %v4254
        %v4511 = vxor.u32 %v3999, %v4255
        %v4512 = vxor.u32 %v4000, %v4256
        %v4513 = vxor.u32 %v4001, %v4257
        %v4514 = vxor.u32 %v4002, %v4258
        %v4515 = vxor.u32 %v4003, %v4259
        %v4516 = vxor.u32 %v4004, %v4260
        %v4517 = vxor.u32 %v4005, %v4261
        %v4518 = vxor.u32 %v4006, %v4262
        %v4519 = vxor.u32 %v4007, %v4263
        %v4520 = vxor.u32 %v4008, %v4264
        %v4521 = vxor.u32 %v4009, %v4265
        %v4522 = vxor.u32 %v4010, %v4266
        %v4523 = vxor.u32 %v4011, %v4267
        %v4524 = vxor.u32 %v4012, %v4268
        %v4525 = vxor.u32 %v4013, %v4269
        %v4526 = vxor.u32 %v4014, %v4270
        %v4527 = vxor.u32 %v4015, %v4271
        %v4528 = vxor.u32 %v4016, %v4272
        %v4529 = vxor.u32 %v4017, %v4273
        %v4530 = vxor.u32 %v4018, %v4274
        %v4531 = vxor.u32 %v4019, %v4275
        %v4532 = vxor.u32 %v4020, %v4276
        %v4533 = vxor.u32 %v4021, %v4277
        %v4534 = vxor.u32 %v4022, %v4278
        %v4535 = vxor.u32 %v4023, %v4279
        %v4536 = vxor.u32 %v4024, %v4280
        %v4537 = vxor.u32 %v4025, %v4281
        %v4538 = vxor.u32 %v4026, %v4282
        %v4539 = vxor.u32 %v4027, %v4283
        %v4540 = vxor.u32 %v4028, %v4284
        %v4541 = vxor.u32 %v4029, %v4285
        %v4542 = vxor.u32 %v4030, %v4286
        %v4543 = vxor.u32 %v4031, %v4287
        %v4544 = vxor.u32 %v4032, %v4288
        %v4545 = vxor.u32 %v4033, %v4289
        %v4546 = vxor.u32 %v4034, %v4290
        %v4547 = vxor.u32 %v4035, %v4291
        %v4548 = vxor.u32 %v4036, %v4292
        %v4549 = vxor.u32 %v4037, %v4293
        %v4550 = vxor.u32 %v4038, %v4294
        %v4551 = vxor.u32 %v4039, %v4295
        %v4552 = vxor.u32 %v4040, %v4296
        %v4553 = vxor.u32 %v4041, %v4297
        %v4554 = vxor.u32 %v4042, %v4298
        %v4555 = vxor.u32 %v4043, %v4299
        %v4556 = vxor.u32 %v4044, %v4300
        %v4557 = vxor.u32 %v4045, %v4301
        %v4558 = vxor.u32 %v4046, %v4302
        %v4559 = vxor.u32 %v4047, %v4303
        %v4560 = vmul.u32 %v4304, 2221713035
        %v4561 = vmul.u32 %v4305, 2221713035
        %v4562 = vmul.u32 %v4306, 2221713035
        %v4563 = vmul.u32 %v4307, 2221713035
        %v4564 = vmul.u32 %v4308, 2221713035
        %v4565 = vmul.u32 %v4309, 2221713035
        %v4566 = vmul.u32 %v4310, 2221713035
        %v4567 = vmul.u32 %v4311, 2221713035
        %v4568 = vmul.u32 %v4312, 2221713035
        %v4569 = vmul.u32 %v4313, 2221713035
        %v4570 = vmul.u32 %v4314, 2221713035
        %v4571 = vmul.u32 %v4315, 2221713035
        %v4572 = vmul.u32 %v4316, 2221713035
        %v4573 = vmul.u32 %v4317, 2221713035
        %v4574 = vmul.u32 %v4318, 2221713035
        %v4575 = vmul.u32 %v4319, 2221713035
        %v4576 = vmul.u32 %v4320, 2221713035
        %v4577 = vmul.u32 %v4321, 2221713035
        %v4578 = vmul.u32 %v4322, 2221713035
        %v4579 = vmul.u32 %v4323, 2221713035
        %v4580 = vmul.u32 %v4324, 2221713035
        %v4581 = vmul.u32 %v4325, 2221713035
        %v4582 = vmul.u32 %v4326, 2221713035
        %v4583 = vmul.u32 %v4327, 2221713035
        %v4584 = vmul.u32 %v4328, 2221713035
        %v4585 = vmul.u32 %v4329, 2221713035
        %v4586 = vmul.u32 %v4330, 2221713035
        %v4587 = vmul.u32 %v4331, 2221713035
        %v4588 = vmul.u32 %v4332, 2221713035
        %v4589 = vmul.u32 %v4333, 2221713035
        %v4590 = vmul.u32 %v4334, 2221713035
        %v4591 = vmul.u32 %v4335, 2221713035
        %v4592 = vmul.u32 %v4336, 2221713035
        %v4593 = vmul.u32 %v4337, 2221713035
        %v4594 = vmul.u32 %v4338, 2221713035
        %v4595 = vmul.u32 %v4339, 2221713035
        %v4596 = vmul.u32 %v4340, 2221713035
        %v4597 = vmul.u32 %v4341, 2221713035
        %v4598 = vmul.u32 %v4342, 2221713035
        %v4599 = vmul.u32 %v4343, 2221713035
        %v4600 = vmul.u32 %v4344, 2221713035
        %v4601 = vmul.u32 %v4345, 2221713035
        %v4602 = vmul.u32 %v4346, 2221713035
        %v4603 = vmul.u32 %v4347, 2221713035
        %v4604 = vmul.u32 %v4348, 2221713035
        %v4605 = vmul.u32 %v4349, 2221713035
        %v4606 = vmul.u32 %v4350, 2221713035
        %v4607 = vmul.u32 %v4351, 2221713035
        %v4608 = vmul.u32 %v4352, 2221713035
        %v4609 = vmul.u32 %v4353, 2221713035
        %v4610 = vmul.u32 %v4354, 2221713035
        %v4611 = vmul.u32 %v4355, 2221713035
        %v4612 = vmul.u32 %v4356, 2221713035
        %v4613 = vmul.u32 %v4357, 2221713035
        %v4614 = vmul.u32 %v4358, 2221713035
        %v4615 = vmul.u32 %v4359, 2221713035
        %v4616 = vmul.u32 %v4360, 2221713035
        %v4617 = vmul.u32 %v4361, 2221713035
        %v4618 = vmul.u32 %v4362, 2221713035
        %v4619 = vmul.u32 %v4363, 2221713035
        %v4620 = vmul.u32 %v4364, 2221713035
        %v4621 = vmul.u32 %v4365, 2221713035
        %v4622 = vmul.u32 %v4366, 2221713035
        %v4623 = vmul.u32 %v4367, 2221713035
        %v4624 = vmul.u32 %v4368, 2221713035
        %v4625 = vmul.u32 %v4369, 2221713035
        %v4626 = vmul.u32 %v4370, 2221713035
        %v4627 = vmul.u32 %v4371, 2221713035
        %v4628 = vmul.u32 %v4372, 2221713035
        %v4629 = vmul.u32 %v4373, 2221713035
        %v4630 = vmul.u32 %v4374, 2221713035
        %v4631 = vmul.u32 %v4375, 2221713035
        %v4632 = vmul.u32 %v4376, 2221713035
        %v4633 = vmul.u32 %v4377, 2221713035
        %v4634 = vmul.u32 %v4378, 2221713035
        %v4635 = vmul.u32 %v4379, 2221713035
        %v4636 = vmul.u32 %v4380, 2221713035
        %v4637 = vmul.u32 %v4381, 2221713035
        %v4638 = vmul.u32 %v4382, 2221713035
        %v4639 = vmul.u32 %v4383, 2221713035
        %v4640 = vmul.u32 %v4384, 2221713035
        %v4641 = vmul.u32 %v4385, 2221713035
        %v4642 = vmul.u32 %v4386, 2221713035
        %v4643 = vmul.u32 %v4387, 2221713035
        %v4644 = vmul.u32 %v4388, 2221713035
        %v4645 = vmul.u32 %v4389, 2221713035
        %v4646 = vmul.u32 %v4390, 2221713035
        %v4647 = vmul.u32 %v4391, 2221713035
        %v4648 = vmul.u32 %v4392, 2221713035
        %v4649 = vmul.u32 %v4393, 2221713035
        %v4650 = vmul.u32 %v4394, 2221713035
        %v4651 = vmul.u32 %v4395, 2221713035
        %v4652 = vmul.u32 %v4396, 2221713035
        %v4653 = vmul.u32 %v4397, 2221713035
        %v4654 = vmul.u32 %v4398, 2221713035
        %v4655 = vmul.u32 %v4399, 2221713035
        %v4656 = vmul.u32 %v4400, 2221713035
        %v4657 = vmul.u32 %v4401, 2221713035
        %v4658 = vmul.u32 %v4402, 2221713035
        %v4659 = vmul.u32 %v4403, 2221713035
        %v4660 = vmul.u32 %v4404, 2221713035
        %v4661 = vmul.u32 %v4405, 2221713035
        %v4662 = vmul.u32 %v4406, 2221713035
        %v4663 = vmul.u32 %v4407, 2221713035
        %v4664 = vmul.u32 %v4408, 2221713035
        %v4665 = vmul.u32 %v4409, 2221713035
        %v4666 = vmul.u32 %v4410, 2221713035
        %v4667 = vmul.u32 %v4411, 2221713035
        %v4668 = vmul.u32 %v4412, 2221713035
        %v4669 = vmul.u32 %v4413, 2221713035
        %v4670 = vmul.u32 %v4414, 2221713035
        %v4671 = vmul.u32 %v4415, 2221713035
        %v4672 = vmul.u32 %v4416, 2221713035
        %v4673 = vmul.u32 %v4417, 2221713035
        %v4674 = vmul.u32 %v4418, 2221713035
        %v4675 = vmul.u32 %v4419, 2221713035
        %v4676 = vmul.u32 %v4420, 2221713035
        %v4677 = vmul.u32 %v4421, 2221713035
        %v4678 = vmul.u32 %v4422, 2221713035
        %v4679 = vmul.u32 %v4423, 2221713035
        %v4680 = vmul.u32 %v4424, 2221713035
        %v4681 = vmul.u32 %v4425, 2221713035
        %v4682 = vmul.u32 %v4426, 2221713035
        %v4683 = vmul.u32 %v4427, 2221713035
        %v4684 = vmul.u32 %v4428, 2221713035
        %v4685 = vmul.u32 %v4429, 2221713035
        %v4686 = vmul.u32 %v4430, 2221713035
        %v4687 = vmul.u32 %v4431, 2221713035
        %v4688 = vmul.u32 %v4432, 2221713035
        %v4689 = vmul.u32 %v4433, 2221713035
        %v4690 = vmul.u32 %v4434, 2221713035
        %v4691 = vmul.u32 %v4435, 2221713035
        %v4692 = vmul.u32 %v4436, 2221713035
        %v4693 = vmul.u32 %v4437, 2221713035
        %v4694 = vmul.u32 %v4438, 2221713035
        %v4695 = vmul.u32 %v4439, 2221713035
        %v4696 = vmul.u32 %v4440, 2221713035
        %v4697 = vmul.u32 %v4441, 2221713035
        %v4698 = vmul.u32 %v4442, 2221713035
        %v4699 = vmul.u32 %v4443, 2221713035
        %v4700 = vmul.u32 %v4444, 2221713035
        %v4701 = vmul.u32 %v4445, 2221713035
        %v4702 = vmul.u32 %v4446, 2221713035
        %v4703 = vmul.u32 %v4447, 2221713035
        %v4704 = vmul.u32 %v4448, 2221713035
        %v4705 = vmul.u32 %v4449, 2221713035
        %v4706 = vmul.u32 %v4450, 2221713035
        %v4707 = vmul.u32 %v4451, 2221713035
        %v4708 = vmul.u32 %v4452, 2221713035
        %v4709 = vmul.u32 %v4453, 2221713035
        %v4710 = vmul.u32 %v4454, 2221713035
        %v4711 = vmul.u32 %v4455, 2221713035
        %v4712 = vmul.u32 %v4456, 2221713035
        %v4713 = vmul.u32 %v4457, 2221713035
        %v4714 = vmul.u32 %v4458, 2221713035
        %v4715 = vmul.u32 %v4459, 2221713035
        %v4716 = vmul.u32 %v4460, 2221713035
        %v4717 = vmul.u32 %v4461, 2221713035
        %v4718 = vmul.u32 %v4462, 2221713035
        %v4719 = vmul.u32 %v4463, 2221713035
        %v4720 = vmul.u32 %v4464, 2221713035
        %v4721 = vmul.u32 %v4465, 2221713035
        %v4722 = vmul.u32 %v4466, 2221713035
        %v4723 = vmul.u32 %v4467, 2221713035
        %v4724 = vmul.u32 %v4468, 2221713035
        %v4725 = vmul.u32 %v4469, 2221713035
        %v4726 = vmul.u32 %v4470, 2221713035
        %v4727 = vmul.u32 %v4471, 2221713035
        %v4728 = vmul.u32 %v4472, 2221713035
        %v4729 = vmul.u32 %v4473, 2221713035
        %v4730 = vmul.u32 %v4474, 2221713035
        %v4731 = vmul.u32 %v4475, 2221713035
        %v4732 = vmul.u32 %v4476, 2221713035
        %v4733 = vmul.u32 %v4477, 2221713035
        %v4734 = vmul.u32 %v4478, 2221713035
        %v4735 = vmul.u32 %v4479, 2221713035
        %v4736 = vmul.u32 %v4480, 2221713035
        %v4737 = vmul.u32 %v4481, 2221713035
        %v4738 = vmul.u32 %v4482, 2221713035
        %v4739 = vmul.u32 %v4483, 2221713035
        %v4740 = vmul.u32 %v4484, 2221713035
        %v4741 = vmul.u32 %v4485, 2221713035
        %v4742 = vmul.u32 %v4486, 2221713035
        %v4743 = vmul.u32 %v4487, 2221713035
        %v4744 = vmul.u32 %v4488, 2221713035
        %v4745 = vmul.u32 %v4489, 2221713035
        %v4746 = vmul.u32 %v4490, 2221713035
        %v4747 = vmul.u32 %v4491, 2221713035
        %v4748 = vmul.u32 %v4492, 2221713035
        %v4749 = vmul.u32 %v4493, 2221713035
        %v4750 = vmul.u32 %v4494, 2221713035
        %v4751 = vmul.u32 %v4495, 2221713035
        %v4752 = vmul.u32 %v4496, 2221713035
        %v4753 = vmul.u32 %v4497, 2221713035
        %v4754 = vmul.u32 %v4498, 2221713035
        %v4755 = vmul.u32 %v4499, 2221713035
        %v4756 = vmul.u32 %v4500, 2221713035
        %v4757 = vmul.u32 %v4501, 2221713035
        %v4758 = vmul.u32 %v4502, 2221713035
        %v4759 = vmul.u32 %v4503, 2221713035
        %v4760 = vmul.u32 %v4504, 2221713035
        %v4761 = vmul.u32 %v4505, 2221713035
        %v4762 = vmul.u32 %v4506, 2221713035
        %v4763 = vmul.u32 %v4507, 2221713035
        %v4764 = vmul.u32 %v4508, 2221713035
        %v4765 = vmul.u32 %v4509, 2221713035
        %v4766 = vmul.u32 %v4510, 2221713035
        %v4767 = vmul.u32 %v4511, 2221713035
        %v4768 = vmul.u32 %v4512, 2221713035
        %v4769 = vmul.u32 %v4513, 2221713035
        %v4770 = vmul.u32 %v4514, 2221713035
        %v4771 = vmul.u32 %v4515, 2221713035
        %v4772 = vmul.u32 %v4516, 2221713035
        %v4773 = vmul.u32 %v4517, 2221713035
        %v4774 = vmul.u32 %v4518, 2221713035
        %v4775 = vmul.u32 %v4519, 2221713035
        %v4776 = vmul.u32 %v4520, 2221713035
        %v4777 = vmul.u32 %v4521, 2221713035
        %v4778 = vmul.u32 %v4522, 2221713035
        %v4779 = vmul.u32 %v4523, 2221713035
        %v4780 = vmul.u32 %v4524, 2221713035
        %v4781 = vmul.u32 %v4525, 2221713035
        %v4782 = vmul.u32 %v4526, 2221713035
        %v4783 = vmul.u32 %v4527, 2221713035
        %v4784 = vmul.u32 %v4528, 2221713035
        %v4785 = vmul.u32 %v4529, 2221713035
        %v4786 = vmul.u32 %v4530, 2221713035
        %v4787 = vmul.u32 %v4531, 2221713035
        %v4788 = vmul.u32 %v4532, 2221713035
        %v4789 = vmul.u32 %v4533, 2221713035
        %v4790 = vmul.u32 %v4534, 2221713035
        %v4791 = vmul.u32 %v4535, 2221713035
        %v4792 = vmul.u32 %v4536, 2221713035
        %v4793 = vmul.u32 %v4537, 2221713035
        %v4794 = vmul.u32 %v4538, 2221713035
        %v4795 = vmul.u32 %v4539, 2221713035
        %v4796 = vmul.u32 %v4540, 2221713035
        %v4797 = vmul.u32 %v4541, 2221713035
        %v4798 = vmul.u32 %v4542, 2221713035
        %v4799 = vmul.u32 %v4543, 2221713035
        %v4800 = vmul.u32 %v4544, 2221713035
        %v4801 = vmul.u32 %v4545, 2221713035
        %v4802 = vmul.u32 %v4546, 2221713035
        %v4803 = vmul.u32 %v4547, 2221713035
        %v4804 = vmul.u32 %v4548, 2221713035
        %v4805 = vmul.u32 %v4549, 2221713035
        %v4806 = vmul.u32 %v4550, 2221713035
        %v4807 = vmul.u32 %v4551, 2221713035
        %v4808 = vmul.u32 %v4552, 2221713035
        %v4809 = vmul.u32 %v4553, 2221713035
        %v4810 = vmul.u32 %v4554, 2221713035
        %v4811 = vmul.u32 %v4555, 2221713035
        %v4812 = vmul.u32 %v4556, 2221713035
        %v4813 = vmul.u32 %v4557, 2221713035
        %v4814 = vmul.u32 %v4558, 2221713035
        %v4815 = vmul.u32 %v4559, 2221713035
        %v4816 = vshrl.u32 %v4560, 16
        %v4817 = vshrl.u32 %v4561, 16
        %v4818 = vshrl.u32 %v4562, 16
        %v4819 = vshrl.u32 %v4563, 16
        %v4820 = vshrl.u32 %v4564, 16
        %v4821 = vshrl.u32 %v4565, 16
        %v4822 = vshrl.u32 %v4566, 16
        %v4823 = vshrl.u32 %v4567, 16
        %v4824 = vshrl.u32 %v4568, 16
        %v4825 = vshrl.u32 %v4569, 16
        %v4826 = vshrl.u32 %v4570, 16
        %v4827 = vshrl.u32 %v4571, 16
        %v4828 = vshrl.u32 %v4572, 16
        %v4829 = vshrl.u32 %v4573, 16
        %v4830 = vshrl.u32 %v4574, 16
        %v4831 = vshrl.u32 %v4575, 16
        %v4832 = vshrl.u32 %v4576, 16
        %v4833 = vshrl.u32 %v4577, 16
        %v4834 = vshrl.u32 %v4578, 16
        %v4835 = vshrl.u32 %v4579, 16
        %v4836 = vshrl.u32 %v4580, 16
        %v4837 = vshrl.u32 %v4581, 16
        %v4838 = vshrl.u32 %v4582, 16
        %v4839 = vshrl.u32 %v4583, 16
        %v4840 = vshrl.u32 %v4584, 16
        %v4841 = vshrl.u32 %v4585, 16
        %v4842 = vshrl.u32 %v4586, 16
        %v4843 = vshrl.u32 %v4587, 16
        %v4844 = vshrl.u32 %v4588, 16
        %v4845 = vshrl.u32 %v4589, 16
        %v4846 = vshrl.u32 %v4590, 16
        %v4847 = vshrl.u32 %v4591, 16
        %v4848 = vshrl.u32 %v4592, 16
        %v4849 = vshrl.u32 %v4593, 16
        %v4850 = vshrl.u32 %v4594, 16
        %v4851 = vshrl.u32 %v4595, 16
        %v4852 = vshrl.u32 %v4596, 16
        %v4853 = vshrl.u32 %v4597, 16
        %v4854 = vshrl.u32 %v4598, 16
        %v4855 = vshrl.u32 %v4599, 16
        %v4856 = vshrl.u32 %v4600, 16
        %v4857 = vshrl.u32 %v4601, 16
        %v4858 = vshrl.u32 %v4602, 16
        %v4859 = vshrl.u32 %v4603, 16
        %v4860 = vshrl.u32 %v4604, 16
        %v4861 = vshrl.u32 %v4605, 16
        %v4862 = vshrl.u32 %v4606, 16
        %v4863 = vshrl.u32 %v4607, 16
        %v4864 = vshrl.u32 %v4608, 16
        %v4865 = vshrl.u32 %v4609, 16
        %v4866 = vshrl.u32 %v4610, 16
        %v4867 = vshrl.u32 %v4611, 16
        %v4868 = vshrl.u32 %v4612, 16
        %v4869 = vshrl.u32 %v4613, 16
        %v4870 = vshrl.u32 %v4614, 16
        %v4871 = vshrl.u32 %v4615, 16
        %v4872 = vshrl.u32 %v4616, 16
        %v4873 = vshrl.u32 %v4617, 16
        %v4874 = vshrl.u32 %v4618, 16
        %v4875 = vshrl.u32 %v4619, 16
        %v4876 = vshrl.u32 %v4620, 16
        %v4877 = vshrl.u32 %v4621, 16
        %v4878 = vshrl.u32 %v4622, 16
        %v4879 = vshrl.u32 %v4623, 16
        %v4880 = vshrl.u32 %v4624, 16
        %v4881 = vshrl.u32 %v4625, 16
        %v4882 = vshrl.u32 %v4626, 16
        %v4883 = vshrl.u32 %v4627, 16
        %v4884 = vshrl.u32 %v4628, 16
        %v4885 = vshrl.u32 %v4629, 16
        %v4886 = vshrl.u32 %v4630, 16
        %v4887 = vshrl.u32 %v4631, 16
        %v4888 = vshrl.u32 %v4632, 16
        %v4889 = vshrl.u32 %v4633, 16
        %v4890 = vshrl.u32 %v4634, 16
        %v4891 = vshrl.u32 %v4635, 16
        %v4892 = vshrl.u32 %v4636, 16
        %v4893 = vshrl.u32 %v4637, 16
        %v4894 = vshrl.u32 %v4638, 16
        %v4895 = vshrl.u32 %v4639, 16
        %v4896 = vshrl.u32 %v4640, 16
        %v4897 = vshrl.u32 %v4641, 16
        %v4898 = vshrl.u32 %v4642, 16
        %v4899 = vshrl.u32 %v4643, 16
        %v4900 = vshrl.u32 %v4644, 16
        %v4901 = vshrl.u32 %v4645, 16
        %v4902 = vshrl.u32 %v4646, 16
        %v4903 = vshrl.u32 %v4647, 16
        %v4904 = vshrl.u32 %v4648, 16
        %v4905 = vshrl.u32 %v4649, 16
        %v4906 = vshrl.u32 %v4650, 16
        %v4907 = vshrl.u32 %v4651, 16
        %v4908 = vshrl.u32 %v4652, 16
        %v4909 = vshrl.u32 %v4653, 16
        %v4910 = vshrl.u32 %v4654, 16
        %v4911 = vshrl.u32 %v4655, 16
        %v4912 = vshrl.u32 %v4656, 16
        %v4913 = vshrl.u32 %v4657, 16
        %v4914 = vshrl.u32 %v4658, 16
        %v4915 = vshrl.u32 %v4659, 16
        %v4916 = vshrl.u32 %v4660, 16
        %v4917 = vshrl.u32 %v4661, 16
        %v4918 = vshrl.u32 %v4662, 16
        %v4919 = vshrl.u32 %v4663, 16
        %v4920 = vshrl.u32 %v4664, 16
        %v4921 = vshrl.u32 %v4665, 16
        %v4922 = vshrl.u32 %v4666, 16
        %v4923 = vshrl.u32 %v4667, 16
        %v4924 = vshrl.u32 %v4668, 16
        %v4925 = vshrl.u32 %v4669, 16
        %v4926 = vshrl.u32 %v4670, 16
        %v4927 = vshrl.u32 %v4671, 16
        %v4928 = vshrl.u32 %v4672, 16
        %v4929 = vshrl.u32 %v4673, 16
        %v4930 = vshrl.u32 %v4674, 16
        %v4931 = vshrl.u32 %v4675, 16
        %v4932 = vshrl.u32 %v4676, 16
        %v4933 = vshrl.u32 %v4677, 16
        %v4934 = vshrl.u32 %v4678, 16
        %v4935 = vshrl.u32 %v4679, 16
        %v4936 = vshrl.u32 %v4680, 16
        %v4937 = vshrl.u32 %v4681, 16
        %v4938 = vshrl.u32 %v4682, 16
        %v4939 = vshrl.u32 %v4683, 16
        %v4940 = vshrl.u32 %v4684, 16
        %v4941 = vshrl.u32 %v4685, 16
        %v4942 = vshrl.u32 %v4686, 16
        %v4943 = vshrl.u32 %v4687, 16
        %v4944 = vshrl.u32 %v4688, 16
        %v4945 = vshrl.u32 %v4689, 16
        %v4946 = vshrl.u32 %v4690, 16
        %v4947 = vshrl.u32 %v4691, 16
        %v4948 = vshrl.u32 %v4692, 16
        %v4949 = vshrl.u32 %v4693, 16
        %v4950 = vshrl.u32 %v4694, 16
        %v4951 = vshrl.u32 %v4695, 16
        %v4952 = vshrl.u32 %v4696, 16
        %v4953 = vshrl.u32 %v4697, 16
        %v4954 = vshrl.u32 %v4698, 16
        %v4955 = vshrl.u32 %v4699, 16
        %v4956 = vshrl.u32 %v4700, 16
        %v4957 = vshrl.u32 %v4701, 16
        %v4958 = vshrl.u32 %v4702, 16
        %v4959 = vshrl.u32 %v4703, 16
        %v4960 = vshrl.u32 %v4704, 16
        %v4961 = vshrl.u32 %v4705, 16
        %v4962 = vshrl.u32 %v4706, 16
        %v4963 = vshrl.u32 %v4707, 16
        %v4964 = vshrl.u32 %v4708, 16
        %v4965 = vshrl.u32 %v4709, 16
        %v4966 = vshrl.u32 %v4710, 16
        %v4967 = vshrl.u32 %v4711, 16
        %v4968 = vshrl.u32 %v4712, 16
        %v4969 = vshrl.u32 %v4713, 16
        %v4970 = vshrl.u32 %v4714, 16
        %v4971 = vshrl.u32 %v4715, 16
        %v4972 = vshrl.u32 %v4716, 16
        %v4973 = vshrl.u32 %v4717, 16
        %v4974 = vshrl.u32 %v4718, 16
        %v4975 = vshrl.u32 %v4719, 16
        %v4976 = vshrl.u32 %v4720, 16
        %v4977 = vshrl.u32 %v4721, 16
        %v4978 = vshrl.u32 %v4722, 16
        %v4979 = vshrl.u32 %v4723, 16
        %v4980 = vshrl.u32 %v4724, 16
        %v4981 = vshrl.u32 %v4725, 16
        %v4982 = vshrl.u32 %v4726, 16
        %v4983 = vshrl.u32 %v4727, 16
        %v4984 = vshrl.u32 %v4728, 16
        %v4985 = vshrl.u32 %v4729, 16
        %v4986 = vshrl.u32 %v4730, 16
        %v4987 = vshrl.u32 %v4731, 16
        %v4988 = vshrl.u32 %v4732, 16
        %v4989 = vshrl.u32 %v4733, 16
        %v4990 = vshrl.u32 %v4734, 16
        %v4991 = vshrl.u32 %v4735, 16
        %v4992 = vshrl.u32 %v4736, 16
        %v4993 = vshrl.u32 %v4737, 16
        %v4994 = vshrl.u32 %v4738, 16
        %v4995 = vshrl.u32 %v4739, 16
        %v4996 = vshrl.u32 %v4740, 16
        %v4997 = vshrl.u32 %v4741, 16
        %v4998 = vshrl.u32 %v4742, 16
        %v4999 = vshrl.u32 %v4743, 16
        %v5000 = vshrl.u32 %v4744, 16
        %v5001 = vshrl.u32 %v4745, 16
        %v5002 = vshrl.u32 %v4746, 16
        %v5003 = vshrl.u32 %v4747, 16
        %v5004 = vshrl.u32 %v4748, 16
        %v5005 = vshrl.u32 %v4749, 16
        %v5006 = vshrl.u32 %v4750, 16
        %v5007 = vshrl.u32 %v4751, 16
        %v5008 = vshrl.u32 %v4752, 16
        %v5009 = vshrl.u32 %v4753, 16
        %v5010 = vshrl.u32 %v4754, 16
        %v5011 = vshrl.u32 %v4755, 16
        %v5012 = vshrl.u32 %v4756, 16
        %v5013 = vshrl.u32 %v4757, 16
        %v5014 = vshrl.u32 %v4758, 16
        %v5015 = vshrl.u32 %v4759, 16
        %v5016 = vshrl.u32 %v4760, 16
        %v5017 = vshrl.u32 %v4761, 16
        %v5018 = vshrl.u32 %v4762, 16
        %v5019 = vshrl.u32 %v4763, 16
        %v5020 = vshrl.u32 %v4764, 16
        %v5021 = vshrl.u32 %v4765, 16
        %v5022 = vshrl.u32 %v4766, 16
        %v5023 = vshrl.u32 %v4767, 16
        %v5024 = vshrl.u32 %v4768, 16
        %v5025 = vshrl.u32 %v4769, 16
        %v5026 = vshrl.u32 %v4770, 16
        %v5027 = vshrl.u32 %v4771, 16
        %v5028 = vshrl.u32 %v4772, 16
        %v5029 = vshrl.u32 %v4773, 16
        %v5030 = vshrl.u32 %v4774, 16
        %v5031 = vshrl.u32 %v4775, 16
        %v5032 = vshrl.u32 %v4776, 16
        %v5033 = vshrl.u32 %v4777, 16
        %v5034 = vshrl.u32 %v4778, 16
        %v5035 = vshrl.u32 %v4779, 16
        %v5036 = vshrl.u32 %v4780, 16
        %v5037 = vshrl.u32 %v4781, 16
        %v5038 = vshrl.u32 %v4782, 16
        %v5039 = vshrl.u32 %v4783, 16
        %v5040 = vshrl.u32 %v4784, 16
        %v5041 = vshrl.u32 %v4785, 16
        %v5042 = vshrl.u32 %v4786, 16
        %v5043 = vshrl.u32 %v4787, 16
        %v5044 = vshrl.u32 %v4788, 16
        %v5045 = vshrl.u32 %v4789, 16
        %v5046 = vshrl.u32 %v4790, 16
        %v5047 = vshrl.u32 %v4791, 16
        %v5048 = vshrl.u32 %v4792, 16
        %v5049 = vshrl.u32 %v4793, 16
        %v5050 = vshrl.u32 %v4794, 16
        %v5051 = vshrl.u32 %v4795, 16
        %v5052 = vshrl.u32 %v4796, 16
        %v5053 = vshrl.u32 %v4797, 16
        %v5054 = vshrl.u32 %v4798, 16
        %v5055 = vshrl.u32 %v4799, 16
        %v5056 = vshrl.u32 %v4800, 16
        %v5057 = vshrl.u32 %v4801, 16
        %v5058 = vshrl.u32 %v4802, 16
        %v5059 = vshrl.u32 %v4803, 16
        %v5060 = vshrl.u32 %v4804, 16
        %v5061 = vshrl.u32 %v4805, 16
        %v5062 = vshrl.u32 %v4806, 16
        %v5063 = vshrl.u32 %v4807, 16
        %v5064 = vshrl.u32 %v4808, 16
        %v5065 = vshrl.u32 %v4809, 16
        %v5066 = vshrl.u32 %v4810, 16
        %v5067 = vshrl.u32 %v4811, 16
        %v5068 = vshrl.u32 %v4812, 16
        %v5069 = vshrl.u32 %v4813, 16
        %v5070 = vshrl.u32 %v4814, 16
        %v5071 = vshrl.u32 %v4815, 16
        %v5072 = vxor.u32 %v4560, %v4816
        %v5073 = vxor.u32 %v4561, %v4817
        %v5074 = vxor.u32 %v4562, %v4818
        %v5075 = vxor.u32 %v4563, %v4819
        %v5076 = vxor.u32 %v4564, %v4820
        %v5077 = vxor.u32 %v4565, %v4821
        %v5078 = vxor.u32 %v4566, %v4822
        %v5079 = vxor.u32 %v4567, %v4823
        %v5080 = vxor.u32 %v4568, %v4824
        %v5081 = vxor.u32 %v4569, %v4825
        %v5082 = vxor.u32 %v4570, %v4826
        %v5083 = vxor.u32 %v4571, %v4827
        %v5084 = vxor.u32 %v4572, %v4828
        %v5085 = vxor.u32 %v4573, %v4829
        %v5086 = vxor.u32 %v4574, %v4830
        %v5087 = vxor.u32 %v4575, %v4831
        %v5088 = vxor.u32 %v4576, %v4832
        %v5089 = vxor.u32 %v4577, %v4833
        %v5090 = vxor.u32 %v4578, %v4834
        %v5091 = vxor.u32 %v4579, %v4835
        %v5092 = vxor.u32 %v4580, %v4836
        %v5093 = vxor.u32 %v4581, %v4837
        %v5094 = vxor.u32 %v4582, %v4838
        %v5095 = vxor.u32 %v4583, %v4839
        %v5096 = vxor.u32 %v4584, %v4840
        %v5097 = vxor.u32 %v4585, %v4841
        %v5098 = vxor.u32 %v4586, %v4842
        %v5099 = vxor.u32 %v4587, %v4843
        %v5100 = vxor.u32 %v4588, %v4844
        %v5101 = vxor.u32 %v4589, %v4845
        %v5102 = vxor.u32 %v4590, %v4846
        %v5103 = vxor.u32 %v4591, %v4847
        %v5104 = vxor.u32 %v4592, %v4848
        %v5105 = vxor.u32 %v4593, %v4849
        %v5106 = vxor.u32 %v4594, %v4850
        %v5107 = vxor.u32 %v4595, %v4851
        %v5108 = vxor.u32 %v4596, %v4852
        %v5109 = vxor.u32 %v4597, %v4853
        %v5110 = vxor.u32 %v4598, %v4854
        %v5111 = vxor.u32 %v4599, %v4855
        %v5112 = vxor.u32 %v4600, %v4856
        %v5113 = vxor.u32 %v4601, %v4857
        %v5114 = vxor.u32 %v4602, %v4858
        %v5115 = vxor.u32 %v4603, %v4859
        %v5116 = vxor.u32 %v4604, %v4860
        %v5117 = vxor.u32 %v4605, %v4861
        %v5118 = vxor.u32 %v4606, %v4862
        %v5119 = vxor.u32 %v4607, %v4863
        %v5120 = vxor.u32 %v4608, %v4864
        %v5121 = vxor.u32 %v4609, %v4865
        %v5122 = vxor.u32 %v4610, %v4866
        %v5123 = vxor.u32 %v4611, %v4867
        %v5124 = vxor.u32 %v4612, %v4868
        %v5125 = vxor.u32 %v4613, %v4869
        %v5126 = vxor.u32 %v4614, %v4870
        %v5127 = vxor.u32 %v4615, %v4871
        %v5128 = vxor.u32 %v4616, %v4872
        %v5129 = vxor.u32 %v4617, %v4873
        %v5130 = vxor.u32 %v4618, %v4874
        %v5131 = vxor.u32 %v4619, %v4875
        %v5132 = vxor.u32 %v4620, %v4876
        %v5133 = vxor.u32 %v4621, %v4877
        %v5134 = vxor.u32 %v4622, %v4878
        %v5135 = vxor.u32 %v4623, %v4879
        %v5136 = vxor.u32 %v4624, %v4880
        %v5137 = vxor.u32 %v4625, %v4881
        %v5138 = vxor.u32 %v4626, %v4882
        %v5139 = vxor.u32 %v4627, %v4883
        %v5140 = vxor.u32 %v4628, %v4884
        %v5141 = vxor.u32 %v4629, %v4885
        %v5142 = vxor.u32 %v4630, %v4886
        %v5143 = vxor.u32 %v4631, %v4887
        %v5144 = vxor.u32 %v4632, %v4888
        %v5145 = vxor.u32 %v4633, %v4889
        %v5146 = vxor.u32 %v4634, %v4890
        %v5147 = vxor.u32 %v4635, %v4891
        %v5148 = vxor.u32 %v4636, %v4892
        %v5149 = vxor.u32 %v4637, %v4893
        %v5150 = vxor.u32 %v4638, %v4894
        %v5151 = vxor.u32 %v4639, %v4895
        %v5152 = vxor.u32 %v4640, %v4896
        %v5153 = vxor.u32 %v4641, %v4897
        %v5154 = vxor.u32 %v4642, %v4898
        %v5155 = vxor.u32 %v4643, %v4899
        %v5156 = vxor.u32 %v4644, %v4900
        %v5157 = vxor.u32 %v4645, %v4901
        %v5158 = vxor.u32 %v4646, %v4902
        %v5159 = vxor.u32 %v4647, %v4903
        %v5160 = vxor.u32 %v4648, %v4904
        %v5161 = vxor.u32 %v4649, %v4905
        %v5162 = vxor.u32 %v4650, %v4906
        %v5163 = vxor.u32 %v4651, %v4907
        %v5164 = vxor.u32 %v4652, %v4908
        %v5165 = vxor.u32 %v4653, %v4909
        %v5166 = vxor.u32 %v4654, %v4910
        %v5167 = vxor.u32 %v4655, %v4911
        %v5168 = vxor.u32 %v4656, %v4912
        %v5169 = vxor.u32 %v4657, %v4913
        %v5170 = vxor.u32 %v4658, %v4914
        %v5171 = vxor.u32 %v4659, %v4915
        %v5172 = vxor.u32 %v4660, %v4916
        %v5173 = vxor.u32 %v4661, %v4917
        %v5174 = vxor.u32 %v4662, %v4918
        %v5175 = vxor.u32 %v4663, %v4919
        %v5176 = vxor.u32 %v4664, %v4920
        %v5177 = vxor.u32 %v4665, %v4921
        %v5178 = vxor.u32 %v4666, %v4922
        %v5179 = vxor.u32 %v4667, %v4923
        %v5180 = vxor.u32 %v4668, %v4924
        %v5181 = vxor.u32 %v4669, %v4925
        %v5182 = vxor.u32 %v4670, %v4926
        %v5183 = vxor.u32 %v4671, %v4927
        %v5184 = vxor.u32 %v4672, %v4928
        %v5185 = vxor.u32 %v4673, %v4929
        %v5186 = vxor.u32 %v4674, %v4930
        %v5187 = vxor.u32 %v4675, %v4931
        %v5188 = vxor.u32 %v4676, %v4932
        %v5189 = vxor.u32 %v4677, %v4933
        %v5190 = vxor.u32 %v4678, %v4934
        %v5191 = vxor.u32 %v4679, %v4935
        %v5192 = vxor.u32 %v4680, %v4936
        %v5193 = vxor.u32 %v4681, %v4937
        %v5194 = vxor.u32 %v4682, %v4938
        %v5195 = vxor.u32 %v4683, %v4939
        %v5196 = vxor.u32 %v4684, %v4940
        %v5197 = vxor.u32 %v4685, %v4941
        %v5198 = vxor.u32 %v4686, %v4942
        %v5199 = vxor.u32 %v4687, %v4943
        %v5200 = vxor.u32 %v4688, %v4944
        %v5201 = vxor.u32 %v4689, %v4945
        %v5202 = vxor.u32 %v4690, %v4946
        %v5203 = vxor.u32 %v4691, %v4947
        %v5204 = vxor.u32 %v4692, %v4948
        %v5205 = vxor.u32 %v4693, %v4949
        %v5206 = vxor.u32 %v4694, %v4950
        %v5207 = vxor.u32 %v4695, %v4951
        %v5208 = vxor.u32 %v4696, %v4952
        %v5209 = vxor.u32 %v4697, %v4953
        %v5210 = vxor.u32 %v4698, %v4954
        %v5211 = vxor.u32 %v4699, %v4955
        %v5212 = vxor.u32 %v4700, %v4956
        %v5213 = vxor.u32 %v4701, %v4957
        %v5214 = vxor.u32 %v4702, %v4958
        %v5215 = vxor.u32 %v4703, %v4959
        %v5216 = vxor.u32 %v4704, %v4960
        %v5217 = vxor.u32 %v4705, %v4961
        %v5218 = vxor.u32 %v4706, %v4962
        %v5219 = vxor.u32 %v4707, %v4963
        %v5220 = vxor.u32 %v4708, %v4964
        %v5221 = vxor.u32 %v4709, %v4965
        %v5222 = vxor.u32 %v4710, %v4966
        %v5223 = vxor.u32 %v4711, %v4967
        %v5224 = vxor.u32 %v4712, %v4968
        %v5225 = vxor.u32 %v4713, %v4969
        %v5226 = vxor.u32 %v4714, %v4970
        %v5227 = vxor.u32 %v4715, %v4971
        %v5228 = vxor.u32 %v4716, %v4972
        %v5229 = vxor.u32 %v4717, %v4973
        %v5230 = vxor.u32 %v4718, %v4974
        %v5231 = vxor.u32 %v4719, %v4975
        %v5232 = vxor.u32 %v4720, %v4976
        %v5233 = vxor.u32 %v4721, %v4977
        %v5234 = vxor.u32 %v4722, %v4978
        %v5235 = vxor.u32 %v4723, %v4979
        %v5236 = vxor.u32 %v4724, %v4980
        %v5237 = vxor.u32 %v4725, %v4981
        %v5238 = vxor.u32 %v4726, %v4982
        %v5239 = vxor.u32 %v4727, %v4983
        %v5240 = vxor.u32 %v4728, %v4984
        %v5241 = vxor.u32 %v4729, %v4985
        %v5242 = vxor.u32 %v4730, %v4986
        %v5243 = vxor.u32 %v4731, %v4987
        %v5244 = vxor.u32 %v4732, %v4988
        %v5245 = vxor.u32 %v4733, %v4989
        %v5246 = vxor.u32 %v4734, %v4990
        %v5247 = vxor.u32 %v4735, %v4991
        %v5248 = vxor.u32 %v4736, %v4992
        %v5249 = vxor.u32 %v4737, %v4993
        %v5250 = vxor.u32 %v4738, %v4994
        %v5251 = vxor.u32 %v4739, %v4995
        %v5252 = vxor.u32 %v4740, %v4996
        %v5253 = vxor.u32 %v4741, %v4997
        %v5254 = vxor.u32 %v4742, %v4998
        %v5255 = vxor.u32 %v4743, %v4999
        %v5256 = vxor.u32 %v4744, %v5000
        %v5257 = vxor.u32 %v4745, %v5001
        %v5258 = vxor.u32 %v4746, %v5002
        %v5259 = vxor.u32 %v4747, %v5003
        %v5260 = vxor.u32 %v4748, %v5004
        %v5261 = vxor.u32 %v4749, %v5005
        %v5262 = vxor.u32 %v4750, %v5006
        %v5263 = vxor.u32 %v4751, %v5007
        %v5264 = vxor.u32 %v4752, %v5008
        %v5265 = vxor.u32 %v4753, %v5009
        %v5266 = vxor.u32 %v4754, %v5010
        %v5267 = vxor.u32 %v4755, %v5011
        %v5268 = vxor.u32 %v4756, %v5012
        %v5269 = vxor.u32 %v4757, %v5013
        %v5270 = vxor.u32 %v4758, %v5014
        %v5271 = vxor.u32 %v4759, %v5015
        %v5272 = vxor.u32 %v4760, %v5016
        %v5273 = vxor.u32 %v4761, %v5017
        %v5274 = vxor.u32 %v4762, %v5018
        %v5275 = vxor.u32 %v4763, %v5019
        %v5276 = vxor.u32 %v4764, %v5020
        %v5277 = vxor.u32 %v4765, %v5021
        %v5278 = vxor.u32 %v4766, %v5022
        %v5279 = vxor.u32 %v4767, %v5023
        %v5280 = vxor.u32 %v4768, %v5024
        %v5281 = vxor.u32 %v4769, %v5025
        %v5282 = vxor.u32 %v4770, %v5026
        %v5283 = vxor.u32 %v4771, %v5027
        %v5284 = vxor.u32 %v4772, %v5028
        %v5285 = vxor.u32 %v4773, %v5029
        %v5286 = vxor.u32 %v4774, %v5030
        %v5287 = vxor.u32 %v4775, %v5031
        %v5288 = vxor.u32 %v4776, %v5032
        %v5289 = vxor.u32 %v4777, %v5033
        %v5290 = vxor.u32 %v4778, %v5034
        %v5291 = vxor.u32 %v4779, %v5035
        %v5292 = vxor.u32 %v4780, %v5036
        %v5293 = vxor.u32 %v4781, %v5037
        %v5294 = vxor.u32 %v4782, %v5038
        %v5295 = vxor.u32 %v4783, %v5039
        %v5296 = vxor.u32 %v4784, %v5040
        %v5297 = vxor.u32 %v4785, %v5041
        %v5298 = vxor.u32 %v4786, %v5042
        %v5299 = vxor.u32 %v4787, %v5043
        %v5300 = vxor.u32 %v4788, %v5044
        %v5301 = vxor.u32 %v4789, %v5045
        %v5302 = vxor.u32 %v4790, %v5046
        %v5303 = vxor.u32 %v4791, %v5047
        %v5304 = vxor.u32 %v4792, %v5048
        %v5305 = vxor.u32 %v4793, %v5049
        %v5306 = vxor.u32 %v4794, %v5050
        %v5307 = vxor.u32 %v4795, %v5051
        %v5308 = vxor.u32 %v4796, %v5052
        %v5309 = vxor.u32 %v4797, %v5053
        %v5310 = vxor.u32 %v4798, %v5054
        %v5311 = vxor.u32 %v4799, %v5055
        %v5312 = vxor.u32 %v4800, %v5056
        %v5313 = vxor.u32 %v4801, %v5057
        %v5314 = vxor.u32 %v4802, %v5058
        %v5315 = vxor.u32 %v4803, %v5059
        %v5316 = vxor.u32 %v4804, %v5060
        %v5317 = vxor.u32 %v4805, %v5061
        %v5318 = vxor.u32 %v4806, %v5062
        %v5319 = vxor.u32 %v4807, %v5063
        %v5320 = vxor.u32 %v4808, %v5064
        %v5321 = vxor.u32 %v4809, %v5065
        %v5322 = vxor.u32 %v4810, %v5066
        %v5323 = vxor.u32 %v4811, %v5067
        %v5324 = vxor.u32 %v4812, %v5068
        %v5325 = vxor.u32 %v4813, %v5069
        %v5326 = vxor.u32 %v4814, %v5070
        %v5327 = vxor.u32 %v4815, %v5071
        %v5328 = vand.u32 %v5072, 2147483647
        %v5329 = vand.u32 %v5073, 2147483647
        %v5330 = vand.u32 %v5074, 2147483647
        %v5331 = vand.u32 %v5075, 2147483647
        %v5332 = vand.u32 %v5076, 2147483647
        %v5333 = vand.u32 %v5077, 2147483647
        %v5334 = vand.u32 %v5078, 2147483647
        %v5335 = vand.u32 %v5079, 2147483647
        %v5336 = vand.u32 %v5080, 2147483647
        %v5337 = vand.u32 %v5081, 2147483647
        %v5338 = vand.u32 %v5082, 2147483647
        %v5339 = vand.u32 %v5083, 2147483647
        %v5340 = vand.u32 %v5084, 2147483647
        %v5341 = vand.u32 %v5085, 2147483647
        %v5342 = vand.u32 %v5086, 2147483647
        %v5343 = vand.u32 %v5087, 2147483647
        %v5344 = vand.u32 %v5088, 2147483647
        %v5345 = vand.u32 %v5089, 2147483647
        %v5346 = vand.u32 %v5090, 2147483647
        %v5347 = vand.u32 %v5091, 2147483647
        %v5348 = vand.u32 %v5092, 2147483647
        %v5349 = vand.u32 %v5093, 2147483647
        %v5350 = vand.u32 %v5094, 2147483647
        %v5351 = vand.u32 %v5095, 2147483647
        %v5352 = vand.u32 %v5096, 2147483647
        %v5353 = vand.u32 %v5097, 2147483647
        %v5354 = vand.u32 %v5098, 2147483647
        %v5355 = vand.u32 %v5099, 2147483647
        %v5356 = vand.u32 %v5100, 2147483647
        %v5357 = vand.u32 %v5101, 2147483647
        %v5358 = vand.u32 %v5102, 2147483647
        %v5359 = vand.u32 %v5103, 2147483647
        %v5360 = vand.u32 %v5104, 2147483647
        %v5361 = vand.u32 %v5105, 2147483647
        %v5362 = vand.u32 %v5106, 2147483647
        %v5363 = vand.u32 %v5107, 2147483647
        %v5364 = vand.u32 %v5108, 2147483647
        %v5365 = vand.u32 %v5109, 2147483647
        %v5366 = vand.u32 %v5110, 2147483647
        %v5367 = vand.u32 %v5111, 2147483647
        %v5368 = vand.u32 %v5112, 2147483647
        %v5369 = vand.u32 %v5113, 2147483647
        %v5370 = vand.u32 %v5114, 2147483647
        %v5371 = vand.u32 %v5115, 2147483647
        %v5372 = vand.u32 %v5116, 2147483647
        %v5373 = vand.u32 %v5117, 2147483647
        %v5374 = vand.u32 %v5118, 2147483647
        %v5375 = vand.u32 %v5119, 2147483647
        %v5376 = vand.u32 %v5120, 2147483647
        %v5377 = vand.u32 %v5121, 2147483647
        %v5378 = vand.u32 %v5122, 2147483647
        %v5379 = vand.u32 %v5123, 2147483647
        %v5380 = vand.u32 %v5124, 2147483647
        %v5381 = vand.u32 %v5125, 2147483647
        %v5382 = vand.u32 %v5126, 2147483647
        %v5383 = vand.u32 %v5127, 2147483647
        %v5384 = vand.u32 %v5128, 2147483647
        %v5385 = vand.u32 %v5129, 2147483647
        %v5386 = vand.u32 %v5130, 2147483647
        %v5387 = vand.u32 %v5131, 2147483647
        %v5388 = vand.u32 %v5132, 2147483647
        %v5389 = vand.u32 %v5133, 2147483647
        %v5390 = vand.u32 %v5134, 2147483647
        %v5391 = vand.u32 %v5135, 2147483647
        %v5392 = vand.u32 %v5136, 2147483647
        %v5393 = vand.u32 %v5137, 2147483647
        %v5394 = vand.u32 %v5138, 2147483647
        %v5395 = vand.u32 %v5139, 2147483647
        %v5396 = vand.u32 %v5140, 2147483647
        %v5397 = vand.u32 %v5141, 2147483647
        %v5398 = vand.u32 %v5142, 2147483647
        %v5399 = vand.u32 %v5143, 2147483647
        %v5400 = vand.u32 %v5144, 2147483647
        %v5401 = vand.u32 %v5145, 2147483647
        %v5402 = vand.u32 %v5146, 2147483647
        %v5403 = vand.u32 %v5147, 2147483647
        %v5404 = vand.u32 %v5148, 2147483647
        %v5405 = vand.u32 %v5149, 2147483647
        %v5406 = vand.u32 %v5150, 2147483647
        %v5407 = vand.u32 %v5151, 2147483647
        %v5408 = vand.u32 %v5152, 2147483647
        %v5409 = vand.u32 %v5153, 2147483647
        %v5410 = vand.u32 %v5154, 2147483647
        %v5411 = vand.u32 %v5155, 2147483647
        %v5412 = vand.u32 %v5156, 2147483647
        %v5413 = vand.u32 %v5157, 2147483647
        %v5414 = vand.u32 %v5158, 2147483647
        %v5415 = vand.u32 %v5159, 2147483647
        %v5416 = vand.u32 %v5160, 2147483647
        %v5417 = vand.u32 %v5161, 2147483647
        %v5418 = vand.u32 %v5162, 2147483647
        %v5419 = vand.u32 %v5163, 2147483647
        %v5420 = vand.u32 %v5164, 2147483647
        %v5421 = vand.u32 %v5165, 2147483647
        %v5422 = vand.u32 %v5166, 2147483647
        %v5423 = vand.u32 %v5167, 2147483647
        %v5424 = vand.u32 %v5168, 2147483647
        %v5425 = vand.u32 %v5169, 2147483647
        %v5426 = vand.u32 %v5170, 2147483647
        %v5427 = vand.u32 %v5171, 2147483647
        %v5428 = vand.u32 %v5172, 2147483647
        %v5429 = vand.u32 %v5173, 2147483647
        %v5430 = vand.u32 %v5174, 2147483647
        %v5431 = vand.u32 %v5175, 2147483647
        %v5432 = vand.u32 %v5176, 2147483647
        %v5433 = vand.u32 %v5177, 2147483647
        %v5434 = vand.u32 %v5178, 2147483647
        %v5435 = vand.u32 %v5179, 2147483647
        %v5436 = vand.u32 %v5180, 2147483647
        %v5437 = vand.u32 %v5181, 2147483647
        %v5438 = vand.u32 %v5182, 2147483647
        %v5439 = vand.u32 %v5183, 2147483647
        %v5440 = vand.u32 %v5184, 2147483647
        %v5441 = vand.u32 %v5185, 2147483647
        %v5442 = vand.u32 %v5186, 2147483647
        %v5443 = vand.u32 %v5187, 2147483647
        %v5444 = vand.u32 %v5188, 2147483647
        %v5445 = vand.u32 %v5189, 2147483647
        %v5446 = vand.u32 %v5190, 2147483647
        %v5447 = vand.u32 %v5191, 2147483647
        %v5448 = vand.u32 %v5192, 2147483647
        %v5449 = vand.u32 %v5193, 2147483647
        %v5450 = vand.u32 %v5194, 2147483647
        %v5451 = vand.u32 %v5195, 2147483647
        %v5452 = vand.u32 %v5196, 2147483647
        %v5453 = vand.u32 %v5197, 2147483647
        %v5454 = vand.u32 %v5198, 2147483647
        %v5455 = vand.u32 %v5199, 2147483647
        %v5456 = vand.u32 %v5200, 2147483647
        %v5457 = vand.u32 %v5201, 2147483647
        %v5458 = vand.u32 %v5202, 2147483647
        %v5459 = vand.u32 %v5203, 2147483647
        %v5460 = vand.u32 %v5204, 2147483647
        %v5461 = vand.u32 %v5205, 2147483647
        %v5462 = vand.u32 %v5206, 2147483647
        %v5463 = vand.u32 %v5207, 2147483647
        %v5464 = vand.u32 %v5208, 2147483647
        %v5465 = vand.u32 %v5209, 2147483647
        %v5466 = vand.u32 %v5210, 2147483647
        %v5467 = vand.u32 %v5211, 2147483647
        %v5468 = vand.u32 %v5212, 2147483647
        %v5469 = vand.u32 %v5213, 2147483647
        %v5470 = vand.u32 %v5214, 2147483647
        %v5471 = vand.u32 %v5215, 2147483647
        %v5472 = vand.u32 %v5216, 2147483647
        %v5473 = vand.u32 %v5217, 2147483647
        %v5474 = vand.u32 %v5218, 2147483647
        %v5475 = vand.u32 %v5219, 2147483647
        %v5476 = vand.u32 %v5220, 2147483647
        %v5477 = vand.u32 %v5221, 2147483647
        %v5478 = vand.u32 %v5222, 2147483647
        %v5479 = vand.u32 %v5223, 2147483647
        %v5480 = vand.u32 %v5224, 2147483647
        %v5481 = vand.u32 %v5225, 2147483647
        %v5482 = vand.u32 %v5226, 2147483647
        %v5483 = vand.u32 %v5227, 2147483647
        %v5484 = vand.u32 %v5228, 2147483647
        %v5485 = vand.u32 %v5229, 2147483647
        %v5486 = vand.u32 %v5230, 2147483647
        %v5487 = vand.u32 %v5231, 2147483647
        %v5488 = vand.u32 %v5232, 2147483647
        %v5489 = vand.u32 %v5233, 2147483647
        %v5490 = vand.u32 %v5234, 2147483647
        %v5491 = vand.u32 %v5235, 2147483647
        %v5492 = vand.u32 %v5236, 2147483647
        %v5493 = vand.u32 %v5237, 2147483647
        %v5494 = vand.u32 %v5238, 2147483647
        %v5495 = vand.u32 %v5239, 2147483647
        %v5496 = vand.u32 %v5240, 2147483647
        %v5497 = vand.u32 %v5241, 2147483647
        %v5498 = vand.u32 %v5242, 2147483647
        %v5499 = vand.u32 %v5243, 2147483647
        %v5500 = vand.u32 %v5244, 2147483647
        %v5501 = vand.u32 %v5245, 2147483647
        %v5502 = vand.u32 %v5246, 2147483647
        %v5503 = vand.u32 %v5247, 2147483647
        %v5504 = vand.u32 %v5248, 2147483647
        %v5505 = vand.u32 %v5249, 2147483647
        %v5506 = vand.u32 %v5250, 2147483647
        %v5507 = vand.u32 %v5251, 2147483647
        %v5508 = vand.u32 %v5252, 2147483647
        %v5509 = vand.u32 %v5253, 2147483647
        %v5510 = vand.u32 %v5254, 2147483647
        %v5511 = vand.u32 %v5255, 2147483647
        %v5512 = vand.u32 %v5256, 2147483647
        %v5513 = vand.u32 %v5257, 2147483647
        %v5514 = vand.u32 %v5258, 2147483647
        %v5515 = vand.u32 %v5259, 2147483647
        %v5516 = vand.u32 %v5260, 2147483647
        %v5517 = vand.u32 %v5261, 2147483647
        %v5518 = vand.u32 %v5262, 2147483647
        %v5519 = vand.u32 %v5263, 2147483647
        %v5520 = vand.u32 %v5264, 2147483647
        %v5521 = vand.u32 %v5265, 2147483647
        %v5522 = vand.u32 %v5266, 2147483647
        %v5523 = vand.u32 %v5267, 2147483647
        %v5524 = vand.u32 %v5268, 2147483647
        %v5525 = vand.u32 %v5269, 2147483647
        %v5526 = vand.u32 %v5270, 2147483647
        %v5527 = vand.u32 %v5271, 2147483647
        %v5528 = vand.u32 %v5272, 2147483647
        %v5529 = vand.u32 %v5273, 2147483647
        %v5530 = vand.u32 %v5274, 2147483647
        %v5531 = vand.u32 %v5275, 2147483647
        %v5532 = vand.u32 %v5276, 2147483647
        %v5533 = vand.u32 %v5277, 2147483647
        %v5534 = vand.u32 %v5278, 2147483647
        %v5535 = vand.u32 %v5279, 2147483647
        %v5536 = vand.u32 %v5280, 2147483647
        %v5537 = vand.u32 %v5281, 2147483647
        %v5538 = vand.u32 %v5282, 2147483647
        %v5539 = vand.u32 %v5283, 2147483647
        %v5540 = vand.u32 %v5284, 2147483647
        %v5541 = vand.u32 %v5285, 2147483647
        %v5542 = vand.u32 %v5286, 2147483647
        %v5543 = vand.u32 %v5287, 2147483647
        %v5544 = vand.u32 %v5288, 2147483647
        %v5545 = vand.u32 %v5289, 2147483647
        %v5546 = vand.u32 %v5290, 2147483647
        %v5547 = vand.u32 %v5291, 2147483647
        %v5548 = vand.u32 %v5292, 2147483647
        %v5549 = vand.u32 %v5293, 2147483647
        %v5550 = vand.u32 %v5294, 2147483647
        %v5551 = vand.u32 %v5295, 2147483647
        %v5552 = vand.u32 %v5296, 2147483647
        %v5553 = vand.u32 %v5297, 2147483647
        %v5554 = vand.u32 %v5298, 2147483647
        %v5555 = vand.u32 %v5299, 2147483647
        %v5556 = vand.u32 %v5300, 2147483647
        %v5557 = vand.u32 %v5301, 2147483647
        %v5558 = vand.u32 %v5302, 2147483647
        %v5559 = vand.u32 %v5303, 2147483647
        %v5560 = vand.u32 %v5304, 2147483647
        %v5561 = vand.u32 %v5305, 2147483647
        %v5562 = vand.u32 %v5306, 2147483647
        %v5563 = vand.u32 %v5307, 2147483647
        %v5564 = vand.u32 %v5308, 2147483647
        %v5565 = vand.u32 %v5309, 2147483647
        %v5566 = vand.u32 %v5310, 2147483647
        %v5567 = vand.u32 %v5311, 2147483647
        %v5568 = vand.u32 %v5312, 2147483647
        %v5569 = vand.u32 %v5313, 2147483647
        %v5570 = vand.u32 %v5314, 2147483647
        %v5571 = vand.u32 %v5315, 2147483647
        %v5572 = vand.u32 %v5316, 2147483647
        %v5573 = vand.u32 %v5317, 2147483647
        %v5574 = vand.u32 %v5318, 2147483647
        %v5575 = vand.u32 %v5319, 2147483647
        %v5576 = vand.u32 %v5320, 2147483647
        %v5577 = vand.u32 %v5321, 2147483647
        %v5578 = vand.u32 %v5322, 2147483647
        %v5579 = vand.u32 %v5323, 2147483647
        %v5580 = vand.u32 %v5324, 2147483647
        %v5581 = vand.u32 %v5325, 2147483647
        %v5582 = vand.u32 %v5326, 2147483647
        %v5583 = vand.u32 %v5327, 2147483647
        %vm5584 = vcmp.ge.s32.totalorder %v5328, 1073741824
        %vm5585 = vcmp.ge.s32.totalorder %v5329, 1073741824
        %vm5586 = vcmp.ge.s32.totalorder %v5330, 1073741824
        %vm5587 = vcmp.ge.s32.totalorder %v5331, 1073741824
        %vm5588 = vcmp.ge.s32.totalorder %v5332, 1073741824
        %vm5589 = vcmp.ge.s32.totalorder %v5333, 1073741824
        %vm5590 = vcmp.ge.s32.totalorder %v5334, 1073741824
        %vm5591 = vcmp.ge.s32.totalorder %v5335, 1073741824
        %vm5592 = vcmp.ge.s32.totalorder %v5336, 1073741824
        %vm5593 = vcmp.ge.s32.totalorder %v5337, 1073741824
        %vm5594 = vcmp.ge.s32.totalorder %v5338, 1073741824
        %vm5595 = vcmp.ge.s32.totalorder %v5339, 1073741824
        %vm5596 = vcmp.ge.s32.totalorder %v5340, 1073741824
        %vm5597 = vcmp.ge.s32.totalorder %v5341, 1073741824
        %vm5598 = vcmp.ge.s32.totalorder %v5342, 1073741824
        %vm5599 = vcmp.ge.s32.totalorder %v5343, 1073741824
        %vm5600 = vcmp.ge.s32.totalorder %v5344, 1073741824
        %vm5601 = vcmp.ge.s32.totalorder %v5345, 1073741824
        %vm5602 = vcmp.ge.s32.totalorder %v5346, 1073741824
        %vm5603 = vcmp.ge.s32.totalorder %v5347, 1073741824
        %vm5604 = vcmp.ge.s32.totalorder %v5348, 1073741824
        %vm5605 = vcmp.ge.s32.totalorder %v5349, 1073741824
        %vm5606 = vcmp.ge.s32.totalorder %v5350, 1073741824
        %vm5607 = vcmp.ge.s32.totalorder %v5351, 1073741824
        %vm5608 = vcmp.ge.s32.totalorder %v5352, 1073741824
        %vm5609 = vcmp.ge.s32.totalorder %v5353, 1073741824
        %vm5610 = vcmp.ge.s32.totalorder %v5354, 1073741824
        %vm5611 = vcmp.ge.s32.totalorder %v5355, 1073741824
        %vm5612 = vcmp.ge.s32.totalorder %v5356, 1073741824
        %vm5613 = vcmp.ge.s32.totalorder %v5357, 1073741824
        %vm5614 = vcmp.ge.s32.totalorder %v5358, 1073741824
        %vm5615 = vcmp.ge.s32.totalorder %v5359, 1073741824
        %vm5616 = vcmp.ge.s32.totalorder %v5360, 1073741824
        %vm5617 = vcmp.ge.s32.totalorder %v5361, 1073741824
        %vm5618 = vcmp.ge.s32.totalorder %v5362, 1073741824
        %vm5619 = vcmp.ge.s32.totalorder %v5363, 1073741824
        %vm5620 = vcmp.ge.s32.totalorder %v5364, 1073741824
        %vm5621 = vcmp.ge.s32.totalorder %v5365, 1073741824
        %vm5622 = vcmp.ge.s32.totalorder %v5366, 1073741824
        %vm5623 = vcmp.ge.s32.totalorder %v5367, 1073741824
        %vm5624 = vcmp.ge.s32.totalorder %v5368, 1073741824
        %vm5625 = vcmp.ge.s32.totalorder %v5369, 1073741824
        %vm5626 = vcmp.ge.s32.totalorder %v5370, 1073741824
        %vm5627 = vcmp.ge.s32.totalorder %v5371, 1073741824
        %vm5628 = vcmp.ge.s32.totalorder %v5372, 1073741824
        %vm5629 = vcmp.ge.s32.totalorder %v5373, 1073741824
        %vm5630 = vcmp.ge.s32.totalorder %v5374, 1073741824
        %vm5631 = vcmp.ge.s32.totalorder %v5375, 1073741824
        %vm5632 = vcmp.ge.s32.totalorder %v5376, 1073741824
        %vm5633 = vcmp.ge.s32.totalorder %v5377, 1073741824
        %vm5634 = vcmp.ge.s32.totalorder %v5378, 1073741824
        %vm5635 = vcmp.ge.s32.totalorder %v5379, 1073741824
        %vm5636 = vcmp.ge.s32.totalorder %v5380, 1073741824
        %vm5637 = vcmp.ge.s32.totalorder %v5381, 1073741824
        %vm5638 = vcmp.ge.s32.totalorder %v5382, 1073741824
        %vm5639 = vcmp.ge.s32.totalorder %v5383, 1073741824
        %vm5640 = vcmp.ge.s32.totalorder %v5384, 1073741824
        %vm5641 = vcmp.ge.s32.totalorder %v5385, 1073741824
        %vm5642 = vcmp.ge.s32.totalorder %v5386, 1073741824
        %vm5643 = vcmp.ge.s32.totalorder %v5387, 1073741824
        %vm5644 = vcmp.ge.s32.totalorder %v5388, 1073741824
        %vm5645 = vcmp.ge.s32.totalorder %v5389, 1073741824
        %vm5646 = vcmp.ge.s32.totalorder %v5390, 1073741824
        %vm5647 = vcmp.ge.s32.totalorder %v5391, 1073741824
        %vm5648 = vcmp.ge.s32.totalorder %v5392, 1073741824
        %vm5649 = vcmp.ge.s32.totalorder %v5393, 1073741824
        %vm5650 = vcmp.ge.s32.totalorder %v5394, 1073741824
        %vm5651 = vcmp.ge.s32.totalorder %v5395, 1073741824
        %vm5652 = vcmp.ge.s32.totalorder %v5396, 1073741824
        %vm5653 = vcmp.ge.s32.totalorder %v5397, 1073741824
        %vm5654 = vcmp.ge.s32.totalorder %v5398, 1073741824
        %vm5655 = vcmp.ge.s32.totalorder %v5399, 1073741824
        %vm5656 = vcmp.ge.s32.totalorder %v5400, 1073741824
        %vm5657 = vcmp.ge.s32.totalorder %v5401, 1073741824
        %vm5658 = vcmp.ge.s32.totalorder %v5402, 1073741824
        %vm5659 = vcmp.ge.s32.totalorder %v5403, 1073741824
        %vm5660 = vcmp.ge.s32.totalorder %v5404, 1073741824
        %vm5661 = vcmp.ge.s32.totalorder %v5405, 1073741824
        %vm5662 = vcmp.ge.s32.totalorder %v5406, 1073741824
        %vm5663 = vcmp.ge.s32.totalorder %v5407, 1073741824
        %vm5664 = vcmp.ge.s32.totalorder %v5408, 1073741824
        %vm5665 = vcmp.ge.s32.totalorder %v5409, 1073741824
        %vm5666 = vcmp.ge.s32.totalorder %v5410, 1073741824
        %vm5667 = vcmp.ge.s32.totalorder %v5411, 1073741824
        %vm5668 = vcmp.ge.s32.totalorder %v5412, 1073741824
        %vm5669 = vcmp.ge.s32.totalorder %v5413, 1073741824
        %vm5670 = vcmp.ge.s32.totalorder %v5414, 1073741824
        %vm5671 = vcmp.ge.s32.totalorder %v5415, 1073741824
        %vm5672 = vcmp.ge.s32.totalorder %v5416, 1073741824
        %vm5673 = vcmp.ge.s32.totalorder %v5417, 1073741824
        %vm5674 = vcmp.ge.s32.totalorder %v5418, 1073741824
        %vm5675 = vcmp.ge.s32.totalorder %v5419, 1073741824
        %vm5676 = vcmp.ge.s32.totalorder %v5420, 1073741824
        %vm5677 = vcmp.ge.s32.totalorder %v5421, 1073741824
        %vm5678 = vcmp.ge.s32.totalorder %v5422, 1073741824
        %vm5679 = vcmp.ge.s32.totalorder %v5423, 1073741824
        %vm5680 = vcmp.ge.s32.totalorder %v5424, 1073741824
        %vm5681 = vcmp.ge.s32.totalorder %v5425, 1073741824
        %vm5682 = vcmp.ge.s32.totalorder %v5426, 1073741824
        %vm5683 = vcmp.ge.s32.totalorder %v5427, 1073741824
        %vm5684 = vcmp.ge.s32.totalorder %v5428, 1073741824
        %vm5685 = vcmp.ge.s32.totalorder %v5429, 1073741824
        %vm5686 = vcmp.ge.s32.totalorder %v5430, 1073741824
        %vm5687 = vcmp.ge.s32.totalorder %v5431, 1073741824
        %vm5688 = vcmp.ge.s32.totalorder %v5432, 1073741824
        %vm5689 = vcmp.ge.s32.totalorder %v5433, 1073741824
        %vm5690 = vcmp.ge.s32.totalorder %v5434, 1073741824
        %vm5691 = vcmp.ge.s32.totalorder %v5435, 1073741824
        %vm5692 = vcmp.ge.s32.totalorder %v5436, 1073741824
        %vm5693 = vcmp.ge.s32.totalorder %v5437, 1073741824
        %vm5694 = vcmp.ge.s32.totalorder %v5438, 1073741824
        %vm5695 = vcmp.ge.s32.totalorder %v5439, 1073741824
        %vm5696 = vcmp.ge.s32.totalorder %v5440, 1073741824
        %vm5697 = vcmp.ge.s32.totalorder %v5441, 1073741824
        %vm5698 = vcmp.ge.s32.totalorder %v5442, 1073741824
        %vm5699 = vcmp.ge.s32.totalorder %v5443, 1073741824
        %vm5700 = vcmp.ge.s32.totalorder %v5444, 1073741824
        %vm5701 = vcmp.ge.s32.totalorder %v5445, 1073741824
        %vm5702 = vcmp.ge.s32.totalorder %v5446, 1073741824
        %vm5703 = vcmp.ge.s32.totalorder %v5447, 1073741824
        %vm5704 = vcmp.ge.s32.totalorder %v5448, 1073741824
        %vm5705 = vcmp.ge.s32.totalorder %v5449, 1073741824
        %vm5706 = vcmp.ge.s32.totalorder %v5450, 1073741824
        %vm5707 = vcmp.ge.s32.totalorder %v5451, 1073741824
        %vm5708 = vcmp.ge.s32.totalorder %v5452, 1073741824
        %vm5709 = vcmp.ge.s32.totalorder %v5453, 1073741824
        %vm5710 = vcmp.ge.s32.totalorder %v5454, 1073741824
        %vm5711 = vcmp.ge.s32.totalorder %v5455, 1073741824
        %vm5712 = vcmp.ge.s32.totalorder %v5456, 1073741824
        %vm5713 = vcmp.ge.s32.totalorder %v5457, 1073741824
        %vm5714 = vcmp.ge.s32.totalorder %v5458, 1073741824
        %vm5715 = vcmp.ge.s32.totalorder %v5459, 1073741824
        %vm5716 = vcmp.ge.s32.totalorder %v5460, 1073741824
        %vm5717 = vcmp.ge.s32.totalorder %v5461, 1073741824
        %vm5718 = vcmp.ge.s32.totalorder %v5462, 1073741824
        %vm5719 = vcmp.ge.s32.totalorder %v5463, 1073741824
        %vm5720 = vcmp.ge.s32.totalorder %v5464, 1073741824
        %vm5721 = vcmp.ge.s32.totalorder %v5465, 1073741824
        %vm5722 = vcmp.ge.s32.totalorder %v5466, 1073741824
        %vm5723 = vcmp.ge.s32.totalorder %v5467, 1073741824
        %vm5724 = vcmp.ge.s32.totalorder %v5468, 1073741824
        %vm5725 = vcmp.ge.s32.totalorder %v5469, 1073741824
        %vm5726 = vcmp.ge.s32.totalorder %v5470, 1073741824
        %vm5727 = vcmp.ge.s32.totalorder %v5471, 1073741824
        %vm5728 = vcmp.ge.s32.totalorder %v5472, 1073741824
        %vm5729 = vcmp.ge.s32.totalorder %v5473, 1073741824
        %vm5730 = vcmp.ge.s32.totalorder %v5474, 1073741824
        %vm5731 = vcmp.ge.s32.totalorder %v5475, 1073741824
        %vm5732 = vcmp.ge.s32.totalorder %v5476, 1073741824
        %vm5733 = vcmp.ge.s32.totalorder %v5477, 1073741824
        %vm5734 = vcmp.ge.s32.totalorder %v5478, 1073741824
        %vm5735 = vcmp.ge.s32.totalorder %v5479, 1073741824
        %vm5736 = vcmp.ge.s32.totalorder %v5480, 1073741824
        %vm5737 = vcmp.ge.s32.totalorder %v5481, 1073741824
        %vm5738 = vcmp.ge.s32.totalorder %v5482, 1073741824
        %vm5739 = vcmp.ge.s32.totalorder %v5483, 1073741824
        %vm5740 = vcmp.ge.s32.totalorder %v5484, 1073741824
        %vm5741 = vcmp.ge.s32.totalorder %v5485, 1073741824
        %vm5742 = vcmp.ge.s32.totalorder %v5486, 1073741824
        %vm5743 = vcmp.ge.s32.totalorder %v5487, 1073741824
        %vm5744 = vcmp.ge.s32.totalorder %v5488, 1073741824
        %vm5745 = vcmp.ge.s32.totalorder %v5489, 1073741824
        %vm5746 = vcmp.ge.s32.totalorder %v5490, 1073741824
        %vm5747 = vcmp.ge.s32.totalorder %v5491, 1073741824
        %vm5748 = vcmp.ge.s32.totalorder %v5492, 1073741824
        %vm5749 = vcmp.ge.s32.totalorder %v5493, 1073741824
        %vm5750 = vcmp.ge.s32.totalorder %v5494, 1073741824
        %vm5751 = vcmp.ge.s32.totalorder %v5495, 1073741824
        %vm5752 = vcmp.ge.s32.totalorder %v5496, 1073741824
        %vm5753 = vcmp.ge.s32.totalorder %v5497, 1073741824
        %vm5754 = vcmp.ge.s32.totalorder %v5498, 1073741824
        %vm5755 = vcmp.ge.s32.totalorder %v5499, 1073741824
        %vm5756 = vcmp.ge.s32.totalorder %v5500, 1073741824
        %vm5757 = vcmp.ge.s32.totalorder %v5501, 1073741824
        %vm5758 = vcmp.ge.s32.totalorder %v5502, 1073741824
        %vm5759 = vcmp.ge.s32.totalorder %v5503, 1073741824
        %vm5760 = vcmp.ge.s32.totalorder %v5504, 1073741824
        %vm5761 = vcmp.ge.s32.totalorder %v5505, 1073741824
        %vm5762 = vcmp.ge.s32.totalorder %v5506, 1073741824
        %vm5763 = vcmp.ge.s32.totalorder %v5507, 1073741824
        %vm5764 = vcmp.ge.s32.totalorder %v5508, 1073741824
        %vm5765 = vcmp.ge.s32.totalorder %v5509, 1073741824
        %vm5766 = vcmp.ge.s32.totalorder %v5510, 1073741824
        %vm5767 = vcmp.ge.s32.totalorder %v5511, 1073741824
        %vm5768 = vcmp.ge.s32.totalorder %v5512, 1073741824
        %vm5769 = vcmp.ge.s32.totalorder %v5513, 1073741824
        %vm5770 = vcmp.ge.s32.totalorder %v5514, 1073741824
        %vm5771 = vcmp.ge.s32.totalorder %v5515, 1073741824
        %vm5772 = vcmp.ge.s32.totalorder %v5516, 1073741824
        %vm5773 = vcmp.ge.s32.totalorder %v5517, 1073741824
        %vm5774 = vcmp.ge.s32.totalorder %v5518, 1073741824
        %vm5775 = vcmp.ge.s32.totalorder %v5519, 1073741824
        %vm5776 = vcmp.ge.s32.totalorder %v5520, 1073741824
        %vm5777 = vcmp.ge.s32.totalorder %v5521, 1073741824
        %vm5778 = vcmp.ge.s32.totalorder %v5522, 1073741824
        %vm5779 = vcmp.ge.s32.totalorder %v5523, 1073741824
        %vm5780 = vcmp.ge.s32.totalorder %v5524, 1073741824
        %vm5781 = vcmp.ge.s32.totalorder %v5525, 1073741824
        %vm5782 = vcmp.ge.s32.totalorder %v5526, 1073741824
        %vm5783 = vcmp.ge.s32.totalorder %v5527, 1073741824
        %vm5784 = vcmp.ge.s32.totalorder %v5528, 1073741824
        %vm5785 = vcmp.ge.s32.totalorder %v5529, 1073741824
        %vm5786 = vcmp.ge.s32.totalorder %v5530, 1073741824
        %vm5787 = vcmp.ge.s32.totalorder %v5531, 1073741824
        %vm5788 = vcmp.ge.s32.totalorder %v5532, 1073741824
        %vm5789 = vcmp.ge.s32.totalorder %v5533, 1073741824
        %vm5790 = vcmp.ge.s32.totalorder %v5534, 1073741824
        %vm5791 = vcmp.ge.s32.totalorder %v5535, 1073741824
        %vm5792 = vcmp.ge.s32.totalorder %v5536, 1073741824
        %vm5793 = vcmp.ge.s32.totalorder %v5537, 1073741824
        %vm5794 = vcmp.ge.s32.totalorder %v5538, 1073741824
        %vm5795 = vcmp.ge.s32.totalorder %v5539, 1073741824
        %vm5796 = vcmp.ge.s32.totalorder %v5540, 1073741824
        %vm5797 = vcmp.ge.s32.totalorder %v5541, 1073741824
        %vm5798 = vcmp.ge.s32.totalorder %v5542, 1073741824
        %vm5799 = vcmp.ge.s32.totalorder %v5543, 1073741824
        %vm5800 = vcmp.ge.s32.totalorder %v5544, 1073741824
        %vm5801 = vcmp.ge.s32.totalorder %v5545, 1073741824
        %vm5802 = vcmp.ge.s32.totalorder %v5546, 1073741824
        %vm5803 = vcmp.ge.s32.totalorder %v5547, 1073741824
        %vm5804 = vcmp.ge.s32.totalorder %v5548, 1073741824
        %vm5805 = vcmp.ge.s32.totalorder %v5549, 1073741824
        %vm5806 = vcmp.ge.s32.totalorder %v5550, 1073741824
        %vm5807 = vcmp.ge.s32.totalorder %v5551, 1073741824
        %vm5808 = vcmp.ge.s32.totalorder %v5552, 1073741824
        %vm5809 = vcmp.ge.s32.totalorder %v5553, 1073741824
        %vm5810 = vcmp.ge.s32.totalorder %v5554, 1073741824
        %vm5811 = vcmp.ge.s32.totalorder %v5555, 1073741824
        %vm5812 = vcmp.ge.s32.totalorder %v5556, 1073741824
        %vm5813 = vcmp.ge.s32.totalorder %v5557, 1073741824
        %vm5814 = vcmp.ge.s32.totalorder %v5558, 1073741824
        %vm5815 = vcmp.ge.s32.totalorder %v5559, 1073741824
        %vm5816 = vcmp.ge.s32.totalorder %v5560, 1073741824
        %vm5817 = vcmp.ge.s32.totalorder %v5561, 1073741824
        %vm5818 = vcmp.ge.s32.totalorder %v5562, 1073741824
        %vm5819 = vcmp.ge.s32.totalorder %v5563, 1073741824
        %vm5820 = vcmp.ge.s32.totalorder %v5564, 1073741824
        %vm5821 = vcmp.ge.s32.totalorder %v5565, 1073741824
        %vm5822 = vcmp.ge.s32.totalorder %v5566, 1073741824
        %vm5823 = vcmp.ge.s32.totalorder %v5567, 1073741824
        %vm5824 = vcmp.ge.s32.totalorder %v5568, 1073741824
        %vm5825 = vcmp.ge.s32.totalorder %v5569, 1073741824
        %vm5826 = vcmp.ge.s32.totalorder %v5570, 1073741824
        %vm5827 = vcmp.ge.s32.totalorder %v5571, 1073741824
        %vm5828 = vcmp.ge.s32.totalorder %v5572, 1073741824
        %vm5829 = vcmp.ge.s32.totalorder %v5573, 1073741824
        %vm5830 = vcmp.ge.s32.totalorder %v5574, 1073741824
        %vm5831 = vcmp.ge.s32.totalorder %v5575, 1073741824
        %vm5832 = vcmp.ge.s32.totalorder %v5576, 1073741824
        %vm5833 = vcmp.ge.s32.totalorder %v5577, 1073741824
        %vm5834 = vcmp.ge.s32.totalorder %v5578, 1073741824
        %vm5835 = vcmp.ge.s32.totalorder %v5579, 1073741824
        %vm5836 = vcmp.ge.s32.totalorder %v5580, 1073741824
        %vm5837 = vcmp.ge.s32.totalorder %v5581, 1073741824
        %vm5838 = vcmp.ge.s32.totalorder %v5582, 1073741824
        %vm5839 = vcmp.ge.s32.totalorder %v5583, 1073741824
        %v5840 = vmul.f32 %v1227, 2.0
        %v5841 = vmul.f32 %v1230, 2.0
        %v5842 = vmul.f32 %v1233, 2.0
        %v5843 = vmul.f32 %v1236, 2.0
        %v5844 = vmul.f32 %v1239, 2.0
        %v5845 = vmul.f32 %v1242, 2.0
        %v5846 = vmul.f32 %v1245, 2.0
        %v5847 = vmul.f32 %v1248, 2.0
        %v5848 = vmul.f32 %v1251, 2.0
        %v5849 = vmul.f32 %v1254, 2.0
        %v5850 = vmul.f32 %v1257, 2.0
        %v5851 = vmul.f32 %v1260, 2.0
        %v5852 = vmul.f32 %v1263, 2.0
        %v5853 = vmul.f32 %v1266, 2.0
        %v5854 = vmul.f32 %v1269, 2.0
        %v5855 = vmul.f32 %v1272, 2.0
        %v5856 = vmul.f32 %v1275, 2.0
        %v5857 = vmul.f32 %v1278, 2.0
        %v5858 = vmul.f32 %v1281, 2.0
        %v5859 = vmul.f32 %v1284, 2.0
        %v5860 = vmul.f32 %v1287, 2.0
        %v5861 = vmul.f32 %v1290, 2.0
        %v5862 = vmul.f32 %v1293, 2.0
        %v5863 = vmul.f32 %v1296, 2.0
        %v5864 = vmul.f32 %v1299, 2.0
        %v5865 = vmul.f32 %v1302, 2.0
        %v5866 = vmul.f32 %v1305, 2.0
        %v5867 = vmul.f32 %v1308, 2.0
        %v5868 = vmul.f32 %v1311, 2.0
        %v5869 = vmul.f32 %v1314, 2.0
        %v5870 = vmul.f32 %v1317, 2.0
        %v5871 = vmul.f32 %v1320, 2.0
        %v5872 = vmul.f32 %v1323, 2.0
        %v5873 = vmul.f32 %v1326, 2.0
        %v5874 = vmul.f32 %v1329, 2.0
        %v5875 = vmul.f32 %v1332, 2.0
        %v5876 = vmul.f32 %v1335, 2.0
        %v5877 = vmul.f32 %v1338, 2.0
        %v5878 = vmul.f32 %v1341, 2.0
        %v5879 = vmul.f32 %v1344, 2.0
        %v5880 = vmul.f32 %v1347, 2.0
        %v5881 = vmul.f32 %v1350, 2.0
        %v5882 = vmul.f32 %v1353, 2.0
        %v5883 = vmul.f32 %v1356, 2.0
        %v5884 = vmul.f32 %v1359, 2.0
        %v5885 = vmul.f32 %v1362, 2.0
        %v5886 = vmul.f32 %v1365, 2.0
        %v5887 = vmul.f32 %v1368, 2.0
        %v5888 = vmul.f32 %v1371, 2.0
        %v5889 = vmul.f32 %v1374, 2.0
        %v5890 = vmul.f32 %v1377, 2.0
        %v5891 = vmul.f32 %v1380, 2.0
        %v5892 = vmul.f32 %v1383, 2.0
        %v5893 = vmul.f32 %v1386, 2.0
        %v5894 = vmul.f32 %v1389, 2.0
        %v5895 = vmul.f32 %v1392, 2.0
        %v5896 = vmul.f32 %v1395, 2.0
        %v5897 = vmul.f32 %v1398, 2.0
        %v5898 = vmul.f32 %v1401, 2.0
        %v5899 = vmul.f32 %v1404, 2.0
        %v5900 = vmul.f32 %v1407, 2.0
        %v5901 = vmul.f32 %v1410, 2.0
        %v5902 = vmul.f32 %v1413, 2.0
        %v5903 = vmul.f32 %v1416, 2.0
        %v5904 = vmul.f32 %v1419, 2.0
        %v5905 = vmul.f32 %v1422, 2.0
        %v5906 = vmul.f32 %v1425, 2.0
        %v5907 = vmul.f32 %v1428, 2.0
        %v5908 = vmul.f32 %v1431, 2.0
        %v5909 = vmul.f32 %v1434, 2.0
        %v5910 = vmul.f32 %v1437, 2.0
        %v5911 = vmul.f32 %v1440, 2.0
        %v5912 = vmul.f32 %v1443, 2.0
        %v5913 = vmul.f32 %v1446, 2.0
        %v5914 = vmul.f32 %v1449, 2.0
        %v5915 = vmul.f32 %v1452, 2.0
        %v5916 = vmul.f32 %v1455, 2.0
        %v5917 = vmul.f32 %v1458, 2.0
        %v5918 = vmul.f32 %v1461, 2.0
        %v5919 = vmul.f32 %v1464, 2.0
        %v5920 = vmul.f32 %v1467, 2.0
        %v5921 = vmul.f32 %v1470, 2.0
        %v5922 = vmul.f32 %v1473, 2.0
        %v5923 = vmul.f32 %v1476, 2.0
        %v5924 = vmul.f32 %v1479, 2.0
        %v5925 = vmul.f32 %v1482, 2.0
        %v5926 = vmul.f32 %v1485, 2.0
        %v5927 = vmul.f32 %v1488, 2.0
        %v5928 = vmul.f32 %v1491, 2.0
        %v5929 = vmul.f32 %v1494, 2.0
        %v5930 = vmul.f32 %v1497, 2.0
        %v5931 = vmul.f32 %v1500, 2.0
        %v5932 = vmul.f32 %v1503, 2.0
        %v5933 = vmul.f32 %v1506, 2.0
        %v5934 = vmul.f32 %v1509, 2.0
        %v5935 = vmul.f32 %v1512, 2.0
        %v5936 = vmul.f32 %v1515, 2.0
        %v5937 = vmul.f32 %v1518, 2.0
        %v5938 = vmul.f32 %v1521, 2.0
        %v5939 = vmul.f32 %v1524, 2.0
        %v5940 = vmul.f32 %v1527, 2.0
        %v5941 = vmul.f32 %v1530, 2.0
        %v5942 = vmul.f32 %v1533, 2.0
        %v5943 = vmul.f32 %v1536, 2.0
        %v5944 = vmul.f32 %v1539, 2.0
        %v5945 = vmul.f32 %v1542, 2.0
        %v5946 = vmul.f32 %v1545, 2.0
        %v5947 = vmul.f32 %v1548, 2.0
        %v5948 = vmul.f32 %v1551, 2.0
        %v5949 = vmul.f32 %v1554, 2.0
        %v5950 = vmul.f32 %v1557, 2.0
        %v5951 = vmul.f32 %v1560, 2.0
        %v5952 = vmul.f32 %v1563, 2.0
        %v5953 = vmul.f32 %v1566, 2.0
        %v5954 = vmul.f32 %v1569, 2.0
        %v5955 = vmul.f32 %v1572, 2.0
        %v5956 = vmul.f32 %v1575, 2.0
        %v5957 = vmul.f32 %v1578, 2.0
        %v5958 = vmul.f32 %v1581, 2.0
        %v5959 = vmul.f32 %v1584, 2.0
        %v5960 = vmul.f32 %v1587, 2.0
        %v5961 = vmul.f32 %v1590, 2.0
        %v5962 = vmul.f32 %v1593, 2.0
        %v5963 = vmul.f32 %v1596, 2.0
        %v5964 = vmul.f32 %v1599, 2.0
        %v5965 = vmul.f32 %v1602, 2.0
        %v5966 = vmul.f32 %v1605, 2.0
        %v5967 = vmul.f32 %v1608, 2.0
        %v5968 = vmul.f32 %v1611, 2.0
        %v5969 = vmul.f32 %v1614, 2.0
        %v5970 = vmul.f32 %v1617, 2.0
        %v5971 = vmul.f32 %v1620, 2.0
        %v5972 = vmul.f32 %v1623, 2.0
        %v5973 = vmul.f32 %v1626, 2.0
        %v5974 = vmul.f32 %v1629, 2.0
        %v5975 = vmul.f32 %v1632, 2.0
        %v5976 = vmul.f32 %v1635, 2.0
        %v5977 = vmul.f32 %v1638, 2.0
        %v5978 = vmul.f32 %v1641, 2.0
        %v5979 = vmul.f32 %v1644, 2.0
        %v5980 = vmul.f32 %v1647, 2.0
        %v5981 = vmul.f32 %v1650, 2.0
        %v5982 = vmul.f32 %v1653, 2.0
        %v5983 = vmul.f32 %v1656, 2.0
        %v5984 = vmul.f32 %v1659, 2.0
        %v5985 = vmul.f32 %v1662, 2.0
        %v5986 = vmul.f32 %v1665, 2.0
        %v5987 = vmul.f32 %v1668, 2.0
        %v5988 = vmul.f32 %v1671, 2.0
        %v5989 = vmul.f32 %v1674, 2.0
        %v5990 = vmul.f32 %v1677, 2.0
        %v5991 = vmul.f32 %v1680, 2.0
        %v5992 = vmul.f32 %v1683, 2.0
        %v5993 = vmul.f32 %v1686, 2.0
        %v5994 = vmul.f32 %v1689, 2.0
        %v5995 = vmul.f32 %v1692, 2.0
        %v5996 = vmul.f32 %v1695, 2.0
        %v5997 = vmul.f32 %v1698, 2.0
        %v5998 = vmul.f32 %v1701, 2.0
        %v5999 = vmul.f32 %v1704, 2.0
        %v6000 = vmul.f32 %v1707, 2.0
        %v6001 = vmul.f32 %v1710, 2.0
        %v6002 = vmul.f32 %v1713, 2.0
        %v6003 = vmul.f32 %v1716, 2.0
        %v6004 = vmul.f32 %v1719, 2.0
        %v6005 = vmul.f32 %v1722, 2.0
        %v6006 = vmul.f32 %v1725, 2.0
        %v6007 = vmul.f32 %v1728, 2.0
        %v6008 = vmul.f32 %v1731, 2.0
        %v6009 = vmul.f32 %v1734, 2.0
        %v6010 = vmul.f32 %v1737, 2.0
        %v6011 = vmul.f32 %v1740, 2.0
        %v6012 = vmul.f32 %v1743, 2.0
        %v6013 = vmul.f32 %v1746, 2.0
        %v6014 = vmul.f32 %v1749, 2.0
        %v6015 = vmul.f32 %v1752, 2.0
        %v6016 = vmul.f32 %v1755, 2.0
        %v6017 = vmul.f32 %v1758, 2.0
        %v6018 = vmul.f32 %v1761, 2.0
        %v6019 = vmul.f32 %v1764, 2.0
        %v6020 = vmul.f32 %v1767, 2.0
        %v6021 = vmul.f32 %v1770, 2.0
        %v6022 = vmul.f32 %v1773, 2.0
        %v6023 = vmul.f32 %v1776, 2.0
        %v6024 = vmul.f32 %v1779, 2.0
        %v6025 = vmul.f32 %v1782, 2.0
        %v6026 = vmul.f32 %v1785, 2.0
        %v6027 = vmul.f32 %v1788, 2.0
        %v6028 = vmul.f32 %v1791, 2.0
        %v6029 = vmul.f32 %v1794, 2.0
        %v6030 = vmul.f32 %v1797, 2.0
        %v6031 = vmul.f32 %v1800, 2.0
        %v6032 = vmul.f32 %v1803, 2.0
        %v6033 = vmul.f32 %v1806, 2.0
        %v6034 = vmul.f32 %v1809, 2.0
        %v6035 = vmul.f32 %v1812, 2.0
        %v6036 = vmul.f32 %v1815, 2.0
        %v6037 = vmul.f32 %v1818, 2.0
        %v6038 = vmul.f32 %v1821, 2.0
        %v6039 = vmul.f32 %v1824, 2.0
        %v6040 = vmul.f32 %v1827, 2.0
        %v6041 = vmul.f32 %v1830, 2.0
        %v6042 = vmul.f32 %v1833, 2.0
        %v6043 = vmul.f32 %v1836, 2.0
        %v6044 = vmul.f32 %v1839, 2.0
        %v6045 = vmul.f32 %v1842, 2.0
        %v6046 = vmul.f32 %v1845, 2.0
        %v6047 = vmul.f32 %v1848, 2.0
        %v6048 = vmul.f32 %v1851, 2.0
        %v6049 = vmul.f32 %v1854, 2.0
        %v6050 = vmul.f32 %v1857, 2.0
        %v6051 = vmul.f32 %v1860, 2.0
        %v6052 = vmul.f32 %v1863, 2.0
        %v6053 = vmul.f32 %v1866, 2.0
        %v6054 = vmul.f32 %v1869, 2.0
        %v6055 = vmul.f32 %v1872, 2.0
        %v6056 = vmul.f32 %v1875, 2.0
        %v6057 = vmul.f32 %v1878, 2.0
        %v6058 = vmul.f32 %v1881, 2.0
        %v6059 = vmul.f32 %v1884, 2.0
        %v6060 = vmul.f32 %v1887, 2.0
        %v6061 = vmul.f32 %v1890, 2.0
        %v6062 = vmul.f32 %v1893, 2.0
        %v6063 = vmul.f32 %v1896, 2.0
        %v6064 = vmul.f32 %v1899, 2.0
        %v6065 = vmul.f32 %v1902, 2.0
        %v6066 = vmul.f32 %v1905, 2.0
        %v6067 = vmul.f32 %v1908, 2.0
        %v6068 = vmul.f32 %v1911, 2.0
        %v6069 = vmul.f32 %v1914, 2.0
        %v6070 = vmul.f32 %v1917, 2.0
        %v6071 = vmul.f32 %v1920, 2.0
        %v6072 = vmul.f32 %v1923, 2.0
        %v6073 = vmul.f32 %v1926, 2.0
        %v6074 = vmul.f32 %v1929, 2.0
        %v6075 = vmul.f32 %v1932, 2.0
        %v6076 = vmul.f32 %v1935, 2.0
        %v6077 = vmul.f32 %v1938, 2.0
        %v6078 = vmul.f32 %v1941, 2.0
        %v6079 = vmul.f32 %v1944, 2.0
        %v6080 = vmul.f32 %v1947, 2.0
        %v6081 = vmul.f32 %v1950, 2.0
        %v6082 = vmul.f32 %v1953, 2.0
        %v6083 = vmul.f32 %v1956, 2.0
        %v6084 = vmul.f32 %v1959, 2.0
        %v6085 = vmul.f32 %v1962, 2.0
        %v6086 = vmul.f32 %v1965, 2.0
        %v6087 = vmul.f32 %v1968, 2.0
        %v6088 = vmul.f32 %v1971, 2.0
        %v6089 = vmul.f32 %v1974, 2.0
        %v6090 = vmul.f32 %v1977, 2.0
        %v6091 = vmul.f32 %v1980, 2.0
        %v6092 = vmul.f32 %v1983, 2.0
        %v6093 = vmul.f32 %v1986, 2.0
        %v6094 = vmul.f32 %v1989, 2.0
        %v6095 = vmul.f32 %v1992, 2.0
        %v6096 = vsel %vm5584, %v5840, 0.0
        %v6097 = vsel %vm5585, %v5841, 0.0
        %v6098 = vsel %vm5586, %v5842, 0.0
        %v6099 = vsel %vm5587, %v5843, 0.0
        %v6100 = vsel %vm5588, %v5844, 0.0
        %v6101 = vsel %vm5589, %v5845, 0.0
        %v6102 = vsel %vm5590, %v5846, 0.0
        %v6103 = vsel %vm5591, %v5847, 0.0
        %v6104 = vsel %vm5592, %v5848, 0.0
        %v6105 = vsel %vm5593, %v5849, 0.0
        %v6106 = vsel %vm5594, %v5850, 0.0
        %v6107 = vsel %vm5595, %v5851, 0.0
        %v6108 = vsel %vm5596, %v5852, 0.0
        %v6109 = vsel %vm5597, %v5853, 0.0
        %v6110 = vsel %vm5598, %v5854, 0.0
        %v6111 = vsel %vm5599, %v5855, 0.0
        %v6112 = vsel %vm5600, %v5856, 0.0
        %v6113 = vsel %vm5601, %v5857, 0.0
        %v6114 = vsel %vm5602, %v5858, 0.0
        %v6115 = vsel %vm5603, %v5859, 0.0
        %v6116 = vsel %vm5604, %v5860, 0.0
        %v6117 = vsel %vm5605, %v5861, 0.0
        %v6118 = vsel %vm5606, %v5862, 0.0
        %v6119 = vsel %vm5607, %v5863, 0.0
        %v6120 = vsel %vm5608, %v5864, 0.0
        %v6121 = vsel %vm5609, %v5865, 0.0
        %v6122 = vsel %vm5610, %v5866, 0.0
        %v6123 = vsel %vm5611, %v5867, 0.0
        %v6124 = vsel %vm5612, %v5868, 0.0
        %v6125 = vsel %vm5613, %v5869, 0.0
        %v6126 = vsel %vm5614, %v5870, 0.0
        %v6127 = vsel %vm5615, %v5871, 0.0
        %v6128 = vsel %vm5616, %v5872, 0.0
        %v6129 = vsel %vm5617, %v5873, 0.0
        %v6130 = vsel %vm5618, %v5874, 0.0
        %v6131 = vsel %vm5619, %v5875, 0.0
        %v6132 = vsel %vm5620, %v5876, 0.0
        %v6133 = vsel %vm5621, %v5877, 0.0
        %v6134 = vsel %vm5622, %v5878, 0.0
        %v6135 = vsel %vm5623, %v5879, 0.0
        %v6136 = vsel %vm5624, %v5880, 0.0
        %v6137 = vsel %vm5625, %v5881, 0.0
        %v6138 = vsel %vm5626, %v5882, 0.0
        %v6139 = vsel %vm5627, %v5883, 0.0
        %v6140 = vsel %vm5628, %v5884, 0.0
        %v6141 = vsel %vm5629, %v5885, 0.0
        %v6142 = vsel %vm5630, %v5886, 0.0
        %v6143 = vsel %vm5631, %v5887, 0.0
        %v6144 = vsel %vm5632, %v5888, 0.0
        %v6145 = vsel %vm5633, %v5889, 0.0
        %v6146 = vsel %vm5634, %v5890, 0.0
        %v6147 = vsel %vm5635, %v5891, 0.0
        %v6148 = vsel %vm5636, %v5892, 0.0
        %v6149 = vsel %vm5637, %v5893, 0.0
        %v6150 = vsel %vm5638, %v5894, 0.0
        %v6151 = vsel %vm5639, %v5895, 0.0
        %v6152 = vsel %vm5640, %v5896, 0.0
        %v6153 = vsel %vm5641, %v5897, 0.0
        %v6154 = vsel %vm5642, %v5898, 0.0
        %v6155 = vsel %vm5643, %v5899, 0.0
        %v6156 = vsel %vm5644, %v5900, 0.0
        %v6157 = vsel %vm5645, %v5901, 0.0
        %v6158 = vsel %vm5646, %v5902, 0.0
        %v6159 = vsel %vm5647, %v5903, 0.0
        %v6160 = vsel %vm5648, %v5904, 0.0
        %v6161 = vsel %vm5649, %v5905, 0.0
        %v6162 = vsel %vm5650, %v5906, 0.0
        %v6163 = vsel %vm5651, %v5907, 0.0
        %v6164 = vsel %vm5652, %v5908, 0.0
        %v6165 = vsel %vm5653, %v5909, 0.0
        %v6166 = vsel %vm5654, %v5910, 0.0
        %v6167 = vsel %vm5655, %v5911, 0.0
        %v6168 = vsel %vm5656, %v5912, 0.0
        %v6169 = vsel %vm5657, %v5913, 0.0
        %v6170 = vsel %vm5658, %v5914, 0.0
        %v6171 = vsel %vm5659, %v5915, 0.0
        %v6172 = vsel %vm5660, %v5916, 0.0
        %v6173 = vsel %vm5661, %v5917, 0.0
        %v6174 = vsel %vm5662, %v5918, 0.0
        %v6175 = vsel %vm5663, %v5919, 0.0
        %v6176 = vsel %vm5664, %v5920, 0.0
        %v6177 = vsel %vm5665, %v5921, 0.0
        %v6178 = vsel %vm5666, %v5922, 0.0
        %v6179 = vsel %vm5667, %v5923, 0.0
        %v6180 = vsel %vm5668, %v5924, 0.0
        %v6181 = vsel %vm5669, %v5925, 0.0
        %v6182 = vsel %vm5670, %v5926, 0.0
        %v6183 = vsel %vm5671, %v5927, 0.0
        %v6184 = vsel %vm5672, %v5928, 0.0
        %v6185 = vsel %vm5673, %v5929, 0.0
        %v6186 = vsel %vm5674, %v5930, 0.0
        %v6187 = vsel %vm5675, %v5931, 0.0
        %v6188 = vsel %vm5676, %v5932, 0.0
        %v6189 = vsel %vm5677, %v5933, 0.0
        %v6190 = vsel %vm5678, %v5934, 0.0
        %v6191 = vsel %vm5679, %v5935, 0.0
        %v6192 = vsel %vm5680, %v5936, 0.0
        %v6193 = vsel %vm5681, %v5937, 0.0
        %v6194 = vsel %vm5682, %v5938, 0.0
        %v6195 = vsel %vm5683, %v5939, 0.0
        %v6196 = vsel %vm5684, %v5940, 0.0
        %v6197 = vsel %vm5685, %v5941, 0.0
        %v6198 = vsel %vm5686, %v5942, 0.0
        %v6199 = vsel %vm5687, %v5943, 0.0
        %v6200 = vsel %vm5688, %v5944, 0.0
        %v6201 = vsel %vm5689, %v5945, 0.0
        %v6202 = vsel %vm5690, %v5946, 0.0
        %v6203 = vsel %vm5691, %v5947, 0.0
        %v6204 = vsel %vm5692, %v5948, 0.0
        %v6205 = vsel %vm5693, %v5949, 0.0
        %v6206 = vsel %vm5694, %v5950, 0.0
        %v6207 = vsel %vm5695, %v5951, 0.0
        %v6208 = vsel %vm5696, %v5952, 0.0
        %v6209 = vsel %vm5697, %v5953, 0.0
        %v6210 = vsel %vm5698, %v5954, 0.0
        %v6211 = vsel %vm5699, %v5955, 0.0
        %v6212 = vsel %vm5700, %v5956, 0.0
        %v6213 = vsel %vm5701, %v5957, 0.0
        %v6214 = vsel %vm5702, %v5958, 0.0
        %v6215 = vsel %vm5703, %v5959, 0.0
        %v6216 = vsel %vm5704, %v5960, 0.0
        %v6217 = vsel %vm5705, %v5961, 0.0
        %v6218 = vsel %vm5706, %v5962, 0.0
        %v6219 = vsel %vm5707, %v5963, 0.0
        %v6220 = vsel %vm5708, %v5964, 0.0
        %v6221 = vsel %vm5709, %v5965, 0.0
        %v6222 = vsel %vm5710, %v5966, 0.0
        %v6223 = vsel %vm5711, %v5967, 0.0
        %v6224 = vsel %vm5712, %v5968, 0.0
        %v6225 = vsel %vm5713, %v5969, 0.0
        %v6226 = vsel %vm5714, %v5970, 0.0
        %v6227 = vsel %vm5715, %v5971, 0.0
        %v6228 = vsel %vm5716, %v5972, 0.0
        %v6229 = vsel %vm5717, %v5973, 0.0
        %v6230 = vsel %vm5718, %v5974, 0.0
        %v6231 = vsel %vm5719, %v5975, 0.0
        %v6232 = vsel %vm5720, %v5976, 0.0
        %v6233 = vsel %vm5721, %v5977, 0.0
        %v6234 = vsel %vm5722, %v5978, 0.0
        %v6235 = vsel %vm5723, %v5979, 0.0
        %v6236 = vsel %vm5724, %v5980, 0.0
        %v6237 = vsel %vm5725, %v5981, 0.0
        %v6238 = vsel %vm5726, %v5982, 0.0
        %v6239 = vsel %vm5727, %v5983, 0.0
        %v6240 = vsel %vm5728, %v5984, 0.0
        %v6241 = vsel %vm5729, %v5985, 0.0
        %v6242 = vsel %vm5730, %v5986, 0.0
        %v6243 = vsel %vm5731, %v5987, 0.0
        %v6244 = vsel %vm5732, %v5988, 0.0
        %v6245 = vsel %vm5733, %v5989, 0.0
        %v6246 = vsel %vm5734, %v5990, 0.0
        %v6247 = vsel %vm5735, %v5991, 0.0
        %v6248 = vsel %vm5736, %v5992, 0.0
        %v6249 = vsel %vm5737, %v5993, 0.0
        %v6250 = vsel %vm5738, %v5994, 0.0
        %v6251 = vsel %vm5739, %v5995, 0.0
        %v6252 = vsel %vm5740, %v5996, 0.0
        %v6253 = vsel %vm5741, %v5997, 0.0
        %v6254 = vsel %vm5742, %v5998, 0.0
        %v6255 = vsel %vm5743, %v5999, 0.0
        %v6256 = vsel %vm5744, %v6000, 0.0
        %v6257 = vsel %vm5745, %v6001, 0.0
        %v6258 = vsel %vm5746, %v6002, 0.0
        %v6259 = vsel %vm5747, %v6003, 0.0
        %v6260 = vsel %vm5748, %v6004, 0.0
        %v6261 = vsel %vm5749, %v6005, 0.0
        %v6262 = vsel %vm5750, %v6006, 0.0
        %v6263 = vsel %vm5751, %v6007, 0.0
        %v6264 = vsel %vm5752, %v6008, 0.0
        %v6265 = vsel %vm5753, %v6009, 0.0
        %v6266 = vsel %vm5754, %v6010, 0.0
        %v6267 = vsel %vm5755, %v6011, 0.0
        %v6268 = vsel %vm5756, %v6012, 0.0
        %v6269 = vsel %vm5757, %v6013, 0.0
        %v6270 = vsel %vm5758, %v6014, 0.0
        %v6271 = vsel %vm5759, %v6015, 0.0
        %v6272 = vsel %vm5760, %v6016, 0.0
        %v6273 = vsel %vm5761, %v6017, 0.0
        %v6274 = vsel %vm5762, %v6018, 0.0
        %v6275 = vsel %vm5763, %v6019, 0.0
        %v6276 = vsel %vm5764, %v6020, 0.0
        %v6277 = vsel %vm5765, %v6021, 0.0
        %v6278 = vsel %vm5766, %v6022, 0.0
        %v6279 = vsel %vm5767, %v6023, 0.0
        %v6280 = vsel %vm5768, %v6024, 0.0
        %v6281 = vsel %vm5769, %v6025, 0.0
        %v6282 = vsel %vm5770, %v6026, 0.0
        %v6283 = vsel %vm5771, %v6027, 0.0
        %v6284 = vsel %vm5772, %v6028, 0.0
        %v6285 = vsel %vm5773, %v6029, 0.0
        %v6286 = vsel %vm5774, %v6030, 0.0
        %v6287 = vsel %vm5775, %v6031, 0.0
        %v6288 = vsel %vm5776, %v6032, 0.0
        %v6289 = vsel %vm5777, %v6033, 0.0
        %v6290 = vsel %vm5778, %v6034, 0.0
        %v6291 = vsel %vm5779, %v6035, 0.0
        %v6292 = vsel %vm5780, %v6036, 0.0
        %v6293 = vsel %vm5781, %v6037, 0.0
        %v6294 = vsel %vm5782, %v6038, 0.0
        %v6295 = vsel %vm5783, %v6039, 0.0
        %v6296 = vsel %vm5784, %v6040, 0.0
        %v6297 = vsel %vm5785, %v6041, 0.0
        %v6298 = vsel %vm5786, %v6042, 0.0
        %v6299 = vsel %vm5787, %v6043, 0.0
        %v6300 = vsel %vm5788, %v6044, 0.0
        %v6301 = vsel %vm5789, %v6045, 0.0
        %v6302 = vsel %vm5790, %v6046, 0.0
        %v6303 = vsel %vm5791, %v6047, 0.0
        %v6304 = vsel %vm5792, %v6048, 0.0
        %v6305 = vsel %vm5793, %v6049, 0.0
        %v6306 = vsel %vm5794, %v6050, 0.0
        %v6307 = vsel %vm5795, %v6051, 0.0
        %v6308 = vsel %vm5796, %v6052, 0.0
        %v6309 = vsel %vm5797, %v6053, 0.0
        %v6310 = vsel %vm5798, %v6054, 0.0
        %v6311 = vsel %vm5799, %v6055, 0.0
        %v6312 = vsel %vm5800, %v6056, 0.0
        %v6313 = vsel %vm5801, %v6057, 0.0
        %v6314 = vsel %vm5802, %v6058, 0.0
        %v6315 = vsel %vm5803, %v6059, 0.0
        %v6316 = vsel %vm5804, %v6060, 0.0
        %v6317 = vsel %vm5805, %v6061, 0.0
        %v6318 = vsel %vm5806, %v6062, 0.0
        %v6319 = vsel %vm5807, %v6063, 0.0
        %v6320 = vsel %vm5808, %v6064, 0.0
        %v6321 = vsel %vm5809, %v6065, 0.0
        %v6322 = vsel %vm5810, %v6066, 0.0
        %v6323 = vsel %vm5811, %v6067, 0.0
        %v6324 = vsel %vm5812, %v6068, 0.0
        %v6325 = vsel %vm5813, %v6069, 0.0
        %v6326 = vsel %vm5814, %v6070, 0.0
        %v6327 = vsel %vm5815, %v6071, 0.0
        %v6328 = vsel %vm5816, %v6072, 0.0
        %v6329 = vsel %vm5817, %v6073, 0.0
        %v6330 = vsel %vm5818, %v6074, 0.0
        %v6331 = vsel %vm5819, %v6075, 0.0
        %v6332 = vsel %vm5820, %v6076, 0.0
        %v6333 = vsel %vm5821, %v6077, 0.0
        %v6334 = vsel %vm5822, %v6078, 0.0
        %v6335 = vsel %vm5823, %v6079, 0.0
        %v6336 = vsel %vm5824, %v6080, 0.0
        %v6337 = vsel %vm5825, %v6081, 0.0
        %v6338 = vsel %vm5826, %v6082, 0.0
        %v6339 = vsel %vm5827, %v6083, 0.0
        %v6340 = vsel %vm5828, %v6084, 0.0
        %v6341 = vsel %vm5829, %v6085, 0.0
        %v6342 = vsel %vm5830, %v6086, 0.0
        %v6343 = vsel %vm5831, %v6087, 0.0
        %v6344 = vsel %vm5832, %v6088, 0.0
        %v6345 = vsel %vm5833, %v6089, 0.0
        %v6346 = vsel %vm5834, %v6090, 0.0
        %v6347 = vsel %vm5835, %v6091, 0.0
        %v6348 = vsel %vm5836, %v6092, 0.0
        %v6349 = vsel %vm5837, %v6093, 0.0
        %v6350 = vsel %vm5838, %v6094, 0.0
        %v6351 = vsel %vm5839, %v6095, 0.0
        %v6352 = vmax.f32 %v6096, 0.0
        %v6353 = vmax.f32 %v6097, 0.0
        %v6354 = vmax.f32 %v6098, 0.0
        %v6355 = vmax.f32 %v6099, 0.0
        %v6356 = vmax.f32 %v6100, 0.0
        %v6357 = vmax.f32 %v6101, 0.0
        %v6358 = vmax.f32 %v6102, 0.0
        %v6359 = vmax.f32 %v6103, 0.0
        %v6360 = vmax.f32 %v6104, 0.0
        %v6361 = vmax.f32 %v6105, 0.0
        %v6362 = vmax.f32 %v6106, 0.0
        %v6363 = vmax.f32 %v6107, 0.0
        %v6364 = vmax.f32 %v6108, 0.0
        %v6365 = vmax.f32 %v6109, 0.0
        %v6366 = vmax.f32 %v6110, 0.0
        %v6367 = vmax.f32 %v6111, 0.0
        %v6368 = vmax.f32 %v6112, 0.0
        %v6369 = vmax.f32 %v6113, 0.0
        %v6370 = vmax.f32 %v6114, 0.0
        %v6371 = vmax.f32 %v6115, 0.0
        %v6372 = vmax.f32 %v6116, 0.0
        %v6373 = vmax.f32 %v6117, 0.0
        %v6374 = vmax.f32 %v6118, 0.0
        %v6375 = vmax.f32 %v6119, 0.0
        %v6376 = vmax.f32 %v6120, 0.0
        %v6377 = vmax.f32 %v6121, 0.0
        %v6378 = vmax.f32 %v6122, 0.0
        %v6379 = vmax.f32 %v6123, 0.0
        %v6380 = vmax.f32 %v6124, 0.0
        %v6381 = vmax.f32 %v6125, 0.0
        %v6382 = vmax.f32 %v6126, 0.0
        %v6383 = vmax.f32 %v6127, 0.0
        %v6384 = vmax.f32 %v6128, 0.0
        %v6385 = vmax.f32 %v6129, 0.0
        %v6386 = vmax.f32 %v6130, 0.0
        %v6387 = vmax.f32 %v6131, 0.0
        %v6388 = vmax.f32 %v6132, 0.0
        %v6389 = vmax.f32 %v6133, 0.0
        %v6390 = vmax.f32 %v6134, 0.0
        %v6391 = vmax.f32 %v6135, 0.0
        %v6392 = vmax.f32 %v6136, 0.0
        %v6393 = vmax.f32 %v6137, 0.0
        %v6394 = vmax.f32 %v6138, 0.0
        %v6395 = vmax.f32 %v6139, 0.0
        %v6396 = vmax.f32 %v6140, 0.0
        %v6397 = vmax.f32 %v6141, 0.0
        %v6398 = vmax.f32 %v6142, 0.0
        %v6399 = vmax.f32 %v6143, 0.0
        %v6400 = vmax.f32 %v6144, 0.0
        %v6401 = vmax.f32 %v6145, 0.0
        %v6402 = vmax.f32 %v6146, 0.0
        %v6403 = vmax.f32 %v6147, 0.0
        %v6404 = vmax.f32 %v6148, 0.0
        %v6405 = vmax.f32 %v6149, 0.0
        %v6406 = vmax.f32 %v6150, 0.0
        %v6407 = vmax.f32 %v6151, 0.0
        %v6408 = vmax.f32 %v6152, 0.0
        %v6409 = vmax.f32 %v6153, 0.0
        %v6410 = vmax.f32 %v6154, 0.0
        %v6411 = vmax.f32 %v6155, 0.0
        %v6412 = vmax.f32 %v6156, 0.0
        %v6413 = vmax.f32 %v6157, 0.0
        %v6414 = vmax.f32 %v6158, 0.0
        %v6415 = vmax.f32 %v6159, 0.0
        %v6416 = vmax.f32 %v6160, 0.0
        %v6417 = vmax.f32 %v6161, 0.0
        %v6418 = vmax.f32 %v6162, 0.0
        %v6419 = vmax.f32 %v6163, 0.0
        %v6420 = vmax.f32 %v6164, 0.0
        %v6421 = vmax.f32 %v6165, 0.0
        %v6422 = vmax.f32 %v6166, 0.0
        %v6423 = vmax.f32 %v6167, 0.0
        %v6424 = vmax.f32 %v6168, 0.0
        %v6425 = vmax.f32 %v6169, 0.0
        %v6426 = vmax.f32 %v6170, 0.0
        %v6427 = vmax.f32 %v6171, 0.0
        %v6428 = vmax.f32 %v6172, 0.0
        %v6429 = vmax.f32 %v6173, 0.0
        %v6430 = vmax.f32 %v6174, 0.0
        %v6431 = vmax.f32 %v6175, 0.0
        %v6432 = vmax.f32 %v6176, 0.0
        %v6433 = vmax.f32 %v6177, 0.0
        %v6434 = vmax.f32 %v6178, 0.0
        %v6435 = vmax.f32 %v6179, 0.0
        %v6436 = vmax.f32 %v6180, 0.0
        %v6437 = vmax.f32 %v6181, 0.0
        %v6438 = vmax.f32 %v6182, 0.0
        %v6439 = vmax.f32 %v6183, 0.0
        %v6440 = vmax.f32 %v6184, 0.0
        %v6441 = vmax.f32 %v6185, 0.0
        %v6442 = vmax.f32 %v6186, 0.0
        %v6443 = vmax.f32 %v6187, 0.0
        %v6444 = vmax.f32 %v6188, 0.0
        %v6445 = vmax.f32 %v6189, 0.0
        %v6446 = vmax.f32 %v6190, 0.0
        %v6447 = vmax.f32 %v6191, 0.0
        %v6448 = vmax.f32 %v6192, 0.0
        %v6449 = vmax.f32 %v6193, 0.0
        %v6450 = vmax.f32 %v6194, 0.0
        %v6451 = vmax.f32 %v6195, 0.0
        %v6452 = vmax.f32 %v6196, 0.0
        %v6453 = vmax.f32 %v6197, 0.0
        %v6454 = vmax.f32 %v6198, 0.0
        %v6455 = vmax.f32 %v6199, 0.0
        %v6456 = vmax.f32 %v6200, 0.0
        %v6457 = vmax.f32 %v6201, 0.0
        %v6458 = vmax.f32 %v6202, 0.0
        %v6459 = vmax.f32 %v6203, 0.0
        %v6460 = vmax.f32 %v6204, 0.0
        %v6461 = vmax.f32 %v6205, 0.0
        %v6462 = vmax.f32 %v6206, 0.0
        %v6463 = vmax.f32 %v6207, 0.0
        %v6464 = vmax.f32 %v6208, 0.0
        %v6465 = vmax.f32 %v6209, 0.0
        %v6466 = vmax.f32 %v6210, 0.0
        %v6467 = vmax.f32 %v6211, 0.0
        %v6468 = vmax.f32 %v6212, 0.0
        %v6469 = vmax.f32 %v6213, 0.0
        %v6470 = vmax.f32 %v6214, 0.0
        %v6471 = vmax.f32 %v6215, 0.0
        %v6472 = vmax.f32 %v6216, 0.0
        %v6473 = vmax.f32 %v6217, 0.0
        %v6474 = vmax.f32 %v6218, 0.0
        %v6475 = vmax.f32 %v6219, 0.0
        %v6476 = vmax.f32 %v6220, 0.0
        %v6477 = vmax.f32 %v6221, 0.0
        %v6478 = vmax.f32 %v6222, 0.0
        %v6479 = vmax.f32 %v6223, 0.0
        %v6480 = vmax.f32 %v6224, 0.0
        %v6481 = vmax.f32 %v6225, 0.0
        %v6482 = vmax.f32 %v6226, 0.0
        %v6483 = vmax.f32 %v6227, 0.0
        %v6484 = vmax.f32 %v6228, 0.0
        %v6485 = vmax.f32 %v6229, 0.0
        %v6486 = vmax.f32 %v6230, 0.0
        %v6487 = vmax.f32 %v6231, 0.0
        %v6488 = vmax.f32 %v6232, 0.0
        %v6489 = vmax.f32 %v6233, 0.0
        %v6490 = vmax.f32 %v6234, 0.0
        %v6491 = vmax.f32 %v6235, 0.0
        %v6492 = vmax.f32 %v6236, 0.0
        %v6493 = vmax.f32 %v6237, 0.0
        %v6494 = vmax.f32 %v6238, 0.0
        %v6495 = vmax.f32 %v6239, 0.0
        %v6496 = vmax.f32 %v6240, 0.0
        %v6497 = vmax.f32 %v6241, 0.0
        %v6498 = vmax.f32 %v6242, 0.0
        %v6499 = vmax.f32 %v6243, 0.0
        %v6500 = vmax.f32 %v6244, 0.0
        %v6501 = vmax.f32 %v6245, 0.0
        %v6502 = vmax.f32 %v6246, 0.0
        %v6503 = vmax.f32 %v6247, 0.0
        %v6504 = vmax.f32 %v6248, 0.0
        %v6505 = vmax.f32 %v6249, 0.0
        %v6506 = vmax.f32 %v6250, 0.0
        %v6507 = vmax.f32 %v6251, 0.0
        %v6508 = vmax.f32 %v6252, 0.0
        %v6509 = vmax.f32 %v6253, 0.0
        %v6510 = vmax.f32 %v6254, 0.0
        %v6511 = vmax.f32 %v6255, 0.0
        %v6512 = vmax.f32 %v6256, 0.0
        %v6513 = vmax.f32 %v6257, 0.0
        %v6514 = vmax.f32 %v6258, 0.0
        %v6515 = vmax.f32 %v6259, 0.0
        %v6516 = vmax.f32 %v6260, 0.0
        %v6517 = vmax.f32 %v6261, 0.0
        %v6518 = vmax.f32 %v6262, 0.0
        %v6519 = vmax.f32 %v6263, 0.0
        %v6520 = vmax.f32 %v6264, 0.0
        %v6521 = vmax.f32 %v6265, 0.0
        %v6522 = vmax.f32 %v6266, 0.0
        %v6523 = vmax.f32 %v6267, 0.0
        %v6524 = vmax.f32 %v6268, 0.0
        %v6525 = vmax.f32 %v6269, 0.0
        %v6526 = vmax.f32 %v6270, 0.0
        %v6527 = vmax.f32 %v6271, 0.0
        %v6528 = vmax.f32 %v6272, 0.0
        %v6529 = vmax.f32 %v6273, 0.0
        %v6530 = vmax.f32 %v6274, 0.0
        %v6531 = vmax.f32 %v6275, 0.0
        %v6532 = vmax.f32 %v6276, 0.0
        %v6533 = vmax.f32 %v6277, 0.0
        %v6534 = vmax.f32 %v6278, 0.0
        %v6535 = vmax.f32 %v6279, 0.0
        %v6536 = vmax.f32 %v6280, 0.0
        %v6537 = vmax.f32 %v6281, 0.0
        %v6538 = vmax.f32 %v6282, 0.0
        %v6539 = vmax.f32 %v6283, 0.0
        %v6540 = vmax.f32 %v6284, 0.0
        %v6541 = vmax.f32 %v6285, 0.0
        %v6542 = vmax.f32 %v6286, 0.0
        %v6543 = vmax.f32 %v6287, 0.0
        %v6544 = vmax.f32 %v6288, 0.0
        %v6545 = vmax.f32 %v6289, 0.0
        %v6546 = vmax.f32 %v6290, 0.0
        %v6547 = vmax.f32 %v6291, 0.0
        %v6548 = vmax.f32 %v6292, 0.0
        %v6549 = vmax.f32 %v6293, 0.0
        %v6550 = vmax.f32 %v6294, 0.0
        %v6551 = vmax.f32 %v6295, 0.0
        %v6552 = vmax.f32 %v6296, 0.0
        %v6553 = vmax.f32 %v6297, 0.0
        %v6554 = vmax.f32 %v6298, 0.0
        %v6555 = vmax.f32 %v6299, 0.0
        %v6556 = vmax.f32 %v6300, 0.0
        %v6557 = vmax.f32 %v6301, 0.0
        %v6558 = vmax.f32 %v6302, 0.0
        %v6559 = vmax.f32 %v6303, 0.0
        %v6560 = vmax.f32 %v6304, 0.0
        %v6561 = vmax.f32 %v6305, 0.0
        %v6562 = vmax.f32 %v6306, 0.0
        %v6563 = vmax.f32 %v6307, 0.0
        %v6564 = vmax.f32 %v6308, 0.0
        %v6565 = vmax.f32 %v6309, 0.0
        %v6566 = vmax.f32 %v6310, 0.0
        %v6567 = vmax.f32 %v6311, 0.0
        %v6568 = vmax.f32 %v6312, 0.0
        %v6569 = vmax.f32 %v6313, 0.0
        %v6570 = vmax.f32 %v6314, 0.0
        %v6571 = vmax.f32 %v6315, 0.0
        %v6572 = vmax.f32 %v6316, 0.0
        %v6573 = vmax.f32 %v6317, 0.0
        %v6574 = vmax.f32 %v6318, 0.0
        %v6575 = vmax.f32 %v6319, 0.0
        %v6576 = vmax.f32 %v6320, 0.0
        %v6577 = vmax.f32 %v6321, 0.0
        %v6578 = vmax.f32 %v6322, 0.0
        %v6579 = vmax.f32 %v6323, 0.0
        %v6580 = vmax.f32 %v6324, 0.0
        %v6581 = vmax.f32 %v6325, 0.0
        %v6582 = vmax.f32 %v6326, 0.0
        %v6583 = vmax.f32 %v6327, 0.0
        %v6584 = vmax.f32 %v6328, 0.0
        %v6585 = vmax.f32 %v6329, 0.0
        %v6586 = vmax.f32 %v6330, 0.0
        %v6587 = vmax.f32 %v6331, 0.0
        %v6588 = vmax.f32 %v6332, 0.0
        %v6589 = vmax.f32 %v6333, 0.0
        %v6590 = vmax.f32 %v6334, 0.0
        %v6591 = vmax.f32 %v6335, 0.0
        %v6592 = vmax.f32 %v6336, 0.0
        %v6593 = vmax.f32 %v6337, 0.0
        %v6594 = vmax.f32 %v6338, 0.0
        %v6595 = vmax.f32 %v6339, 0.0
        %v6596 = vmax.f32 %v6340, 0.0
        %v6597 = vmax.f32 %v6341, 0.0
        %v6598 = vmax.f32 %v6342, 0.0
        %v6599 = vmax.f32 %v6343, 0.0
        %v6600 = vmax.f32 %v6344, 0.0
        %v6601 = vmax.f32 %v6345, 0.0
        %v6602 = vmax.f32 %v6346, 0.0
        %v6603 = vmax.f32 %v6347, 0.0
        %v6604 = vmax.f32 %v6348, 0.0
        %v6605 = vmax.f32 %v6349, 0.0
        %v6606 = vmax.f32 %v6350, 0.0
        %v6607 = vmax.f32 %v6351, 0.0
        %6608 = vst [vmem:[%s164] sm:$0xff] %v6352
        %6609 = vst [vmem:[%s164 + $0x8] sm:$0xff] %v6353
        %6610 = vst [vmem:[%s164 + $0x10] sm:$0xff] %v6354
        %6611 = vst [vmem:[%s164 + $0x18] sm:$0xff] %v6355
        %6612 = vst [vmem:[%s164 + $0x20] sm:$0xff] %v6356
        %6613 = vst [vmem:[%s164 + $0x28] sm:$0xff] %v6357
        %6614 = vst [vmem:[%s164 + $0x30] sm:$0xff] %v6358
        %6615 = vst [vmem:[%s164 + $0x38] sm:$0xff] %v6359
        %6616 = vst [vmem:[%s164 + $0x40] sm:$0xff] %v6360
        %6617 = vst [vmem:[%s164 + $0x48] sm:$0xff] %v6361
        %6618 = vst [vmem:[%s164 + $0x50] sm:$0xff] %v6362
        %6619 = vst [vmem:[%s164 + $0x58] sm:$0xff] %v6363
        %6620 = vst [vmem:[%s164 + $0x60] sm:$0xff] %v6364
        %6621 = vst [vmem:[%s164 + $0x68] sm:$0xff] %v6365
        %6622 = vst [vmem:[%s164 + $0x70] sm:$0xff] %v6366
        %6623 = vst [vmem:[%s164 + $0x78] sm:$0xff] %v6367
        %6624 = vst [vmem:[%s164 + $0x80] sm:$0xff] %v6368
        %6625 = vst [vmem:[%s164 + $0x88] sm:$0xff] %v6369
        %6626 = vst [vmem:[%s164 + $0x90] sm:$0xff] %v6370
        %6627 = vst [vmem:[%s164 + $0x98] sm:$0xff] %v6371
        %6628 = vst [vmem:[%s164 + $0xa0] sm:$0xff] %v6372
        %6629 = vst [vmem:[%s164 + $0xa8] sm:$0xff] %v6373
        %6630 = vst [vmem:[%s164 + $0xb0] sm:$0xff] %v6374
        %6631 = vst [vmem:[%s164 + $0xb8] sm:$0xff] %v6375
        %6632 = vst [vmem:[%s164 + $0xc0] sm:$0xff] %v6376
        %6633 = vst [vmem:[%s164 + $0xc8] sm:$0xff] %v6377
        %6634 = vst [vmem:[%s164 + $0xd0] sm:$0xff] %v6378
        %6635 = vst [vmem:[%s164 + $0xd8] sm:$0xff] %v6379
        %6636 = vst [vmem:[%s164 + $0xe0] sm:$0xff] %v6380
        %6637 = vst [vmem:[%s164 + $0xe8] sm:$0xff] %v6381
        %6638 = vst [vmem:[%s164 + $0xf0] sm:$0xff] %v6382
        %6639 = vst [vmem:[%s164 + $0xf8] sm:$0xff] %v6383
        %6640 = vst [vmem:[%s164 + $0x100] sm:$0xff] %v6384
        %6641 = vst [vmem:[%s164 + $0x108] sm:$0xff] %v6385
        %6642 = vst [vmem:[%s164 + $0x110] sm:$0xff] %v6386
        %6643 = vst [vmem:[%s164 + $0x118] sm:$0xff] %v6387
        %6644 = vst [vmem:[%s164 + $0x120] sm:$0xff] %v6388
        %6645 = vst [vmem:[%s164 + $0x128] sm:$0xff] %v6389
        %6646 = vst [vmem:[%s164 + $0x130] sm:$0xff] %v6390
        %6647 = vst [vmem:[%s164 + $0x138] sm:$0xff] %v6391
        %6648 = vst [vmem:[%s164 + $0x140] sm:$0xff] %v6392
        %6649 = vst [vmem:[%s164 + $0x148] sm:$0xff] %v6393
        %6650 = vst [vmem:[%s164 + $0x150] sm:$0xff] %v6394
        %6651 = vst [vmem:[%s164 + $0x158] sm:$0xff] %v6395
        %6652 = vst [vmem:[%s164 + $0x160] sm:$0xff] %v6396
        %6653 = vst [vmem:[%s164 + $0x168] sm:$0xff] %v6397
        %6654 = vst [vmem:[%s164 + $0x170] sm:$0xff] %v6398
        %6655 = vst [vmem:[%s164 + $0x178] sm:$0xff] %v6399
        %6656 = vst [vmem:[%s164 + $0x180] sm:$0xff] %v6400
        %6657 = vst [vmem:[%s164 + $0x188] sm:$0xff] %v6401
        %6658 = vst [vmem:[%s164 + $0x190] sm:$0xff] %v6402
        %6659 = vst [vmem:[%s164 + $0x198] sm:$0xff] %v6403
        %6660 = vst [vmem:[%s164 + $0x1a0] sm:$0xff] %v6404
        %6661 = vst [vmem:[%s164 + $0x1a8] sm:$0xff] %v6405
        %6662 = vst [vmem:[%s164 + $0x1b0] sm:$0xff] %v6406
        %6663 = vst [vmem:[%s164 + $0x1b8] sm:$0xff] %v6407
        %6664 = vst [vmem:[%s164 + $0x1c0] sm:$0xff] %v6408
        %6665 = vst [vmem:[%s164 + $0x1c8] sm:$0xff] %v6409
        %6666 = vst [vmem:[%s164 + $0x1d0] sm:$0xff] %v6410
        %6667 = vst [vmem:[%s164 + $0x1d8] sm:$0xff] %v6411
        %6668 = vst [vmem:[%s164 + $0x1e0] sm:$0xff] %v6412
        %6669 = vst [vmem:[%s164 + $0x1e8] sm:$0xff] %v6413
        %6670 = vst [vmem:[%s164 + $0x1f0] sm:$0xff] %v6414
        %6671 = vst [vmem:[%s164 + $0x1f8] sm:$0xff] %v6415
        %6672 = vst [vmem:[%s164 + $0x200] sm:$0xff] %v6416
        %6673 = vst [vmem:[%s164 + $0x208] sm:$0xff] %v6417
        %6674 = vst [vmem:[%s164 + $0x210] sm:$0xff] %v6418
        %6675 = vst [vmem:[%s164 + $0x218] sm:$0xff] %v6419
        %6676 = vst [vmem:[%s164 + $0x220] sm:$0xff] %v6420
        %6677 = vst [vmem:[%s164 + $0x228] sm:$0xff] %v6421
        %6678 = vst [vmem:[%s164 + $0x230] sm:$0xff] %v6422
        %6679 = vst [vmem:[%s164 + $0x238] sm:$0xff] %v6423
        %6680 = vst [vmem:[%s164 + $0x240] sm:$0xff] %v6424
        %6681 = vst [vmem:[%s164 + $0x248] sm:$0xff] %v6425
        %6682 = vst [vmem:[%s164 + $0x250] sm:$0xff] %v6426
        %6683 = vst [vmem:[%s164 + $0x258] sm:$0xff] %v6427
        %6684 = vst [vmem:[%s164 + $0x260] sm:$0xff] %v6428
        %6685 = vst [vmem:[%s164 + $0x268] sm:$0xff] %v6429
        %6686 = vst [vmem:[%s164 + $0x270] sm:$0xff] %v6430
        %6687 = vst [vmem:[%s164 + $0x278] sm:$0xff] %v6431
        %6688 = vst [vmem:[%s164 + $0x280] sm:$0xff] %v6432
        %6689 = vst [vmem:[%s164 + $0x288] sm:$0xff] %v6433
        %6690 = vst [vmem:[%s164 + $0x290] sm:$0xff] %v6434
        %6691 = vst [vmem:[%s164 + $0x298] sm:$0xff] %v6435
        %6692 = vst [vmem:[%s164 + $0x2a0] sm:$0xff] %v6436
        %6693 = vst [vmem:[%s164 + $0x2a8] sm:$0xff] %v6437
        %6694 = vst [vmem:[%s164 + $0x2b0] sm:$0xff] %v6438
        %6695 = vst [vmem:[%s164 + $0x2b8] sm:$0xff] %v6439
        %6696 = vst [vmem:[%s164 + $0x2c0] sm:$0xff] %v6440
        %6697 = vst [vmem:[%s164 + $0x2c8] sm:$0xff] %v6441
        %6698 = vst [vmem:[%s164 + $0x2d0] sm:$0xff] %v6442
        %6699 = vst [vmem:[%s164 + $0x2d8] sm:$0xff] %v6443
        %6700 = vst [vmem:[%s164 + $0x2e0] sm:$0xff] %v6444
        %6701 = vst [vmem:[%s164 + $0x2e8] sm:$0xff] %v6445
        %6702 = vst [vmem:[%s164 + $0x2f0] sm:$0xff] %v6446
        %6703 = vst [vmem:[%s164 + $0x2f8] sm:$0xff] %v6447
        %6704 = vst [vmem:[%s164 + $0x300] sm:$0xff] %v6448
        %6705 = vst [vmem:[%s164 + $0x308] sm:$0xff] %v6449
        %6706 = vst [vmem:[%s164 + $0x310] sm:$0xff] %v6450
        %6707 = vst [vmem:[%s164 + $0x318] sm:$0xff] %v6451
        %6708 = vst [vmem:[%s164 + $0x320] sm:$0xff] %v6452
        %6709 = vst [vmem:[%s164 + $0x328] sm:$0xff] %v6453
        %6710 = vst [vmem:[%s164 + $0x330] sm:$0xff] %v6454
        %6711 = vst [vmem:[%s164 + $0x338] sm:$0xff] %v6455
        %6712 = vst [vmem:[%s164 + $0x340] sm:$0xff] %v6456
        %6713 = vst [vmem:[%s164 + $0x348] sm:$0xff] %v6457
        %6714 = vst [vmem:[%s164 + $0x350] sm:$0xff] %v6458
        %6715 = vst [vmem:[%s164 + $0x358] sm:$0xff] %v6459
        %6716 = vst [vmem:[%s164 + $0x360] sm:$0xff] %v6460
        %6717 = vst [vmem:[%s164 + $0x368] sm:$0xff] %v6461
        %6718 = vst [vmem:[%s164 + $0x370] sm:$0xff] %v6462
        %6719 = vst [vmem:[%s164 + $0x378] sm:$0xff] %v6463
        %6720 = vst [vmem:[%s164 + $0x380] sm:$0xff] %v6464
        %6721 = vst [vmem:[%s164 + $0x388] sm:$0xff] %v6465
        %6722 = vst [vmem:[%s164 + $0x390] sm:$0xff] %v6466
        %6723 = vst [vmem:[%s164 + $0x398] sm:$0xff] %v6467
        %6724 = vst [vmem:[%s164 + $0x3a0] sm:$0xff] %v6468
        %6725 = vst [vmem:[%s164 + $0x3a8] sm:$0xff] %v6469
        %6726 = vst [vmem:[%s164 + $0x3b0] sm:$0xff] %v6470
        %6727 = vst [vmem:[%s164 + $0x3b8] sm:$0xff] %v6471
        %6728 = vst [vmem:[%s164 + $0x3c0] sm:$0xff] %v6472
        %6729 = vst [vmem:[%s164 + $0x3c8] sm:$0xff] %v6473
        %6730 = vst [vmem:[%s164 + $0x3d0] sm:$0xff] %v6474
        %6731 = vst [vmem:[%s164 + $0x3d8] sm:$0xff] %v6475
        %6732 = vst [vmem:[%s164 + $0x3e0] sm:$0xff] %v6476
        %6733 = vst [vmem:[%s164 + $0x3e8] sm:$0xff] %v6477
        %6734 = vst [vmem:[%s164 + $0x3f0] sm:$0xff] %v6478
        %6735 = vst [vmem:[%s164 + $0x3f8] sm:$0xff] %v6479
        %6736 = vst [vmem:[%s164 + $0x400] sm:$0xff] %v6480
        %6737 = vst [vmem:[%s164 + $0x408] sm:$0xff] %v6481
        %6738 = vst [vmem:[%s164 + $0x410] sm:$0xff] %v6482
        %6739 = vst [vmem:[%s164 + $0x418] sm:$0xff] %v6483
        %6740 = vst [vmem:[%s164 + $0x420] sm:$0xff] %v6484
        %6741 = vst [vmem:[%s164 + $0x428] sm:$0xff] %v6485
        %6742 = vst [vmem:[%s164 + $0x430] sm:$0xff] %v6486
        %6743 = vst [vmem:[%s164 + $0x438] sm:$0xff] %v6487
        %6744 = vst [vmem:[%s164 + $0x440] sm:$0xff] %v6488
        %6745 = vst [vmem:[%s164 + $0x448] sm:$0xff] %v6489
        %6746 = vst [vmem:[%s164 + $0x450] sm:$0xff] %v6490
        %6747 = vst [vmem:[%s164 + $0x458] sm:$0xff] %v6491
        %6748 = vst [vmem:[%s164 + $0x460] sm:$0xff] %v6492
        %6749 = vst [vmem:[%s164 + $0x468] sm:$0xff] %v6493
        %6750 = vst [vmem:[%s164 + $0x470] sm:$0xff] %v6494
        %6751 = vst [vmem:[%s164 + $0x478] sm:$0xff] %v6495
        %6752 = vst [vmem:[%s164 + $0x480] sm:$0xff] %v6496
        %6753 = vst [vmem:[%s164 + $0x488] sm:$0xff] %v6497
        %6754 = vst [vmem:[%s164 + $0x490] sm:$0xff] %v6498
        %6755 = vst [vmem:[%s164 + $0x498] sm:$0xff] %v6499
        %6756 = vst [vmem:[%s164 + $0x4a0] sm:$0xff] %v6500
        %6757 = vst [vmem:[%s164 + $0x4a8] sm:$0xff] %v6501
        %6758 = vst [vmem:[%s164 + $0x4b0] sm:$0xff] %v6502
        %6759 = vst [vmem:[%s164 + $0x4b8] sm:$0xff] %v6503
        %6760 = vst [vmem:[%s164 + $0x4c0] sm:$0xff] %v6504
        %6761 = vst [vmem:[%s164 + $0x4c8] sm:$0xff] %v6505
        %6762 = vst [vmem:[%s164 + $0x4d0] sm:$0xff] %v6506
        %6763 = vst [vmem:[%s164 + $0x4d8] sm:$0xff] %v6507
        %6764 = vst [vmem:[%s164 + $0x4e0] sm:$0xff] %v6508
        %6765 = vst [vmem:[%s164 + $0x4e8] sm:$0xff] %v6509
        %6766 = vst [vmem:[%s164 + $0x4f0] sm:$0xff] %v6510
        %6767 = vst [vmem:[%s164 + $0x4f8] sm:$0xff] %v6511
        %6768 = vst [vmem:[%s164 + $0x500] sm:$0xff] %v6512
        %6769 = vst [vmem:[%s164 + $0x508] sm:$0xff] %v6513
        %6770 = vst [vmem:[%s164 + $0x510] sm:$0xff] %v6514
        %6771 = vst [vmem:[%s164 + $0x518] sm:$0xff] %v6515
        %6772 = vst [vmem:[%s164 + $0x520] sm:$0xff] %v6516
        %6773 = vst [vmem:[%s164 + $0x528] sm:$0xff] %v6517
        %6774 = vst [vmem:[%s164 + $0x530] sm:$0xff] %v6518
        %6775 = vst [vmem:[%s164 + $0x538] sm:$0xff] %v6519
        %6776 = vst [vmem:[%s164 + $0x540] sm:$0xff] %v6520
        %6777 = vst [vmem:[%s164 + $0x548] sm:$0xff] %v6521
        %6778 = vst [vmem:[%s164 + $0x550] sm:$0xff] %v6522
        %6779 = vst [vmem:[%s164 + $0x558] sm:$0xff] %v6523
        %6780 = vst [vmem:[%s164 + $0x560] sm:$0xff] %v6524
        %6781 = vst [vmem:[%s164 + $0x568] sm:$0xff] %v6525
        %6782 = vst [vmem:[%s164 + $0x570] sm:$0xff] %v6526
        %6783 = vst [vmem:[%s164 + $0x578] sm:$0xff] %v6527
        %6784 = vst [vmem:[%s164 + $0x580] sm:$0xff] %v6528
        %6785 = vst [vmem:[%s164 + $0x588] sm:$0xff] %v6529
        %6786 = vst [vmem:[%s164 + $0x590] sm:$0xff] %v6530
        %6787 = vst [vmem:[%s164 + $0x598] sm:$0xff] %v6531
        %6788 = vst [vmem:[%s164 + $0x5a0] sm:$0xff] %v6532
        %6789 = vst [vmem:[%s164 + $0x5a8] sm:$0xff] %v6533
        %6790 = vst [vmem:[%s164 + $0x5b0] sm:$0xff] %v6534
        %6791 = vst [vmem:[%s164 + $0x5b8] sm:$0xff] %v6535
        %6792 = vst [vmem:[%s164 + $0x5c0] sm:$0xff] %v6536
        %6793 = vst [vmem:[%s164 + $0x5c8] sm:$0xff] %v6537
        %6794 = vst [vmem:[%s164 + $0x5d0] sm:$0xff] %v6538
        %6795 = vst [vmem:[%s164 + $0x5d8] sm:$0xff] %v6539
        %6796 = vst [vmem:[%s164 + $0x5e0] sm:$0xff] %v6540
        %6797 = vst [vmem:[%s164 + $0x5e8] sm:$0xff] %v6541
        %6798 = vst [vmem:[%s164 + $0x5f0] sm:$0xff] %v6542
        %6799 = vst [vmem:[%s164 + $0x5f8] sm:$0xff] %v6543
        %6800 = vst [vmem:[%s164 + $0x600] sm:$0xff] %v6544
        %6801 = vst [vmem:[%s164 + $0x608] sm:$0xff] %v6545
        %6802 = vst [vmem:[%s164 + $0x610] sm:$0xff] %v6546
        %6803 = vst [vmem:[%s164 + $0x618] sm:$0xff] %v6547
        %6804 = vst [vmem:[%s164 + $0x620] sm:$0xff] %v6548
        %6805 = vst [vmem:[%s164 + $0x628] sm:$0xff] %v6549
        %6806 = vst [vmem:[%s164 + $0x630] sm:$0xff] %v6550
        %6807 = vst [vmem:[%s164 + $0x638] sm:$0xff] %v6551
        %6808 = vst [vmem:[%s164 + $0x640] sm:$0xff] %v6552
        %6809 = vst [vmem:[%s164 + $0x648] sm:$0xff] %v6553
        %6810 = vst [vmem:[%s164 + $0x650] sm:$0xff] %v6554
        %6811 = vst [vmem:[%s164 + $0x658] sm:$0xff] %v6555
        %6812 = vst [vmem:[%s164 + $0x660] sm:$0xff] %v6556
        %6813 = vst [vmem:[%s164 + $0x668] sm:$0xff] %v6557
        %6814 = vst [vmem:[%s164 + $0x670] sm:$0xff] %v6558
        %6815 = vst [vmem:[%s164 + $0x678] sm:$0xff] %v6559
        %6816 = vst [vmem:[%s164 + $0x680] sm:$0xff] %v6560
        %6817 = vst [vmem:[%s164 + $0x688] sm:$0xff] %v6561
        %6818 = vst [vmem:[%s164 + $0x690] sm:$0xff] %v6562
        %6819 = vst [vmem:[%s164 + $0x698] sm:$0xff] %v6563
        %6820 = vst [vmem:[%s164 + $0x6a0] sm:$0xff] %v6564
        %6821 = vst [vmem:[%s164 + $0x6a8] sm:$0xff] %v6565
        %6822 = vst [vmem:[%s164 + $0x6b0] sm:$0xff] %v6566
        %6823 = vst [vmem:[%s164 + $0x6b8] sm:$0xff] %v6567
        %6824 = vst [vmem:[%s164 + $0x6c0] sm:$0xff] %v6568
        %6825 = vst [vmem:[%s164 + $0x6c8] sm:$0xff] %v6569
        %6826 = vst [vmem:[%s164 + $0x6d0] sm:$0xff] %v6570
        %6827 = vst [vmem:[%s164 + $0x6d8] sm:$0xff] %v6571
        %6828 = vst [vmem:[%s164 + $0x6e0] sm:$0xff] %v6572
        %6829 = vst [vmem:[%s164 + $0x6e8] sm:$0xff] %v6573
        %6830 = vst [vmem:[%s164 + $0x6f0] sm:$0xff] %v6574
        %6831 = vst [vmem:[%s164 + $0x6f8] sm:$0xff] %v6575
        %6832 = vst [vmem:[%s164 + $0x700] sm:$0xff] %v6576
        %6833 = vst [vmem:[%s164 + $0x708] sm:$0xff] %v6577
        %6834 = vst [vmem:[%s164 + $0x710] sm:$0xff] %v6578
        %6835 = vst [vmem:[%s164 + $0x718] sm:$0xff] %v6579
        %6836 = vst [vmem:[%s164 + $0x720] sm:$0xff] %v6580
        %6837 = vst [vmem:[%s164 + $0x728] sm:$0xff] %v6581
        %6838 = vst [vmem:[%s164 + $0x730] sm:$0xff] %v6582
        %6839 = vst [vmem:[%s164 + $0x738] sm:$0xff] %v6583
        %6840 = vst [vmem:[%s164 + $0x740] sm:$0xff] %v6584
        %6841 = vst [vmem:[%s164 + $0x748] sm:$0xff] %v6585
        %6842 = vst [vmem:[%s164 + $0x750] sm:$0xff] %v6586
        %6843 = vst [vmem:[%s164 + $0x758] sm:$0xff] %v6587
        %6844 = vst [vmem:[%s164 + $0x760] sm:$0xff] %v6588
        %6845 = vst [vmem:[%s164 + $0x768] sm:$0xff] %v6589
        %6846 = vst [vmem:[%s164 + $0x770] sm:$0xff] %v6590
        %6847 = vst [vmem:[%s164 + $0x778] sm:$0xff] %v6591
        %6848 = vst [vmem:[%s164 + $0x780] sm:$0xff] %v6592
        %6849 = vst [vmem:[%s164 + $0x788] sm:$0xff] %v6593
        %6850 = vst [vmem:[%s164 + $0x790] sm:$0xff] %v6594
        %6851 = vst [vmem:[%s164 + $0x798] sm:$0xff] %v6595
        %6852 = vst [vmem:[%s164 + $0x7a0] sm:$0xff] %v6596
        %6853 = vst [vmem:[%s164 + $0x7a8] sm:$0xff] %v6597
        %6854 = vst [vmem:[%s164 + $0x7b0] sm:$0xff] %v6598
        %6855 = vst [vmem:[%s164 + $0x7b8] sm:$0xff] %v6599
        %6856 = vst [vmem:[%s164 + $0x7c0] sm:$0xff] %v6600
        %6857 = vst [vmem:[%s164 + $0x7c8] sm:$0xff] %v6601
        %6858 = vst [vmem:[%s164 + $0x7d0] sm:$0xff] %v6602
        %6859 = vst [vmem:[%s164 + $0x7d8] sm:$0xff] %v6603
        %6860 = vst [vmem:[%s164 + $0x7e0] sm:$0xff] %v6604
        %6861 = vst [vmem:[%s164 + $0x7e8] sm:$0xff] %v6605
        %6862 = vst [vmem:[%s164 + $0x7f0] sm:$0xff] %v6606
        %6863 = vst [vmem:[%s164 + $0x7f8] sm:$0xff] %v6607
        %s6864 = sand.u32 %s93, 1
        %s6865 = scalar_lea.sflag [#allocation3], %s6864
        %s6866 = sand.u32 %s93, 1
        %s6867 = smul.addr %s6866, 2048
        %s6868 = scalar_lea.vmem [#allocation2], %s6867
        // Predicated region
        $region33: #{tpu_custom_call.1} parent=31 // pred_check
          %p6869 = pneg %p103
        $region34: #{tpu_custom_call.1} parent=31 // pred_check_branch
          %6871 = sbr.rel (%p6869) target = $region36
        $region35: #{tpu_custom_call.1} parent=31 // pred_region
          %s6872 = smul.u32 256, %s17
          %6874 = vsyncadd %s6865, 0
          %s6875 = smul.addr %s6872, 8
          %s6876 = scalar_lea.hbm %s3, %s6875
          %s6877 = sshll.u32 %s6868, 4
          %s6878 = int_to_ptr.vmem [resolvable:$true] %s6877
          %s6879 = sshll.u32 %s6876, 4
          %s6880 = int_to_ptr.hbm [resolvable:$true] %s6879
          %6885 = dma.vmem_to_hbm [thread:$0]  %s6878, 32768, %s6880, %s6865, 128, 128, 8
        $region36: #{tpu_custom_call.1} parent=31 // pred_fallthru
          _
      $region32: #{tpu_custom_call.1} parent=5 // pred_fallthru
        _
      %p6886 = scmp.le.s32.totalorder 2, %s12
      // Predicated region
      $region37: #{tpu_custom_call.1} parent=5 // pred_check
        %p6887 = pneg %p6886
      $region38: #{tpu_custom_call.1} parent=5 // pred_check_branch
        %6889 = sbr.rel (%p6887) target = $region40
      $region39: #{tpu_custom_call.1} parent=5 // pred_region
        %s6890 = ssub.s32 %s12, 2
        // Predicated region
        $region41: #{tpu_custom_call.1} parent=39 // pred_check
          %p6891 = pneg %p109
        $region42: #{tpu_custom_call.1} parent=39 // pred_check_branch
          %6893 = sbr.rel (%p6891) target = $region44
        $region43: #{tpu_custom_call.1} parent=39 // pred_region
          %s6894 = sand.u32 %s94, 1
          %s6895 = scalar_lea.sflag [#allocation3], %s6894
          %s6896 = sand.u32 %s94, 1
          %s6897 = smul.addr %s6896, 2048
          %s6898 = scalar_lea.vmem [#allocation2], %s6897
          %6900 = dma.done %s6895, 32768
        $region44: #{tpu_custom_call.1} parent=39 // pred_fallthru
          _
      $region40: #{tpu_custom_call.1} parent=5 // pred_fallthru
        _
    $region6: #{tpu_custom_call.1} parent=1 // loop_footer
      %s16 = sadd.s32 1, %s12
    $region7: #{tpu_custom_call.1} parent=1 // loop_footer_branch
      %11 = sbr.rel target = $region3
    $region8: #{tpu_custom_call.1} parent=1 // loop_exit
      _
    %6901 = vsyncpa [#allocation3], 1
    %s6902 = scalar_lea.sflag [#allocation3], 1
    %6903 = vsyncpa %s6902, 1

</llo_original>
